<compile_context>
chip_gen: v7x
topology: tpu7x:2x2x1
jax: 0.10.0
libtpu: 0.0.40
codegen_flags: <defaults>
</compile_context>

<pallas_src>
import math

import jax
import jax.numpy as jnp
from jax.experimental import pallas as pl
from jax.experimental.pallas import tpu as pltpu

# -------------------------- model config (small, synthetic) --------------------------
BATCH = 2
IN_CHANNELS = 4
OUT_CHANNELS = 4
SAMPLE = 16                  # latent H = W
PATCH = 2
NUM_HEADS = 2
HEAD_DIM = 16
INNER = NUM_HEADS * HEAD_DIM            # 32
JOINT_ATTENTION_DIM = 32                # encoder_hidden_states feature dim
POOLED_PROJECTION_DIM = 32
TEXT_SEQ = 8
NUM_LAYERS = 2
POS_EMBED_MAX_SIZE = 16
TIME_FREQ_DIM = 256
EPS = 1e-6

F32 = jnp.float32
BF16 = jnp.bfloat16

VMEM_SPEC = pl.BlockSpec(memory_space=pltpu.MemorySpace.VMEM)


# ------------------------------ in-kernel helpers --------------------------------------
def _silu(v):
    return v * jax.nn.sigmoid(v)


def _gelu_tanh(v):
    # torch.nn.GELU(approximate="tanh")
    return 0.5 * v * (1.0 + jnp.tanh(0.7978845608028654 * (v + 0.044715 * v * v * v)))


def _ln_mod(v, scale, shift):
    # LayerNorm (no affine) over the last dim, then v * (1 + scale) + shift.
    mean = jnp.mean(v, axis=-1, keepdims=True)
    var = jnp.mean(jnp.square(v - mean), axis=-1, keepdims=True)
    vn = (v - mean) * jax.lax.rsqrt(var + EPS)
    return vn * (1.0 + scale) + shift


def _mm(a_f32, w_ref, b_ref=None):
    # bf16 MXU operands, f32 accumulation, f32 bias add.
    y = jnp.dot(a_f32.astype(BF16), w_ref[...], preferred_element_type=F32)
    if b_ref is not None:
        y = y + b_ref[...]
    return y


def _block_weight_names(pre_only):
    names = ["n1w", "n1b", "ncw", "ncb", "wqkv", "bqkv", "wqkvc", "bqkvc", "wout", "bout"]
    if not pre_only:
        names += ["waddout", "baddout"]
    names += ["ffw1", "ffb1", "ffw2", "ffb2"]
    if not pre_only:
        names += ["fcw1", "fcb1", "fcw2", "fcb2"]
    return names


# ------------------------------- the single fused kernel -----------------------------------
def _sd3_kernel(*refs):
    it = iter(refs)

    # ---- unpack refs (order must match the wrapper's input list) ----
    patches = next(it); pos = next(it); wpa = next(it); bpa = next(it)
    tfreq = next(it); wt1 = next(it); bt1 = next(it); wt2 = next(it); bt2 = next(it)
    pooled = next(it); wp1 = next(it); bp1 = next(it); wp2 = next(it); bp2 = next(it)
    ctx_in = next(it); wc = next(it); bc = next(it)
    blocks = []
    for li in range(NUM_LAYERS):
        pre_only = li == NUM_LAYERS - 1
        blocks.append({name: next(it) for name in _block_weight_names(pre_only)})
    wno = next(it); bno = next(it); wpr = next(it); bpr = next(it)
    out_ref = next(it)

    B, Np, _ = patches.shape
    M = ctx_in.shape[1]
    D = INNER
    Dh = HEAD_DIM
    S = Np + M

    # ---------------- prologue: time/text embeddings (silu(temb) reused everywhere) --------
    t = _silu(_mm(tfreq[...], wt1, bt1))
    t = _mm(t, wt2, bt2)
    pp = _silu(_mm(pooled[...], wp1, bp1))
    pp = _mm(pp, wp2, bp2)
    st_b = _silu(t + pp).astype(BF16)                 # (B, D) = silu(temb)

    # ---------------- patch embed (conv-as-matmul, batch folded) + pos; context embedder ----
    x = (_mm(patches[...].reshape(B * Np, IN_CHANNELS * PATCH * PATCH), wpa, bpa)
         .reshape(B, Np, D) + pos[...][None])         # (B, Np, D)
    ctx = _mm(ctx_in[...].reshape(B * M, JOINT_ATTENTION_DIM), wc, bc).reshape(B, M, D)

    lane = jax.lax.broadcasted_iota(jnp.int32, (1, 1, D), 2)   # head masks for merged PV

    # ---------------- joint transformer blocks ------------------------------------------
    for li, blk in enumerate(blocks):
        pre_only = li == NUM_LAYERS - 1

        # AdaLN modulation: ONE wide matmul per stream, chunks = static lane slices.
        mod_x = jnp.dot(st_b, blk["n1w"][...], preferred_element_type=F32) + blk["n1b"][...]
        mod_c = jnp.dot(st_b, blk["ncw"][...], preferred_element_type=F32) + blk["ncb"][...]

        def ch(m, c):
            return m[:, c * D:(c + 1) * D][:, None, :]          # (B, 1, D)

        # AdaLayerNormZero chunk order: shift, scale, gate, shift_mlp, scale_mlp, gate_mlp
        shift_msa, scale_msa, gate_msa = ch(mod_x, 0), ch(mod_x, 1), ch(mod_x, 2)
        shift_mlp, scale_mlp, gate_mlp = ch(mod_x, 3), ch(mod_x, 4), ch(mod_x, 5)
        norm_x = _ln_mod(x, scale_msa, shift_msa)
        if pre_only:
            # AdaLayerNormContinuous chunk order: scale, shift
            norm_c = _ln_mod(ctx, ch(mod_c, 0), ch(mod_c, 1))
        else:
            c_shift_msa, c_scale_msa, c_gate_msa = ch(mod_c, 0), ch(mod_c, 1), ch(mod_c, 2)
            c_shift_mlp, c_scale_mlp, c_gate_mlp = ch(mod_c, 3), ch(mod_c, 4), ch(mod_c, 5)
            norm_c = _ln_mod(ctx, c_scale_msa, c_shift_msa)

        # Fused QKV projections (lane width 3*D = 96), batch folded into rows.
        # Softmax scale 1/sqrt(Dh) is pre-folded into the q weights/bias.
        qkv_x = _mm(norm_x.reshape(B * Np, D), blk["wqkv"], blk["bqkv"])      # (B*Np, 3D)
        qkv_c = _mm(norm_c.reshape(B * M, D), blk["wqkvc"], blk["bqkvc"])     # (B*M , 3D)
        qkv = jnp.concatenate([qkv_x.reshape(B, Np, 3 * D),
                               qkv_c.reshape(B, M, 3 * D)], axis=1).astype(BF16)  # (B,S,3D)
        v_full = qkv[:, :, 2 * D:3 * D]                                        # (B,S,D)

        # Joint attention: per-head softmax, batched over B via dot_general batch dims.
        # V is lane-masked per head so the PV outputs land pre-merged in (B,S,D) — the
        # head merge + output projection then become a single (rows,D)@(D,D) matmul.
        o_all = jnp.zeros((B, S, D), F32)
        for h in range(NUM_HEADS):
            q = qkv[:, :, h * Dh:(h + 1) * Dh]                                 # (B,S,Dh)
            k = qkv[:, :, D + h * Dh:D + (h + 1) * Dh]                         # (B,S,Dh)
            head_mask = (lane >= h * Dh) & (lane < (h + 1) * Dh)
            v = jnp.where(head_mask, v_full, jnp.zeros_like(v_full))           # (B,S,D)
            s = jax.lax.dot_general(q, k, (((2,), (2,)), ((0,), (0,))),
                                    preferred_element_type=F32)                # (B,S,S)
            m = jnp.max(s, axis=-1, keepdims=True)
            p = jnp.exp(s - m)
            l = jnp.sum(p, axis=-1, keepdims=True)
            o = jax.lax.dot_general(p.astype(BF16), v, (((2,), (1,)), ((0,), (0,))),
                                    preferred_element_type=F32)                # (B,S,D)
            o_all = o_all + o * pl.reciprocal(l, approx=True)

        # --- sample stream: single wide out-proj, gated residual, feed-forward ---
        x_attn = _mm(o_all[:, :Np].reshape(B * Np, D), blk["wout"], blk["bout"])
        x = x + gate_msa * x_attn.reshape(B, Np, D)
        norm_x2 = _ln_mod(x, scale_mlp, shift_mlp)
        hmid = _gelu_tanh(_mm(norm_x2.reshape(B * Np, D), blk["ffw1"], blk["ffb1"]))
        x = x + gate_mlp * _mm(hmid, blk["ffw2"], blk["ffb2"]).reshape(B, Np, D)

        # --- context stream (skipped on the last, context_pre_only block) ---
        if not pre_only:
            c_attn = _mm(o_all[:, Np:].reshape(B * M, D), blk["waddout"], blk["baddout"])
            ctx = ctx + c_gate_msa * c_attn.reshape(B, M, D)
            norm_c2 = _ln_mod(ctx, c_scale_mlp, c_shift_mlp)
            cmid = _gelu_tanh(_mm(norm_c2.reshape(B * M, D), blk["fcw1"], blk["fcb1"]))
            ctx = ctx + c_gate_mlp * _mm(cmid, blk["fcw2"], blk["fcb2"]).reshape(B, M, D)

    # ---------------- epilogue: AdaLayerNormContinuous (norm_out) + proj_out --------------
    mod_o = jnp.dot(st_b, wno[...], preferred_element_type=F32) + bno[...]     # (B, 2D)
    y = _ln_mod(x, mod_o[:, :D][:, None, :], mod_o[:, D:][:, None, :])
    out = _mm(y.reshape(B * Np, D), wpr, bpr)                                  # (B*Np, p*p*Cout)
    out_ref[...] = out.reshape(B, Np, -1)


# --------------------------- deterministic embeddings ------------------------------------
def sinusoidal_timestep_embedding(t, dim=TIME_FREQ_DIM):
    # diffusers Timesteps(dim, flip_sin_to_cos=True, downscale_freq_shift=0)
    half = dim // 2
    exponent = -math.log(10000.0) * jnp.arange(half, dtype=F32) / half
    freqs = jnp.exp(exponent)
    args = t.astype(F32)[:, None] * freqs[None, :]
    emb = jnp.concatenate([jnp.sin(args), jnp.cos(args)], axis=-1)
    emb = jnp.concatenate([emb[:, half:], emb[:, :half]], axis=-1)  # flip sin/cos
    return emb


def _get_1d_sincos(embed_dim, pos):
    omega = jnp.arange(embed_dim // 2, dtype=F32) / (embed_dim / 2.0)
    omega = 1.0 / (10000.0 ** omega)
    out = pos.reshape(-1)[:, None] * omega[None, :]
    return jnp.concatenate([jnp.sin(out), jnp.cos(out)], axis=1)


def get_2d_sincos_pos_embed(embed_dim, grid_size, base_size, interpolation_scale=1.0):
    grid_h = jnp.arange(grid_size, dtype=F32) / (grid_size / base_size) / interpolation_scale
    grid_w = jnp.arange(grid_size, dtype=F32) / (grid_size / base_size) / interpolation_scale
    gw, gh = jnp.meshgrid(grid_w, grid_h)          # w first, as in diffusers
    grid = jnp.stack([gw, gh], axis=0).reshape(2, 1, grid_size, grid_size)
    emb_h = _get_1d_sincos(embed_dim // 2, grid[0])
    emb_w = _get_1d_sincos(embed_dim // 2, grid[1])
    return jnp.concatenate([emb_h, emb_w], axis=1)  # (grid_size**2, embed_dim)


def cropped_pos_embed(pos_embed, hp, wp, max_size):
    pe = pos_embed.reshape(1, max_size, max_size, -1)
    top = (max_size - hp) // 2
    left = (max_size - wp) // 2
    pe = pe[:, top:top + hp, left:left + wp, :]
    return pe.reshape(1, hp * wp, -1)


# ------------------------------- parameter init -------------------------------------------
def init_params(key):
    keys = iter(jax.random.split(key, 256))

    def lin(k_in, k_out):
        w = jax.random.normal(next(keys), (k_in, k_out), F32) * 0.02
        b = jax.random.normal(next(keys), (k_out,), F32) * 0.02
        return w, b

    def simple(k_in, k_out):
        w, b = lin(k_in, k_out)
        return w.astype(BF16), b.reshape(1, k_out)

    def fused_qkv(qscale):
        # to_q / to_k / to_v (or add_q/k/v) fused into one (D, 3D) weight; softmax scale
        # pre-folded into the q columns (weights and bias).
        wq, bq = lin(INNER, INNER)
        wk, bk = lin(INNER, INNER)
        wv, bv = lin(INNER, INNER)
        w = jnp.concatenate([wq * qscale, wk, wv], axis=1).astype(BF16)
        b = jnp.concatenate([bq * qscale, bk, bv]).reshape(1, 3 * INNER)
        return w, b

    params = {}
    params["patch_w"], params["patch_b"] = simple(IN_CHANNELS * PATCH * PATCH, INNER)
    params["pos_embed"] = get_2d_sincos_pos_embed(
        INNER, POS_EMBED_MAX_SIZE, base_size=SAMPLE // PATCH).astype(F32)

    params["t_w1"], params["t_b1"] = simple(TIME_FREQ_DIM, INNER)
    params["t_w2"], params["t_b2"] = simple(INNER, INNER)
    params["p_w1"], params["p_b1"] = simple(POOLED_PROJECTION_DIM, INNER)
    params["p_w2"], params["p_b2"] = simple(INNER, INNER)
    params["ctx_w"], params["ctx_b"] = simple(JOINT_ATTENTION_DIM, INNER)

    qscale = 1.0 / math.sqrt(HEAD_DIM)
    blocks = []
    for i in range(NUM_LAYERS):
        pre_only = (i == NUM_LAYERS - 1)
        blk = {}
        # AdaLN linears fused: (D, 6D) (or (D, 2D) for the pre-only context norm).
        blk["n1w"], blk["n1b"] = simple(INNER, 6 * INNER)
        blk["ncw"], blk["ncb"] = simple(INNER, (2 if pre_only else 6) * INNER)
        blk["wqkv"], blk["bqkv"] = fused_qkv(qscale)
        blk["wqkvc"], blk["bqkvc"] = fused_qkv(qscale)
        blk["wout"], blk["bout"] = simple(INNER, INNER)
        if not pre_only:
            blk["waddout"], blk["baddout"] = simple(INNER, INNER)
        blk["ffw1"], blk["ffb1"] = simple(INNER, 4 * INNER)
        blk["ffw2"], blk["ffb2"] = simple(4 * INNER, INNER)
        if not pre_only:
            blk["fcw1"], blk["fcb1"] = simple(INNER, 4 * INNER)
            blk["fcw2"], blk["fcb2"] = simple(4 * INNER, INNER)
        blocks.append(blk)
    params["blocks"] = blocks

    # norm_out (AdaLayerNormContinuous: scale, shift) + proj_out
    params["norm_out_w"], params["norm_out_b"] = simple(INNER, 2 * INNER)
    params["proj_out_w"], params["proj_out_b"] = simple(INNER, PATCH * PATCH * OUT_CHANNELS)
    return params


# --------------------------------- forward -------------------------------------------------
def sd3_transformer_forward(params, hidden_states, encoder_hidden_states,
                            pooled_projections, timestep):
    """Equivalent of SD3Transformer2DModelWrapper.forward (return_dict=False)."""
    B, C, H, W = hidden_states.shape
    hp, wp = H // PATCH, W // PATCH
    n_tok = hp * wp

    # patchify NCHW -> (B, tokens, C*p*p)  (PatchEmbed's conv expressed as a matmul)
    patches = hidden_states.reshape(B, C, hp, PATCH, wp, PATCH)
    patches = patches.transpose(0, 2, 4, 1, 3, 5).reshape(B, n_tok, C * PATCH * PATCH)
    pos = cropped_pos_embed(params["pos_embed"], hp, wp, POS_EMBED_MAX_SIZE)[0]   # (tokens, D)
    t_freq = sinusoidal_timestep_embedding(timestep, TIME_FREQ_DIM)               # (B, 256)

    # ---- ONE fused pallas_call: prologue + all blocks + epilogue, all VMEM-resident ----
    inputs = [patches, pos, params["patch_w"], params["patch_b"],
              t_freq, params["t_w1"], params["t_b1"], params["t_w2"], params["t_b2"],
              pooled_projections, params["p_w1"], params["p_b1"],
              params["p_w2"], params["p_b2"],
              encoder_hidden_states, params["ctx_w"], params["ctx_b"]]
    for i, blk in enumerate(params["blocks"]):
        pre_only = (i == NUM_LAYERS - 1)
        inputs += [blk[name] for name in _block_weight_names(pre_only)]
    inputs += [params["norm_out_w"], params["norm_out_b"],
               params["proj_out_w"], params["proj_out_b"]]

    out = pl.pallas_call(
        _sd3_kernel,
        out_shape=jax.ShapeDtypeStruct((B, n_tok, PATCH * PATCH * OUT_CHANNELS), F32),
        in_specs=[VMEM_SPEC] * len(inputs),
        out_specs=VMEM_SPEC,
    )(*inputs)

    # unpatchify "nhwpqc -> nchpwq"
    out = out.reshape(B, hp, wp, PATCH, PATCH, OUT_CHANNELS)
    out = out.transpose(0, 5, 1, 3, 2, 4).reshape(B, OUT_CHANNELS, hp * PATCH, wp * PATCH)
    return (out,)   # matches return_dict=False


# ----------------------------------- main --------------------------------------------------
if __name__ == "__main__":
    key = jax.random.PRNGKey(0)
    kp, k1, k2, k3 = jax.random.split(key, 4)

    params = init_params(kp)

    hidden_states = jax.random.normal(k1, (BATCH, IN_CHANNELS, SAMPLE, SAMPLE), F32)
    encoder_hidden_states = jax.random.normal(k2, (BATCH, TEXT_SEQ, JOINT_ATTENTION_DIM), F32)
    pooled_projections = jax.random.normal(k3, (BATCH, POOLED_PROJECTION_DIM), F32)
    timestep = jnp.array([3, 501], dtype=jnp.int32)   # LongTensor in PyTorch

    fwd = jax.jit(sd3_transformer_forward)
    (sample,) = fwd(params, hidden_states, encoder_hidden_states, pooled_projections, timestep)
    sample = jax.block_until_ready(sample)

    assert sample.shape == (BATCH, OUT_CHANNELS, SAMPLE, SAMPLE), sample.shape
    assert bool(jnp.all(jnp.isfinite(sample)))
    # TODO(synk): block_controlnet_hidden_states / joint_attention_kwargs are unused by the
    # wrapper's forward (not forwarded to the model), so they are intentionally omitted.
    print("KERNEL_OK")
</pallas_src>

<mosaic_0001>
module attributes {stable_mosaic.version = 11 : i64} {
  func.func @_sd3_kernel(%arg0: memref<2x64x16xf32, #tpu.memory_space<vmem>>, %arg1: memref<64x32xf32, #tpu.memory_space<vmem>>, %arg2: memref<16x32xbf16, #tpu.memory_space<vmem>>, %arg3: memref<1x32xf32, #tpu.memory_space<vmem>>, %arg4: memref<2x256xf32, #tpu.memory_space<vmem>>, %arg5: memref<256x32xbf16, #tpu.memory_space<vmem>>, %arg6: memref<1x32xf32, #tpu.memory_space<vmem>>, %arg7: memref<32x32xbf16, #tpu.memory_space<vmem>>, %arg8: memref<1x32xf32, #tpu.memory_space<vmem>>, %arg9: memref<2x32xf32, #tpu.memory_space<vmem>>, %arg10: memref<32x32xbf16, #tpu.memory_space<vmem>>, %arg11: memref<1x32xf32, #tpu.memory_space<vmem>>, %arg12: memref<32x32xbf16, #tpu.memory_space<vmem>>, %arg13: memref<1x32xf32, #tpu.memory_space<vmem>>, %arg14: memref<2x8x32xf32, #tpu.memory_space<vmem>>, %arg15: memref<32x32xbf16, #tpu.memory_space<vmem>>, %arg16: memref<1x32xf32, #tpu.memory_space<vmem>>, %arg17: memref<32x192xbf16, #tpu.memory_space<vmem>>, %arg18: memref<1x192xf32, #tpu.memory_space<vmem>>, %arg19: memref<32x192xbf16, #tpu.memory_space<vmem>>, %arg20: memref<1x192xf32, #tpu.memory_space<vmem>>, %arg21: memref<32x96xbf16, #tpu.memory_space<vmem>>, %arg22: memref<1x96xf32, #tpu.memory_space<vmem>>, %arg23: memref<32x96xbf16, #tpu.memory_space<vmem>>, %arg24: memref<1x96xf32, #tpu.memory_space<vmem>>, %arg25: memref<32x32xbf16, #tpu.memory_space<vmem>>, %arg26: memref<1x32xf32, #tpu.memory_space<vmem>>, %arg27: memref<32x32xbf16, #tpu.memory_space<vmem>>, %arg28: memref<1x32xf32, #tpu.memory_space<vmem>>, %arg29: memref<32x128xbf16, #tpu.memory_space<vmem>>, %arg30: memref<1x128xf32, #tpu.memory_space<vmem>>, %arg31: memref<128x32xbf16, #tpu.memory_space<vmem>>, %arg32: memref<1x32xf32, #tpu.memory_space<vmem>>, %arg33: memref<32x128xbf16, #tpu.memory_space<vmem>>, %arg34: memref<1x128xf32, #tpu.memory_space<vmem>>, %arg35: memref<128x32xbf16, #tpu.memory_space<vmem>>, %arg36: memref<1x32xf32, #tpu.memory_space<vmem>>, %arg37: memref<32x192xbf16, #tpu.memory_space<vmem>>, %arg38: memref<1x192xf32, #tpu.memory_space<vmem>>, %arg39: memref<32x64xbf16, #tpu.memory_space<vmem>>, %arg40: memref<1x64xf32, #tpu.memory_space<vmem>>, %arg41: memref<32x96xbf16, #tpu.memory_space<vmem>>, %arg42: memref<1x96xf32, #tpu.memory_space<vmem>>, %arg43: memref<32x96xbf16, #tpu.memory_space<vmem>>, %arg44: memref<1x96xf32, #tpu.memory_space<vmem>>, %arg45: memref<32x32xbf16, #tpu.memory_space<vmem>>, %arg46: memref<1x32xf32, #tpu.memory_space<vmem>>, %arg47: memref<32x128xbf16, #tpu.memory_space<vmem>>, %arg48: memref<1x128xf32, #tpu.memory_space<vmem>>, %arg49: memref<128x32xbf16, #tpu.memory_space<vmem>>, %arg50: memref<1x32xf32, #tpu.memory_space<vmem>>, %arg51: memref<32x64xbf16, #tpu.memory_space<vmem>>, %arg52: memref<1x64xf32, #tpu.memory_space<vmem>>, %arg53: memref<32x16xbf16, #tpu.memory_space<vmem>>, %arg54: memref<1x16xf32, #tpu.memory_space<vmem>>, %arg55: memref<2x64x16xf32, #tpu.memory_space<vmem>>) attributes {dimension_semantics = [], scalar_prefetch = 0 : i64, scratch_operands = 0 : i64, tpu.core_type = #tpu.core_type<tc>} {
    %c0 = arith.constant 0 : index
    %c0_0 = arith.constant 0 : index
    %0 = vector.load %arg4[%c0, %c0_0] : memref<2x256xf32, #tpu.memory_space<vmem>>, vector<2x256xf32>
    %1 = arith.truncf %0 : vector<2x256xf32> to vector<2x256xbf16>
    %c0_1 = arith.constant 0 : index
    %c0_2 = arith.constant 0 : index
    %2 = vector.load %arg5[%c0_1, %c0_2] : memref<256x32xbf16, #tpu.memory_space<vmem>>, vector<256x32xbf16>
    %cst = arith.constant dense<0.000000e+00> : vector<2x32xf32>
    %3 = tpu.matmul %1, %2, %cst {dimension_numbers = #tpu.dot_dimension_numbers<[1], [0], [0], [1], [0, 0, 1, 1], [], []>} : vector<2x256xbf16>, vector<256x32xbf16>, vector<2x32xf32> -> vector<2x32xf32>
    %c0_3 = arith.constant 0 : index
    %c0_4 = arith.constant 0 : index
    %4 = vector.load %arg6[%c0_3, %c0_4] : memref<1x32xf32, #tpu.memory_space<vmem>>, vector<1x32xf32>
    %5 = vector.broadcast %4 : vector<1x32xf32> to vector<2x32xf32>
    %6 = arith.addf %3, %5 : vector<2x32xf32>
    %7 = arith.negf %6 : vector<2x32xf32>
    %8 = math.exp %7 : vector<2x32xf32>
    %cst_5 = arith.constant 1.000000e+00 : f32
    %9 = vector.broadcast %cst_5 : f32 to vector<2x32xf32>
    %10 = arith.addf %9, %8 : vector<2x32xf32>
    %11 = arith.divf %9, %10 : vector<2x32xf32>
    %12 = arith.mulf %6, %11 : vector<2x32xf32>
    %13 = arith.truncf %12 : vector<2x32xf32> to vector<2x32xbf16>
    %c0_6 = arith.constant 0 : index
    %c0_7 = arith.constant 0 : index
    %14 = vector.load %arg7[%c0_6, %c0_7] : memref<32x32xbf16, #tpu.memory_space<vmem>>, vector<32x32xbf16>
    %cst_8 = arith.constant dense<0.000000e+00> : vector<2x32xf32>
    %15 = tpu.matmul %13, %14, %cst_8 {dimension_numbers = #tpu.dot_dimension_numbers<[1], [0], [0], [1], [0, 0, 1, 1], [], []>} : vector<2x32xbf16>, vector<32x32xbf16>, vector<2x32xf32> -> vector<2x32xf32>
    %c0_9 = arith.constant 0 : index
    %c0_10 = arith.constant 0 : index
    %16 = vector.load %arg8[%c0_9, %c0_10] : memref<1x32xf32, #tpu.memory_space<vmem>>, vector<1x32xf32>
    %17 = vector.broadcast %16 : vector<1x32xf32> to vector<2x32xf32>
    %18 = arith.addf %15, %17 : vector<2x32xf32>
    %c0_11 = arith.constant 0 : index
    %c0_12 = arith.constant 0 : index
    %19 = vector.load %arg9[%c0_11, %c0_12] : memref<2x32xf32, #tpu.memory_space<vmem>>, vector<2x32xf32>
    %20 = arith.truncf %19 : vector<2x32xf32> to vector<2x32xbf16>
    %c0_13 = arith.constant 0 : index
    %c0_14 = arith.constant 0 : index
    %21 = vector.load %arg10[%c0_13, %c0_14] : memref<32x32xbf16, #tpu.memory_space<vmem>>, vector<32x32xbf16>
    %cst_15 = arith.constant dense<0.000000e+00> : vector<2x32xf32>
    %22 = tpu.matmul %20, %21, %cst_15 {dimension_numbers = #tpu.dot_dimension_numbers<[1], [0], [0], [1], [0, 0, 1, 1], [], []>} : vector<2x32xbf16>, vector<32x32xbf16>, vector<2x32xf32> -> vector<2x32xf32>
    %c0_16 = arith.constant 0 : index
    %c0_17 = arith.constant 0 : index
    %23 = vector.load %arg11[%c0_16, %c0_17] : memref<1x32xf32, #tpu.memory_space<vmem>>, vector<1x32xf32>
    %24 = vector.broadcast %23 : vector<1x32xf32> to vector<2x32xf32>
    %25 = arith.addf %22, %24 : vector<2x32xf32>
    %26 = arith.negf %25 : vector<2x32xf32>
    %27 = math.exp %26 : vector<2x32xf32>
    %cst_18 = arith.constant 1.000000e+00 : f32
    %28 = vector.broadcast %cst_18 : f32 to vector<2x32xf32>
    %29 = arith.addf %28, %27 : vector<2x32xf32>
    %30 = arith.divf %28, %29 : vector<2x32xf32>
    %31 = arith.mulf %25, %30 : vector<2x32xf32>
    %32 = arith.truncf %31 : vector<2x32xf32> to vector<2x32xbf16>
    %c0_19 = arith.constant 0 : index
    %c0_20 = arith.constant 0 : index
    %33 = vector.load %arg12[%c0_19, %c0_20] : memref<32x32xbf16, #tpu.memory_space<vmem>>, vector<32x32xbf16>
    %cst_21 = arith.constant dense<0.000000e+00> : vector<2x32xf32>
    %34 = tpu.matmul %32, %33, %cst_21 {dimension_numbers = #tpu.dot_dimension_numbers<[1], [0], [0], [1], [0, 0, 1, 1], [], []>} : vector<2x32xbf16>, vector<32x32xbf16>, vector<2x32xf32> -> vector<2x32xf32>
    %c0_22 = arith.constant 0 : index
    %c0_23 = arith.constant 0 : index
    %35 = vector.load %arg13[%c0_22, %c0_23] : memref<1x32xf32, #tpu.memory_space<vmem>>, vector<1x32xf32>
    %36 = vector.broadcast %35 : vector<1x32xf32> to vector<2x32xf32>
    %37 = arith.addf %34, %36 : vector<2x32xf32>
    %38 = arith.addf %18, %37 : vector<2x32xf32>
    %39 = arith.negf %38 : vector<2x32xf32>
    %40 = math.exp %39 : vector<2x32xf32>
    %cst_24 = arith.constant 1.000000e+00 : f32
    %41 = vector.broadcast %cst_24 : f32 to vector<2x32xf32>
    %42 = arith.addf %41, %40 : vector<2x32xf32>
    %43 = arith.divf %41, %42 : vector<2x32xf32>
    %44 = arith.mulf %38, %43 : vector<2x32xf32>
    %45 = arith.truncf %44 : vector<2x32xf32> to vector<2x32xbf16>
    %c0_25 = arith.constant 0 : index
    %c0_26 = arith.constant 0 : index
    %c0_27 = arith.constant 0 : index
    %46 = vector.load %arg0[%c0_25, %c0_26, %c0_27] : memref<2x64x16xf32, #tpu.memory_space<vmem>>, vector<2x64x16xf32>
    %47 = vector.shape_cast %46 : vector<2x64x16xf32> to vector<128x16xf32>
    %48 = arith.truncf %47 : vector<128x16xf32> to vector<128x16xbf16>
    %c0_28 = arith.constant 0 : index
    %c0_29 = arith.constant 0 : index
    %49 = vector.load %arg2[%c0_28, %c0_29] : memref<16x32xbf16, #tpu.memory_space<vmem>>, vector<16x32xbf16>
    %cst_30 = arith.constant dense<0.000000e+00> : vector<128x32xf32>
    %50 = tpu.matmul %48, %49, %cst_30 {dimension_numbers = #tpu.dot_dimension_numbers<[1], [0], [0], [1], [0, 0, 1, 1], [], []>} : vector<128x16xbf16>, vector<16x32xbf16>, vector<128x32xf32> -> vector<128x32xf32>
    %c0_31 = arith.constant 0 : index
    %c0_32 = arith.constant 0 : index
    %51 = vector.load %arg3[%c0_31, %c0_32] : memref<1x32xf32, #tpu.memory_space<vmem>>, vector<1x32xf32>
    %52 = vector.broadcast %51 : vector<1x32xf32> to vector<128x32xf32>
    %53 = arith.addf %50, %52 : vector<128x32xf32>
    %54 = vector.shape_cast %53 : vector<128x32xf32> to vector<2x64x32xf32>
    %c0_33 = arith.constant 0 : index
    %c0_34 = arith.constant 0 : index
    %55 = vector.load %arg1[%c0_33, %c0_34] : memref<64x32xf32, #tpu.memory_space<vmem>>, vector<64x32xf32>
    %56 = vector.shape_cast %55 : vector<64x32xf32> to vector<1x64x32xf32>
    %57 = vector.broadcast %56 : vector<1x64x32xf32> to vector<2x64x32xf32>
    %58 = arith.addf %54, %57 : vector<2x64x32xf32>
    %c0_35 = arith.constant 0 : index
    %c0_36 = arith.constant 0 : index
    %c0_37 = arith.constant 0 : index
    %59 = vector.load %arg14[%c0_35, %c0_36, %c0_37] : memref<2x8x32xf32, #tpu.memory_space<vmem>>, vector<2x8x32xf32>
    %60 = vector.shape_cast %59 : vector<2x8x32xf32> to vector<16x32xf32>
    %61 = arith.truncf %60 : vector<16x32xf32> to vector<16x32xbf16>
    %c0_38 = arith.constant 0 : index
    %c0_39 = arith.constant 0 : index
    %62 = vector.load %arg15[%c0_38, %c0_39] : memref<32x32xbf16, #tpu.memory_space<vmem>>, vector<32x32xbf16>
    %cst_40 = arith.constant dense<0.000000e+00> : vector<16x32xf32>
    %63 = tpu.matmul %61, %62, %cst_40 {dimension_numbers = #tpu.dot_dimension_numbers<[1], [0], [0], [1], [0, 0, 1, 1], [], []>} : vector<16x32xbf16>, vector<32x32xbf16>, vector<16x32xf32> -> vector<16x32xf32>
    %c0_41 = arith.constant 0 : index
    %c0_42 = arith.constant 0 : index
    %64 = vector.load %arg16[%c0_41, %c0_42] : memref<1x32xf32, #tpu.memory_space<vmem>>, vector<1x32xf32>
    %65 = vector.broadcast %64 : vector<1x32xf32> to vector<16x32xf32>
    %66 = arith.addf %63, %65 : vector<16x32xf32>
    %67 = vector.shape_cast %66 : vector<16x32xf32> to vector<2x8x32xf32>
    %68 = tpu.iota {dimensions = array<i32: 2>} : vector<1x1x32xi32>
    %c0_43 = arith.constant 0 : index
    %c0_44 = arith.constant 0 : index
    %69 = vector.load %arg17[%c0_43, %c0_44] : memref<32x192xbf16, #tpu.memory_space<vmem>>, vector<32x192xbf16>
    %cst_45 = arith.constant dense<0.000000e+00> : vector<2x192xf32>
    %70 = tpu.matmul %45, %69, %cst_45 {dimension_numbers = #tpu.dot_dimension_numbers<[1], [0], [0], [1], [0, 0, 1, 1], [], []>} : vector<2x32xbf16>, vector<32x192xbf16>, vector<2x192xf32> -> vector<2x192xf32>
    %c0_46 = arith.constant 0 : index
    %c0_47 = arith.constant 0 : index
    %71 = vector.load %arg18[%c0_46, %c0_47] : memref<1x192xf32, #tpu.memory_space<vmem>>, vector<1x192xf32>
    %72 = vector.broadcast %71 : vector<1x192xf32> to vector<2x192xf32>
    %73 = arith.addf %70, %72 : vector<2x192xf32>
    %c0_48 = arith.constant 0 : index
    %c0_49 = arith.constant 0 : index
    %74 = vector.load %arg19[%c0_48, %c0_49] : memref<32x192xbf16, #tpu.memory_space<vmem>>, vector<32x192xbf16>
    %cst_50 = arith.constant dense<0.000000e+00> : vector<2x192xf32>
    %75 = tpu.matmul %45, %74, %cst_50 {dimension_numbers = #tpu.dot_dimension_numbers<[1], [0], [0], [1], [0, 0, 1, 1], [], []>} : vector<2x32xbf16>, vector<32x192xbf16>, vector<2x192xf32> -> vector<2x192xf32>
    %c0_51 = arith.constant 0 : index
    %c0_52 = arith.constant 0 : index
    %76 = vector.load %arg20[%c0_51, %c0_52] : memref<1x192xf32, #tpu.memory_space<vmem>>, vector<1x192xf32>
    %77 = vector.broadcast %76 : vector<1x192xf32> to vector<2x192xf32>
    %78 = arith.addf %75, %77 : vector<2x192xf32>
    %79 = vector.extract_strided_slice %73 {offsets = [0, 0], sizes = [2, 32], strides = [1, 1]} : vector<2x192xf32> to vector<2x32xf32>
    %80 = vector.shape_cast %79 : vector<2x32xf32> to vector<2x1x32xf32>
    %81 = vector.extract_strided_slice %73 {offsets = [0, 32], sizes = [2, 32], strides = [1, 1]} : vector<2x192xf32> to vector<2x32xf32>
    %82 = vector.shape_cast %81 : vector<2x32xf32> to vector<2x1x32xf32>
    %83 = vector.extract_strided_slice %73 {offsets = [0, 64], sizes = [2, 32], strides = [1, 1]} : vector<2x192xf32> to vector<2x32xf32>
    %84 = vector.shape_cast %83 : vector<2x32xf32> to vector<2x1x32xf32>
    %85 = vector.extract_strided_slice %73 {offsets = [0, 96], sizes = [2, 32], strides = [1, 1]} : vector<2x192xf32> to vector<2x32xf32>
    %86 = vector.shape_cast %85 : vector<2x32xf32> to vector<2x1x32xf32>
    %87 = vector.extract_strided_slice %73 {offsets = [0, 128], sizes = [2, 32], strides = [1, 1]} : vector<2x192xf32> to vector<2x32xf32>
    %88 = vector.shape_cast %87 : vector<2x32xf32> to vector<2x1x32xf32>
    %89 = vector.extract_strided_slice %73 {offsets = [0, 160], sizes = [2, 32], strides = [1, 1]} : vector<2x192xf32> to vector<2x32xf32>
    %90 = vector.shape_cast %89 : vector<2x32xf32> to vector<2x1x32xf32>
    %cst_53 = arith.constant dense<0.000000e+00> : vector<2x64xf32>
    %91 = vector.multi_reduction <add>, %58, %cst_53 [2] : vector<2x64x32xf32> to vector<2x64xf32>
    %92 = vector.shape_cast %91 : vector<2x64xf32> to vector<2x64x1xf32>
    %cst_54 = arith.constant 3.200000e+01 : f32
    %93 = vector.broadcast %cst_54 : f32 to vector<2x64x1xf32>
    %94 = arith.divf %92, %93 : vector<2x64x1xf32>
    %95 = vector.broadcast %94 : vector<2x64x1xf32> to vector<2x64x32xf32>
    %96 = arith.subf %58, %95 : vector<2x64x32xf32>
    %97 = arith.mulf %96, %96 : vector<2x64x32xf32>
    %cst_55 = arith.constant dense<0.000000e+00> : vector<2x64xf32>
    %98 = vector.multi_reduction <add>, %97, %cst_55 [2] : vector<2x64x32xf32> to vector<2x64xf32>
    %99 = vector.shape_cast %98 : vector<2x64xf32> to vector<2x64x1xf32>
    %cst_56 = arith.constant 3.200000e+01 : f32
    %100 = vector.broadcast %cst_56 : f32 to vector<2x64x1xf32>
    %101 = arith.divf %99, %100 : vector<2x64x1xf32>
    %102 = vector.broadcast %94 : vector<2x64x1xf32> to vector<2x64x32xf32>
    %103 = arith.subf %58, %102 : vector<2x64x32xf32>
    %cst_57 = arith.constant 9.99999997E-7 : f32
    %104 = vector.broadcast %cst_57 : f32 to vector<2x64x1xf32>
    %105 = arith.addf %101, %104 : vector<2x64x1xf32>
    %106 = math.rsqrt %105 : vector<2x64x1xf32>
    %107 = vector.broadcast %106 : vector<2x64x1xf32> to vector<2x64x32xf32>
    %108 = arith.mulf %103, %107 : vector<2x64x32xf32>
    %cst_58 = arith.constant 1.000000e+00 : f32
    %109 = vector.broadcast %cst_58 : f32 to vector<2x1x32xf32>
    %110 = arith.addf %109, %82 : vector<2x1x32xf32>
    %111 = vector.broadcast %110 : vector<2x1x32xf32> to vector<2x64x32xf32>
    %112 = arith.mulf %108, %111 : vector<2x64x32xf32>
    %113 = vector.broadcast %80 : vector<2x1x32xf32> to vector<2x64x32xf32>
    %114 = arith.addf %112, %113 : vector<2x64x32xf32>
    %115 = vector.extract_strided_slice %78 {offsets = [0, 0], sizes = [2, 32], strides = [1, 1]} : vector<2x192xf32> to vector<2x32xf32>
    %116 = vector.shape_cast %115 : vector<2x32xf32> to vector<2x1x32xf32>
    %117 = vector.extract_strided_slice %78 {offsets = [0, 32], sizes = [2, 32], strides = [1, 1]} : vector<2x192xf32> to vector<2x32xf32>
    %118 = vector.shape_cast %117 : vector<2x32xf32> to vector<2x1x32xf32>
    %119 = vector.extract_strided_slice %78 {offsets = [0, 64], sizes = [2, 32], strides = [1, 1]} : vector<2x192xf32> to vector<2x32xf32>
    %120 = vector.shape_cast %119 : vector<2x32xf32> to vector<2x1x32xf32>
    %121 = vector.extract_strided_slice %78 {offsets = [0, 96], sizes = [2, 32], strides = [1, 1]} : vector<2x192xf32> to vector<2x32xf32>
    %122 = vector.shape_cast %121 : vector<2x32xf32> to vector<2x1x32xf32>
    %123 = vector.extract_strided_slice %78 {offsets = [0, 128], sizes = [2, 32], strides = [1, 1]} : vector<2x192xf32> to vector<2x32xf32>
    %124 = vector.shape_cast %123 : vector<2x32xf32> to vector<2x1x32xf32>
    %125 = vector.extract_strided_slice %78 {offsets = [0, 160], sizes = [2, 32], strides = [1, 1]} : vector<2x192xf32> to vector<2x32xf32>
    %126 = vector.shape_cast %125 : vector<2x32xf32> to vector<2x1x32xf32>
    %cst_59 = arith.constant dense<0.000000e+00> : vector<2x8xf32>
    %127 = vector.multi_reduction <add>, %67, %cst_59 [2] : vector<2x8x32xf32> to vector<2x8xf32>
    %128 = vector.shape_cast %127 : vector<2x8xf32> to vector<2x8x1xf32>
    %cst_60 = arith.constant 3.200000e+01 : f32
    %129 = vector.broadcast %cst_60 : f32 to vector<2x8x1xf32>
    %130 = arith.divf %128, %129 : vector<2x8x1xf32>
    %131 = vector.broadcast %130 : vector<2x8x1xf32> to vector<2x8x32xf32>
    %132 = arith.subf %67, %131 : vector<2x8x32xf32>
    %133 = arith.mulf %132, %132 : vector<2x8x32xf32>
    %cst_61 = arith.constant dense<0.000000e+00> : vector<2x8xf32>
    %134 = vector.multi_reduction <add>, %133, %cst_61 [2] : vector<2x8x32xf32> to vector<2x8xf32>
    %135 = vector.shape_cast %134 : vector<2x8xf32> to vector<2x8x1xf32>
    %cst_62 = arith.constant 3.200000e+01 : f32
    %136 = vector.broadcast %cst_62 : f32 to vector<2x8x1xf32>
    %137 = arith.divf %135, %136 : vector<2x8x1xf32>
    %138 = vector.broadcast %130 : vector<2x8x1xf32> to vector<2x8x32xf32>
    %139 = arith.subf %67, %138 : vector<2x8x32xf32>
    %cst_63 = arith.constant 9.99999997E-7 : f32
    %140 = vector.broadcast %cst_63 : f32 to vector<2x8x1xf32>
    %141 = arith.addf %137, %140 : vector<2x8x1xf32>
    %142 = math.rsqrt %141 : vector<2x8x1xf32>
    %143 = vector.broadcast %142 : vector<2x8x1xf32> to vector<2x8x32xf32>
    %144 = arith.mulf %139, %143 : vector<2x8x32xf32>
    %cst_64 = arith.constant 1.000000e+00 : f32
    %145 = vector.broadcast %cst_64 : f32 to vector<2x1x32xf32>
    %146 = arith.addf %145, %118 : vector<2x1x32xf32>
    %147 = vector.broadcast %146 : vector<2x1x32xf32> to vector<2x8x32xf32>
    %148 = arith.mulf %144, %147 : vector<2x8x32xf32>
    %149 = vector.broadcast %116 : vector<2x1x32xf32> to vector<2x8x32xf32>
    %150 = arith.addf %148, %149 : vector<2x8x32xf32>
    %151 = vector.shape_cast %114 : vector<2x64x32xf32> to vector<128x32xf32>
    %152 = arith.truncf %151 : vector<128x32xf32> to vector<128x32xbf16>
    %c0_65 = arith.constant 0 : index
    %c0_66 = arith.constant 0 : index
    %153 = vector.load %arg21[%c0_65, %c0_66] : memref<32x96xbf16, #tpu.memory_space<vmem>>, vector<32x96xbf16>
    %cst_67 = arith.constant dense<0.000000e+00> : vector<128x96xf32>
    %154 = tpu.matmul %152, %153, %cst_67 {dimension_numbers = #tpu.dot_dimension_numbers<[1], [0], [0], [1], [0, 0, 1, 1], [], []>} : vector<128x32xbf16>, vector<32x96xbf16>, vector<128x96xf32> -> vector<128x96xf32>
    %c0_68 = arith.constant 0 : index
    %c0_69 = arith.constant 0 : index
    %155 = vector.load %arg22[%c0_68, %c0_69] : memref<1x96xf32, #tpu.memory_space<vmem>>, vector<1x96xf32>
    %156 = vector.broadcast %155 : vector<1x96xf32> to vector<128x96xf32>
    %157 = arith.addf %154, %156 : vector<128x96xf32>
    %158 = vector.shape_cast %150 : vector<2x8x32xf32> to vector<16x32xf32>
    %159 = arith.truncf %158 : vector<16x32xf32> to vector<16x32xbf16>
    %c0_70 = arith.constant 0 : index
    %c0_71 = arith.constant 0 : index
    %160 = vector.load %arg23[%c0_70, %c0_71] : memref<32x96xbf16, #tpu.memory_space<vmem>>, vector<32x96xbf16>
    %cst_72 = arith.constant dense<0.000000e+00> : vector<16x96xf32>
    %161 = tpu.matmul %159, %160, %cst_72 {dimension_numbers = #tpu.dot_dimension_numbers<[1], [0], [0], [1], [0, 0, 1, 1], [], []>} : vector<16x32xbf16>, vector<32x96xbf16>, vector<16x96xf32> -> vector<16x96xf32>
    %c0_73 = arith.constant 0 : index
    %c0_74 = arith.constant 0 : index
    %162 = vector.load %arg24[%c0_73, %c0_74] : memref<1x96xf32, #tpu.memory_space<vmem>>, vector<1x96xf32>
    %163 = vector.broadcast %162 : vector<1x96xf32> to vector<16x96xf32>
    %164 = arith.addf %161, %163 : vector<16x96xf32>
    %165 = vector.shape_cast %157 : vector<128x96xf32> to vector<2x64x96xf32>
    %166 = vector.shape_cast %164 : vector<16x96xf32> to vector<2x8x96xf32>
    %167 = tpu.concatenate %165, %166 in 1 : vector<2x64x96xf32>, vector<2x8x96xf32> -> vector<2x72x96xf32>
    %168 = arith.truncf %167 : vector<2x72x96xf32> to vector<2x72x96xbf16>
    %169 = vector.extract_strided_slice %168 {offsets = [0, 0, 64], sizes = [2, 72, 32], strides = [1, 1, 1]} : vector<2x72x96xbf16> to vector<2x72x32xbf16>
    %cst_75 = arith.constant 0.000000e+00 : f32
    %170 = vector.broadcast %cst_75 : f32 to vector<2x72x32xf32>
    %171 = vector.extract_strided_slice %168 {offsets = [0, 0, 0], sizes = [2, 72, 16], strides = [1, 1, 1]} : vector<2x72x96xbf16> to vector<2x72x16xbf16>
    %172 = vector.extract_strided_slice %168 {offsets = [0, 0, 32], sizes = [2, 72, 16], strides = [1, 1, 1]} : vector<2x72x96xbf16> to vector<2x72x16xbf16>
    %c0_i32 = arith.constant 0 : i32
    %173 = vector.broadcast %c0_i32 : i32 to vector<1x1x32xi32>
    %174 = arith.cmpi sge, %68, %173 : vector<1x1x32xi32>
    %c16_i32 = arith.constant 16 : i32
    %175 = vector.broadcast %c16_i32 : i32 to vector<1x1x32xi32>
    %176 = arith.cmpi slt, %68, %175 : vector<1x1x32xi32>
    %177 = arith.andi %174, %176 : vector<1x1x32xi1>
    %cst_76 = arith.constant 0.000000e+00 : bf16
    %178 = vector.broadcast %cst_76 : bf16 to vector<2x72x32xbf16>
    %179 = vector.shape_cast %177 : vector<1x1x32xi1> to vector<1x1x32xi1>
    %180 = vector.broadcast %179 : vector<1x1x32xi1> to vector<2x72x32xi1>
    %181 = arith.select %180, %169, %178 : vector<2x72x32xi1>, vector<2x72x32xbf16>
    %cst_77 = arith.constant dense<0.000000e+00> : vector<2x72x72xf32>
    %182 = tpu.matmul %171, %172, %cst_77 {dimension_numbers = #tpu.dot_dimension_numbers<[2], [2], [1], [1], [0, 0, 0, 1, 1, 1], [0], [0]>} : vector<2x72x16xbf16>, vector<2x72x16xbf16>, vector<2x72x72xf32> -> vector<2x72x72xf32>
    %cst_78 = arith.constant dense<0xFF800000> : vector<2x72xf32>
    %183 = vector.multi_reduction <maximumf>, %182, %cst_78 [2] : vector<2x72x72xf32> to vector<2x72xf32>
    %184 = vector.shape_cast %183 : vector<2x72xf32> to vector<2x72x1xf32>
    %185 = vector.broadcast %184 : vector<2x72x1xf32> to vector<2x72x72xf32>
    %186 = arith.subf %182, %185 : vector<2x72x72xf32>
    %187 = math.exp %186 : vector<2x72x72xf32>
    %cst_79 = arith.constant dense<0.000000e+00> : vector<2x72xf32>
    %188 = vector.multi_reduction <add>, %187, %cst_79 [2] : vector<2x72x72xf32> to vector<2x72xf32>
    %189 = vector.shape_cast %188 : vector<2x72xf32> to vector<2x72x1xf32>
    %190 = arith.truncf %187 : vector<2x72x72xf32> to vector<2x72x72xbf16>
    %cst_80 = arith.constant dense<0.000000e+00> : vector<2x72x32xf32>
    %191 = tpu.matmul %190, %181, %cst_80 {dimension_numbers = #tpu.dot_dimension_numbers<[2], [1], [1], [2], [0, 0, 0, 1, 1, 2], [0], [0]>} : vector<2x72x72xbf16>, vector<2x72x32xbf16>, vector<2x72x32xf32> -> vector<2x72x32xf32>
    %192 = tpu.reciprocal %189 {approx = true} : vector<2x72x1xf32> -> vector<2x72x1xf32>
    %193 = vector.broadcast %192 : vector<2x72x1xf32> to vector<2x72x32xf32>
    %194 = arith.mulf %191, %193 : vector<2x72x32xf32>
    %195 = arith.addf %170, %194 : vector<2x72x32xf32>
    %196 = vector.extract_strided_slice %168 {offsets = [0, 0, 16], sizes = [2, 72, 16], strides = [1, 1, 1]} : vector<2x72x96xbf16> to vector<2x72x16xbf16>
    %197 = vector.extract_strided_slice %168 {offsets = [0, 0, 48], sizes = [2, 72, 16], strides = [1, 1, 1]} : vector<2x72x96xbf16> to vector<2x72x16xbf16>
    %c16_i32_81 = arith.constant 16 : i32
    %198 = vector.broadcast %c16_i32_81 : i32 to vector<1x1x32xi32>
    %199 = arith.cmpi sge, %68, %198 : vector<1x1x32xi32>
    %c32_i32 = arith.constant 32 : i32
    %200 = vector.broadcast %c32_i32 : i32 to vector<1x1x32xi32>
    %201 = arith.cmpi slt, %68, %200 : vector<1x1x32xi32>
    %202 = arith.andi %199, %201 : vector<1x1x32xi1>
    %cst_82 = arith.constant 0.000000e+00 : bf16
    %203 = vector.broadcast %cst_82 : bf16 to vector<2x72x32xbf16>
    %204 = vector.shape_cast %202 : vector<1x1x32xi1> to vector<1x1x32xi1>
    %205 = vector.broadcast %204 : vector<1x1x32xi1> to vector<2x72x32xi1>
    %206 = arith.select %205, %169, %203 : vector<2x72x32xi1>, vector<2x72x32xbf16>
    %cst_83 = arith.constant dense<0.000000e+00> : vector<2x72x72xf32>
    %207 = tpu.matmul %196, %197, %cst_83 {dimension_numbers = #tpu.dot_dimension_numbers<[2], [2], [1], [1], [0, 0, 0, 1, 1, 1], [0], [0]>} : vector<2x72x16xbf16>, vector<2x72x16xbf16>, vector<2x72x72xf32> -> vector<2x72x72xf32>
    %cst_84 = arith.constant dense<0xFF800000> : vector<2x72xf32>
    %208 = vector.multi_reduction <maximumf>, %207, %cst_84 [2] : vector<2x72x72xf32> to vector<2x72xf32>
    %209 = vector.shape_cast %208 : vector<2x72xf32> to vector<2x72x1xf32>
    %210 = vector.broadcast %209 : vector<2x72x1xf32> to vector<2x72x72xf32>
    %211 = arith.subf %207, %210 : vector<2x72x72xf32>
    %212 = math.exp %211 : vector<2x72x72xf32>
    %cst_85 = arith.constant dense<0.000000e+00> : vector<2x72xf32>
    %213 = vector.multi_reduction <add>, %212, %cst_85 [2] : vector<2x72x72xf32> to vector<2x72xf32>
    %214 = vector.shape_cast %213 : vector<2x72xf32> to vector<2x72x1xf32>
    %215 = arith.truncf %212 : vector<2x72x72xf32> to vector<2x72x72xbf16>
    %cst_86 = arith.constant dense<0.000000e+00> : vector<2x72x32xf32>
    %216 = tpu.matmul %215, %206, %cst_86 {dimension_numbers = #tpu.dot_dimension_numbers<[2], [1], [1], [2], [0, 0, 0, 1, 1, 2], [0], [0]>} : vector<2x72x72xbf16>, vector<2x72x32xbf16>, vector<2x72x32xf32> -> vector<2x72x32xf32>
    %217 = tpu.reciprocal %214 {approx = true} : vector<2x72x1xf32> -> vector<2x72x1xf32>
    %218 = vector.broadcast %217 : vector<2x72x1xf32> to vector<2x72x32xf32>
    %219 = arith.mulf %216, %218 : vector<2x72x32xf32>
    %220 = arith.addf %195, %219 : vector<2x72x32xf32>
    %221 = vector.extract_strided_slice %220 {offsets = [0, 0, 0], sizes = [2, 64, 32], strides = [1, 1, 1]} : vector<2x72x32xf32> to vector<2x64x32xf32>
    %222 = vector.shape_cast %221 : vector<2x64x32xf32> to vector<128x32xf32>
    %223 = arith.truncf %222 : vector<128x32xf32> to vector<128x32xbf16>
    %c0_87 = arith.constant 0 : index
    %c0_88 = arith.constant 0 : index
    %224 = vector.load %arg25[%c0_87, %c0_88] : memref<32x32xbf16, #tpu.memory_space<vmem>>, vector<32x32xbf16>
    %cst_89 = arith.constant dense<0.000000e+00> : vector<128x32xf32>
    %225 = tpu.matmul %223, %224, %cst_89 {dimension_numbers = #tpu.dot_dimension_numbers<[1], [0], [0], [1], [0, 0, 1, 1], [], []>} : vector<128x32xbf16>, vector<32x32xbf16>, vector<128x32xf32> -> vector<128x32xf32>
    %c0_90 = arith.constant 0 : index
    %c0_91 = arith.constant 0 : index
    %226 = vector.load %arg26[%c0_90, %c0_91] : memref<1x32xf32, #tpu.memory_space<vmem>>, vector<1x32xf32>
    %227 = vector.broadcast %226 : vector<1x32xf32> to vector<128x32xf32>
    %228 = arith.addf %225, %227 : vector<128x32xf32>
    %229 = vector.shape_cast %228 : vector<128x32xf32> to vector<2x64x32xf32>
    %230 = vector.broadcast %84 : vector<2x1x32xf32> to vector<2x64x32xf32>
    %231 = arith.mulf %230, %229 : vector<2x64x32xf32>
    %232 = arith.addf %58, %231 : vector<2x64x32xf32>
    %cst_92 = arith.constant dense<0.000000e+00> : vector<2x64xf32>
    %233 = vector.multi_reduction <add>, %232, %cst_92 [2] : vector<2x64x32xf32> to vector<2x64xf32>
    %234 = vector.shape_cast %233 : vector<2x64xf32> to vector<2x64x1xf32>
    %cst_93 = arith.constant 3.200000e+01 : f32
    %235 = vector.broadcast %cst_93 : f32 to vector<2x64x1xf32>
    %236 = arith.divf %234, %235 : vector<2x64x1xf32>
    %237 = vector.broadcast %236 : vector<2x64x1xf32> to vector<2x64x32xf32>
    %238 = arith.subf %232, %237 : vector<2x64x32xf32>
    %239 = arith.mulf %238, %238 : vector<2x64x32xf32>
    %cst_94 = arith.constant dense<0.000000e+00> : vector<2x64xf32>
    %240 = vector.multi_reduction <add>, %239, %cst_94 [2] : vector<2x64x32xf32> to vector<2x64xf32>
    %241 = vector.shape_cast %240 : vector<2x64xf32> to vector<2x64x1xf32>
    %cst_95 = arith.constant 3.200000e+01 : f32
    %242 = vector.broadcast %cst_95 : f32 to vector<2x64x1xf32>
    %243 = arith.divf %241, %242 : vector<2x64x1xf32>
    %244 = vector.broadcast %236 : vector<2x64x1xf32> to vector<2x64x32xf32>
    %245 = arith.subf %232, %244 : vector<2x64x32xf32>
    %cst_96 = arith.constant 9.99999997E-7 : f32
    %246 = vector.broadcast %cst_96 : f32 to vector<2x64x1xf32>
    %247 = arith.addf %243, %246 : vector<2x64x1xf32>
    %248 = math.rsqrt %247 : vector<2x64x1xf32>
    %249 = vector.broadcast %248 : vector<2x64x1xf32> to vector<2x64x32xf32>
    %250 = arith.mulf %245, %249 : vector<2x64x32xf32>
    %cst_97 = arith.constant 1.000000e+00 : f32
    %251 = vector.broadcast %cst_97 : f32 to vector<2x1x32xf32>
    %252 = arith.addf %251, %88 : vector<2x1x32xf32>
    %253 = vector.broadcast %252 : vector<2x1x32xf32> to vector<2x64x32xf32>
    %254 = arith.mulf %250, %253 : vector<2x64x32xf32>
    %255 = vector.broadcast %86 : vector<2x1x32xf32> to vector<2x64x32xf32>
    %256 = arith.addf %254, %255 : vector<2x64x32xf32>
    %257 = vector.shape_cast %256 : vector<2x64x32xf32> to vector<128x32xf32>
    %258 = arith.truncf %257 : vector<128x32xf32> to vector<128x32xbf16>
    %c0_98 = arith.constant 0 : index
    %c0_99 = arith.constant 0 : index
    %259 = vector.load %arg29[%c0_98, %c0_99] : memref<32x128xbf16, #tpu.memory_space<vmem>>, vector<32x128xbf16>
    %cst_100 = arith.constant dense<0.000000e+00> : vector<128x128xf32>
    %260 = tpu.matmul %258, %259, %cst_100 {dimension_numbers = #tpu.dot_dimension_numbers<[1], [0], [0], [1], [0, 0, 1, 1], [], []>} : vector<128x32xbf16>, vector<32x128xbf16>, vector<128x128xf32> -> vector<128x128xf32>
    %c0_101 = arith.constant 0 : index
    %c0_102 = arith.constant 0 : index
    %261 = vector.load %arg30[%c0_101, %c0_102] : memref<1x128xf32, #tpu.memory_space<vmem>>, vector<1x128xf32>
    %262 = vector.broadcast %261 : vector<1x128xf32> to vector<128x128xf32>
    %263 = arith.addf %260, %262 : vector<128x128xf32>
    %cst_103 = arith.constant 5.000000e-01 : f32
    %264 = vector.broadcast %cst_103 : f32 to vector<128x128xf32>
    %265 = arith.mulf %264, %263 : vector<128x128xf32>
    %cst_104 = arith.constant 4.471500e-02 : f32
    %266 = vector.broadcast %cst_104 : f32 to vector<128x128xf32>
    %267 = arith.mulf %266, %263 : vector<128x128xf32>
    %268 = arith.mulf %267, %263 : vector<128x128xf32>
    %269 = arith.mulf %268, %263 : vector<128x128xf32>
    %270 = arith.addf %263, %269 : vector<128x128xf32>
    %cst_105 = arith.constant 0.797884583 : f32
    %271 = vector.broadcast %cst_105 : f32 to vector<128x128xf32>
    %272 = arith.mulf %271, %270 : vector<128x128xf32>
    %273 = math.tanh %272 : vector<128x128xf32>
    %cst_106 = arith.constant 1.000000e+00 : f32
    %274 = vector.broadcast %cst_106 : f32 to vector<128x128xf32>
    %275 = arith.addf %274, %273 : vector<128x128xf32>
    %276 = arith.mulf %265, %275 : vector<128x128xf32>
    %277 = arith.truncf %276 : vector<128x128xf32> to vector<128x128xbf16>
    %c0_107 = arith.constant 0 : index
    %c0_108 = arith.constant 0 : index
    %278 = vector.load %arg31[%c0_107, %c0_108] : memref<128x32xbf16, #tpu.memory_space<vmem>>, vector<128x32xbf16>
    %cst_109 = arith.constant dense<0.000000e+00> : vector<128x32xf32>
    %279 = tpu.matmul %277, %278, %cst_109 {dimension_numbers = #tpu.dot_dimension_numbers<[1], [0], [0], [1], [0, 0, 1, 1], [], []>} : vector<128x128xbf16>, vector<128x32xbf16>, vector<128x32xf32> -> vector<128x32xf32>
    %c0_110 = arith.constant 0 : index
    %c0_111 = arith.constant 0 : index
    %280 = vector.load %arg32[%c0_110, %c0_111] : memref<1x32xf32, #tpu.memory_space<vmem>>, vector<1x32xf32>
    %281 = vector.broadcast %280 : vector<1x32xf32> to vector<128x32xf32>
    %282 = arith.addf %279, %281 : vector<128x32xf32>
    %283 = vector.shape_cast %282 : vector<128x32xf32> to vector<2x64x32xf32>
    %284 = vector.broadcast %90 : vector<2x1x32xf32> to vector<2x64x32xf32>
    %285 = arith.mulf %284, %283 : vector<2x64x32xf32>
    %286 = arith.addf %232, %285 : vector<2x64x32xf32>
    %287 = vector.extract_strided_slice %220 {offsets = [0, 64, 0], sizes = [2, 8, 32], strides = [1, 1, 1]} : vector<2x72x32xf32> to vector<2x8x32xf32>
    %288 = vector.shape_cast %287 : vector<2x8x32xf32> to vector<16x32xf32>
    %289 = arith.truncf %288 : vector<16x32xf32> to vector<16x32xbf16>
    %c0_112 = arith.constant 0 : index
    %c0_113 = arith.constant 0 : index
    %290 = vector.load %arg27[%c0_112, %c0_113] : memref<32x32xbf16, #tpu.memory_space<vmem>>, vector<32x32xbf16>
    %cst_114 = arith.constant dense<0.000000e+00> : vector<16x32xf32>
    %291 = tpu.matmul %289, %290, %cst_114 {dimension_numbers = #tpu.dot_dimension_numbers<[1], [0], [0], [1], [0, 0, 1, 1], [], []>} : vector<16x32xbf16>, vector<32x32xbf16>, vector<16x32xf32> -> vector<16x32xf32>
    %c0_115 = arith.constant 0 : index
    %c0_116 = arith.constant 0 : index
    %292 = vector.load %arg28[%c0_115, %c0_116] : memref<1x32xf32, #tpu.memory_space<vmem>>, vector<1x32xf32>
    %293 = vector.broadcast %292 : vector<1x32xf32> to vector<16x32xf32>
    %294 = arith.addf %291, %293 : vector<16x32xf32>
    %295 = vector.shape_cast %294 : vector<16x32xf32> to vector<2x8x32xf32>
    %296 = vector.broadcast %120 : vector<2x1x32xf32> to vector<2x8x32xf32>
    %297 = arith.mulf %296, %295 : vector<2x8x32xf32>
    %298 = arith.addf %67, %297 : vector<2x8x32xf32>
    %cst_117 = arith.constant dense<0.000000e+00> : vector<2x8xf32>
    %299 = vector.multi_reduction <add>, %298, %cst_117 [2] : vector<2x8x32xf32> to vector<2x8xf32>
    %300 = vector.shape_cast %299 : vector<2x8xf32> to vector<2x8x1xf32>
    %cst_118 = arith.constant 3.200000e+01 : f32
    %301 = vector.broadcast %cst_118 : f32 to vector<2x8x1xf32>
    %302 = arith.divf %300, %301 : vector<2x8x1xf32>
    %303 = vector.broadcast %302 : vector<2x8x1xf32> to vector<2x8x32xf32>
    %304 = arith.subf %298, %303 : vector<2x8x32xf32>
    %305 = arith.mulf %304, %304 : vector<2x8x32xf32>
    %cst_119 = arith.constant dense<0.000000e+00> : vector<2x8xf32>
    %306 = vector.multi_reduction <add>, %305, %cst_119 [2] : vector<2x8x32xf32> to vector<2x8xf32>
    %307 = vector.shape_cast %306 : vector<2x8xf32> to vector<2x8x1xf32>
    %cst_120 = arith.constant 3.200000e+01 : f32
    %308 = vector.broadcast %cst_120 : f32 to vector<2x8x1xf32>
    %309 = arith.divf %307, %308 : vector<2x8x1xf32>
    %310 = vector.broadcast %302 : vector<2x8x1xf32> to vector<2x8x32xf32>
    %311 = arith.subf %298, %310 : vector<2x8x32xf32>
    %cst_121 = arith.constant 9.99999997E-7 : f32
    %312 = vector.broadcast %cst_121 : f32 to vector<2x8x1xf32>
    %313 = arith.addf %309, %312 : vector<2x8x1xf32>
    %314 = math.rsqrt %313 : vector<2x8x1xf32>
    %315 = vector.broadcast %314 : vector<2x8x1xf32> to vector<2x8x32xf32>
    %316 = arith.mulf %311, %315 : vector<2x8x32xf32>
    %cst_122 = arith.constant 1.000000e+00 : f32
    %317 = vector.broadcast %cst_122 : f32 to vector<2x1x32xf32>
    %318 = arith.addf %317, %124 : vector<2x1x32xf32>
    %319 = vector.broadcast %318 : vector<2x1x32xf32> to vector<2x8x32xf32>
    %320 = arith.mulf %316, %319 : vector<2x8x32xf32>
    %321 = vector.broadcast %122 : vector<2x1x32xf32> to vector<2x8x32xf32>
    %322 = arith.addf %320, %321 : vector<2x8x32xf32>
    %323 = vector.shape_cast %322 : vector<2x8x32xf32> to vector<16x32xf32>
    %324 = arith.truncf %323 : vector<16x32xf32> to vector<16x32xbf16>
    %c0_123 = arith.constant 0 : index
    %c0_124 = arith.constant 0 : index
    %325 = vector.load %arg33[%c0_123, %c0_124] : memref<32x128xbf16, #tpu.memory_space<vmem>>, vector<32x128xbf16>
    %cst_125 = arith.constant dense<0.000000e+00> : vector<16x128xf32>
    %326 = tpu.matmul %324, %325, %cst_125 {dimension_numbers = #tpu.dot_dimension_numbers<[1], [0], [0], [1], [0, 0, 1, 1], [], []>} : vector<16x32xbf16>, vector<32x128xbf16>, vector<16x128xf32> -> vector<16x128xf32>
    %c0_126 = arith.constant 0 : index
    %c0_127 = arith.constant 0 : index
    %327 = vector.load %arg34[%c0_126, %c0_127] : memref<1x128xf32, #tpu.memory_space<vmem>>, vector<1x128xf32>
    %328 = vector.broadcast %327 : vector<1x128xf32> to vector<16x128xf32>
    %329 = arith.addf %326, %328 : vector<16x128xf32>
    %cst_128 = arith.constant 5.000000e-01 : f32
    %330 = vector.broadcast %cst_128 : f32 to vector<16x128xf32>
    %331 = arith.mulf %330, %329 : vector<16x128xf32>
    %cst_129 = arith.constant 4.471500e-02 : f32
    %332 = vector.broadcast %cst_129 : f32 to vector<16x128xf32>
    %333 = arith.mulf %332, %329 : vector<16x128xf32>
    %334 = arith.mulf %333, %329 : vector<16x128xf32>
    %335 = arith.mulf %334, %329 : vector<16x128xf32>
    %336 = arith.addf %329, %335 : vector<16x128xf32>
    %cst_130 = arith.constant 0.797884583 : f32
    %337 = vector.broadcast %cst_130 : f32 to vector<16x128xf32>
    %338 = arith.mulf %337, %336 : vector<16x128xf32>
    %339 = math.tanh %338 : vector<16x128xf32>
    %cst_131 = arith.constant 1.000000e+00 : f32
    %340 = vector.broadcast %cst_131 : f32 to vector<16x128xf32>
    %341 = arith.addf %340, %339 : vector<16x128xf32>
    %342 = arith.mulf %331, %341 : vector<16x128xf32>
    %343 = arith.truncf %342 : vector<16x128xf32> to vector<16x128xbf16>
    %c0_132 = arith.constant 0 : index
    %c0_133 = arith.constant 0 : index
    %344 = vector.load %arg35[%c0_132, %c0_133] : memref<128x32xbf16, #tpu.memory_space<vmem>>, vector<128x32xbf16>
    %cst_134 = arith.constant dense<0.000000e+00> : vector<16x32xf32>
    %345 = tpu.matmul %343, %344, %cst_134 {dimension_numbers = #tpu.dot_dimension_numbers<[1], [0], [0], [1], [0, 0, 1, 1], [], []>} : vector<16x128xbf16>, vector<128x32xbf16>, vector<16x32xf32> -> vector<16x32xf32>
    %c0_135 = arith.constant 0 : index
    %c0_136 = arith.constant 0 : index
    %346 = vector.load %arg36[%c0_135, %c0_136] : memref<1x32xf32, #tpu.memory_space<vmem>>, vector<1x32xf32>
    %347 = vector.broadcast %346 : vector<1x32xf32> to vector<16x32xf32>
    %348 = arith.addf %345, %347 : vector<16x32xf32>
    %349 = vector.shape_cast %348 : vector<16x32xf32> to vector<2x8x32xf32>
    %350 = vector.broadcast %126 : vector<2x1x32xf32> to vector<2x8x32xf32>
    %351 = arith.mulf %350, %349 : vector<2x8x32xf32>
    %352 = arith.addf %298, %351 : vector<2x8x32xf32>
    %c0_137 = arith.constant 0 : index
    %c0_138 = arith.constant 0 : index
    %353 = vector.load %arg37[%c0_137, %c0_138] : memref<32x192xbf16, #tpu.memory_space<vmem>>, vector<32x192xbf16>
    %cst_139 = arith.constant dense<0.000000e+00> : vector<2x192xf32>
    %354 = tpu.matmul %45, %353, %cst_139 {dimension_numbers = #tpu.dot_dimension_numbers<[1], [0], [0], [1], [0, 0, 1, 1], [], []>} : vector<2x32xbf16>, vector<32x192xbf16>, vector<2x192xf32> -> vector<2x192xf32>
    %c0_140 = arith.constant 0 : index
    %c0_141 = arith.constant 0 : index
    %355 = vector.load %arg38[%c0_140, %c0_141] : memref<1x192xf32, #tpu.memory_space<vmem>>, vector<1x192xf32>
    %356 = vector.broadcast %355 : vector<1x192xf32> to vector<2x192xf32>
    %357 = arith.addf %354, %356 : vector<2x192xf32>
    %c0_142 = arith.constant 0 : index
    %c0_143 = arith.constant 0 : index
    %358 = vector.load %arg39[%c0_142, %c0_143] : memref<32x64xbf16, #tpu.memory_space<vmem>>, vector<32x64xbf16>
    %cst_144 = arith.constant dense<0.000000e+00> : vector<2x64xf32>
    %359 = tpu.matmul %45, %358, %cst_144 {dimension_numbers = #tpu.dot_dimension_numbers<[1], [0], [0], [1], [0, 0, 1, 1], [], []>} : vector<2x32xbf16>, vector<32x64xbf16>, vector<2x64xf32> -> vector<2x64xf32>
    %c0_145 = arith.constant 0 : index
    %c0_146 = arith.constant 0 : index
    %360 = vector.load %arg40[%c0_145, %c0_146] : memref<1x64xf32, #tpu.memory_space<vmem>>, vector<1x64xf32>
    %361 = vector.broadcast %360 : vector<1x64xf32> to vector<2x64xf32>
    %362 = arith.addf %359, %361 : vector<2x64xf32>
    %363 = vector.extract_strided_slice %357 {offsets = [0, 0], sizes = [2, 32], strides = [1, 1]} : vector<2x192xf32> to vector<2x32xf32>
    %364 = vector.shape_cast %363 : vector<2x32xf32> to vector<2x1x32xf32>
    %365 = vector.extract_strided_slice %357 {offsets = [0, 32], sizes = [2, 32], strides = [1, 1]} : vector<2x192xf32> to vector<2x32xf32>
    %366 = vector.shape_cast %365 : vector<2x32xf32> to vector<2x1x32xf32>
    %367 = vector.extract_strided_slice %357 {offsets = [0, 64], sizes = [2, 32], strides = [1, 1]} : vector<2x192xf32> to vector<2x32xf32>
    %368 = vector.shape_cast %367 : vector<2x32xf32> to vector<2x1x32xf32>
    %369 = vector.extract_strided_slice %357 {offsets = [0, 96], sizes = [2, 32], strides = [1, 1]} : vector<2x192xf32> to vector<2x32xf32>
    %370 = vector.shape_cast %369 : vector<2x32xf32> to vector<2x1x32xf32>
    %371 = vector.extract_strided_slice %357 {offsets = [0, 128], sizes = [2, 32], strides = [1, 1]} : vector<2x192xf32> to vector<2x32xf32>
    %372 = vector.shape_cast %371 : vector<2x32xf32> to vector<2x1x32xf32>
    %373 = vector.extract_strided_slice %357 {offsets = [0, 160], sizes = [2, 32], strides = [1, 1]} : vector<2x192xf32> to vector<2x32xf32>
    %374 = vector.shape_cast %373 : vector<2x32xf32> to vector<2x1x32xf32>
    %cst_147 = arith.constant dense<0.000000e+00> : vector<2x64xf32>
    %375 = vector.multi_reduction <add>, %286, %cst_147 [2] : vector<2x64x32xf32> to vector<2x64xf32>
    %376 = vector.shape_cast %375 : vector<2x64xf32> to vector<2x64x1xf32>
    %cst_148 = arith.constant 3.200000e+01 : f32
    %377 = vector.broadcast %cst_148 : f32 to vector<2x64x1xf32>
    %378 = arith.divf %376, %377 : vector<2x64x1xf32>
    %379 = vector.broadcast %378 : vector<2x64x1xf32> to vector<2x64x32xf32>
    %380 = arith.subf %286, %379 : vector<2x64x32xf32>
    %381 = arith.mulf %380, %380 : vector<2x64x32xf32>
    %cst_149 = arith.constant dense<0.000000e+00> : vector<2x64xf32>
    %382 = vector.multi_reduction <add>, %381, %cst_149 [2] : vector<2x64x32xf32> to vector<2x64xf32>
    %383 = vector.shape_cast %382 : vector<2x64xf32> to vector<2x64x1xf32>
    %cst_150 = arith.constant 3.200000e+01 : f32
    %384 = vector.broadcast %cst_150 : f32 to vector<2x64x1xf32>
    %385 = arith.divf %383, %384 : vector<2x64x1xf32>
    %386 = vector.broadcast %378 : vector<2x64x1xf32> to vector<2x64x32xf32>
    %387 = arith.subf %286, %386 : vector<2x64x32xf32>
    %cst_151 = arith.constant 9.99999997E-7 : f32
    %388 = vector.broadcast %cst_151 : f32 to vector<2x64x1xf32>
    %389 = arith.addf %385, %388 : vector<2x64x1xf32>
    %390 = math.rsqrt %389 : vector<2x64x1xf32>
    %391 = vector.broadcast %390 : vector<2x64x1xf32> to vector<2x64x32xf32>
    %392 = arith.mulf %387, %391 : vector<2x64x32xf32>
    %cst_152 = arith.constant 1.000000e+00 : f32
    %393 = vector.broadcast %cst_152 : f32 to vector<2x1x32xf32>
    %394 = arith.addf %393, %366 : vector<2x1x32xf32>
    %395 = vector.broadcast %394 : vector<2x1x32xf32> to vector<2x64x32xf32>
    %396 = arith.mulf %392, %395 : vector<2x64x32xf32>
    %397 = vector.broadcast %364 : vector<2x1x32xf32> to vector<2x64x32xf32>
    %398 = arith.addf %396, %397 : vector<2x64x32xf32>
    %399 = vector.extract_strided_slice %362 {offsets = [0, 0], sizes = [2, 32], strides = [1, 1]} : vector<2x64xf32> to vector<2x32xf32>
    %400 = vector.shape_cast %399 : vector<2x32xf32> to vector<2x1x32xf32>
    %401 = vector.extract_strided_slice %362 {offsets = [0, 32], sizes = [2, 32], strides = [1, 1]} : vector<2x64xf32> to vector<2x32xf32>
    %402 = vector.shape_cast %401 : vector<2x32xf32> to vector<2x1x32xf32>
    %cst_153 = arith.constant dense<0.000000e+00> : vector<2x8xf32>
    %403 = vector.multi_reduction <add>, %352, %cst_153 [2] : vector<2x8x32xf32> to vector<2x8xf32>
    %404 = vector.shape_cast %403 : vector<2x8xf32> to vector<2x8x1xf32>
    %cst_154 = arith.constant 3.200000e+01 : f32
    %405 = vector.broadcast %cst_154 : f32 to vector<2x8x1xf32>
    %406 = arith.divf %404, %405 : vector<2x8x1xf32>
    %407 = vector.broadcast %406 : vector<2x8x1xf32> to vector<2x8x32xf32>
    %408 = arith.subf %352, %407 : vector<2x8x32xf32>
    %409 = arith.mulf %408, %408 : vector<2x8x32xf32>
    %cst_155 = arith.constant dense<0.000000e+00> : vector<2x8xf32>
    %410 = vector.multi_reduction <add>, %409, %cst_155 [2] : vector<2x8x32xf32> to vector<2x8xf32>
    %411 = vector.shape_cast %410 : vector<2x8xf32> to vector<2x8x1xf32>
    %cst_156 = arith.constant 3.200000e+01 : f32
    %412 = vector.broadcast %cst_156 : f32 to vector<2x8x1xf32>
    %413 = arith.divf %411, %412 : vector<2x8x1xf32>
    %414 = vector.broadcast %406 : vector<2x8x1xf32> to vector<2x8x32xf32>
    %415 = arith.subf %352, %414 : vector<2x8x32xf32>
    %cst_157 = arith.constant 9.99999997E-7 : f32
    %416 = vector.broadcast %cst_157 : f32 to vector<2x8x1xf32>
    %417 = arith.addf %413, %416 : vector<2x8x1xf32>
    %418 = math.rsqrt %417 : vector<2x8x1xf32>
    %419 = vector.broadcast %418 : vector<2x8x1xf32> to vector<2x8x32xf32>
    %420 = arith.mulf %415, %419 : vector<2x8x32xf32>
    %cst_158 = arith.constant 1.000000e+00 : f32
    %421 = vector.broadcast %cst_158 : f32 to vector<2x1x32xf32>
    %422 = arith.addf %421, %400 : vector<2x1x32xf32>
    %423 = vector.broadcast %422 : vector<2x1x32xf32> to vector<2x8x32xf32>
    %424 = arith.mulf %420, %423 : vector<2x8x32xf32>
    %425 = vector.broadcast %402 : vector<2x1x32xf32> to vector<2x8x32xf32>
    %426 = arith.addf %424, %425 : vector<2x8x32xf32>
    %427 = vector.shape_cast %398 : vector<2x64x32xf32> to vector<128x32xf32>
    %428 = arith.truncf %427 : vector<128x32xf32> to vector<128x32xbf16>
    %c0_159 = arith.constant 0 : index
    %c0_160 = arith.constant 0 : index
    %429 = vector.load %arg41[%c0_159, %c0_160] : memref<32x96xbf16, #tpu.memory_space<vmem>>, vector<32x96xbf16>
    %cst_161 = arith.constant dense<0.000000e+00> : vector<128x96xf32>
    %430 = tpu.matmul %428, %429, %cst_161 {dimension_numbers = #tpu.dot_dimension_numbers<[1], [0], [0], [1], [0, 0, 1, 1], [], []>} : vector<128x32xbf16>, vector<32x96xbf16>, vector<128x96xf32> -> vector<128x96xf32>
    %c0_162 = arith.constant 0 : index
    %c0_163 = arith.constant 0 : index
    %431 = vector.load %arg42[%c0_162, %c0_163] : memref<1x96xf32, #tpu.memory_space<vmem>>, vector<1x96xf32>
    %432 = vector.broadcast %431 : vector<1x96xf32> to vector<128x96xf32>
    %433 = arith.addf %430, %432 : vector<128x96xf32>
    %434 = vector.shape_cast %426 : vector<2x8x32xf32> to vector<16x32xf32>
    %435 = arith.truncf %434 : vector<16x32xf32> to vector<16x32xbf16>
    %c0_164 = arith.constant 0 : index
    %c0_165 = arith.constant 0 : index
    %436 = vector.load %arg43[%c0_164, %c0_165] : memref<32x96xbf16, #tpu.memory_space<vmem>>, vector<32x96xbf16>
    %cst_166 = arith.constant dense<0.000000e+00> : vector<16x96xf32>
    %437 = tpu.matmul %435, %436, %cst_166 {dimension_numbers = #tpu.dot_dimension_numbers<[1], [0], [0], [1], [0, 0, 1, 1], [], []>} : vector<16x32xbf16>, vector<32x96xbf16>, vector<16x96xf32> -> vector<16x96xf32>
    %c0_167 = arith.constant 0 : index
    %c0_168 = arith.constant 0 : index
    %438 = vector.load %arg44[%c0_167, %c0_168] : memref<1x96xf32, #tpu.memory_space<vmem>>, vector<1x96xf32>
    %439 = vector.broadcast %438 : vector<1x96xf32> to vector<16x96xf32>
    %440 = arith.addf %437, %439 : vector<16x96xf32>
    %441 = vector.shape_cast %433 : vector<128x96xf32> to vector<2x64x96xf32>
    %442 = vector.shape_cast %440 : vector<16x96xf32> to vector<2x8x96xf32>
    %443 = tpu.concatenate %441, %442 in 1 : vector<2x64x96xf32>, vector<2x8x96xf32> -> vector<2x72x96xf32>
    %444 = arith.truncf %443 : vector<2x72x96xf32> to vector<2x72x96xbf16>
    %445 = vector.extract_strided_slice %444 {offsets = [0, 0, 64], sizes = [2, 72, 32], strides = [1, 1, 1]} : vector<2x72x96xbf16> to vector<2x72x32xbf16>
    %cst_169 = arith.constant 0.000000e+00 : f32
    %446 = vector.broadcast %cst_169 : f32 to vector<2x72x32xf32>
    %447 = vector.extract_strided_slice %444 {offsets = [0, 0, 0], sizes = [2, 72, 16], strides = [1, 1, 1]} : vector<2x72x96xbf16> to vector<2x72x16xbf16>
    %448 = vector.extract_strided_slice %444 {offsets = [0, 0, 32], sizes = [2, 72, 16], strides = [1, 1, 1]} : vector<2x72x96xbf16> to vector<2x72x16xbf16>
    %c0_i32_170 = arith.constant 0 : i32
    %449 = vector.broadcast %c0_i32_170 : i32 to vector<1x1x32xi32>
    %450 = arith.cmpi sge, %68, %449 : vector<1x1x32xi32>
    %c16_i32_171 = arith.constant 16 : i32
    %451 = vector.broadcast %c16_i32_171 : i32 to vector<1x1x32xi32>
    %452 = arith.cmpi slt, %68, %451 : vector<1x1x32xi32>
    %453 = arith.andi %450, %452 : vector<1x1x32xi1>
    %cst_172 = arith.constant 0.000000e+00 : bf16
    %454 = vector.broadcast %cst_172 : bf16 to vector<2x72x32xbf16>
    %455 = vector.shape_cast %453 : vector<1x1x32xi1> to vector<1x1x32xi1>
    %456 = vector.broadcast %455 : vector<1x1x32xi1> to vector<2x72x32xi1>
    %457 = arith.select %456, %445, %454 : vector<2x72x32xi1>, vector<2x72x32xbf16>
    %cst_173 = arith.constant dense<0.000000e+00> : vector<2x72x72xf32>
    %458 = tpu.matmul %447, %448, %cst_173 {dimension_numbers = #tpu.dot_dimension_numbers<[2], [2], [1], [1], [0, 0, 0, 1, 1, 1], [0], [0]>} : vector<2x72x16xbf16>, vector<2x72x16xbf16>, vector<2x72x72xf32> -> vector<2x72x72xf32>
    %cst_174 = arith.constant dense<0xFF800000> : vector<2x72xf32>
    %459 = vector.multi_reduction <maximumf>, %458, %cst_174 [2] : vector<2x72x72xf32> to vector<2x72xf32>
    %460 = vector.shape_cast %459 : vector<2x72xf32> to vector<2x72x1xf32>
    %461 = vector.broadcast %460 : vector<2x72x1xf32> to vector<2x72x72xf32>
    %462 = arith.subf %458, %461 : vector<2x72x72xf32>
    %463 = math.exp %462 : vector<2x72x72xf32>
    %cst_175 = arith.constant dense<0.000000e+00> : vector<2x72xf32>
    %464 = vector.multi_reduction <add>, %463, %cst_175 [2] : vector<2x72x72xf32> to vector<2x72xf32>
    %465 = vector.shape_cast %464 : vector<2x72xf32> to vector<2x72x1xf32>
    %466 = arith.truncf %463 : vector<2x72x72xf32> to vector<2x72x72xbf16>
    %cst_176 = arith.constant dense<0.000000e+00> : vector<2x72x32xf32>
    %467 = tpu.matmul %466, %457, %cst_176 {dimension_numbers = #tpu.dot_dimension_numbers<[2], [1], [1], [2], [0, 0, 0, 1, 1, 2], [0], [0]>} : vector<2x72x72xbf16>, vector<2x72x32xbf16>, vector<2x72x32xf32> -> vector<2x72x32xf32>
    %468 = tpu.reciprocal %465 {approx = true} : vector<2x72x1xf32> -> vector<2x72x1xf32>
    %469 = vector.broadcast %468 : vector<2x72x1xf32> to vector<2x72x32xf32>
    %470 = arith.mulf %467, %469 : vector<2x72x32xf32>
    %471 = arith.addf %446, %470 : vector<2x72x32xf32>
    %472 = vector.extract_strided_slice %444 {offsets = [0, 0, 16], sizes = [2, 72, 16], strides = [1, 1, 1]} : vector<2x72x96xbf16> to vector<2x72x16xbf16>
    %473 = vector.extract_strided_slice %444 {offsets = [0, 0, 48], sizes = [2, 72, 16], strides = [1, 1, 1]} : vector<2x72x96xbf16> to vector<2x72x16xbf16>
    %c16_i32_177 = arith.constant 16 : i32
    %474 = vector.broadcast %c16_i32_177 : i32 to vector<1x1x32xi32>
    %475 = arith.cmpi sge, %68, %474 : vector<1x1x32xi32>
    %c32_i32_178 = arith.constant 32 : i32
    %476 = vector.broadcast %c32_i32_178 : i32 to vector<1x1x32xi32>
    %477 = arith.cmpi slt, %68, %476 : vector<1x1x32xi32>
    %478 = arith.andi %475, %477 : vector<1x1x32xi1>
    %cst_179 = arith.constant 0.000000e+00 : bf16
    %479 = vector.broadcast %cst_179 : bf16 to vector<2x72x32xbf16>
    %480 = vector.shape_cast %478 : vector<1x1x32xi1> to vector<1x1x32xi1>
    %481 = vector.broadcast %480 : vector<1x1x32xi1> to vector<2x72x32xi1>
    %482 = arith.select %481, %445, %479 : vector<2x72x32xi1>, vector<2x72x32xbf16>
    %cst_180 = arith.constant dense<0.000000e+00> : vector<2x72x72xf32>
    %483 = tpu.matmul %472, %473, %cst_180 {dimension_numbers = #tpu.dot_dimension_numbers<[2], [2], [1], [1], [0, 0, 0, 1, 1, 1], [0], [0]>} : vector<2x72x16xbf16>, vector<2x72x16xbf16>, vector<2x72x72xf32> -> vector<2x72x72xf32>
    %cst_181 = arith.constant dense<0xFF800000> : vector<2x72xf32>
    %484 = vector.multi_reduction <maximumf>, %483, %cst_181 [2] : vector<2x72x72xf32> to vector<2x72xf32>
    %485 = vector.shape_cast %484 : vector<2x72xf32> to vector<2x72x1xf32>
    %486 = vector.broadcast %485 : vector<2x72x1xf32> to vector<2x72x72xf32>
    %487 = arith.subf %483, %486 : vector<2x72x72xf32>
    %488 = math.exp %487 : vector<2x72x72xf32>
    %cst_182 = arith.constant dense<0.000000e+00> : vector<2x72xf32>
    %489 = vector.multi_reduction <add>, %488, %cst_182 [2] : vector<2x72x72xf32> to vector<2x72xf32>
    %490 = vector.shape_cast %489 : vector<2x72xf32> to vector<2x72x1xf32>
    %491 = arith.truncf %488 : vector<2x72x72xf32> to vector<2x72x72xbf16>
    %cst_183 = arith.constant dense<0.000000e+00> : vector<2x72x32xf32>
    %492 = tpu.matmul %491, %482, %cst_183 {dimension_numbers = #tpu.dot_dimension_numbers<[2], [1], [1], [2], [0, 0, 0, 1, 1, 2], [0], [0]>} : vector<2x72x72xbf16>, vector<2x72x32xbf16>, vector<2x72x32xf32> -> vector<2x72x32xf32>
    %493 = tpu.reciprocal %490 {approx = true} : vector<2x72x1xf32> -> vector<2x72x1xf32>
    %494 = vector.broadcast %493 : vector<2x72x1xf32> to vector<2x72x32xf32>
    %495 = arith.mulf %492, %494 : vector<2x72x32xf32>
    %496 = arith.addf %471, %495 : vector<2x72x32xf32>
    %497 = vector.extract_strided_slice %496 {offsets = [0, 0, 0], sizes = [2, 64, 32], strides = [1, 1, 1]} : vector<2x72x32xf32> to vector<2x64x32xf32>
    %498 = vector.shape_cast %497 : vector<2x64x32xf32> to vector<128x32xf32>
    %499 = arith.truncf %498 : vector<128x32xf32> to vector<128x32xbf16>
    %c0_184 = arith.constant 0 : index
    %c0_185 = arith.constant 0 : index
    %500 = vector.load %arg45[%c0_184, %c0_185] : memref<32x32xbf16, #tpu.memory_space<vmem>>, vector<32x32xbf16>
    %cst_186 = arith.constant dense<0.000000e+00> : vector<128x32xf32>
    %501 = tpu.matmul %499, %500, %cst_186 {dimension_numbers = #tpu.dot_dimension_numbers<[1], [0], [0], [1], [0, 0, 1, 1], [], []>} : vector<128x32xbf16>, vector<32x32xbf16>, vector<128x32xf32> -> vector<128x32xf32>
    %c0_187 = arith.constant 0 : index
    %c0_188 = arith.constant 0 : index
    %502 = vector.load %arg46[%c0_187, %c0_188] : memref<1x32xf32, #tpu.memory_space<vmem>>, vector<1x32xf32>
    %503 = vector.broadcast %502 : vector<1x32xf32> to vector<128x32xf32>
    %504 = arith.addf %501, %503 : vector<128x32xf32>
    %505 = vector.shape_cast %504 : vector<128x32xf32> to vector<2x64x32xf32>
    %506 = vector.broadcast %368 : vector<2x1x32xf32> to vector<2x64x32xf32>
    %507 = arith.mulf %506, %505 : vector<2x64x32xf32>
    %508 = arith.addf %286, %507 : vector<2x64x32xf32>
    %cst_189 = arith.constant dense<0.000000e+00> : vector<2x64xf32>
    %509 = vector.multi_reduction <add>, %508, %cst_189 [2] : vector<2x64x32xf32> to vector<2x64xf32>
    %510 = vector.shape_cast %509 : vector<2x64xf32> to vector<2x64x1xf32>
    %cst_190 = arith.constant 3.200000e+01 : f32
    %511 = vector.broadcast %cst_190 : f32 to vector<2x64x1xf32>
    %512 = arith.divf %510, %511 : vector<2x64x1xf32>
    %513 = vector.broadcast %512 : vector<2x64x1xf32> to vector<2x64x32xf32>
    %514 = arith.subf %508, %513 : vector<2x64x32xf32>
    %515 = arith.mulf %514, %514 : vector<2x64x32xf32>
    %cst_191 = arith.constant dense<0.000000e+00> : vector<2x64xf32>
    %516 = vector.multi_reduction <add>, %515, %cst_191 [2] : vector<2x64x32xf32> to vector<2x64xf32>
    %517 = vector.shape_cast %516 : vector<2x64xf32> to vector<2x64x1xf32>
    %cst_192 = arith.constant 3.200000e+01 : f32
    %518 = vector.broadcast %cst_192 : f32 to vector<2x64x1xf32>
    %519 = arith.divf %517, %518 : vector<2x64x1xf32>
    %520 = vector.broadcast %512 : vector<2x64x1xf32> to vector<2x64x32xf32>
    %521 = arith.subf %508, %520 : vector<2x64x32xf32>
    %cst_193 = arith.constant 9.99999997E-7 : f32
    %522 = vector.broadcast %cst_193 : f32 to vector<2x64x1xf32>
    %523 = arith.addf %519, %522 : vector<2x64x1xf32>
    %524 = math.rsqrt %523 : vector<2x64x1xf32>
    %525 = vector.broadcast %524 : vector<2x64x1xf32> to vector<2x64x32xf32>
    %526 = arith.mulf %521, %525 : vector<2x64x32xf32>
    %cst_194 = arith.constant 1.000000e+00 : f32
    %527 = vector.broadcast %cst_194 : f32 to vector<2x1x32xf32>
    %528 = arith.addf %527, %372 : vector<2x1x32xf32>
    %529 = vector.broadcast %528 : vector<2x1x32xf32> to vector<2x64x32xf32>
    %530 = arith.mulf %526, %529 : vector<2x64x32xf32>
    %531 = vector.broadcast %370 : vector<2x1x32xf32> to vector<2x64x32xf32>
    %532 = arith.addf %530, %531 : vector<2x64x32xf32>
    %533 = vector.shape_cast %532 : vector<2x64x32xf32> to vector<128x32xf32>
    %534 = arith.truncf %533 : vector<128x32xf32> to vector<128x32xbf16>
    %c0_195 = arith.constant 0 : index
    %c0_196 = arith.constant 0 : index
    %535 = vector.load %arg47[%c0_195, %c0_196] : memref<32x128xbf16, #tpu.memory_space<vmem>>, vector<32x128xbf16>
    %cst_197 = arith.constant dense<0.000000e+00> : vector<128x128xf32>
    %536 = tpu.matmul %534, %535, %cst_197 {dimension_numbers = #tpu.dot_dimension_numbers<[1], [0], [0], [1], [0, 0, 1, 1], [], []>} : vector<128x32xbf16>, vector<32x128xbf16>, vector<128x128xf32> -> vector<128x128xf32>
    %c0_198 = arith.constant 0 : index
    %c0_199 = arith.constant 0 : index
    %537 = vector.load %arg48[%c0_198, %c0_199] : memref<1x128xf32, #tpu.memory_space<vmem>>, vector<1x128xf32>
    %538 = vector.broadcast %537 : vector<1x128xf32> to vector<128x128xf32>
    %539 = arith.addf %536, %538 : vector<128x128xf32>
    %cst_200 = arith.constant 5.000000e-01 : f32
    %540 = vector.broadcast %cst_200 : f32 to vector<128x128xf32>
    %541 = arith.mulf %540, %539 : vector<128x128xf32>
    %cst_201 = arith.constant 4.471500e-02 : f32
    %542 = vector.broadcast %cst_201 : f32 to vector<128x128xf32>
    %543 = arith.mulf %542, %539 : vector<128x128xf32>
    %544 = arith.mulf %543, %539 : vector<128x128xf32>
    %545 = arith.mulf %544, %539 : vector<128x128xf32>
    %546 = arith.addf %539, %545 : vector<128x128xf32>
    %cst_202 = arith.constant 0.797884583 : f32
    %547 = vector.broadcast %cst_202 : f32 to vector<128x128xf32>
    %548 = arith.mulf %547, %546 : vector<128x128xf32>
    %549 = math.tanh %548 : vector<128x128xf32>
    %cst_203 = arith.constant 1.000000e+00 : f32
    %550 = vector.broadcast %cst_203 : f32 to vector<128x128xf32>
    %551 = arith.addf %550, %549 : vector<128x128xf32>
    %552 = arith.mulf %541, %551 : vector<128x128xf32>
    %553 = arith.truncf %552 : vector<128x128xf32> to vector<128x128xbf16>
    %c0_204 = arith.constant 0 : index
    %c0_205 = arith.constant 0 : index
    %554 = vector.load %arg49[%c0_204, %c0_205] : memref<128x32xbf16, #tpu.memory_space<vmem>>, vector<128x32xbf16>
    %cst_206 = arith.constant dense<0.000000e+00> : vector<128x32xf32>
    %555 = tpu.matmul %553, %554, %cst_206 {dimension_numbers = #tpu.dot_dimension_numbers<[1], [0], [0], [1], [0, 0, 1, 1], [], []>} : vector<128x128xbf16>, vector<128x32xbf16>, vector<128x32xf32> -> vector<128x32xf32>
    %c0_207 = arith.constant 0 : index
    %c0_208 = arith.constant 0 : index
    %556 = vector.load %arg50[%c0_207, %c0_208] : memref<1x32xf32, #tpu.memory_space<vmem>>, vector<1x32xf32>
    %557 = vector.broadcast %556 : vector<1x32xf32> to vector<128x32xf32>
    %558 = arith.addf %555, %557 : vector<128x32xf32>
    %559 = vector.shape_cast %558 : vector<128x32xf32> to vector<2x64x32xf32>
    %560 = vector.broadcast %374 : vector<2x1x32xf32> to vector<2x64x32xf32>
    %561 = arith.mulf %560, %559 : vector<2x64x32xf32>
    %562 = arith.addf %508, %561 : vector<2x64x32xf32>
    %c0_209 = arith.constant 0 : index
    %c0_210 = arith.constant 0 : index
    %563 = vector.load %arg51[%c0_209, %c0_210] : memref<32x64xbf16, #tpu.memory_space<vmem>>, vector<32x64xbf16>
    %cst_211 = arith.constant dense<0.000000e+00> : vector<2x64xf32>
    %564 = tpu.matmul %45, %563, %cst_211 {dimension_numbers = #tpu.dot_dimension_numbers<[1], [0], [0], [1], [0, 0, 1, 1], [], []>} : vector<2x32xbf16>, vector<32x64xbf16>, vector<2x64xf32> -> vector<2x64xf32>
    %c0_212 = arith.constant 0 : index
    %c0_213 = arith.constant 0 : index
    %565 = vector.load %arg52[%c0_212, %c0_213] : memref<1x64xf32, #tpu.memory_space<vmem>>, vector<1x64xf32>
    %566 = vector.broadcast %565 : vector<1x64xf32> to vector<2x64xf32>
    %567 = arith.addf %564, %566 : vector<2x64xf32>
    %568 = vector.extract_strided_slice %567 {offsets = [0, 0], sizes = [2, 32], strides = [1, 1]} : vector<2x64xf32> to vector<2x32xf32>
    %569 = vector.shape_cast %568 : vector<2x32xf32> to vector<2x1x32xf32>
    %570 = vector.extract_strided_slice %567 {offsets = [0, 32], sizes = [2, 32], strides = [1, 1]} : vector<2x64xf32> to vector<2x32xf32>
    %571 = vector.shape_cast %570 : vector<2x32xf32> to vector<2x1x32xf32>
    %cst_214 = arith.constant dense<0.000000e+00> : vector<2x64xf32>
    %572 = vector.multi_reduction <add>, %562, %cst_214 [2] : vector<2x64x32xf32> to vector<2x64xf32>
    %573 = vector.shape_cast %572 : vector<2x64xf32> to vector<2x64x1xf32>
    %cst_215 = arith.constant 3.200000e+01 : f32
    %574 = vector.broadcast %cst_215 : f32 to vector<2x64x1xf32>
    %575 = arith.divf %573, %574 : vector<2x64x1xf32>
    %576 = vector.broadcast %575 : vector<2x64x1xf32> to vector<2x64x32xf32>
    %577 = arith.subf %562, %576 : vector<2x64x32xf32>
    %578 = arith.mulf %577, %577 : vector<2x64x32xf32>
    %cst_216 = arith.constant dense<0.000000e+00> : vector<2x64xf32>
    %579 = vector.multi_reduction <add>, %578, %cst_216 [2] : vector<2x64x32xf32> to vector<2x64xf32>
    %580 = vector.shape_cast %579 : vector<2x64xf32> to vector<2x64x1xf32>
    %cst_217 = arith.constant 3.200000e+01 : f32
    %581 = vector.broadcast %cst_217 : f32 to vector<2x64x1xf32>
    %582 = arith.divf %580, %581 : vector<2x64x1xf32>
    %583 = vector.broadcast %575 : vector<2x64x1xf32> to vector<2x64x32xf32>
    %584 = arith.subf %562, %583 : vector<2x64x32xf32>
    %cst_218 = arith.constant 9.99999997E-7 : f32
    %585 = vector.broadcast %cst_218 : f32 to vector<2x64x1xf32>
    %586 = arith.addf %582, %585 : vector<2x64x1xf32>
    %587 = math.rsqrt %586 : vector<2x64x1xf32>
    %588 = vector.broadcast %587 : vector<2x64x1xf32> to vector<2x64x32xf32>
    %589 = arith.mulf %584, %588 : vector<2x64x32xf32>
    %cst_219 = arith.constant 1.000000e+00 : f32
    %590 = vector.broadcast %cst_219 : f32 to vector<2x1x32xf32>
    %591 = arith.addf %590, %569 : vector<2x1x32xf32>
    %592 = vector.broadcast %591 : vector<2x1x32xf32> to vector<2x64x32xf32>
    %593 = arith.mulf %589, %592 : vector<2x64x32xf32>
    %594 = vector.broadcast %571 : vector<2x1x32xf32> to vector<2x64x32xf32>
    %595 = arith.addf %593, %594 : vector<2x64x32xf32>
    %596 = vector.shape_cast %595 : vector<2x64x32xf32> to vector<128x32xf32>
    %597 = arith.truncf %596 : vector<128x32xf32> to vector<128x32xbf16>
    %c0_220 = arith.constant 0 : index
    %c0_221 = arith.constant 0 : index
    %598 = vector.load %arg53[%c0_220, %c0_221] : memref<32x16xbf16, #tpu.memory_space<vmem>>, vector<32x16xbf16>
    %cst_222 = arith.constant dense<0.000000e+00> : vector<128x16xf32>
    %599 = tpu.matmul %597, %598, %cst_222 {dimension_numbers = #tpu.dot_dimension_numbers<[1], [0], [0], [1], [0, 0, 1, 1], [], []>} : vector<128x32xbf16>, vector<32x16xbf16>, vector<128x16xf32> -> vector<128x16xf32>
    %c0_223 = arith.constant 0 : index
    %c0_224 = arith.constant 0 : index
    %600 = vector.load %arg54[%c0_223, %c0_224] : memref<1x16xf32, #tpu.memory_space<vmem>>, vector<1x16xf32>
    %601 = vector.broadcast %600 : vector<1x16xf32> to vector<128x16xf32>
    %602 = arith.addf %599, %601 : vector<128x16xf32>
    %603 = vector.shape_cast %602 : vector<128x16xf32> to vector<2x64x16xf32>
    %c0_225 = arith.constant 0 : index
    %c0_226 = arith.constant 0 : index
    %c0_227 = arith.constant 0 : index
    %604 = vector.load %arg55[%c0_225, %c0_226, %c0_227] : memref<2x64x16xf32, #tpu.memory_space<vmem>>, vector<2x64x16xf32>
    tpu.vector_store %arg55[%c0_225, %c0_226, %c0_227], %603 {strides = array<i32>} : memref<2x64x16xf32, #tpu.memory_space<vmem>>, vector<2x64x16xf32>,
    return
  }
}

</mosaic_0001>

<llo_original>
// kernel: sd3_transformer_forward.1
$region0: #{sd3_transformer_forward.1}
  #allocation0 [shape = 'u32[]', space=smem, size = 0x4, offset = 0x4, fixed_abs, tag = 'smem constant byte address 0x4 - core index']
  #allocation1 [shape = 'u32[144,128]{1,0:T(1,128)}', space=vmem, size = 0x12000, scoped, tag = 'internal scratch']
  %s0 = inlined_call_operand.smem [shape: u32[56], index: -1, kind: input, shape index: {}]
  %s1 = sld [smem:[%s0]]
  %s2 = scalar_lea.smem %s0, 1
  %s3 = sld [smem:[%s2]]
  %s4 = scalar_lea.smem %s0, 2
  %s5 = sld [smem:[%s4]]
  %s6 = scalar_lea.smem %s0, 3
  %s7 = sld [smem:[%s6]]
  %s8 = scalar_lea.smem %s0, 4
  %s9 = sld [smem:[%s8]]
  %s10 = scalar_lea.smem %s0, 5
  %s11 = sld [smem:[%s10]]
  %s12 = scalar_lea.smem %s0, 6
  %s13 = sld [smem:[%s12]]
  %s14 = scalar_lea.smem %s0, 7
  %s15 = sld [smem:[%s14]]
  %s16 = scalar_lea.smem %s0, 8
  %s17 = sld [smem:[%s16]]
  %s18 = scalar_lea.smem %s0, 9
  %s19 = sld [smem:[%s18]]
  %s20 = scalar_lea.smem %s0, 10
  %s21 = sld [smem:[%s20]]
  %s22 = scalar_lea.smem %s0, 11
  %s23 = sld [smem:[%s22]]
  %s24 = scalar_lea.smem %s0, 12
  %s25 = sld [smem:[%s24]]
  %s26 = scalar_lea.smem %s0, 13
  %s27 = sld [smem:[%s26]]
  %s28 = scalar_lea.smem %s0, 14
  %s29 = sld [smem:[%s28]]
  %s30 = scalar_lea.smem %s0, 15
  %s31 = sld [smem:[%s30]]
  %s32 = scalar_lea.smem %s0, 16
  %s33 = sld [smem:[%s32]]
  %s34 = scalar_lea.smem %s0, 17
  %s35 = sld [smem:[%s34]]
  %s36 = scalar_lea.smem %s0, 18
  %s37 = sld [smem:[%s36]]
  %s38 = scalar_lea.smem %s0, 19
  %s39 = sld [smem:[%s38]]
  %s40 = scalar_lea.smem %s0, 20
  %s41 = sld [smem:[%s40]]
  %s42 = scalar_lea.smem %s0, 21
  %s43 = sld [smem:[%s42]]
  %s44 = scalar_lea.smem %s0, 22
  %s45 = sld [smem:[%s44]]
  %s46 = scalar_lea.smem %s0, 23
  %s47 = sld [smem:[%s46]]
  %s48 = scalar_lea.smem %s0, 24
  %s49 = sld [smem:[%s48]]
  %s50 = scalar_lea.smem %s0, 25
  %s51 = sld [smem:[%s50]]
  %s52 = scalar_lea.smem %s0, 26
  %s53 = sld [smem:[%s52]]
  %s54 = scalar_lea.smem %s0, 27
  %s55 = sld [smem:[%s54]]
  %s56 = scalar_lea.smem %s0, 28
  %s57 = sld [smem:[%s56]]
  %s58 = scalar_lea.smem %s0, 29
  %s59 = sld [smem:[%s58]]
  %s60 = scalar_lea.smem %s0, 30
  %s61 = sld [smem:[%s60]]
  %s62 = scalar_lea.smem %s0, 31
  %s63 = sld [smem:[%s62]]
  %s64 = scalar_lea.smem %s0, 32
  %s65 = sld [smem:[%s64]]
  %s66 = scalar_lea.smem %s0, 33
  %s67 = sld [smem:[%s66]]
  %s68 = scalar_lea.smem %s0, 34
  %s69 = sld [smem:[%s68]]
  %s70 = scalar_lea.smem %s0, 35
  %s71 = sld [smem:[%s70]]
  %s72 = scalar_lea.smem %s0, 36
  %s73 = sld [smem:[%s72]]
  %s74 = scalar_lea.smem %s0, 37
  %s75 = sld [smem:[%s74]]
  %s76 = scalar_lea.smem %s0, 38
  %s77 = sld [smem:[%s76]]
  %s78 = scalar_lea.smem %s0, 39
  %s79 = sld [smem:[%s78]]
  %s80 = scalar_lea.smem %s0, 40
  %s81 = sld [smem:[%s80]]
  %s82 = scalar_lea.smem %s0, 41
  %s83 = sld [smem:[%s82]]
  %s84 = scalar_lea.smem %s0, 42
  %s85 = sld [smem:[%s84]]
  %s86 = scalar_lea.smem %s0, 43
  %s87 = sld [smem:[%s86]]
  %s88 = scalar_lea.smem %s0, 44
  %s89 = sld [smem:[%s88]]
  %s90 = scalar_lea.smem %s0, 45
  %s91 = sld [smem:[%s90]]
  %s92 = scalar_lea.smem %s0, 46
  %s93 = sld [smem:[%s92]]
  %s94 = scalar_lea.smem %s0, 47
  %s95 = sld [smem:[%s94]]
  %s96 = scalar_lea.smem %s0, 48
  %s97 = sld [smem:[%s96]]
  %s98 = scalar_lea.smem %s0, 49
  %s99 = sld [smem:[%s98]]
  %s100 = scalar_lea.smem %s0, 50
  %s101 = sld [smem:[%s100]]
  %s102 = scalar_lea.smem %s0, 51
  %s103 = sld [smem:[%s102]]
  %s104 = scalar_lea.smem %s0, 52
  %s105 = sld [smem:[%s104]]
  %s106 = scalar_lea.smem %s0, 53
  %s107 = sld [smem:[%s106]]
  %s108 = scalar_lea.smem %s0, 54
  %s109 = sld [smem:[%s108]]
  %s110 = scalar_lea.smem %s0, 55
  %s111 = sld [smem:[%s110]]
  %s112 = sld [smem:[#allocation0]]
  $region278: #{sd3_transformer_forward.1} parent=0
    _
  %s114 = ssub.s32 1, %s112
  %s115 = scalar_select 0, %s114, %s112
  $region1: #{sd3_transformer_forward.1} parent=0
    #allocation2 [shape = 'u8[512]{0}', space=vmem, size = 0x400, scoped, tag = 'input window, operand 30, single buffered']
    #allocation3 [shape = 's32[1]{0}', space=sflag, size = 0x4, scoped, tag = 'scoped memory for sd3_transformer_forward.1']
    #allocation4 [shape = 'u8[512]{0}', space=vmem, size = 0x400, scoped, tag = 'input window, operand 32, single buffered']
    #allocation5 [shape = 's32[1]{0}', space=sflag, size = 0x4, scoped, tag = 'scoped memory for sd3_transformer_forward.1']
    #allocation6 [shape = 'u8[512]{0}', space=vmem, size = 0x400, scoped, tag = 'input window, operand 34, single buffered']
    #allocation7 [shape = 'u8[512]{0}', space=vmem, size = 0x400, scoped, tag = 'input window, operand 36, single buffered']
    #allocation8 [shape = 's32[1]{0}', space=sflag, size = 0x4, scoped, tag = 'scoped memory for sd3_transformer_forward.1']
    #allocation9 [shape = 'u8[512]{0}', space=vmem, size = 0x400, scoped, tag = 'input window, operand 40, single buffered']
    #allocation10 [shape = 'u8[512]{0}', space=vmem, size = 0x400, scoped, tag = 'input window, operand 42, single buffered']
    #allocation11 [shape = 's32[1]{0}', space=sflag, size = 0x4, scoped, tag = 'scoped memory for sd3_transformer_forward.1']
    #allocation12 [shape = 'u8[512]{0}', space=vmem, size = 0x400, scoped, tag = 'input window, operand 44, single buffered']
    #allocation13 [shape = 'u8[512]{0}', space=vmem, size = 0x400, scoped, tag = 'input window, operand 46, single buffered']
    #allocation14 [shape = 's32[1]{0}', space=sflag, size = 0x4, scoped, tag = 'scoped memory for sd3_transformer_forward.1']
    #allocation15 [shape = 'u8[512]{0}', space=vmem, size = 0x400, scoped, tag = 'input window, operand 48, single buffered']
    #allocation16 [shape = 'u8[512]{0}', space=vmem, size = 0x400, scoped, tag = 'input window, operand 50, single buffered']
    #allocation17 [shape = 's32[1]{0}', space=sflag, size = 0x4, scoped, tag = 'scoped memory for sd3_transformer_forward.1']
    #allocation18 [shape = 'u8[512]{0}', space=vmem, size = 0x400, scoped, tag = 'input window, operand 52, single buffered']
    #allocation19 [shape = 'u8[512]{0}', space=vmem, size = 0x400, scoped, tag = 'input window, operand 54, single buffered']
    #allocation20 [shape = 's32[1]{0}', space=sflag, size = 0x4, scoped, tag = 'scoped memory for sd3_transformer_forward.1']
    %116 = vsyncpa [#allocation3], 0
    %117 = vsyncpa [#allocation5], 0
    %118 = vsyncpa [#allocation8], 0
    %119 = vsyncpa [#allocation11], 0
    %120 = vsyncpa [#allocation14], 0
    %121 = vsyncpa [#allocation17], 0
    %122 = vsyncpa [#allocation20], 0
    // Predicated region
    $region2: #{sd3_transformer_forward.1} parent=1 // pred_check
      _
    $region3: #{sd3_transformer_forward.1} parent=1 // pred_check_branch
      %124 = sbr.rel (0) target = $region5
    $region4: #{sd3_transformer_forward.1} parent=1 // pred_region
      _
    $region5: #{sd3_transformer_forward.1} parent=1 // pred_fallthru
      _
    // Predicated region
    $region6: #{sd3_transformer_forward.1} parent=1 // pred_check
      _
    $region7: #{sd3_transformer_forward.1} parent=1 // pred_check_branch
      %126 = sbr.rel (0) target = $region9
    $region8: #{sd3_transformer_forward.1} parent=1 // pred_region
      _
    $region9: #{sd3_transformer_forward.1} parent=1 // pred_fallthru
      _
    // Predicated region
    $region10: #{sd3_transformer_forward.1} parent=1 // pred_check
      _
    $region11: #{sd3_transformer_forward.1} parent=1 // pred_check_branch
      %128 = sbr.rel (0) target = $region13
    $region12: #{sd3_transformer_forward.1} parent=1 // pred_region
      _
    $region13: #{sd3_transformer_forward.1} parent=1 // pred_fallthru
      _
    // Predicated region
    $region14: #{sd3_transformer_forward.1} parent=1 // pred_check
      _
    $region15: #{sd3_transformer_forward.1} parent=1 // pred_check_branch
      %130 = sbr.rel (0) target = $region17
    $region16: #{sd3_transformer_forward.1} parent=1 // pred_region
      _
    $region17: #{sd3_transformer_forward.1} parent=1 // pred_fallthru
      _
    // Predicated region
    $region18: #{sd3_transformer_forward.1} parent=1 // pred_check
      _
    $region19: #{sd3_transformer_forward.1} parent=1 // pred_check_branch
      %132 = sbr.rel (0) target = $region21
    $region20: #{sd3_transformer_forward.1} parent=1 // pred_region
      _
    $region21: #{sd3_transformer_forward.1} parent=1 // pred_fallthru
      _
    // Predicated region
    $region22: #{sd3_transformer_forward.1} parent=1 // pred_check
      _
    $region23: #{sd3_transformer_forward.1} parent=1 // pred_check_branch
      %134 = sbr.rel (0) target = $region25
    $region24: #{sd3_transformer_forward.1} parent=1 // pred_region
      _
    $region25: #{sd3_transformer_forward.1} parent=1 // pred_fallthru
      _
    // Predicated region
    $region26: #{sd3_transformer_forward.1} parent=1 // pred_check
      _
    $region27: #{sd3_transformer_forward.1} parent=1 // pred_check_branch
      %136 = sbr.rel (0) target = $region29
    $region28: #{sd3_transformer_forward.1} parent=1 // pred_region
      _
    $region29: #{sd3_transformer_forward.1} parent=1 // pred_fallthru
      _
    // Predicated region
    $region30: #{sd3_transformer_forward.1} parent=1 // pred_check
      _
    $region31: #{sd3_transformer_forward.1} parent=1 // pred_check_branch
      %138 = sbr.rel (0) target = $region33
    $region32: #{sd3_transformer_forward.1} parent=1 // pred_region
      _
    $region33: #{sd3_transformer_forward.1} parent=1 // pred_fallthru
      _
    // Predicated region
    $region34: #{sd3_transformer_forward.1} parent=1 // pred_check
      _
    $region35: #{sd3_transformer_forward.1} parent=1 // pred_check_branch
      %140 = sbr.rel (0) target = $region37
    $region36: #{sd3_transformer_forward.1} parent=1 // pred_region
      _
    $region37: #{sd3_transformer_forward.1} parent=1 // pred_fallthru
      _
    // Predicated region
    $region38: #{sd3_transformer_forward.1} parent=1 // pred_check
      _
    $region39: #{sd3_transformer_forward.1} parent=1 // pred_check_branch
      %142 = sbr.rel (0) target = $region41
    $region40: #{sd3_transformer_forward.1} parent=1 // pred_region
      _
    $region41: #{sd3_transformer_forward.1} parent=1 // pred_fallthru
      _
    // Predicated region
    $region42: #{sd3_transformer_forward.1} parent=1 // pred_check
      _
    $region43: #{sd3_transformer_forward.1} parent=1 // pred_check_branch
      %144 = sbr.rel (0) target = $region45
    $region44: #{sd3_transformer_forward.1} parent=1 // pred_region
      _
    $region45: #{sd3_transformer_forward.1} parent=1 // pred_fallthru
      _
    // Predicated region
    $region46: #{sd3_transformer_forward.1} parent=1 // pred_check
      _
    $region47: #{sd3_transformer_forward.1} parent=1 // pred_check_branch
      %146 = sbr.rel (0) target = $region49
    $region48: #{sd3_transformer_forward.1} parent=1 // pred_region
      _
    $region49: #{sd3_transformer_forward.1} parent=1 // pred_fallthru
      _
    // Predicated region
    $region50: #{sd3_transformer_forward.1} parent=1 // pred_check
      _
    $region51: #{sd3_transformer_forward.1} parent=1 // pred_check_branch
      %148 = sbr.rel (0) target = $region53
    $region52: #{sd3_transformer_forward.1} parent=1 // pred_region
      _
    $region53: #{sd3_transformer_forward.1} parent=1 // pred_fallthru
      _
    // Predicated region
    $region54: #{sd3_transformer_forward.1} parent=1 // pred_check
      _
    $region55: #{sd3_transformer_forward.1} parent=1 // pred_check_branch
      %150 = sbr.rel (0) target = $region57
    $region56: #{sd3_transformer_forward.1} parent=1 // pred_region
      _
    $region57: #{sd3_transformer_forward.1} parent=1 // pred_fallthru
      _
    // Predicated region
    $region58: #{sd3_transformer_forward.1} parent=1 // pred_check
      _
    $region59: #{sd3_transformer_forward.1} parent=1 // pred_check_branch
      %152 = sbr.rel (0) target = $region61
    $region60: #{sd3_transformer_forward.1} parent=1 // pred_region
      _
    $region61: #{sd3_transformer_forward.1} parent=1 // pred_fallthru
      _
    // Predicated region
    $region62: #{sd3_transformer_forward.1} parent=1 // pred_check
      _
    $region63: #{sd3_transformer_forward.1} parent=1 // pred_check_branch
      %154 = sbr.rel (0) target = $region65
    $region64: #{sd3_transformer_forward.1} parent=1 // pred_region
      _
    $region65: #{sd3_transformer_forward.1} parent=1 // pred_fallthru
      _
    // Predicated region
    $region66: #{sd3_transformer_forward.1} parent=1 // pred_check
      _
    $region67: #{sd3_transformer_forward.1} parent=1 // pred_check_branch
      %156 = sbr.rel (0) target = $region69
    $region68: #{sd3_transformer_forward.1} parent=1 // pred_region
      _
    $region69: #{sd3_transformer_forward.1} parent=1 // pred_fallthru
      _
    // Predicated region
    $region70: #{sd3_transformer_forward.1} parent=1 // pred_check
      _
    $region71: #{sd3_transformer_forward.1} parent=1 // pred_check_branch
      %158 = sbr.rel (0) target = $region73
    $region72: #{sd3_transformer_forward.1} parent=1 // pred_region
      _
    $region73: #{sd3_transformer_forward.1} parent=1 // pred_fallthru
      _
    // Predicated region
    $region74: #{sd3_transformer_forward.1} parent=1 // pred_check
      _
    $region75: #{sd3_transformer_forward.1} parent=1 // pred_check_branch
      %160 = sbr.rel (0) target = $region77
    $region76: #{sd3_transformer_forward.1} parent=1 // pred_region
      _
    $region77: #{sd3_transformer_forward.1} parent=1 // pred_fallthru
      _
    // Predicated region
    $region78: #{sd3_transformer_forward.1} parent=1 // pred_check
      _
    $region79: #{sd3_transformer_forward.1} parent=1 // pred_check_branch
      %162 = sbr.rel (0) target = $region81
    $region80: #{sd3_transformer_forward.1} parent=1 // pred_region
      _
    $region81: #{sd3_transformer_forward.1} parent=1 // pred_fallthru
      _
    // Predicated region
    $region82: #{sd3_transformer_forward.1} parent=1 // pred_check
      _
    $region83: #{sd3_transformer_forward.1} parent=1 // pred_check_branch
      %164 = sbr.rel (0) target = $region85
    $region84: #{sd3_transformer_forward.1} parent=1 // pred_region
      _
    $region85: #{sd3_transformer_forward.1} parent=1 // pred_fallthru
      _
    // Predicated region
    $region86: #{sd3_transformer_forward.1} parent=1 // pred_check
      _
    $region87: #{sd3_transformer_forward.1} parent=1 // pred_check_branch
      %166 = sbr.rel (0) target = $region89
    $region88: #{sd3_transformer_forward.1} parent=1 // pred_region
      _
    $region89: #{sd3_transformer_forward.1} parent=1 // pred_fallthru
      _
    // Predicated region
    $region90: #{sd3_transformer_forward.1} parent=1 // pred_check
      _
    $region91: #{sd3_transformer_forward.1} parent=1 // pred_check_branch
      %168 = sbr.rel (0) target = $region93
    $region92: #{sd3_transformer_forward.1} parent=1 // pred_region
      _
    $region93: #{sd3_transformer_forward.1} parent=1 // pred_fallthru
      _
    // Predicated region
    $region94: #{sd3_transformer_forward.1} parent=1 // pred_check
      _
    $region95: #{sd3_transformer_forward.1} parent=1 // pred_check_branch
      %170 = sbr.rel (0) target = $region97
    $region96: #{sd3_transformer_forward.1} parent=1 // pred_region
      _
    $region97: #{sd3_transformer_forward.1} parent=1 // pred_fallthru
      _
    // Predicated region
    $region98: #{sd3_transformer_forward.1} parent=1 // pred_check
      _
    $region99: #{sd3_transformer_forward.1} parent=1 // pred_check_branch
      %172 = sbr.rel (0) target = $region101
    $region100: #{sd3_transformer_forward.1} parent=1 // pred_region
      _
    $region101: #{sd3_transformer_forward.1} parent=1 // pred_fallthru
      _
    // Predicated region
    $region102: #{sd3_transformer_forward.1} parent=1 // pred_check
      _
    $region103: #{sd3_transformer_forward.1} parent=1 // pred_check_branch
      %174 = sbr.rel (0) target = $region105
    $region104: #{sd3_transformer_forward.1} parent=1 // pred_region
      _
    $region105: #{sd3_transformer_forward.1} parent=1 // pred_fallthru
      _
    // Predicated region
    $region106: #{sd3_transformer_forward.1} parent=1 // pred_check
      _
    $region107: #{sd3_transformer_forward.1} parent=1 // pred_check_branch
      %176 = sbr.rel (0) target = $region109
    $region108: #{sd3_transformer_forward.1} parent=1 // pred_region
      _
    $region109: #{sd3_transformer_forward.1} parent=1 // pred_fallthru
      _
    // Predicated region
    $region110: #{sd3_transformer_forward.1} parent=1 // pred_check
      _
    $region111: #{sd3_transformer_forward.1} parent=1 // pred_check_branch
      %178 = sbr.rel (0) target = $region113
    $region112: #{sd3_transformer_forward.1} parent=1 // pred_region
      _
    $region113: #{sd3_transformer_forward.1} parent=1 // pred_fallthru
      _
    // Predicated region
    $region114: #{sd3_transformer_forward.1} parent=1 // pred_check
      _
    $region115: #{sd3_transformer_forward.1} parent=1 // pred_check_branch
      %180 = sbr.rel (0) target = $region117
    $region116: #{sd3_transformer_forward.1} parent=1 // pred_region
      _
    $region117: #{sd3_transformer_forward.1} parent=1 // pred_fallthru
      _
    // Predicated region
    $region118: #{sd3_transformer_forward.1} parent=1 // pred_check
      _
    $region119: #{sd3_transformer_forward.1} parent=1 // pred_check_branch
      %182 = sbr.rel (0) target = $region121
    $region120: #{sd3_transformer_forward.1} parent=1 // pred_region
      _
    $region121: #{sd3_transformer_forward.1} parent=1 // pred_fallthru
      _
    // Predicated region
    $region122: #{sd3_transformer_forward.1} parent=1 // pred_check
      _
    $region123: #{sd3_transformer_forward.1} parent=1 // pred_check_branch
      %184 = sbr.rel (0) target = $region125
    $region124: #{sd3_transformer_forward.1} parent=1 // pred_region
      %s186 = ssub.s32 16, 16
      %187 = vsyncadd [#allocation3], %s186
      %s189 = sshll.u32 [#allocation2], 4
      %s190 = int_to_ptr.vmem [resolvable:$true] %s189
      %192 = dma.hbm_to_vmem [thread:$0]  %s61, 16, %s190, [#allocation3]
    $region125: #{sd3_transformer_forward.1} parent=1 // pred_fallthru
      _
    // Predicated region
    $region126: #{sd3_transformer_forward.1} parent=1 // pred_check
      _
    $region127: #{sd3_transformer_forward.1} parent=1 // pred_check_branch
      %194 = sbr.rel (0) target = $region129
    $region128: #{sd3_transformer_forward.1} parent=1 // pred_region
      _
    $region129: #{sd3_transformer_forward.1} parent=1 // pred_fallthru
      _
    // Predicated region
    $region130: #{sd3_transformer_forward.1} parent=1 // pred_check
      _
    $region131: #{sd3_transformer_forward.1} parent=1 // pred_check_branch
      %196 = sbr.rel (0) target = $region133
    $region132: #{sd3_transformer_forward.1} parent=1 // pred_region
      %s198 = ssub.s32 16, 16
      %199 = vsyncadd [#allocation5], %s198
      %s201 = sshll.u32 [#allocation4], 4
      %s202 = int_to_ptr.vmem [resolvable:$true] %s201
      %204 = dma.hbm_to_vmem [thread:$0]  %s65, 16, %s202, [#allocation5]
    $region133: #{sd3_transformer_forward.1} parent=1 // pred_fallthru
      _
    // Predicated region
    $region134: #{sd3_transformer_forward.1} parent=1 // pred_check
      _
    $region135: #{sd3_transformer_forward.1} parent=1 // pred_check_branch
      %206 = sbr.rel (0) target = $region137
    $region136: #{sd3_transformer_forward.1} parent=1 // pred_region
      _
    $region137: #{sd3_transformer_forward.1} parent=1 // pred_fallthru
      _
    // Predicated region
    $region138: #{sd3_transformer_forward.1} parent=1 // pred_check
      _
    $region139: #{sd3_transformer_forward.1} parent=1 // pred_check_branch
      %208 = sbr.rel (0) target = $region141
    $region140: #{sd3_transformer_forward.1} parent=1 // pred_region
      %s210 = ssub.s32 16, 16
      %211 = vsyncadd [#allocation5], %s210
      %s213 = sshll.u32 [#allocation6], 4
      %s214 = int_to_ptr.vmem [resolvable:$true] %s213
      %216 = dma.hbm_to_vmem [thread:$0]  %s69, 16, %s214, [#allocation5]
    $region141: #{sd3_transformer_forward.1} parent=1 // pred_fallthru
      _
    // Predicated region
    $region142: #{sd3_transformer_forward.1} parent=1 // pred_check
      _
    $region143: #{sd3_transformer_forward.1} parent=1 // pred_check_branch
      %218 = sbr.rel (0) target = $region145
    $region144: #{sd3_transformer_forward.1} parent=1 // pred_region
      _
    $region145: #{sd3_transformer_forward.1} parent=1 // pred_fallthru
      _
    // Predicated region
    $region146: #{sd3_transformer_forward.1} parent=1 // pred_check
      _
    $region147: #{sd3_transformer_forward.1} parent=1 // pred_check_branch
      %220 = sbr.rel (0) target = $region149
    $region148: #{sd3_transformer_forward.1} parent=1 // pred_region
      %s222 = ssub.s32 16, 16
      %223 = vsyncadd [#allocation8], %s222
      %s225 = sshll.u32 [#allocation7], 4
      %s226 = int_to_ptr.vmem [resolvable:$true] %s225
      %228 = dma.hbm_to_vmem [thread:$0]  %s73, 16, %s226, [#allocation8]
    $region149: #{sd3_transformer_forward.1} parent=1 // pred_fallthru
      _
    // Predicated region
    $region150: #{sd3_transformer_forward.1} parent=1 // pred_check
      _
    $region151: #{sd3_transformer_forward.1} parent=1 // pred_check_branch
      %230 = sbr.rel (0) target = $region153
    $region152: #{sd3_transformer_forward.1} parent=1 // pred_region
      _
    $region153: #{sd3_transformer_forward.1} parent=1 // pred_fallthru
      _
    // Predicated region
    $region154: #{sd3_transformer_forward.1} parent=1 // pred_check
      _
    $region155: #{sd3_transformer_forward.1} parent=1 // pred_check_branch
      %232 = sbr.rel (0) target = $region157
    $region156: #{sd3_transformer_forward.1} parent=1 // pred_region
      _
    $region157: #{sd3_transformer_forward.1} parent=1 // pred_fallthru
      _
    // Predicated region
    $region158: #{sd3_transformer_forward.1} parent=1 // pred_check
      _
    $region159: #{sd3_transformer_forward.1} parent=1 // pred_check_branch
      %234 = sbr.rel (0) target = $region161
    $region160: #{sd3_transformer_forward.1} parent=1 // pred_region
      _
    $region161: #{sd3_transformer_forward.1} parent=1 // pred_fallthru
      _
    // Predicated region
    $region162: #{sd3_transformer_forward.1} parent=1 // pred_check
      _
    $region163: #{sd3_transformer_forward.1} parent=1 // pred_check_branch
      %236 = sbr.rel (0) target = $region165
    $region164: #{sd3_transformer_forward.1} parent=1 // pred_region
      %s238 = ssub.s32 16, 16
      %239 = vsyncadd [#allocation8], %s238
      %s241 = sshll.u32 [#allocation9], 4
      %s242 = int_to_ptr.vmem [resolvable:$true] %s241
      %244 = dma.hbm_to_vmem [thread:$0]  %s81, 16, %s242, [#allocation8]
    $region165: #{sd3_transformer_forward.1} parent=1 // pred_fallthru
      _
    // Predicated region
    $region166: #{sd3_transformer_forward.1} parent=1 // pred_check
      _
    $region167: #{sd3_transformer_forward.1} parent=1 // pred_check_branch
      %246 = sbr.rel (0) target = $region169
    $region168: #{sd3_transformer_forward.1} parent=1 // pred_region
      _
    $region169: #{sd3_transformer_forward.1} parent=1 // pred_fallthru
      _
    // Predicated region
    $region170: #{sd3_transformer_forward.1} parent=1 // pred_check
      _
    $region171: #{sd3_transformer_forward.1} parent=1 // pred_check_branch
      %248 = sbr.rel (0) target = $region173
    $region172: #{sd3_transformer_forward.1} parent=1 // pred_region
      %s250 = ssub.s32 16, 16
      %251 = vsyncadd [#allocation11], %s250
      %s253 = sshll.u32 [#allocation10], 4
      %s254 = int_to_ptr.vmem [resolvable:$true] %s253
      %256 = dma.hbm_to_vmem [thread:$0]  %s85, 16, %s254, [#allocation11]
    $region173: #{sd3_transformer_forward.1} parent=1 // pred_fallthru
      _
    // Predicated region
    $region174: #{sd3_transformer_forward.1} parent=1 // pred_check
      _
    $region175: #{sd3_transformer_forward.1} parent=1 // pred_check_branch
      %258 = sbr.rel (0) target = $region177
    $region176: #{sd3_transformer_forward.1} parent=1 // pred_region
      _
    $region177: #{sd3_transformer_forward.1} parent=1 // pred_fallthru
      _
    // Predicated region
    $region178: #{sd3_transformer_forward.1} parent=1 // pred_check
      _
    $region179: #{sd3_transformer_forward.1} parent=1 // pred_check_branch
      %260 = sbr.rel (0) target = $region181
    $region180: #{sd3_transformer_forward.1} parent=1 // pred_region
      %s262 = ssub.s32 16, 16
      %263 = vsyncadd [#allocation11], %s262
      %s265 = sshll.u32 [#allocation12], 4
      %s266 = int_to_ptr.vmem [resolvable:$true] %s265
      %268 = dma.hbm_to_vmem [thread:$0]  %s89, 16, %s266, [#allocation11]
    $region181: #{sd3_transformer_forward.1} parent=1 // pred_fallthru
      _
    // Predicated region
    $region182: #{sd3_transformer_forward.1} parent=1 // pred_check
      _
    $region183: #{sd3_transformer_forward.1} parent=1 // pred_check_branch
      %270 = sbr.rel (0) target = $region185
    $region184: #{sd3_transformer_forward.1} parent=1 // pred_region
      _
    $region185: #{sd3_transformer_forward.1} parent=1 // pred_fallthru
      _
    // Predicated region
    $region186: #{sd3_transformer_forward.1} parent=1 // pred_check
      _
    $region187: #{sd3_transformer_forward.1} parent=1 // pred_check_branch
      %272 = sbr.rel (0) target = $region189
    $region188: #{sd3_transformer_forward.1} parent=1 // pred_region
      %s274 = ssub.s32 16, 16
      %275 = vsyncadd [#allocation14], %s274
      %s277 = sshll.u32 [#allocation13], 4
      %s278 = int_to_ptr.vmem [resolvable:$true] %s277
      %280 = dma.hbm_to_vmem [thread:$0]  %s93, 16, %s278, [#allocation14]
    $region189: #{sd3_transformer_forward.1} parent=1 // pred_fallthru
      _
    // Predicated region
    $region190: #{sd3_transformer_forward.1} parent=1 // pred_check
      _
    $region191: #{sd3_transformer_forward.1} parent=1 // pred_check_branch
      %282 = sbr.rel (0) target = $region193
    $region192: #{sd3_transformer_forward.1} parent=1 // pred_region
      _
    $region193: #{sd3_transformer_forward.1} parent=1 // pred_fallthru
      _
    // Predicated region
    $region194: #{sd3_transformer_forward.1} parent=1 // pred_check
      _
    $region195: #{sd3_transformer_forward.1} parent=1 // pred_check_branch
      %284 = sbr.rel (0) target = $region197
    $region196: #{sd3_transformer_forward.1} parent=1 // pred_region
      %s286 = ssub.s32 16, 16
      %287 = vsyncadd [#allocation14], %s286
      %s289 = sshll.u32 [#allocation15], 4
      %s290 = int_to_ptr.vmem [resolvable:$true] %s289
      %292 = dma.hbm_to_vmem [thread:$0]  %s97, 16, %s290, [#allocation14]
    $region197: #{sd3_transformer_forward.1} parent=1 // pred_fallthru
      _
    // Predicated region
    $region198: #{sd3_transformer_forward.1} parent=1 // pred_check
      _
    $region199: #{sd3_transformer_forward.1} parent=1 // pred_check_branch
      %294 = sbr.rel (0) target = $region201
    $region200: #{sd3_transformer_forward.1} parent=1 // pred_region
      _
    $region201: #{sd3_transformer_forward.1} parent=1 // pred_fallthru
      _
    // Predicated region
    $region202: #{sd3_transformer_forward.1} parent=1 // pred_check
      _
    $region203: #{sd3_transformer_forward.1} parent=1 // pred_check_branch
      %296 = sbr.rel (0) target = $region205
    $region204: #{sd3_transformer_forward.1} parent=1 // pred_region
      %s298 = ssub.s32 16, 16
      %299 = vsyncadd [#allocation17], %s298
      %s301 = sshll.u32 [#allocation16], 4
      %s302 = int_to_ptr.vmem [resolvable:$true] %s301
      %304 = dma.hbm_to_vmem [thread:$0]  %s101, 16, %s302, [#allocation17]
    $region205: #{sd3_transformer_forward.1} parent=1 // pred_fallthru
      _
    // Predicated region
    $region206: #{sd3_transformer_forward.1} parent=1 // pred_check
      _
    $region207: #{sd3_transformer_forward.1} parent=1 // pred_check_branch
      %306 = sbr.rel (0) target = $region209
    $region208: #{sd3_transformer_forward.1} parent=1 // pred_region
      _
    $region209: #{sd3_transformer_forward.1} parent=1 // pred_fallthru
      _
    // Predicated region
    $region210: #{sd3_transformer_forward.1} parent=1 // pred_check
      _
    $region211: #{sd3_transformer_forward.1} parent=1 // pred_check_branch
      %308 = sbr.rel (0) target = $region213
    $region212: #{sd3_transformer_forward.1} parent=1 // pred_region
      %s310 = ssub.s32 16, 16
      %311 = vsyncadd [#allocation17], %s310
      %s313 = sshll.u32 [#allocation18], 4
      %s314 = int_to_ptr.vmem [resolvable:$true] %s313
      %316 = dma.hbm_to_vmem [thread:$0]  %s105, 16, %s314, [#allocation17]
    $region213: #{sd3_transformer_forward.1} parent=1 // pred_fallthru
      _
    // Predicated region
    $region214: #{sd3_transformer_forward.1} parent=1 // pred_check
      _
    $region215: #{sd3_transformer_forward.1} parent=1 // pred_check_branch
      %318 = sbr.rel (0) target = $region217
    $region216: #{sd3_transformer_forward.1} parent=1 // pred_region
      _
    $region217: #{sd3_transformer_forward.1} parent=1 // pred_fallthru
      _
    // Predicated region
    $region218: #{sd3_transformer_forward.1} parent=1 // pred_check
      _
    $region219: #{sd3_transformer_forward.1} parent=1 // pred_check_branch
      %320 = sbr.rel (0) target = $region221
    $region220: #{sd3_transformer_forward.1} parent=1 // pred_region
      %s322 = ssub.s32 16, 16
      %323 = vsyncadd [#allocation20], %s322
      %s325 = sshll.u32 [#allocation19], 4
      %s326 = int_to_ptr.vmem [resolvable:$true] %s325
      %328 = dma.hbm_to_vmem [thread:$0]  %s109, 16, %s326, [#allocation20]
    $region221: #{sd3_transformer_forward.1} parent=1 // pred_fallthru
      _
    // Predicated region
    $region222: #{sd3_transformer_forward.1} parent=1 // pred_check
      _
    $region223: #{sd3_transformer_forward.1} parent=1 // pred_check_branch
      %330 = sbr.rel (0) target = $region225
    $region224: #{sd3_transformer_forward.1} parent=1 // pred_region
      %331 = dma.done [#allocation3], 16
    $region225: #{sd3_transformer_forward.1} parent=1 // pred_fallthru
      _
    // Predicated region
    $region226: #{sd3_transformer_forward.1} parent=1 // pred_check
      _
    $region227: #{sd3_transformer_forward.1} parent=1 // pred_check_branch
      %333 = sbr.rel (0) target = $region229
    $region228: #{sd3_transformer_forward.1} parent=1 // pred_region
      %334 = dma.done [#allocation5], 16
    $region229: #{sd3_transformer_forward.1} parent=1 // pred_fallthru
      _
    // Predicated region
    $region230: #{sd3_transformer_forward.1} parent=1 // pred_check
      _
    $region231: #{sd3_transformer_forward.1} parent=1 // pred_check_branch
      %336 = sbr.rel (0) target = $region233
    $region232: #{sd3_transformer_forward.1} parent=1 // pred_region
      %337 = dma.done [#allocation5], 16
    $region233: #{sd3_transformer_forward.1} parent=1 // pred_fallthru
      _
    // Predicated region
    $region234: #{sd3_transformer_forward.1} parent=1 // pred_check
      _
    $region235: #{sd3_transformer_forward.1} parent=1 // pred_check_branch
      %339 = sbr.rel (0) target = $region237
    $region236: #{sd3_transformer_forward.1} parent=1 // pred_region
      %340 = dma.done [#allocation8], 16
    $region237: #{sd3_transformer_forward.1} parent=1 // pred_fallthru
      _
    // Predicated region
    $region238: #{sd3_transformer_forward.1} parent=1 // pred_check
      _
    $region239: #{sd3_transformer_forward.1} parent=1 // pred_check_branch
      %342 = sbr.rel (0) target = $region241
    $region240: #{sd3_transformer_forward.1} parent=1 // pred_region
      %343 = dma.done [#allocation8], 16
    $region241: #{sd3_transformer_forward.1} parent=1 // pred_fallthru
      _
    // Predicated region
    $region242: #{sd3_transformer_forward.1} parent=1 // pred_check
      _
    $region243: #{sd3_transformer_forward.1} parent=1 // pred_check_branch
      %345 = sbr.rel (0) target = $region245
    $region244: #{sd3_transformer_forward.1} parent=1 // pred_region
      %346 = dma.done [#allocation11], 16
    $region245: #{sd3_transformer_forward.1} parent=1 // pred_fallthru
      _
    // Predicated region
    $region246: #{sd3_transformer_forward.1} parent=1 // pred_check
      _
    $region247: #{sd3_transformer_forward.1} parent=1 // pred_check_branch
      %348 = sbr.rel (0) target = $region249
    $region248: #{sd3_transformer_forward.1} parent=1 // pred_region
      %349 = dma.done [#allocation11], 16
    $region249: #{sd3_transformer_forward.1} parent=1 // pred_fallthru
      _
    // Predicated region
    $region250: #{sd3_transformer_forward.1} parent=1 // pred_check
      _
    $region251: #{sd3_transformer_forward.1} parent=1 // pred_check_branch
      %351 = sbr.rel (0) target = $region253
    $region252: #{sd3_transformer_forward.1} parent=1 // pred_region
      %352 = dma.done [#allocation14], 16
    $region253: #{sd3_transformer_forward.1} parent=1 // pred_fallthru
      _
    // Predicated region
    $region254: #{sd3_transformer_forward.1} parent=1 // pred_check
      _
    $region255: #{sd3_transformer_forward.1} parent=1 // pred_check_branch
      %354 = sbr.rel (0) target = $region257
    $region256: #{sd3_transformer_forward.1} parent=1 // pred_region
      %355 = dma.done [#allocation14], 16
    $region257: #{sd3_transformer_forward.1} parent=1 // pred_fallthru
      _
    // Predicated region
    $region258: #{sd3_transformer_forward.1} parent=1 // pred_check
      _
    $region259: #{sd3_transformer_forward.1} parent=1 // pred_check_branch
      %357 = sbr.rel (0) target = $region261
    $region260: #{sd3_transformer_forward.1} parent=1 // pred_region
      %358 = dma.done [#allocation17], 16
    $region261: #{sd3_transformer_forward.1} parent=1 // pred_fallthru
      _
    // Predicated region
    $region262: #{sd3_transformer_forward.1} parent=1 // pred_check
      _
    $region263: #{sd3_transformer_forward.1} parent=1 // pred_check_branch
      %360 = sbr.rel (0) target = $region265
    $region264: #{sd3_transformer_forward.1} parent=1 // pred_region
      %361 = dma.done [#allocation17], 16
    $region265: #{sd3_transformer_forward.1} parent=1 // pred_fallthru
      _
    // Predicated region
    $region266: #{sd3_transformer_forward.1} parent=1 // pred_check
      _
    $region267: #{sd3_transformer_forward.1} parent=1 // pred_check_branch
      %363 = sbr.rel (0) target = $region269
    $region268: #{sd3_transformer_forward.1} parent=1 // pred_region
      %364 = dma.done [#allocation20], 16
    $region269: #{sd3_transformer_forward.1} parent=1 // pred_fallthru
      _
    %v368 = vld [vmem:[%s9] sm:$0xf]
    %v371 = vunpack.c.l.s4 1983009808
    %v372 = vunpack.c.0.s8 %v371
    %v373 = vlaneseq
    %v374 = vshrl.u32 %v373, 7
    %v375 = vsub.s32 %v372, %v374
    %v376 = vrot.slane %v368, %v375
    %v377 = vcombine.high %v376, %v376
    %v380 = vpack.c.bf16 %v376, %v376
    %v381 = vpack.c.bf16 %v377, %v377
    %v382 = vld [vmem:[%s11] sm:$0xf]
    %v383 = vld [vmem:[%s11 + $0x4] sm:$0xf]
    %v384 = vld [vmem:[%s11 + $0x8] sm:$0xf]
    %v385 = vld [vmem:[%s11 + $0xc] sm:$0xf]
    %v386 = vld [vmem:[%s11 + $0x10] sm:$0xf]
    %v387 = vld [vmem:[%s11 + $0x14] sm:$0xf]
    %v388 = vld [vmem:[%s11 + $0x18] sm:$0xf]
    %v389 = vld [vmem:[%s11 + $0x1c] sm:$0xf]
    %v390 = vld [vmem:[%s11 + $0x20] sm:$0xf]
    %v391 = vld [vmem:[%s11 + $0x24] sm:$0xf]
    %v392 = vld [vmem:[%s11 + $0x28] sm:$0xf]
    %v393 = vld [vmem:[%s11 + $0x2c] sm:$0xf]
    %v394 = vld [vmem:[%s11 + $0x30] sm:$0xf]
    %v395 = vld [vmem:[%s11 + $0x34] sm:$0xf]
    %v396 = vld [vmem:[%s11 + $0x38] sm:$0xf]
    %v397 = vld [vmem:[%s11 + $0x3c] sm:$0xf]
    %v398 = vld [vmem:[%s11 + $0x40] sm:$0xf]
    %v399 = vld [vmem:[%s11 + $0x44] sm:$0xf]
    %v400 = vld [vmem:[%s11 + $0x48] sm:$0xf]
    %v401 = vld [vmem:[%s11 + $0x4c] sm:$0xf]
    %v402 = vld [vmem:[%s11 + $0x50] sm:$0xf]
    %v403 = vld [vmem:[%s11 + $0x54] sm:$0xf]
    %v404 = vld [vmem:[%s11 + $0x58] sm:$0xf]
    %v405 = vld [vmem:[%s11 + $0x5c] sm:$0xf]
    %v406 = vld [vmem:[%s11 + $0x60] sm:$0xf]
    %v407 = vld [vmem:[%s11 + $0x64] sm:$0xf]
    %v408 = vld [vmem:[%s11 + $0x68] sm:$0xf]
    %v409 = vld [vmem:[%s11 + $0x6c] sm:$0xf]
    %v410 = vld [vmem:[%s11 + $0x70] sm:$0xf]
    %v411 = vld [vmem:[%s11 + $0x74] sm:$0xf]
    %v412 = vld [vmem:[%s11 + $0x78] sm:$0xf]
    %v413 = vld [vmem:[%s11 + $0x7c] sm:$0xf]
    %v414 = vld [vmem:[%s13] sm:$0x1]
    %v416 = vlaneseq
    %v417 = vshrl.u32 %v416, 7
    %v418 = vsub.s32 0, %v417
    %v419 = vrot.slane %v414, %v418
    %v453 = vunpack.c.l.b16 %v382
    %v454 = vunpack.c.l.b16 %v383
    %v455 = vunpack.c.l.b16 %v384
    %v456 = vunpack.c.l.b16 %v385
    %v457 = vunpack.c.l.b16 %v386
    %v458 = vunpack.c.l.b16 %v387
    %v459 = vunpack.c.l.b16 %v388
    %v460 = vunpack.c.l.b16 %v389
    %v461 = vunpack.c.l.b16 %v390
    %v462 = vunpack.c.l.b16 %v391
    %v463 = vunpack.c.l.b16 %v392
    %v464 = vunpack.c.l.b16 %v393
    %v465 = vunpack.c.l.b16 %v394
    %v466 = vunpack.c.l.b16 %v395
    %v467 = vunpack.c.l.b16 %v396
    %v468 = vunpack.c.l.b16 %v397
    %v469 = vunpack.c.l.b16 %v398
    %v470 = vunpack.c.l.b16 %v399
    %v471 = vunpack.c.l.b16 %v400
    %v472 = vunpack.c.l.b16 %v401
    %v473 = vunpack.c.l.b16 %v402
    %v474 = vunpack.c.l.b16 %v403
    %v475 = vunpack.c.l.b16 %v404
    %v476 = vunpack.c.l.b16 %v405
    %v477 = vunpack.c.l.b16 %v406
    %v478 = vunpack.c.l.b16 %v407
    %v479 = vunpack.c.l.b16 %v408
    %v480 = vunpack.c.l.b16 %v409
    %v481 = vunpack.c.l.b16 %v410
    %v482 = vunpack.c.l.b16 %v411
    %v483 = vunpack.c.l.b16 %v412
    %v484 = vunpack.c.l.b16 %v413
    %v485 = vpack.c.b16 %v454, %v453
    %v486 = vpack.c.b16 %v456, %v455
    %v487 = vpack.c.b16 %v458, %v457
    %v488 = vpack.c.b16 %v460, %v459
    %v489 = vpack.c.b16 %v462, %v461
    %v490 = vpack.c.b16 %v464, %v463
    %v491 = vpack.c.b16 %v466, %v465
    %v492 = vpack.c.b16 %v468, %v467
    %v493 = vpack.c.b16 %v470, %v469
    %v494 = vpack.c.b16 %v472, %v471
    %v495 = vpack.c.b16 %v474, %v473
    %v496 = vpack.c.b16 %v476, %v475
    %v497 = vpack.c.b16 %v478, %v477
    %v498 = vpack.c.b16 %v480, %v479
    %v499 = vpack.c.b16 %v482, %v481
    %v500 = vpack.c.b16 %v484, %v483
    %517 = vmatprep.subr.bf16.mxu0 0
    %518 = vmatpush1.bf16.msra.mxu0 %v485
    %519 = vmatprep.subr.bf16.mxu0 0
    %520 = vmatpush1.bf16.msra.mxu0 %v486
    %521 = vmatprep.subr.bf16.mxu0 0
    %522 = vmatpush1.bf16.msra.mxu0 %v487
    %523 = vmatprep.subr.bf16.mxu0 0
    %524 = vmatpush1.bf16.msra.mxu0 %v488
    %525 = vmatprep.subr.bf16.mxu0 0
    %526 = vmatpush1.bf16.msra.mxu0 %v489
    %527 = vmatprep.subr.bf16.mxu0 0
    %528 = vmatpush1.bf16.msra.mxu0 %v490
    %529 = vmatprep.subr.bf16.mxu0 0
    %530 = vmatpush1.bf16.msra.mxu0 %v491
    %531 = vmatprep.subr.bf16.mxu0 0
    %532 = vmatpush1.bf16.msra.mxu0 %v492
    %533 = vmatprep.subr.bf16.mxu0 0
    %534 = vmatpush1.bf16.msra.mxu0 %v493
    %535 = vmatprep.subr.bf16.mxu0 0
    %536 = vmatpush1.bf16.msra.mxu0 %v494
    %537 = vmatprep.subr.bf16.mxu0 0
    %538 = vmatpush1.bf16.msra.mxu0 %v495
    %539 = vmatprep.subr.bf16.mxu0 0
    %540 = vmatpush1.bf16.msra.mxu0 %v496
    %541 = vmatprep.subr.bf16.mxu0 0
    %542 = vmatpush1.bf16.msra.mxu0 %v497
    %543 = vmatprep.subr.bf16.mxu0 0
    %544 = vmatpush1.bf16.msra.mxu0 %v498
    %545 = vmatprep.subr.bf16.mxu0 0
    %546 = vmatpush1.bf16.msra.mxu0 %v499
    %547 = vmatprep.subr.bf16.mxu0 0
    %548 = vmatpush1.bf16.msra.mxu0 %v500
    %549 = vmatprep.mubr.bf16.mxu0 %v381
    %550 = vmatmul.mubr.bf16.gmra.mrb[0].mxu0 %v380
    %v551 = vpop.f32.mrb[0].mxu0
    %v552 = vadd.f32 %v419, %v551
    %v553 = vpop.f32.mrb[0].mxu0
    %v554 = vpop.f32.mrb[0].mxu0
    %v555 = vpop.f32.mrb[0].mxu0
    %556 = vdwg.mxu0
    %v557 = vxor.u32 %v552, 2147483648
    %v558 = vmul.f32 %v557, 1.442695
    %v559 = vpow.pop %v558
    %v560 = vadd.f32 %v559, 1.0
    %v561 = vrcp.pop %v560
    %v562 = vmul.f32 1.0, %v561
    %v563 = vmul.f32 %v552, %v562
    %v564 = vpack.c.bf16 %v563, %v563
    %v565 = vld [vmem:[%s15] sm:$0xf]
    %v566 = vld [vmem:[%s15 + $0x4] sm:$0xf]
    %v567 = vld [vmem:[%s15 + $0x8] sm:$0xf]
    %v568 = vld [vmem:[%s15 + $0xc] sm:$0xf]
    %v569 = vld [vmem:[%s17] sm:$0x1]
    %v571 = vlaneseq
    %v572 = vshrl.u32 %v571, 7
    %v573 = vsub.s32 0, %v572
    %v574 = vrot.slane %v569, %v573
    %v580 = vunpack.c.l.b16 %v565
    %v581 = vunpack.c.l.b16 %v566
    %v582 = vunpack.c.l.b16 %v567
    %v583 = vunpack.c.l.b16 %v568
    %v584 = vpack.c.b16 %v581, %v580
    %v585 = vpack.c.b16 %v583, %v582
    %vm588 = vcmask 261120
    %v590 = vsel %vm588, %v564, 0
    %592 = vmatprep.subr.bf16.mxu0 0
    %593 = vmatpush1.bf16.msra.mxu0 %v584
    %594 = vmatprep.subr.bf16.mxu0 0
    %595 = vmatpush1.bf16.msra.mxu0 %v585
    %596 = vmatprep.subr.bf16.mxu0 0
    %597 = vmatpush1.bf16.msra.mxu0 0
    %598 = vmatprep.subr.bf16.mxu0 0
    %599 = vmatpush1.bf16.msra.mxu0 0
    %600 = vmatprep.subr.bf16.mxu0 0
    %601 = vmatpush1.bf16.msra.mxu0 0
    %602 = vmatprep.subr.bf16.mxu0 0
    %603 = vmatpush1.bf16.msra.mxu0 0
    %604 = vmatprep.subr.bf16.mxu0 0
    %605 = vmatpush1.bf16.msra.mxu0 0
    %606 = vmatprep.subr.bf16.mxu0 0
    %607 = vmatpush1.bf16.msra.mxu0 0
    %608 = vmatprep.subr.bf16.mxu0 0
    %609 = vmatpush1.bf16.msra.mxu0 0
    %610 = vmatprep.subr.bf16.mxu0 0
    %611 = vmatpush1.bf16.msra.mxu0 0
    %612 = vmatprep.subr.bf16.mxu0 0
    %613 = vmatpush1.bf16.msra.mxu0 0
    %614 = vmatprep.subr.bf16.mxu0 0
    %615 = vmatpush1.bf16.msra.mxu0 0
    %616 = vmatprep.subr.bf16.mxu0 0
    %617 = vmatpush1.bf16.msra.mxu0 0
    %618 = vmatprep.subr.bf16.mxu0 0
    %619 = vmatpush1.bf16.msra.mxu0 0
    %620 = vmatprep.subr.bf16.mxu0 0
    %621 = vmatpush1.bf16.msra.mxu0 0
    %622 = vmatprep.subr.bf16.mxu0 0
    %623 = vmatpush1.bf16.msra.mxu0 0
    %624 = vmatprep.mubr.bf16.mxu0 0
    %625 = vmatmul.mubr.bf16.gmra.mrb[0].mxu0 %v590
    %v626 = vpop.f32.mrb[0].mxu0
    %v627 = vadd.f32 %v574, %v626
    %v628 = vpop.f32.mrb[0].mxu0
    %v629 = vpop.f32.mrb[0].mxu0
    %v630 = vpop.f32.mrb[0].mxu0
    %631 = vdwg.mxu0
    %v632 = vld [vmem:[%s19] sm:$0x3]
    %v633 = vpack.c.bf16 %v632, %v632
    %v634 = vld [vmem:[%s21] sm:$0xf]
    %v635 = vld [vmem:[%s21 + $0x4] sm:$0xf]
    %v636 = vld [vmem:[%s21 + $0x8] sm:$0xf]
    %v637 = vld [vmem:[%s21 + $0xc] sm:$0xf]
    %v638 = vld [vmem:[%s23] sm:$0x1]
    %v640 = vlaneseq
    %v641 = vshrl.u32 %v640, 7
    %v642 = vsub.s32 0, %v641
    %v643 = vrot.slane %v638, %v642
    %v649 = vunpack.c.l.b16 %v634
    %v650 = vunpack.c.l.b16 %v635
    %v651 = vunpack.c.l.b16 %v636
    %v652 = vunpack.c.l.b16 %v637
    %v653 = vpack.c.b16 %v650, %v649
    %v654 = vpack.c.b16 %v652, %v651
    %v658 = vsel %vm588, %v633, 0
    %660 = vmatprep.subr.bf16.mxu0 0
    %661 = vmatpush1.bf16.msra.mxu0 %v653
    %662 = vmatprep.subr.bf16.mxu0 0
    %663 = vmatpush1.bf16.msra.mxu0 %v654
    %664 = vmatprep.subr.bf16.mxu0 0
    %665 = vmatpush1.bf16.msra.mxu0 0
    %666 = vmatprep.subr.bf16.mxu0 0
    %667 = vmatpush1.bf16.msra.mxu0 0
    %668 = vmatprep.subr.bf16.mxu0 0
    %669 = vmatpush1.bf16.msra.mxu0 0
    %670 = vmatprep.subr.bf16.mxu0 0
    %671 = vmatpush1.bf16.msra.mxu0 0
    %672 = vmatprep.subr.bf16.mxu0 0
    %673 = vmatpush1.bf16.msra.mxu0 0
    %674 = vmatprep.subr.bf16.mxu0 0
    %675 = vmatpush1.bf16.msra.mxu0 0
    %676 = vmatprep.subr.bf16.mxu0 0
    %677 = vmatpush1.bf16.msra.mxu0 0
    %678 = vmatprep.subr.bf16.mxu0 0
    %679 = vmatpush1.bf16.msra.mxu0 0
    %680 = vmatprep.subr.bf16.mxu0 0
    %681 = vmatpush1.bf16.msra.mxu0 0
    %682 = vmatprep.subr.bf16.mxu0 0
    %683 = vmatpush1.bf16.msra.mxu0 0
    %684 = vmatprep.subr.bf16.mxu0 0
    %685 = vmatpush1.bf16.msra.mxu0 0
    %686 = vmatprep.subr.bf16.mxu0 0
    %687 = vmatpush1.bf16.msra.mxu0 0
    %688 = vmatprep.subr.bf16.mxu0 0
    %689 = vmatpush1.bf16.msra.mxu0 0
    %690 = vmatprep.subr.bf16.mxu0 0
    %691 = vmatpush1.bf16.msra.mxu0 0
    %692 = vmatprep.mubr.bf16.mxu0 0
    %693 = vmatmul.mubr.bf16.gmra.mrb[0].mxu0 %v658
    %v694 = vpop.f32.mrb[0].mxu0
    %v695 = vadd.f32 %v643, %v694
    %v696 = vpop.f32.mrb[0].mxu0
    %v697 = vpop.f32.mrb[0].mxu0
    %v698 = vpop.f32.mrb[0].mxu0
    %699 = vdwg.mxu0
    %v700 = vxor.u32 %v695, 2147483648
    %v701 = vmul.f32 %v700, 1.442695
    %v702 = vpow.pop %v701
    %v703 = vadd.f32 %v702, 1.0
    %v704 = vrcp.pop %v703
    %v705 = vmul.f32 1.0, %v704
    %v706 = vmul.f32 %v695, %v705
    %v707 = vpack.c.bf16 %v706, %v706
    %v708 = vld [vmem:[%s25] sm:$0xf]
    %v709 = vld [vmem:[%s25 + $0x4] sm:$0xf]
    %v710 = vld [vmem:[%s25 + $0x8] sm:$0xf]
    %v711 = vld [vmem:[%s25 + $0xc] sm:$0xf]
    %v712 = vld [vmem:[%s27] sm:$0x1]
    %v714 = vlaneseq
    %v715 = vshrl.u32 %v714, 7
    %v716 = vsub.s32 0, %v715
    %v717 = vrot.slane %v712, %v716
    %v723 = vunpack.c.l.b16 %v708
    %v724 = vunpack.c.l.b16 %v709
    %v725 = vunpack.c.l.b16 %v710
    %v726 = vunpack.c.l.b16 %v711
    %v727 = vpack.c.b16 %v724, %v723
    %v728 = vpack.c.b16 %v726, %v725
    %v732 = vsel %vm588, %v707, 0
    %734 = vmatprep.subr.bf16.mxu0 0
    %735 = vmatpush1.bf16.msra.mxu0 %v727
    %736 = vmatprep.subr.bf16.mxu0 0
    %737 = vmatpush1.bf16.msra.mxu0 %v728
    %738 = vmatprep.subr.bf16.mxu0 0
    %739 = vmatpush1.bf16.msra.mxu0 0
    %740 = vmatprep.subr.bf16.mxu0 0
    %741 = vmatpush1.bf16.msra.mxu0 0
    %742 = vmatprep.subr.bf16.mxu0 0
    %743 = vmatpush1.bf16.msra.mxu0 0
    %744 = vmatprep.subr.bf16.mxu0 0
    %745 = vmatpush1.bf16.msra.mxu0 0
    %746 = vmatprep.subr.bf16.mxu0 0
    %747 = vmatpush1.bf16.msra.mxu0 0
    %748 = vmatprep.subr.bf16.mxu0 0
    %749 = vmatpush1.bf16.msra.mxu0 0
    %750 = vmatprep.subr.bf16.mxu0 0
    %751 = vmatpush1.bf16.msra.mxu0 0
    %752 = vmatprep.subr.bf16.mxu0 0
    %753 = vmatpush1.bf16.msra.mxu0 0
    %754 = vmatprep.subr.bf16.mxu0 0
    %755 = vmatpush1.bf16.msra.mxu0 0
    %756 = vmatprep.subr.bf16.mxu0 0
    %757 = vmatpush1.bf16.msra.mxu0 0
    %758 = vmatprep.subr.bf16.mxu0 0
    %759 = vmatpush1.bf16.msra.mxu0 0
    %760 = vmatprep.subr.bf16.mxu0 0
    %761 = vmatpush1.bf16.msra.mxu0 0
    %762 = vmatprep.subr.bf16.mxu0 0
    %763 = vmatpush1.bf16.msra.mxu0 0
    %764 = vmatprep.subr.bf16.mxu0 0
    %765 = vmatpush1.bf16.msra.mxu0 0
    %766 = vmatprep.mubr.bf16.mxu0 0
    %767 = vmatmul.mubr.bf16.gmra.mrb[0].mxu0 %v732
    %v768 = vpop.f32.mrb[0].mxu0
    %v769 = vadd.f32 %v717, %v768
    %v770 = vpop.f32.mrb[0].mxu0
    %v771 = vpop.f32.mrb[0].mxu0
    %v772 = vpop.f32.mrb[0].mxu0
    %773 = vdwg.mxu0
    %v774 = vadd.f32 %v627, %v769
    %v775 = vxor.u32 %v774, 2147483648
    %v776 = vmul.f32 %v775, 1.442695
    %v777 = vpow.pop %v776
    %v778 = vadd.f32 %v777, 1.0
    %v779 = vrcp.pop %v778
    %v780 = vmul.f32 1.0, %v779
    %v781 = vmul.f32 %v774, %v780
    %v782 = vpack.c.bf16 %v781, %v781
    %v783 = vld [vmem:[%s1] sm:$0xff]
    %v784 = vld [vmem:[%s1 + $0x8] sm:$0xff]
    %v785 = vld [vmem:[%s1 + $0x10] sm:$0xff]
    %v786 = vld [vmem:[%s1 + $0x18] sm:$0xff]
    %v787 = vld [vmem:[%s1 + $0x20] sm:$0xff]
    %v788 = vld [vmem:[%s1 + $0x28] sm:$0xff]
    %v789 = vld [vmem:[%s1 + $0x30] sm:$0xff]
    %v790 = vld [vmem:[%s1 + $0x38] sm:$0xff]
    %v791 = vld [vmem:[%s1 + $0x40] sm:$0xff]
    %v792 = vld [vmem:[%s1 + $0x48] sm:$0xff]
    %v793 = vld [vmem:[%s1 + $0x50] sm:$0xff]
    %v794 = vld [vmem:[%s1 + $0x58] sm:$0xff]
    %v795 = vld [vmem:[%s1 + $0x60] sm:$0xff]
    %v796 = vld [vmem:[%s1 + $0x68] sm:$0xff]
    %v797 = vld [vmem:[%s1 + $0x70] sm:$0xff]
    %v798 = vld [vmem:[%s1 + $0x78] sm:$0xff]
    %v799 = vpack.c.bf16 %v784, %v783
    %v800 = vpack.c.bf16 %v786, %v785
    %v801 = vpack.c.bf16 %v788, %v787
    %v802 = vpack.c.bf16 %v790, %v789
    %v803 = vpack.c.bf16 %v792, %v791
    %v804 = vpack.c.bf16 %v794, %v793
    %v805 = vpack.c.bf16 %v796, %v795
    %v806 = vpack.c.bf16 %v798, %v797
    %v807 = vld [vmem:[%s5] sm:$0xf]
    %v808 = vld [vmem:[%s5 + $0x4] sm:$0xf]
    %v809 = vld [vmem:[%s7] sm:$0x1]
    %v811 = vlaneseq
    %v812 = vshrl.u32 %v811, 7
    %v813 = vsub.s32 0, %v812
    %v814 = vrot.slane %v809, %v813
    %v818 = vunpack.c.l.b16 %v807
    %v819 = vunpack.c.l.b16 %v808
    %v820 = vpack.c.b16 %v819, %v818
    %vm822 = vcmask 130048
    %v824 = vsel %vm822, %v799, 0
    %v827 = vsel %vm822, %v800, 0
    %v830 = vsel %vm822, %v801, 0
    %v833 = vsel %vm822, %v802, 0
    %v836 = vsel %vm822, %v803, 0
    %v839 = vsel %vm822, %v804, 0
    %v842 = vsel %vm822, %v805, 0
    %v845 = vsel %vm822, %v806, 0
    %847 = vmatprep.subr.bf16.mxu0 0
    %848 = vmatpush1.bf16.msra.mxu0 %v820
    %849 = vmatprep.subr.bf16.mxu0 0
    %850 = vmatpush1.bf16.msra.mxu0 0
    %851 = vmatprep.subr.bf16.mxu0 0
    %852 = vmatpush1.bf16.msra.mxu0 0
    %853 = vmatprep.subr.bf16.mxu0 0
    %854 = vmatpush1.bf16.msra.mxu0 0
    %855 = vmatprep.subr.bf16.mxu0 0
    %856 = vmatpush1.bf16.msra.mxu0 0
    %857 = vmatprep.subr.bf16.mxu0 0
    %858 = vmatpush1.bf16.msra.mxu0 0
    %859 = vmatprep.subr.bf16.mxu0 0
    %860 = vmatpush1.bf16.msra.mxu0 0
    %861 = vmatprep.subr.bf16.mxu0 0
    %862 = vmatpush1.bf16.msra.mxu0 0
    %863 = vmatprep.subr.bf16.mxu0 0
    %864 = vmatpush1.bf16.msra.mxu0 0
    %865 = vmatprep.subr.bf16.mxu0 0
    %866 = vmatpush1.bf16.msra.mxu0 0
    %867 = vmatprep.subr.bf16.mxu0 0
    %868 = vmatpush1.bf16.msra.mxu0 0
    %869 = vmatprep.subr.bf16.mxu0 0
    %870 = vmatpush1.bf16.msra.mxu0 0
    %871 = vmatprep.subr.bf16.mxu0 0
    %872 = vmatpush1.bf16.msra.mxu0 0
    %873 = vmatprep.subr.bf16.mxu0 0
    %874 = vmatpush1.bf16.msra.mxu0 0
    %875 = vmatprep.subr.bf16.mxu0 0
    %876 = vmatpush1.bf16.msra.mxu0 0
    %877 = vmatprep.subr.bf16.mxu0 0
    %878 = vmatpush1.bf16.msra.mxu0 0
    %879 = vmatprep.mubr.bf16.mxu0 0
    %880 = vmatmul.mubr.bf16.gmra.mrb[0].mxu0 %v824
    %v881 = vpop.f32.mrb[0].mxu0
    %v882 = vadd.f32 %v814, %v881
    %v883 = vpop.f32.mrb[0].mxu0
    %v884 = vpop.f32.mrb[0].mxu0
    %v885 = vadd.f32 %v814, %v884
    %v886 = vpop.f32.mrb[0].mxu0
    %887 = vmatprep.mubr.bf16.mxu0 0
    %888 = vmatmul.mubr.bf16.gmra.mrb[0].mxu0 %v827
    %v889 = vpop.f32.mrb[0].mxu0
    %v890 = vadd.f32 %v814, %v889
    %v891 = vpop.f32.mrb[0].mxu0
    %v892 = vpop.f32.mrb[0].mxu0
    %v893 = vadd.f32 %v814, %v892
    %v894 = vpop.f32.mrb[0].mxu0
    %895 = vmatprep.mubr.bf16.mxu0 0
    %896 = vmatmul.mubr.bf16.gmra.mrb[0].mxu0 %v830
    %v897 = vpop.f32.mrb[0].mxu0
    %v898 = vadd.f32 %v814, %v897
    %v899 = vpop.f32.mrb[0].mxu0
    %v900 = vpop.f32.mrb[0].mxu0
    %v901 = vadd.f32 %v814, %v900
    %v902 = vpop.f32.mrb[0].mxu0
    %903 = vmatprep.mubr.bf16.mxu0 0
    %904 = vmatmul.mubr.bf16.gmra.mrb[0].mxu0 %v833
    %v905 = vpop.f32.mrb[0].mxu0
    %v906 = vadd.f32 %v814, %v905
    %v907 = vpop.f32.mrb[0].mxu0
    %v908 = vpop.f32.mrb[0].mxu0
    %v909 = vadd.f32 %v814, %v908
    %v910 = vpop.f32.mrb[0].mxu0
    %911 = vmatprep.mubr.bf16.mxu0 0
    %912 = vmatmul.mubr.bf16.gmra.mrb[0].mxu0 %v836
    %v913 = vpop.f32.mrb[0].mxu0
    %v914 = vadd.f32 %v814, %v913
    %v915 = vpop.f32.mrb[0].mxu0
    %v916 = vpop.f32.mrb[0].mxu0
    %v917 = vadd.f32 %v814, %v916
    %v918 = vpop.f32.mrb[0].mxu0
    %919 = vmatprep.mubr.bf16.mxu0 0
    %920 = vmatmul.mubr.bf16.gmra.mrb[0].mxu0 %v839
    %v921 = vpop.f32.mrb[0].mxu0
    %v922 = vadd.f32 %v814, %v921
    %v923 = vpop.f32.mrb[0].mxu0
    %v924 = vpop.f32.mrb[0].mxu0
    %v925 = vadd.f32 %v814, %v924
    %v926 = vpop.f32.mrb[0].mxu0
    %927 = vmatprep.mubr.bf16.mxu0 0
    %928 = vmatmul.mubr.bf16.gmra.mrb[0].mxu0 %v842
    %v929 = vpop.f32.mrb[0].mxu0
    %v930 = vadd.f32 %v814, %v929
    %v931 = vpop.f32.mrb[0].mxu0
    %v932 = vpop.f32.mrb[0].mxu0
    %v933 = vadd.f32 %v814, %v932
    %v934 = vpop.f32.mrb[0].mxu0
    %935 = vmatprep.mubr.bf16.mxu0 0
    %936 = vmatmul.mubr.bf16.gmra.mrb[0].mxu0 %v845
    %v937 = vpop.f32.mrb[0].mxu0
    %v938 = vadd.f32 %v814, %v937
    %v939 = vpop.f32.mrb[0].mxu0
    %v940 = vpop.f32.mrb[0].mxu0
    %v941 = vadd.f32 %v814, %v940
    %v942 = vpop.f32.mrb[0].mxu0
    %943 = vdwg.mxu0
    %v944 = vld [vmem:[%s3] sm:$0xff]
    %v945 = vld [vmem:[%s3 + $0x8] sm:$0xff]
    %v946 = vld [vmem:[%s3 + $0x10] sm:$0xff]
    %v947 = vld [vmem:[%s3 + $0x18] sm:$0xff]
    %v948 = vld [vmem:[%s3 + $0x20] sm:$0xff]
    %v949 = vld [vmem:[%s3 + $0x28] sm:$0xff]
    %v950 = vld [vmem:[%s3 + $0x30] sm:$0xff]
    %v951 = vld [vmem:[%s3 + $0x38] sm:$0xff]
    %v952 = vadd.f32 %v882, %v944
    %v953 = vadd.f32 %v885, %v945
    %v954 = vadd.f32 %v890, %v946
    %v955 = vadd.f32 %v893, %v947
    %v956 = vadd.f32 %v898, %v948
    %v957 = vadd.f32 %v901, %v949
    %v958 = vadd.f32 %v906, %v950
    %v959 = vadd.f32 %v909, %v951
    %v960 = vadd.f32 %v914, %v944
    %v961 = vadd.f32 %v917, %v945
    %v962 = vadd.f32 %v922, %v946
    %v963 = vadd.f32 %v925, %v947
    %v964 = vadd.f32 %v930, %v948
    %v965 = vadd.f32 %v933, %v949
    %v966 = vadd.f32 %v938, %v950
    %v967 = vadd.f32 %v941, %v951
    %v968 = vld [vmem:[%s29] sm:$0xff]
    %v969 = vld [vmem:[%s29 + $0x8] sm:$0xff]
    %v970 = vpack.c.bf16 %v969, %v968
    %v971 = vld [vmem:[%s31] sm:$0xf]
    %v972 = vld [vmem:[%s31 + $0x4] sm:$0xf]
    %v973 = vld [vmem:[%s31 + $0x8] sm:$0xf]
    %v974 = vld [vmem:[%s31 + $0xc] sm:$0xf]
    %v975 = vld [vmem:[%s33] sm:$0x1]
    %v977 = vlaneseq
    %v978 = vshrl.u32 %v977, 7
    %v979 = vsub.s32 0, %v978
    %v980 = vrot.slane %v975, %v979
    %v986 = vunpack.c.l.b16 %v971
    %v987 = vunpack.c.l.b16 %v972
    %v988 = vunpack.c.l.b16 %v973
    %v989 = vunpack.c.l.b16 %v974
    %v990 = vpack.c.b16 %v987, %v986
    %v991 = vpack.c.b16 %v989, %v988
    %v995 = vsel %vm588, %v970, 0
    %997 = vmatprep.subr.bf16.mxu0 0
    %998 = vmatpush1.bf16.msra.mxu0 %v990
    %999 = vmatprep.subr.bf16.mxu0 0
    %1000 = vmatpush1.bf16.msra.mxu0 %v991
    %1001 = vmatprep.subr.bf16.mxu0 0
    %1002 = vmatpush1.bf16.msra.mxu0 0
    %1003 = vmatprep.subr.bf16.mxu0 0
    %1004 = vmatpush1.bf16.msra.mxu0 0
    %1005 = vmatprep.subr.bf16.mxu0 0
    %1006 = vmatpush1.bf16.msra.mxu0 0
    %1007 = vmatprep.subr.bf16.mxu0 0
    %1008 = vmatpush1.bf16.msra.mxu0 0
    %1009 = vmatprep.subr.bf16.mxu0 0
    %1010 = vmatpush1.bf16.msra.mxu0 0
    %1011 = vmatprep.subr.bf16.mxu0 0
    %1012 = vmatpush1.bf16.msra.mxu0 0
    %1013 = vmatprep.subr.bf16.mxu0 0
    %1014 = vmatpush1.bf16.msra.mxu0 0
    %1015 = vmatprep.subr.bf16.mxu0 0
    %1016 = vmatpush1.bf16.msra.mxu0 0
    %1017 = vmatprep.subr.bf16.mxu0 0
    %1018 = vmatpush1.bf16.msra.mxu0 0
    %1019 = vmatprep.subr.bf16.mxu0 0
    %1020 = vmatpush1.bf16.msra.mxu0 0
    %1021 = vmatprep.subr.bf16.mxu0 0
    %1022 = vmatpush1.bf16.msra.mxu0 0
    %1023 = vmatprep.subr.bf16.mxu0 0
    %1024 = vmatpush1.bf16.msra.mxu0 0
    %1025 = vmatprep.subr.bf16.mxu0 0
    %1026 = vmatpush1.bf16.msra.mxu0 0
    %1027 = vmatprep.subr.bf16.mxu0 0
    %1028 = vmatpush1.bf16.msra.mxu0 0
    %1029 = vmatprep.mubr.bf16.mxu0 0
    %1030 = vmatmul.mubr.bf16.gmra.mrb[0].mxu0 %v995
    %v1031 = vpop.f32.mrb[0].mxu0
    %v1032 = vadd.f32 %v980, %v1031
    %v1033 = vpop.f32.mrb[0].mxu0
    %v1034 = vpop.f32.mrb[0].mxu0
    %v1035 = vadd.f32 %v980, %v1034
    %v1036 = vpop.f32.mrb[0].mxu0
    %1037 = vdwg.mxu0
    %v1038 = vlaneseq
    %v1039 = vand.u32 %v1038, 127
    %v1040 = vld [vmem:[%s35] sm:$0xff]
    %v1041 = vld [vmem:[%s35 + $0x8] sm:$0xff]
    %v1042 = vld [vmem:[%s35 + $0x10] sm:$0xff]
    %v1043 = vld [vmem:[%s35 + $0x18] sm:$0xff]
    %v1044 = vld [vmem:[%s37] sm:$0x3]
    %v1046 = vlaneseq
    %v1047 = vshrl.u32 %v1046, 7
    %v1048 = vsub.s32 0, %v1047
    %v1049 = vrot.slane %v1044, %v1048
    %v1050 = vlaneseq
    %v1051 = vshrl.u32 %v1050, 7
    %v1052 = vsub.s32 1, %v1051
    %v1053 = vrot.slane %v1044, %v1052
    %v1060 = vunpack.c.l.b16 %v1040
    %v1061 = vunpack.c.h.b16 %v1040
    %v1062 = vunpack.c.l.b16 %v1041
    %v1063 = vunpack.c.h.b16 %v1041
    %v1064 = vunpack.c.l.b16 %v1042
    %v1065 = vunpack.c.h.b16 %v1042
    %v1066 = vunpack.c.l.b16 %v1043
    %v1067 = vunpack.c.h.b16 %v1043
    %v1068 = vpack.c.b16 %v1062, %v1060
    %v1069 = vpack.c.b16 %v1063, %v1061
    %v1070 = vpack.c.b16 %v1066, %v1064
    %v1071 = vpack.c.b16 %v1067, %v1065
    %v1077 = vsel %vm588, %v782, 0
    %1079 = vmatprep.subr.bf16.mxu0 %v1069
    %1080 = vmatpush1.bf16.msra.mxu0 %v1068
    %1081 = vmatprep.subr.bf16.mxu0 %v1071
    %1082 = vmatpush1.bf16.msra.mxu0 %v1070
    %1083 = vmatprep.subr.bf16.mxu0 0
    %1084 = vmatpush1.bf16.msra.mxu0 0
    %1085 = vmatprep.subr.bf16.mxu0 0
    %1086 = vmatpush1.bf16.msra.mxu0 0
    %1087 = vmatprep.subr.bf16.mxu0 0
    %1088 = vmatpush1.bf16.msra.mxu0 0
    %1089 = vmatprep.subr.bf16.mxu0 0
    %1090 = vmatpush1.bf16.msra.mxu0 0
    %1091 = vmatprep.subr.bf16.mxu0 0
    %1092 = vmatpush1.bf16.msra.mxu0 0
    %1093 = vmatprep.subr.bf16.mxu0 0
    %1094 = vmatpush1.bf16.msra.mxu0 0
    %1095 = vmatprep.subr.bf16.mxu0 0
    %1096 = vmatpush1.bf16.msra.mxu0 0
    %1097 = vmatprep.subr.bf16.mxu0 0
    %1098 = vmatpush1.bf16.msra.mxu0 0
    %1099 = vmatprep.subr.bf16.mxu0 0
    %1100 = vmatpush1.bf16.msra.mxu0 0
    %1101 = vmatprep.subr.bf16.mxu0 0
    %1102 = vmatpush1.bf16.msra.mxu0 0
    %1103 = vmatprep.subr.bf16.mxu0 0
    %1104 = vmatpush1.bf16.msra.mxu0 0
    %1105 = vmatprep.subr.bf16.mxu0 0
    %1106 = vmatpush1.bf16.msra.mxu0 0
    %1107 = vmatprep.subr.bf16.mxu0 0
    %1108 = vmatpush1.bf16.msra.mxu0 0
    %1109 = vmatprep.subr.bf16.mxu0 0
    %1110 = vmatpush1.bf16.msra.mxu0 0
    %1111 = vmatprep.mubr.bf16.mxu0 0
    %1112 = vmatmul.mubr.bf16.gmra.mrb[0].mxu0 %v1077
    %v1113 = vpop.f32.mrb[0].mxu0
    %v1114 = vadd.f32 %v1049, %v1113
    %v1115 = vpop.f32.mrb[0].mxu0
    %v1116 = vadd.f32 %v1053, %v1115
    %v1117 = vpop.f32.mrb[0].mxu0
    %v1118 = vpop.f32.mrb[0].mxu0
    %1119 = vdwg.mxu0
    %v1120 = vld [vmem:[%s39] sm:$0xff]
    %v1121 = vld [vmem:[%s39 + $0x8] sm:$0xff]
    %v1122 = vld [vmem:[%s39 + $0x10] sm:$0xff]
    %v1123 = vld [vmem:[%s39 + $0x18] sm:$0xff]
    %v1124 = vld [vmem:[%s41] sm:$0x3]
    %v1126 = vlaneseq
    %v1127 = vshrl.u32 %v1126, 7
    %v1128 = vsub.s32 0, %v1127
    %v1129 = vrot.slane %v1124, %v1128
    %v1130 = vlaneseq
    %v1131 = vshrl.u32 %v1130, 7
    %v1132 = vsub.s32 1, %v1131
    %v1133 = vrot.slane %v1124, %v1132
    %v1140 = vunpack.c.l.b16 %v1120
    %v1141 = vunpack.c.h.b16 %v1120
    %v1142 = vunpack.c.l.b16 %v1121
    %v1143 = vunpack.c.h.b16 %v1121
    %v1144 = vunpack.c.l.b16 %v1122
    %v1145 = vunpack.c.h.b16 %v1122
    %v1146 = vunpack.c.l.b16 %v1123
    %v1147 = vunpack.c.h.b16 %v1123
    %v1148 = vpack.c.b16 %v1142, %v1140
    %v1149 = vpack.c.b16 %v1143, %v1141
    %v1150 = vpack.c.b16 %v1146, %v1144
    %v1151 = vpack.c.b16 %v1147, %v1145
    %1156 = vmatprep.subr.bf16.mxu0 %v1149
    %1157 = vmatpush1.bf16.msra.mxu0 %v1148
    %1158 = vmatprep.subr.bf16.mxu0 %v1151
    %1159 = vmatpush1.bf16.msra.mxu0 %v1150
    %1160 = vmatprep.subr.bf16.mxu0 0
    %1161 = vmatpush1.bf16.msra.mxu0 0
    %1162 = vmatprep.subr.bf16.mxu0 0
    %1163 = vmatpush1.bf16.msra.mxu0 0
    %1164 = vmatprep.subr.bf16.mxu0 0
    %1165 = vmatpush1.bf16.msra.mxu0 0
    %1166 = vmatprep.subr.bf16.mxu0 0
    %1167 = vmatpush1.bf16.msra.mxu0 0
    %1168 = vmatprep.subr.bf16.mxu0 0
    %1169 = vmatpush1.bf16.msra.mxu0 0
    %1170 = vmatprep.subr.bf16.mxu0 0
    %1171 = vmatpush1.bf16.msra.mxu0 0
    %1172 = vmatprep.subr.bf16.mxu0 0
    %1173 = vmatpush1.bf16.msra.mxu0 0
    %1174 = vmatprep.subr.bf16.mxu0 0
    %1175 = vmatpush1.bf16.msra.mxu0 0
    %1176 = vmatprep.subr.bf16.mxu0 0
    %1177 = vmatpush1.bf16.msra.mxu0 0
    %1178 = vmatprep.subr.bf16.mxu0 0
    %1179 = vmatpush1.bf16.msra.mxu0 0
    %1180 = vmatprep.subr.bf16.mxu0 0
    %1181 = vmatpush1.bf16.msra.mxu0 0
    %1182 = vmatprep.subr.bf16.mxu0 0
    %1183 = vmatpush1.bf16.msra.mxu0 0
    %1184 = vmatprep.subr.bf16.mxu0 0
    %1185 = vmatpush1.bf16.msra.mxu0 0
    %1186 = vmatprep.subr.bf16.mxu0 0
    %1187 = vmatpush1.bf16.msra.mxu0 0
    %1188 = vmatprep.mubr.bf16.mxu0 0
    %1189 = vmatmul.mubr.bf16.gmra.mrb[0].mxu0 %v1077
    %v1190 = vpop.f32.mrb[0].mxu0
    %v1191 = vadd.f32 %v1129, %v1190
    %v1192 = vpop.f32.mrb[0].mxu0
    %v1193 = vadd.f32 %v1133, %v1192
    %v1194 = vpop.f32.mrb[0].mxu0
    %v1195 = vpop.f32.mrb[0].mxu0
    %1196 = vdwg.mxu0
    %v1199 = vunpack.c.l.s4 1966171168
    %v1200 = vunpack.c.0.s8 %v1199
    %v1201 = vlaneseq
    %v1202 = vshrl.u32 %v1201, 7
    %v1203 = vsub.s32 %v1200, %v1202
    %v1204 = vrot.slane %v1114, %v1203
    %v1205 = vcombine.high %v1204, %v1204
    %v1207 = vunpack.c.l.s4 1966171168
    %v1208 = vunpack.c.0.s8 %v1207
    %v1209 = vlaneseq
    %v1210 = vshrl.u32 %v1209, 7
    %v1211 = vsub.s32 %v1208, %v1210
    %v1212 = vrot.slane %v1204, %v1211
    %v1214 = vunpack.c.l.s4 1966171168
    %v1215 = vunpack.c.0.s8 %v1214
    %v1216 = vlaneseq
    %v1217 = vshrl.u32 %v1216, 7
    %v1218 = vsub.s32 %v1215, %v1217
    %v1219 = vrot.slane %v1205, %v1218
    %v1224 = vunpack.c.l.s4 1966171168
    %v1225 = vunpack.c.0.s8 %v1224
    %v1226 = vlaneseq
    %v1227 = vshrl.u32 %v1226, 7
    %v1228 = vsub.s32 %v1225, %v1227
    %v1229 = vrot.slane %v1116, %v1228
    %v1230 = vcombine.high %v1229, %v1229
    %v1232 = vunpack.c.l.s4 1966171168
    %v1233 = vunpack.c.0.s8 %v1232
    %v1234 = vlaneseq
    %v1235 = vshrl.u32 %v1234, 7
    %v1236 = vsub.s32 %v1233, %v1235
    %v1237 = vrot.slane %v1229, %v1236
    %v1239 = vunpack.c.l.s4 1966171168
    %v1240 = vunpack.c.0.s8 %v1239
    %v1241 = vlaneseq
    %v1242 = vshrl.u32 %v1241, 7
    %v1243 = vsub.s32 %v1240, %v1242
    %v1244 = vrot.slane %v1230, %v1243
    %v1247 = vsel %vm588, %v952, 0.0
    %1248 = vadd.xlane.f32.xlu0 %v1247
    %v1249 = vpop.xlane.xlu0 %1248
    %v1250 = vsel %vm588, %v953, 0.0
    %1251 = vadd.xlane.f32.xlu0 %v1250
    %v1252 = vpop.xlane.xlu0 %1251
    %v1253 = vsel %vm588, %v954, 0.0
    %1254 = vadd.xlane.f32.xlu0 %v1253
    %v1255 = vpop.xlane.xlu0 %1254
    %v1256 = vsel %vm588, %v955, 0.0
    %1257 = vadd.xlane.f32.xlu0 %v1256
    %v1258 = vpop.xlane.xlu0 %1257
    %v1259 = vsel %vm588, %v956, 0.0
    %1260 = vadd.xlane.f32.xlu0 %v1259
    %v1261 = vpop.xlane.xlu0 %1260
    %v1262 = vsel %vm588, %v957, 0.0
    %1263 = vadd.xlane.f32.xlu0 %v1262
    %v1264 = vpop.xlane.xlu0 %1263
    %v1265 = vsel %vm588, %v958, 0.0
    %1266 = vadd.xlane.f32.xlu0 %v1265
    %v1267 = vpop.xlane.xlu0 %1266
    %v1268 = vsel %vm588, %v959, 0.0
    %1269 = vadd.xlane.f32.xlu0 %v1268
    %v1270 = vpop.xlane.xlu0 %1269
    %v1271 = vsel %vm588, %v960, 0.0
    %1272 = vadd.xlane.f32.xlu0 %v1271
    %v1273 = vpop.xlane.xlu0 %1272
    %v1274 = vsel %vm588, %v961, 0.0
    %1275 = vadd.xlane.f32.xlu0 %v1274
    %v1276 = vpop.xlane.xlu0 %1275
    %v1277 = vsel %vm588, %v962, 0.0
    %1278 = vadd.xlane.f32.xlu0 %v1277
    %v1279 = vpop.xlane.xlu0 %1278
    %v1280 = vsel %vm588, %v963, 0.0
    %1281 = vadd.xlane.f32.xlu0 %v1280
    %v1282 = vpop.xlane.xlu0 %1281
    %v1283 = vsel %vm588, %v964, 0.0
    %1284 = vadd.xlane.f32.xlu0 %v1283
    %v1285 = vpop.xlane.xlu0 %1284
    %v1286 = vsel %vm588, %v965, 0.0
    %1287 = vadd.xlane.f32.xlu0 %v1286
    %v1288 = vpop.xlane.xlu0 %1287
    %v1289 = vsel %vm588, %v966, 0.0
    %1290 = vadd.xlane.f32.xlu0 %v1289
    %v1291 = vpop.xlane.xlu0 %1290
    %v1292 = vsel %vm588, %v967, 0.0
    %1293 = vadd.xlane.f32.xlu0 %v1292
    %v1294 = vpop.xlane.xlu0 %1293
    %v1295 = vrcp.pop 32.0
    %v1296 = vmul.f32 %v1249, %v1295
    %v1297 = vmul.f32 %v1252, %v1295
    %v1298 = vmul.f32 %v1255, %v1295
    %v1299 = vmul.f32 %v1258, %v1295
    %v1300 = vmul.f32 %v1261, %v1295
    %v1301 = vmul.f32 %v1264, %v1295
    %v1302 = vmul.f32 %v1267, %v1295
    %v1303 = vmul.f32 %v1270, %v1295
    %v1304 = vmul.f32 %v1273, %v1295
    %v1305 = vmul.f32 %v1276, %v1295
    %v1306 = vmul.f32 %v1279, %v1295
    %v1307 = vmul.f32 %v1282, %v1295
    %v1308 = vmul.f32 %v1285, %v1295
    %v1309 = vmul.f32 %v1288, %v1295
    %v1310 = vmul.f32 %v1291, %v1295
    %v1311 = vmul.f32 %v1294, %v1295
    %v1312 = vsub.f32 %v952, %v1296
    %v1313 = vsub.f32 %v953, %v1297
    %v1314 = vsub.f32 %v954, %v1298
    %v1315 = vsub.f32 %v955, %v1299
    %v1316 = vsub.f32 %v956, %v1300
    %v1317 = vsub.f32 %v957, %v1301
    %v1318 = vsub.f32 %v958, %v1302
    %v1319 = vsub.f32 %v959, %v1303
    %v1320 = vsub.f32 %v960, %v1304
    %v1321 = vsub.f32 %v961, %v1305
    %v1322 = vsub.f32 %v962, %v1306
    %v1323 = vsub.f32 %v963, %v1307
    %v1324 = vsub.f32 %v964, %v1308
    %v1325 = vsub.f32 %v965, %v1309
    %v1326 = vsub.f32 %v966, %v1310
    %v1327 = vsub.f32 %v967, %v1311
    %v1328 = vmul.f32 %v1312, %v1312
    %v1329 = vmul.f32 %v1313, %v1313
    %v1330 = vmul.f32 %v1314, %v1314
    %v1331 = vmul.f32 %v1315, %v1315
    %v1332 = vmul.f32 %v1316, %v1316
    %v1333 = vmul.f32 %v1317, %v1317
    %v1334 = vmul.f32 %v1318, %v1318
    %v1335 = vmul.f32 %v1319, %v1319
    %v1336 = vmul.f32 %v1320, %v1320
    %v1337 = vmul.f32 %v1321, %v1321
    %v1338 = vmul.f32 %v1322, %v1322
    %v1339 = vmul.f32 %v1323, %v1323
    %v1340 = vmul.f32 %v1324, %v1324
    %v1341 = vmul.f32 %v1325, %v1325
    %v1342 = vmul.f32 %v1326, %v1326
    %v1343 = vmul.f32 %v1327, %v1327
    %v1344 = vsel %vm588, %v1328, 0.0
    %1345 = vadd.xlane.f32.xlu0 %v1344
    %v1346 = vpop.xlane.xlu0 %1345
    %v1347 = vsel %vm588, %v1329, 0.0
    %1348 = vadd.xlane.f32.xlu0 %v1347
    %v1349 = vpop.xlane.xlu0 %1348
    %v1350 = vsel %vm588, %v1330, 0.0
    %1351 = vadd.xlane.f32.xlu0 %v1350
    %v1352 = vpop.xlane.xlu0 %1351
    %v1353 = vsel %vm588, %v1331, 0.0
    %1354 = vadd.xlane.f32.xlu0 %v1353
    %v1355 = vpop.xlane.xlu0 %1354
    %v1356 = vsel %vm588, %v1332, 0.0
    %1357 = vadd.xlane.f32.xlu0 %v1356
    %v1358 = vpop.xlane.xlu0 %1357
    %v1359 = vsel %vm588, %v1333, 0.0
    %1360 = vadd.xlane.f32.xlu0 %v1359
    %v1361 = vpop.xlane.xlu0 %1360
    %v1362 = vsel %vm588, %v1334, 0.0
    %1363 = vadd.xlane.f32.xlu0 %v1362
    %v1364 = vpop.xlane.xlu0 %1363
    %v1365 = vsel %vm588, %v1335, 0.0
    %1366 = vadd.xlane.f32.xlu0 %v1365
    %v1367 = vpop.xlane.xlu0 %1366
    %v1368 = vsel %vm588, %v1336, 0.0
    %1369 = vadd.xlane.f32.xlu0 %v1368
    %v1370 = vpop.xlane.xlu0 %1369
    %v1371 = vsel %vm588, %v1337, 0.0
    %1372 = vadd.xlane.f32.xlu0 %v1371
    %v1373 = vpop.xlane.xlu0 %1372
    %v1374 = vsel %vm588, %v1338, 0.0
    %1375 = vadd.xlane.f32.xlu0 %v1374
    %v1376 = vpop.xlane.xlu0 %1375
    %v1377 = vsel %vm588, %v1339, 0.0
    %1378 = vadd.xlane.f32.xlu0 %v1377
    %v1379 = vpop.xlane.xlu0 %1378
    %v1380 = vsel %vm588, %v1340, 0.0
    %1381 = vadd.xlane.f32.xlu0 %v1380
    %v1382 = vpop.xlane.xlu0 %1381
    %v1383 = vsel %vm588, %v1341, 0.0
    %1384 = vadd.xlane.f32.xlu0 %v1383
    %v1385 = vpop.xlane.xlu0 %1384
    %v1386 = vsel %vm588, %v1342, 0.0
    %1387 = vadd.xlane.f32.xlu0 %v1386
    %v1388 = vpop.xlane.xlu0 %1387
    %v1389 = vsel %vm588, %v1343, 0.0
    %1390 = vadd.xlane.f32.xlu0 %v1389
    %v1391 = vpop.xlane.xlu0 %1390
    %v1392 = vmul.f32 %v1346, %v1295
    %v1393 = vmul.f32 %v1349, %v1295
    %v1394 = vmul.f32 %v1352, %v1295
    %v1395 = vmul.f32 %v1355, %v1295
    %v1396 = vmul.f32 %v1358, %v1295
    %v1397 = vmul.f32 %v1361, %v1295
    %v1398 = vmul.f32 %v1364, %v1295
    %v1399 = vmul.f32 %v1367, %v1295
    %v1400 = vmul.f32 %v1370, %v1295
    %v1401 = vmul.f32 %v1373, %v1295
    %v1402 = vmul.f32 %v1376, %v1295
    %v1403 = vmul.f32 %v1379, %v1295
    %v1404 = vmul.f32 %v1382, %v1295
    %v1405 = vmul.f32 %v1385, %v1295
    %v1406 = vmul.f32 %v1388, %v1295
    %v1407 = vmul.f32 %v1391, %v1295
    %v1408 = vadd.f32 %v1392, 1e-06
    %v1409 = vadd.f32 %v1393, 1e-06
    %v1410 = vadd.f32 %v1394, 1e-06
    %v1411 = vadd.f32 %v1395, 1e-06
    %v1412 = vadd.f32 %v1396, 1e-06
    %v1413 = vadd.f32 %v1397, 1e-06
    %v1414 = vadd.f32 %v1398, 1e-06
    %v1415 = vadd.f32 %v1399, 1e-06
    %v1416 = vadd.f32 %v1400, 1e-06
    %v1417 = vadd.f32 %v1401, 1e-06
    %v1418 = vadd.f32 %v1402, 1e-06
    %v1419 = vadd.f32 %v1403, 1e-06
    %v1420 = vadd.f32 %v1404, 1e-06
    %v1421 = vadd.f32 %v1405, 1e-06
    %v1422 = vadd.f32 %v1406, 1e-06
    %v1423 = vadd.f32 %v1407, 1e-06
    %v1424 = vrsqrt.pop %v1408
    %v1425 = vrsqrt.pop %v1409
    %v1426 = vrsqrt.pop %v1410
    %v1427 = vrsqrt.pop %v1411
    %v1428 = vrsqrt.pop %v1412
    %v1429 = vrsqrt.pop %v1413
    %v1430 = vrsqrt.pop %v1414
    %v1431 = vrsqrt.pop %v1415
    %v1432 = vrsqrt.pop %v1416
    %v1433 = vrsqrt.pop %v1417
    %v1434 = vrsqrt.pop %v1418
    %v1435 = vrsqrt.pop %v1419
    %v1436 = vrsqrt.pop %v1420
    %v1437 = vrsqrt.pop %v1421
    %v1438 = vrsqrt.pop %v1422
    %v1439 = vrsqrt.pop %v1423
    %v1440 = vmul.f32 %v1312, %v1424
    %v1441 = vmul.f32 %v1313, %v1425
    %v1442 = vmul.f32 %v1314, %v1426
    %v1443 = vmul.f32 %v1315, %v1427
    %v1444 = vmul.f32 %v1316, %v1428
    %v1445 = vmul.f32 %v1317, %v1429
    %v1446 = vmul.f32 %v1318, %v1430
    %v1447 = vmul.f32 %v1319, %v1431
    %v1448 = vmul.f32 %v1320, %v1432
    %v1449 = vmul.f32 %v1321, %v1433
    %v1450 = vmul.f32 %v1322, %v1434
    %v1451 = vmul.f32 %v1323, %v1435
    %v1452 = vmul.f32 %v1324, %v1436
    %v1453 = vmul.f32 %v1325, %v1437
    %v1454 = vmul.f32 %v1326, %v1438
    %v1455 = vmul.f32 %v1327, %v1439
    %v1456 = vadd.f32 %v1212, 1.0
    %v1457 = vadd.f32 %v1219, 1.0
    %v1460 = vlaneseq
    %v1461 = vshrl.u32 %v1460, 7
    %v1462 = vsub.s32 0, %v1461
    %v1463 = vrot.slane %v1456, %v1462
    %v1464 = vlaneseq
    %v1465 = vshrl.u32 %v1464, 7
    %v1466 = vsub.s32 0, %v1465
    %v1467 = vrot.slane %v1457, %v1466
    %1468 = vrot.lane.b32.xlu0 %v1463, 96
    %v1469 = vpop.permute.xlu0 %1468
    %1470 = vrot.lane.b32.xlu0 %v1467, 96
    %v1471 = vpop.permute.xlu0 %1470
    %v1474 = vmul.f32 %v1440, %v1469
    %v1475 = vmul.f32 %v1441, %v1469
    %v1476 = vmul.f32 %v1442, %v1469
    %v1477 = vmul.f32 %v1443, %v1469
    %v1478 = vmul.f32 %v1444, %v1469
    %v1479 = vmul.f32 %v1445, %v1469
    %v1480 = vmul.f32 %v1446, %v1469
    %v1481 = vmul.f32 %v1447, %v1469
    %v1482 = vmul.f32 %v1448, %v1471
    %v1483 = vmul.f32 %v1449, %v1471
    %v1484 = vmul.f32 %v1450, %v1471
    %v1485 = vmul.f32 %v1451, %v1471
    %v1486 = vmul.f32 %v1452, %v1471
    %v1487 = vmul.f32 %v1453, %v1471
    %v1488 = vmul.f32 %v1454, %v1471
    %v1489 = vmul.f32 %v1455, %v1471
    %v1490 = vlaneseq
    %v1491 = vshrl.u32 %v1490, 7
    %v1492 = vsub.s32 0, %v1491
    %v1493 = vrot.slane %v1212, %v1492
    %v1494 = vlaneseq
    %v1495 = vshrl.u32 %v1494, 7
    %v1496 = vsub.s32 0, %v1495
    %v1497 = vrot.slane %v1219, %v1496
    %v1500 = vadd.f32 %v1474, %v1493
    %v1501 = vadd.f32 %v1475, %v1493
    %v1502 = vadd.f32 %v1476, %v1493
    %v1503 = vadd.f32 %v1477, %v1493
    %v1504 = vadd.f32 %v1478, %v1493
    %v1505 = vadd.f32 %v1479, %v1493
    %v1506 = vadd.f32 %v1480, %v1493
    %v1507 = vadd.f32 %v1481, %v1493
    %v1508 = vadd.f32 %v1482, %v1497
    %v1509 = vadd.f32 %v1483, %v1497
    %v1510 = vadd.f32 %v1484, %v1497
    %v1511 = vadd.f32 %v1485, %v1497
    %v1512 = vadd.f32 %v1486, %v1497
    %v1513 = vadd.f32 %v1487, %v1497
    %v1514 = vadd.f32 %v1488, %v1497
    %v1515 = vadd.f32 %v1489, %v1497
    %v1518 = vunpack.c.l.s4 1966171168
    %v1519 = vunpack.c.0.s8 %v1518
    %v1520 = vlaneseq
    %v1521 = vshrl.u32 %v1520, 7
    %v1522 = vsub.s32 %v1519, %v1521
    %v1523 = vrot.slane %v1191, %v1522
    %v1524 = vcombine.high %v1523, %v1523
    %v1526 = vunpack.c.l.s4 1966171168
    %v1527 = vunpack.c.0.s8 %v1526
    %v1528 = vlaneseq
    %v1529 = vshrl.u32 %v1528, 7
    %v1530 = vsub.s32 %v1527, %v1529
    %v1531 = vrot.slane %v1523, %v1530
    %v1533 = vunpack.c.l.s4 1966171168
    %v1534 = vunpack.c.0.s8 %v1533
    %v1535 = vlaneseq
    %v1536 = vshrl.u32 %v1535, 7
    %v1537 = vsub.s32 %v1534, %v1536
    %v1538 = vrot.slane %v1524, %v1537
    %v1543 = vunpack.c.l.s4 1966171168
    %v1544 = vunpack.c.0.s8 %v1543
    %v1545 = vlaneseq
    %v1546 = vshrl.u32 %v1545, 7
    %v1547 = vsub.s32 %v1544, %v1546
    %v1548 = vrot.slane %v1193, %v1547
    %v1549 = vcombine.high %v1548, %v1548
    %v1551 = vunpack.c.l.s4 1966171168
    %v1552 = vunpack.c.0.s8 %v1551
    %v1553 = vlaneseq
    %v1554 = vshrl.u32 %v1553, 7
    %v1555 = vsub.s32 %v1552, %v1554
    %v1556 = vrot.slane %v1548, %v1555
    %v1558 = vunpack.c.l.s4 1966171168
    %v1559 = vunpack.c.0.s8 %v1558
    %v1560 = vlaneseq
    %v1561 = vshrl.u32 %v1560, 7
    %v1562 = vsub.s32 %v1559, %v1561
    %v1563 = vrot.slane %v1549, %v1562
    %v1566 = vsel %vm588, %v1032, 0.0
    %1567 = vadd.xlane.f32.xlu0 %v1566
    %v1568 = vpop.xlane.xlu0 %1567
    %v1569 = vsel %vm588, %v1035, 0.0
    %1570 = vadd.xlane.f32.xlu0 %v1569
    %v1571 = vpop.xlane.xlu0 %1570
    %v1572 = vmul.f32 %v1568, %v1295
    %v1573 = vmul.f32 %v1571, %v1295
    %v1574 = vsub.f32 %v1032, %v1572
    %v1575 = vsub.f32 %v1035, %v1573
    %v1576 = vmul.f32 %v1574, %v1574
    %v1577 = vmul.f32 %v1575, %v1575
    %v1578 = vsel %vm588, %v1576, 0.0
    %1579 = vadd.xlane.f32.xlu0 %v1578
    %v1580 = vpop.xlane.xlu0 %1579
    %v1581 = vsel %vm588, %v1577, 0.0
    %1582 = vadd.xlane.f32.xlu0 %v1581
    %v1583 = vpop.xlane.xlu0 %1582
    %v1584 = vmul.f32 %v1580, %v1295
    %v1585 = vmul.f32 %v1583, %v1295
    %v1586 = vadd.f32 %v1584, 1e-06
    %v1587 = vadd.f32 %v1585, 1e-06
    %v1588 = vrsqrt.pop %v1586
    %v1589 = vrsqrt.pop %v1587
    %v1590 = vmul.f32 %v1574, %v1588
    %v1591 = vmul.f32 %v1575, %v1589
    %v1592 = vadd.f32 %v1531, 1.0
    %v1593 = vadd.f32 %v1538, 1.0
    %v1596 = vlaneseq
    %v1597 = vshrl.u32 %v1596, 7
    %v1598 = vsub.s32 0, %v1597
    %v1599 = vrot.slane %v1592, %v1598
    %v1600 = vlaneseq
    %v1601 = vshrl.u32 %v1600, 7
    %v1602 = vsub.s32 0, %v1601
    %v1603 = vrot.slane %v1593, %v1602
    %1604 = vrot.lane.b32.xlu0 %v1599, 96
    %v1605 = vpop.permute.xlu0 %1604
    %1606 = vrot.lane.b32.xlu0 %v1603, 96
    %v1607 = vpop.permute.xlu0 %1606
    %v1610 = vmul.f32 %v1590, %v1605
    %v1611 = vmul.f32 %v1591, %v1607
    %v1612 = vlaneseq
    %v1613 = vshrl.u32 %v1612, 7
    %v1614 = vsub.s32 0, %v1613
    %v1615 = vrot.slane %v1531, %v1614
    %v1616 = vlaneseq
    %v1617 = vshrl.u32 %v1616, 7
    %v1618 = vsub.s32 0, %v1617
    %v1619 = vrot.slane %v1538, %v1618
    %v1622 = vadd.f32 %v1610, %v1615
    %v1623 = vadd.f32 %v1611, %v1619
    %v1624 = vpack.c.bf16 %v1501, %v1500
    %v1625 = vpack.c.bf16 %v1503, %v1502
    %v1626 = vpack.c.bf16 %v1505, %v1504
    %v1627 = vpack.c.bf16 %v1507, %v1506
    %v1628 = vpack.c.bf16 %v1509, %v1508
    %v1629 = vpack.c.bf16 %v1511, %v1510
    %v1630 = vpack.c.bf16 %v1513, %v1512
    %v1631 = vpack.c.bf16 %v1515, %v1514
    %v1632 = vld [vmem:[%s43] sm:$0xf]
    %v1633 = vld [vmem:[%s43 + $0x4] sm:$0xf]
    %v1634 = vld [vmem:[%s43 + $0x8] sm:$0xf]
    %v1635 = vld [vmem:[%s43 + $0xc] sm:$0xf]
    %v1636 = vld [vmem:[%s45] sm:$0x1]
    %v1638 = vlaneseq
    %v1639 = vshrl.u32 %v1638, 7
    %v1640 = vsub.s32 0, %v1639
    %v1641 = vrot.slane %v1636, %v1640
    %v1647 = vunpack.c.l.b16 %v1632
    %v1648 = vunpack.c.l.b16 %v1633
    %v1649 = vunpack.c.l.b16 %v1634
    %v1650 = vunpack.c.l.b16 %v1635
    %v1651 = vpack.c.b16 %v1648, %v1647
    %v1652 = vpack.c.b16 %v1650, %v1649
    %v1656 = vsel %vm588, %v1624, 0
    %v1659 = vsel %vm588, %v1625, 0
    %v1662 = vsel %vm588, %v1626, 0
    %v1665 = vsel %vm588, %v1627, 0
    %v1668 = vsel %vm588, %v1628, 0
    %v1671 = vsel %vm588, %v1629, 0
    %v1674 = vsel %vm588, %v1630, 0
    %v1677 = vsel %vm588, %v1631, 0
    %1679 = vmatprep.subr.bf16.mxu0 0
    %1680 = vmatpush1.bf16.msra.mxu0 %v1651
    %1681 = vmatprep.subr.bf16.mxu0 0
    %1682 = vmatpush1.bf16.msra.mxu0 %v1652
    %1683 = vmatprep.subr.bf16.mxu0 0
    %1684 = vmatpush1.bf16.msra.mxu0 0
    %1685 = vmatprep.subr.bf16.mxu0 0
    %1686 = vmatpush1.bf16.msra.mxu0 0
    %1687 = vmatprep.subr.bf16.mxu0 0
    %1688 = vmatpush1.bf16.msra.mxu0 0
    %1689 = vmatprep.subr.bf16.mxu0 0
    %1690 = vmatpush1.bf16.msra.mxu0 0
    %1691 = vmatprep.subr.bf16.mxu0 0
    %1692 = vmatpush1.bf16.msra.mxu0 0
    %1693 = vmatprep.subr.bf16.mxu0 0
    %1694 = vmatpush1.bf16.msra.mxu0 0
    %1695 = vmatprep.subr.bf16.mxu0 0
    %1696 = vmatpush1.bf16.msra.mxu0 0
    %1697 = vmatprep.subr.bf16.mxu0 0
    %1698 = vmatpush1.bf16.msra.mxu0 0
    %1699 = vmatprep.subr.bf16.mxu0 0
    %1700 = vmatpush1.bf16.msra.mxu0 0
    %1701 = vmatprep.subr.bf16.mxu0 0
    %1702 = vmatpush1.bf16.msra.mxu0 0
    %1703 = vmatprep.subr.bf16.mxu0 0
    %1704 = vmatpush1.bf16.msra.mxu0 0
    %1705 = vmatprep.subr.bf16.mxu0 0
    %1706 = vmatpush1.bf16.msra.mxu0 0
    %1707 = vmatprep.subr.bf16.mxu0 0
    %1708 = vmatpush1.bf16.msra.mxu0 0
    %1709 = vmatprep.subr.bf16.mxu0 0
    %1710 = vmatpush1.bf16.msra.mxu0 0
    %1711 = vmatprep.mubr.bf16.mxu0 0
    %1712 = vmatmul.mubr.bf16.gmra.mrb[0].mxu0 %v1656
    %v1713 = vpop.f32.mrb[0].mxu0
    %v1714 = vadd.f32 %v1641, %v1713
    %v1715 = vpop.f32.mrb[0].mxu0
    %v1716 = vpop.f32.mrb[0].mxu0
    %v1717 = vadd.f32 %v1641, %v1716
    %v1718 = vpop.f32.mrb[0].mxu0
    %1719 = vmatprep.mubr.bf16.mxu0 0
    %1720 = vmatmul.mubr.bf16.gmra.mrb[0].mxu0 %v1659
    %v1721 = vpop.f32.mrb[0].mxu0
    %v1722 = vadd.f32 %v1641, %v1721
    %v1723 = vpop.f32.mrb[0].mxu0
    %v1724 = vpop.f32.mrb[0].mxu0
    %v1725 = vadd.f32 %v1641, %v1724
    %v1726 = vpop.f32.mrb[0].mxu0
    %1727 = vmatprep.mubr.bf16.mxu0 0
    %1728 = vmatmul.mubr.bf16.gmra.mrb[0].mxu0 %v1662
    %v1729 = vpop.f32.mrb[0].mxu0
    %v1730 = vadd.f32 %v1641, %v1729
    %v1731 = vpop.f32.mrb[0].mxu0
    %v1732 = vpop.f32.mrb[0].mxu0
    %v1733 = vadd.f32 %v1641, %v1732
    %v1734 = vpop.f32.mrb[0].mxu0
    %1735 = vmatprep.mubr.bf16.mxu0 0
    %1736 = vmatmul.mubr.bf16.gmra.mrb[0].mxu0 %v1665
    %v1737 = vpop.f32.mrb[0].mxu0
    %v1738 = vadd.f32 %v1641, %v1737
    %v1739 = vpop.f32.mrb[0].mxu0
    %v1740 = vpop.f32.mrb[0].mxu0
    %v1741 = vadd.f32 %v1641, %v1740
    %v1742 = vpop.f32.mrb[0].mxu0
    %1743 = vmatprep.mubr.bf16.mxu0 0
    %1744 = vmatmul.mubr.bf16.gmra.mrb[0].mxu0 %v1668
    %v1745 = vpop.f32.mrb[0].mxu0
    %v1746 = vadd.f32 %v1641, %v1745
    %v1747 = vpop.f32.mrb[0].mxu0
    %v1748 = vpop.f32.mrb[0].mxu0
    %v1749 = vadd.f32 %v1641, %v1748
    %v1750 = vpop.f32.mrb[0].mxu0
    %1751 = vmatprep.mubr.bf16.mxu0 0
    %1752 = vmatmul.mubr.bf16.gmra.mrb[0].mxu0 %v1671
    %v1753 = vpop.f32.mrb[0].mxu0
    %v1754 = vadd.f32 %v1641, %v1753
    %v1755 = vpop.f32.mrb[0].mxu0
    %v1756 = vpop.f32.mrb[0].mxu0
    %v1757 = vadd.f32 %v1641, %v1756
    %v1758 = vpop.f32.mrb[0].mxu0
    %1759 = vmatprep.mubr.bf16.mxu0 0
    %1760 = vmatmul.mubr.bf16.gmra.mrb[0].mxu0 %v1674
    %v1761 = vpop.f32.mrb[0].mxu0
    %v1762 = vadd.f32 %v1641, %v1761
    %v1763 = vpop.f32.mrb[0].mxu0
    %v1764 = vpop.f32.mrb[0].mxu0
    %v1765 = vadd.f32 %v1641, %v1764
    %v1766 = vpop.f32.mrb[0].mxu0
    %1767 = vmatprep.mubr.bf16.mxu0 0
    %1768 = vmatmul.mubr.bf16.gmra.mrb[0].mxu0 %v1677
    %v1769 = vpop.f32.mrb[0].mxu0
    %v1770 = vadd.f32 %v1641, %v1769
    %v1771 = vpop.f32.mrb[0].mxu0
    %v1772 = vpop.f32.mrb[0].mxu0
    %v1773 = vadd.f32 %v1641, %v1772
    %v1774 = vpop.f32.mrb[0].mxu0
    %1775 = vdwg.mxu0
    %v1776 = vpack.c.bf16 %v1623, %v1622
    %v1777 = vld [vmem:[%s47] sm:$0xf]
    %v1778 = vld [vmem:[%s47 + $0x4] sm:$0xf]
    %v1779 = vld [vmem:[%s47 + $0x8] sm:$0xf]
    %v1780 = vld [vmem:[%s47 + $0xc] sm:$0xf]
    %v1781 = vld [vmem:[%s49] sm:$0x1]
    %v1783 = vlaneseq
    %v1784 = vshrl.u32 %v1783, 7
    %v1785 = vsub.s32 0, %v1784
    %v1786 = vrot.slane %v1781, %v1785
    %v1792 = vunpack.c.l.b16 %v1777
    %v1793 = vunpack.c.l.b16 %v1778
    %v1794 = vunpack.c.l.b16 %v1779
    %v1795 = vunpack.c.l.b16 %v1780
    %v1796 = vpack.c.b16 %v1793, %v1792
    %v1797 = vpack.c.b16 %v1795, %v1794
    %v1801 = vsel %vm588, %v1776, 0
    %1803 = vmatprep.subr.bf16.mxu0 0
    %1804 = vmatpush1.bf16.msra.mxu0 %v1796
    %1805 = vmatprep.subr.bf16.mxu0 0
    %1806 = vmatpush1.bf16.msra.mxu0 %v1797
    %1807 = vmatprep.subr.bf16.mxu0 0
    %1808 = vmatpush1.bf16.msra.mxu0 0
    %1809 = vmatprep.subr.bf16.mxu0 0
    %1810 = vmatpush1.bf16.msra.mxu0 0
    %1811 = vmatprep.subr.bf16.mxu0 0
    %1812 = vmatpush1.bf16.msra.mxu0 0
    %1813 = vmatprep.subr.bf16.mxu0 0
    %1814 = vmatpush1.bf16.msra.mxu0 0
    %1815 = vmatprep.subr.bf16.mxu0 0
    %1816 = vmatpush1.bf16.msra.mxu0 0
    %1817 = vmatprep.subr.bf16.mxu0 0
    %1818 = vmatpush1.bf16.msra.mxu0 0
    %1819 = vmatprep.subr.bf16.mxu0 0
    %1820 = vmatpush1.bf16.msra.mxu0 0
    %1821 = vmatprep.subr.bf16.mxu0 0
    %1822 = vmatpush1.bf16.msra.mxu0 0
    %1823 = vmatprep.subr.bf16.mxu0 0
    %1824 = vmatpush1.bf16.msra.mxu0 0
    %1825 = vmatprep.subr.bf16.mxu0 0
    %1826 = vmatpush1.bf16.msra.mxu0 0
    %1827 = vmatprep.subr.bf16.mxu0 0
    %1828 = vmatpush1.bf16.msra.mxu0 0
    %1829 = vmatprep.subr.bf16.mxu0 0
    %1830 = vmatpush1.bf16.msra.mxu0 0
    %1831 = vmatprep.subr.bf16.mxu0 0
    %1832 = vmatpush1.bf16.msra.mxu0 0
    %1833 = vmatprep.subr.bf16.mxu0 0
    %1834 = vmatpush1.bf16.msra.mxu0 0
    %1835 = vmatprep.mubr.bf16.mxu0 0
    %1836 = vmatmul.mubr.bf16.gmra.mrb[0].mxu0 %v1801
    %v1837 = vpop.f32.mrb[0].mxu0
    %v1838 = vadd.f32 %v1786, %v1837
    %v1839 = vpop.f32.mrb[0].mxu0
    %v1840 = vpop.f32.mrb[0].mxu0
    %v1841 = vadd.f32 %v1786, %v1840
    %v1842 = vpop.f32.mrb[0].mxu0
    %1843 = vdwg.mxu0
    %v1844 = vpack.c.bf16 %v1717, %v1714
    %v1845 = vpack.c.bf16 %v1725, %v1722
    %v1846 = vpack.c.bf16 %v1733, %v1730
    %v1847 = vpack.c.bf16 %v1741, %v1738
    %v1848 = vpack.c.bf16 %v1838, %v1838
    %v1849 = vpack.c.bf16 %v1749, %v1746
    %v1850 = vpack.c.bf16 %v1757, %v1754
    %v1851 = vpack.c.bf16 %v1765, %v1762
    %v1852 = vpack.c.bf16 %v1773, %v1770
    %v1853 = vpack.c.bf16 %v1841, %v1841
    %vm1854 = vcmp.ge.s32.totalorder %v1039, 0
    %vm1855 = vcmp.lt.s32.totalorder %v1039, 16
    %vm1856 = vmand %vm1854, %vm1855
    %v1857 = vsel %vm1856, 1, 0
    %vm1858 = vcmp.eq.s32.totalorder %v1857, 1
    %vm1859 = vmpackc.low %vm1858, %vm1858
    %v1860 = vsel %vm1859, 65537, 0
    %v1861 = vlaneseq
    %v1862 = vshrl.u32 %v1861, 7
    %v1863 = vsub.s32 0, %v1862
    %v1864 = vrot.slane %v1860, %v1863
    %1865 = vrot.lane.b32.xlu0 %v1864, 64
    %v1866 = vpop.permute.xlu0 %1865
    %vm1867 = vcmp.ne.s16.totalorder %v1866, 0
    %v1868 = vsel %vm1867, %v1844, 0
    %v1869 = vsel %vm1867, %v1845, 0
    %v1870 = vsel %vm1867, %v1846, 0
    %v1871 = vsel %vm1867, %v1847, 0
    %v1872 = vsel %vm1867, %v1848, 0
    %v1873 = vsel %vm1867, %v1849, 0
    %v1874 = vsel %vm1867, %v1850, 0
    %v1875 = vsel %vm1867, %v1851, 0
    %v1876 = vsel %vm1867, %v1852, 0
    %v1877 = vsel %vm1867, %v1853, 0
    %1883 = vrot.lane.b32.xlu0 %v1844, 96
    %v1884 = vpop.permute.xlu0 %1883
    %1885 = vrot.lane.b32.xlu0 %v1845, 96
    %v1886 = vpop.permute.xlu0 %1885
    %1887 = vrot.lane.b32.xlu0 %v1846, 96
    %v1888 = vpop.permute.xlu0 %1887
    %1889 = vrot.lane.b32.xlu0 %v1847, 96
    %v1890 = vpop.permute.xlu0 %1889
    %1891 = vrot.lane.b32.xlu0 %v1848, 96
    %v1892 = vpop.permute.xlu0 %1891
    %v1894 = vsel %vm822, %v1844, 0
    %v1897 = vsel %vm822, %v1845, 0
    %v1900 = vsel %vm822, %v1846, 0
    %v1903 = vsel %vm822, %v1847, 0
    %v1906 = vsel %vm822, %v1848, 0
    %v1909 = vsel %vm822, %v1884, 0
    %v1912 = vsel %vm822, %v1886, 0
    %v1915 = vsel %vm822, %v1888, 0
    %v1918 = vsel %vm822, %v1890, 0
    %v1921 = vsel %vm822, %v1892, 0
    %1923 = vmatprep.subr.bf16.mxu0 0
    %1924 = vmatpush1.bf16.xpose.msra.mxu0 %v1909
    %1925 = vmatprep.subr.bf16.mxu0 0
    %1926 = vmatpush1.bf16.xpose.msra.mxu0 %v1912
    %1927 = vmatprep.subr.bf16.mxu0 0
    %1928 = vmatpush1.bf16.xpose.msra.mxu0 %v1915
    %1929 = vmatprep.subr.bf16.mxu0 0
    %1930 = vmatpush1.bf16.xpose.msra.mxu0 %v1918
    %1931 = vmatprep.subr.bf16.mxu0 0
    %1932 = vmatpush1.bf16.xpose.msra.mxu0 %v1921
    %1933 = vmatprep.subr.bf16.mxu0 0
    %1934 = vmatpush1.bf16.xpose.msra.mxu0 0
    %1935 = vmatprep.subr.bf16.mxu0 0
    %1936 = vmatpush1.bf16.xpose.msra.mxu0 0
    %1937 = vmatprep.subr.bf16.mxu0 0
    %1938 = vmatpush1.bf16.xpose.msra.mxu0 0
    %1939 = vmatprep.subr.bf16.mxu0 0
    %1940 = vmatpush1.bf16.xpose.msra.mxu0 0
    %1941 = vmatprep.subr.bf16.mxu0 0
    %1942 = vmatpush1.bf16.xpose.msra.mxu0 0
    %1943 = vmatprep.subr.bf16.mxu0 0
    %1944 = vmatpush1.bf16.xpose.msra.mxu0 0
    %1945 = vmatprep.subr.bf16.mxu0 0
    %1946 = vmatpush1.bf16.xpose.msra.mxu0 0
    %1947 = vmatprep.subr.bf16.mxu0 0
    %1948 = vmatpush1.bf16.xpose.msra.mxu0 0
    %1949 = vmatprep.subr.bf16.mxu0 0
    %1950 = vmatpush1.bf16.xpose.msra.mxu0 0
    %1951 = vmatprep.subr.bf16.mxu0 0
    %1952 = vmatpush1.bf16.xpose.msra.mxu0 0
    %1953 = vmatprep.subr.bf16.mxu0 0
    %1954 = vmatpush1.bf16.xpose.msra.mxu0 0
    %1955 = vmatprep.mubr.bf16.mxu0 0
    %1956 = vmatmul.mubr.bf16.gmra.mrb[0].mxu0 %v1894
    %v1957 = vpop.f32.mrb[0].mxu0
    %v1958 = vadd.f32 0.0, %v1957
    %v1959 = vpop.f32.mrb[0].mxu0
    %v1960 = vpop.f32.mrb[0].mxu0
    %v1961 = vadd.f32 0.0, %v1960
    %v1962 = vpop.f32.mrb[0].mxu0
    %1963 = vmatprep.mubr.bf16.mxu0 0
    %1964 = vmatmul.mubr.bf16.gmra.mrb[0].mxu0 %v1897
    %v1965 = vpop.f32.mrb[0].mxu0
    %v1966 = vadd.f32 0.0, %v1965
    %v1967 = vpop.f32.mrb[0].mxu0
    %v1968 = vpop.f32.mrb[0].mxu0
    %v1969 = vadd.f32 0.0, %v1968
    %v1970 = vpop.f32.mrb[0].mxu0
    %1971 = vmatprep.mubr.bf16.mxu0 0
    %1972 = vmatmul.mubr.bf16.gmra.mrb[0].mxu0 %v1900
    %v1973 = vpop.f32.mrb[0].mxu0
    %v1974 = vadd.f32 0.0, %v1973
    %v1975 = vpop.f32.mrb[0].mxu0
    %v1976 = vpop.f32.mrb[0].mxu0
    %v1977 = vadd.f32 0.0, %v1976
    %v1978 = vpop.f32.mrb[0].mxu0
    %1979 = vmatprep.mubr.bf16.mxu0 0
    %1980 = vmatmul.mubr.bf16.gmra.mrb[0].mxu0 %v1903
    %v1981 = vpop.f32.mrb[0].mxu0
    %v1982 = vadd.f32 0.0, %v1981
    %v1983 = vpop.f32.mrb[0].mxu0
    %v1984 = vpop.f32.mrb[0].mxu0
    %v1985 = vadd.f32 0.0, %v1984
    %v1986 = vpop.f32.mrb[0].mxu0
    %1987 = vmatprep.mubr.bf16.mxu0 0
    %1988 = vmatmul.mubr.bf16.gmra.mrb[0].mxu0 %v1906
    %v1989 = vpop.f32.mrb[0].mxu0
    %v1990 = vadd.f32 0.0, %v1989
    %v1991 = vpop.f32.mrb[0].mxu0
    %v1992 = vpop.f32.mrb[0].mxu0
    %v1993 = vpop.f32.mrb[0].mxu0
    %1994 = vdwg.mxu0
    %2000 = vrot.lane.b32.xlu0 %v1849, 96
    %v2001 = vpop.permute.xlu0 %2000
    %2002 = vrot.lane.b32.xlu0 %v1850, 96
    %v2003 = vpop.permute.xlu0 %2002
    %2004 = vrot.lane.b32.xlu0 %v1851, 96
    %v2005 = vpop.permute.xlu0 %2004
    %2006 = vrot.lane.b32.xlu0 %v1852, 96
    %v2007 = vpop.permute.xlu0 %2006
    %2008 = vrot.lane.b32.xlu0 %v1853, 96
    %v2009 = vpop.permute.xlu0 %2008
    %v2011 = vsel %vm822, %v1849, 0
    %v2014 = vsel %vm822, %v1850, 0
    %v2017 = vsel %vm822, %v1851, 0
    %v2020 = vsel %vm822, %v1852, 0
    %v2023 = vsel %vm822, %v1853, 0
    %v2026 = vsel %vm822, %v2001, 0
    %v2029 = vsel %vm822, %v2003, 0
    %v2032 = vsel %vm822, %v2005, 0
    %v2035 = vsel %vm822, %v2007, 0
    %v2038 = vsel %vm822, %v2009, 0
    %2040 = vmatprep.subr.bf16.mxu0 0
    %2041 = vmatpush1.bf16.xpose.msra.mxu0 %v2026
    %2042 = vmatprep.subr.bf16.mxu0 0
    %2043 = vmatpush1.bf16.xpose.msra.mxu0 %v2029
    %2044 = vmatprep.subr.bf16.mxu0 0
    %2045 = vmatpush1.bf16.xpose.msra.mxu0 %v2032
    %2046 = vmatprep.subr.bf16.mxu0 0
    %2047 = vmatpush1.bf16.xpose.msra.mxu0 %v2035
    %2048 = vmatprep.subr.bf16.mxu0 0
    %2049 = vmatpush1.bf16.xpose.msra.mxu0 %v2038
    %2050 = vmatprep.subr.bf16.mxu0 0
    %2051 = vmatpush1.bf16.xpose.msra.mxu0 0
    %2052 = vmatprep.subr.bf16.mxu0 0
    %2053 = vmatpush1.bf16.xpose.msra.mxu0 0
    %2054 = vmatprep.subr.bf16.mxu0 0
    %2055 = vmatpush1.bf16.xpose.msra.mxu0 0
    %2056 = vmatprep.subr.bf16.mxu0 0
    %2057 = vmatpush1.bf16.xpose.msra.mxu0 0
    %2058 = vmatprep.subr.bf16.mxu0 0
    %2059 = vmatpush1.bf16.xpose.msra.mxu0 0
    %2060 = vmatprep.subr.bf16.mxu0 0
    %2061 = vmatpush1.bf16.xpose.msra.mxu0 0
    %2062 = vmatprep.subr.bf16.mxu0 0
    %2063 = vmatpush1.bf16.xpose.msra.mxu0 0
    %2064 = vmatprep.subr.bf16.mxu0 0
    %2065 = vmatpush1.bf16.xpose.msra.mxu0 0
    %2066 = vmatprep.subr.bf16.mxu0 0
    %2067 = vmatpush1.bf16.xpose.msra.mxu0 0
    %2068 = vmatprep.subr.bf16.mxu0 0
    %2069 = vmatpush1.bf16.xpose.msra.mxu0 0
    %2070 = vmatprep.subr.bf16.mxu0 0
    %2071 = vmatpush1.bf16.xpose.msra.mxu0 0
    %2072 = vmatprep.mubr.bf16.mxu0 0
    %2073 = vmatmul.mubr.bf16.gmra.mrb[0].mxu0 %v2011
    %v2074 = vpop.f32.mrb[0].mxu0
    %v2075 = vadd.f32 0.0, %v2074
    %v2076 = vpop.f32.mrb[0].mxu0
    %v2077 = vpop.f32.mrb[0].mxu0
    %v2078 = vadd.f32 0.0, %v2077
    %v2079 = vpop.f32.mrb[0].mxu0
    %2080 = vmatprep.mubr.bf16.mxu0 0
    %2081 = vmatmul.mubr.bf16.gmra.mrb[0].mxu0 %v2014
    %v2082 = vpop.f32.mrb[0].mxu0
    %v2083 = vadd.f32 0.0, %v2082
    %v2084 = vpop.f32.mrb[0].mxu0
    %v2085 = vpop.f32.mrb[0].mxu0
    %v2086 = vadd.f32 0.0, %v2085
    %v2087 = vpop.f32.mrb[0].mxu0
    %2088 = vmatprep.mubr.bf16.mxu0 0
    %2089 = vmatmul.mubr.bf16.gmra.mrb[0].mxu0 %v2017
    %v2090 = vpop.f32.mrb[0].mxu0
    %v2091 = vadd.f32 0.0, %v2090
    %v2092 = vpop.f32.mrb[0].mxu0
    %v2093 = vpop.f32.mrb[0].mxu0
    %v2094 = vadd.f32 0.0, %v2093
    %v2095 = vpop.f32.mrb[0].mxu0
    %2096 = vmatprep.mubr.bf16.mxu0 0
    %2097 = vmatmul.mubr.bf16.gmra.mrb[0].mxu0 %v2020
    %v2098 = vpop.f32.mrb[0].mxu0
    %v2099 = vadd.f32 0.0, %v2098
    %v2100 = vpop.f32.mrb[0].mxu0
    %v2101 = vpop.f32.mrb[0].mxu0
    %v2102 = vadd.f32 0.0, %v2101
    %v2103 = vpop.f32.mrb[0].mxu0
    %2104 = vmatprep.mubr.bf16.mxu0 0
    %2105 = vmatmul.mubr.bf16.gmra.mrb[0].mxu0 %v2023
    %v2106 = vpop.f32.mrb[0].mxu0
    %v2107 = vadd.f32 0.0, %v2106
    %v2108 = vpop.f32.mrb[0].mxu0
    %v2109 = vpop.f32.mrb[0].mxu0
    %v2110 = vpop.f32.mrb[0].mxu0
    %2111 = vdwg.mxu0
    %vm2112 = vcmask 588800
    %v2113 = vsel %vm2112, %v1958, -inf
    %2114 = vmax.xlane.f32.xlu0 %v2113
    %v2115 = vpop.xlane.xlu0 %2114
    %v2116 = vsel %vm2112, %v1961, -inf
    %2117 = vmax.xlane.f32.xlu0 %v2116
    %v2118 = vpop.xlane.xlu0 %2117
    %v2119 = vsel %vm2112, %v1966, -inf
    %2120 = vmax.xlane.f32.xlu0 %v2119
    %v2121 = vpop.xlane.xlu0 %2120
    %v2122 = vsel %vm2112, %v1969, -inf
    %2123 = vmax.xlane.f32.xlu0 %v2122
    %v2124 = vpop.xlane.xlu0 %2123
    %v2125 = vsel %vm2112, %v1974, -inf
    %2126 = vmax.xlane.f32.xlu0 %v2125
    %v2127 = vpop.xlane.xlu0 %2126
    %v2128 = vsel %vm2112, %v1977, -inf
    %2129 = vmax.xlane.f32.xlu0 %v2128
    %v2130 = vpop.xlane.xlu0 %2129
    %v2131 = vsel %vm2112, %v1982, -inf
    %2132 = vmax.xlane.f32.xlu0 %v2131
    %v2133 = vpop.xlane.xlu0 %2132
    %v2134 = vsel %vm2112, %v1985, -inf
    %2135 = vmax.xlane.f32.xlu0 %v2134
    %v2136 = vpop.xlane.xlu0 %2135
    %v2137 = vsel %vm2112, %v1990, -inf
    %2138 = vmax.xlane.f32.xlu0 %v2137
    %v2139 = vpop.xlane.xlu0 %2138
    %v2140 = vsel %vm2112, %v2075, -inf
    %2141 = vmax.xlane.f32.xlu0 %v2140
    %v2142 = vpop.xlane.xlu0 %2141
    %v2143 = vsel %vm2112, %v2078, -inf
    %2144 = vmax.xlane.f32.xlu0 %v2143
    %v2145 = vpop.xlane.xlu0 %2144
    %v2146 = vsel %vm2112, %v2083, -inf
    %2147 = vmax.xlane.f32.xlu0 %v2146
    %v2148 = vpop.xlane.xlu0 %2147
    %v2149 = vsel %vm2112, %v2086, -inf
    %2150 = vmax.xlane.f32.xlu0 %v2149
    %v2151 = vpop.xlane.xlu0 %2150
    %v2152 = vsel %vm2112, %v2091, -inf
    %2153 = vmax.xlane.f32.xlu0 %v2152
    %v2154 = vpop.xlane.xlu0 %2153
    %v2155 = vsel %vm2112, %v2094, -inf
    %2156 = vmax.xlane.f32.xlu0 %v2155
    %v2157 = vpop.xlane.xlu0 %2156
    %v2158 = vsel %vm2112, %v2099, -inf
    %2159 = vmax.xlane.f32.xlu0 %v2158
    %v2160 = vpop.xlane.xlu0 %2159
    %v2161 = vsel %vm2112, %v2102, -inf
    %2162 = vmax.xlane.f32.xlu0 %v2161
    %v2163 = vpop.xlane.xlu0 %2162
    %v2164 = vsel %vm2112, %v2107, -inf
    %2165 = vmax.xlane.f32.xlu0 %v2164
    %v2166 = vpop.xlane.xlu0 %2165
    %v2167 = vsub.f32 %v1958, %v2115
    %v2168 = vsub.f32 %v1961, %v2118
    %v2169 = vsub.f32 %v1966, %v2121
    %v2170 = vsub.f32 %v1969, %v2124
    %v2171 = vsub.f32 %v1974, %v2127
    %v2172 = vsub.f32 %v1977, %v2130
    %v2173 = vsub.f32 %v1982, %v2133
    %v2174 = vsub.f32 %v1985, %v2136
    %v2175 = vsub.f32 %v1990, %v2139
    %v2176 = vsub.f32 %v2075, %v2142
    %v2177 = vsub.f32 %v2078, %v2145
    %v2178 = vsub.f32 %v2083, %v2148
    %v2179 = vsub.f32 %v2086, %v2151
    %v2180 = vsub.f32 %v2091, %v2154
    %v2181 = vsub.f32 %v2094, %v2157
    %v2182 = vsub.f32 %v2099, %v2160
    %v2183 = vsub.f32 %v2102, %v2163
    %v2184 = vsub.f32 %v2107, %v2166
    %v2185 = vmul.f32 %v2167, 1.442695
    %v2186 = vpow.pop %v2185
    %v2187 = vmul.f32 %v2168, 1.442695
    %v2188 = vpow.pop %v2187
    %v2189 = vmul.f32 %v2169, 1.442695
    %v2190 = vpow.pop %v2189
    %v2191 = vmul.f32 %v2170, 1.442695
    %v2192 = vpow.pop %v2191
    %v2193 = vmul.f32 %v2171, 1.442695
    %v2194 = vpow.pop %v2193
    %v2195 = vmul.f32 %v2172, 1.442695
    %v2196 = vpow.pop %v2195
    %v2197 = vmul.f32 %v2173, 1.442695
    %v2198 = vpow.pop %v2197
    %v2199 = vmul.f32 %v2174, 1.442695
    %v2200 = vpow.pop %v2199
    %v2201 = vmul.f32 %v2175, 1.442695
    %v2202 = vpow.pop %v2201
    %v2203 = vmul.f32 %v2176, 1.442695
    %v2204 = vpow.pop %v2203
    %v2205 = vmul.f32 %v2177, 1.442695
    %v2206 = vpow.pop %v2205
    %v2207 = vmul.f32 %v2178, 1.442695
    %v2208 = vpow.pop %v2207
    %v2209 = vmul.f32 %v2179, 1.442695
    %v2210 = vpow.pop %v2209
    %v2211 = vmul.f32 %v2180, 1.442695
    %v2212 = vpow.pop %v2211
    %v2213 = vmul.f32 %v2181, 1.442695
    %v2214 = vpow.pop %v2213
    %v2215 = vmul.f32 %v2182, 1.442695
    %v2216 = vpow.pop %v2215
    %v2217 = vmul.f32 %v2183, 1.442695
    %v2218 = vpow.pop %v2217
    %v2219 = vmul.f32 %v2184, 1.442695
    %v2220 = vpow.pop %v2219
    %v2221 = vsel %vm2112, %v2186, 0.0
    %2222 = vadd.xlane.f32.xlu0 %v2221
    %v2223 = vpop.xlane.xlu0 %2222
    %v2224 = vsel %vm2112, %v2188, 0.0
    %2225 = vadd.xlane.f32.xlu0 %v2224
    %v2226 = vpop.xlane.xlu0 %2225
    %v2227 = vsel %vm2112, %v2190, 0.0
    %2228 = vadd.xlane.f32.xlu0 %v2227
    %v2229 = vpop.xlane.xlu0 %2228
    %v2230 = vsel %vm2112, %v2192, 0.0
    %2231 = vadd.xlane.f32.xlu0 %v2230
    %v2232 = vpop.xlane.xlu0 %2231
    %v2233 = vsel %vm2112, %v2194, 0.0
    %2234 = vadd.xlane.f32.xlu0 %v2233
    %v2235 = vpop.xlane.xlu0 %2234
    %v2236 = vsel %vm2112, %v2196, 0.0
    %2237 = vadd.xlane.f32.xlu0 %v2236
    %v2238 = vpop.xlane.xlu0 %2237
    %v2239 = vsel %vm2112, %v2198, 0.0
    %2240 = vadd.xlane.f32.xlu0 %v2239
    %v2241 = vpop.xlane.xlu0 %2240
    %v2242 = vsel %vm2112, %v2200, 0.0
    %2243 = vadd.xlane.f32.xlu0 %v2242
    %v2244 = vpop.xlane.xlu0 %2243
    %v2245 = vsel %vm2112, %v2202, 0.0
    %2246 = vadd.xlane.f32.xlu0 %v2245
    %v2247 = vpop.xlane.xlu0 %2246
    %v2248 = vsel %vm2112, %v2204, 0.0
    %2249 = vadd.xlane.f32.xlu0 %v2248
    %v2250 = vpop.xlane.xlu0 %2249
    %v2251 = vsel %vm2112, %v2206, 0.0
    %2252 = vadd.xlane.f32.xlu0 %v2251
    %v2253 = vpop.xlane.xlu0 %2252
    %v2254 = vsel %vm2112, %v2208, 0.0
    %2255 = vadd.xlane.f32.xlu0 %v2254
    %v2256 = vpop.xlane.xlu0 %2255
    %v2257 = vsel %vm2112, %v2210, 0.0
    %2258 = vadd.xlane.f32.xlu0 %v2257
    %v2259 = vpop.xlane.xlu0 %2258
    %v2260 = vsel %vm2112, %v2212, 0.0
    %2261 = vadd.xlane.f32.xlu0 %v2260
    %v2262 = vpop.xlane.xlu0 %2261
    %v2263 = vsel %vm2112, %v2214, 0.0
    %2264 = vadd.xlane.f32.xlu0 %v2263
    %v2265 = vpop.xlane.xlu0 %2264
    %v2266 = vsel %vm2112, %v2216, 0.0
    %2267 = vadd.xlane.f32.xlu0 %v2266
    %v2268 = vpop.xlane.xlu0 %2267
    %v2269 = vsel %vm2112, %v2218, 0.0
    %2270 = vadd.xlane.f32.xlu0 %v2269
    %v2271 = vpop.xlane.xlu0 %2270
    %v2272 = vsel %vm2112, %v2220, 0.0
    %2273 = vadd.xlane.f32.xlu0 %v2272
    %v2274 = vpop.xlane.xlu0 %2273
    %v2275 = vpack.c.bf16 %v2188, %v2186
    %v2276 = vpack.c.bf16 %v2192, %v2190
    %v2277 = vpack.c.bf16 %v2196, %v2194
    %v2278 = vpack.c.bf16 %v2200, %v2198
    %v2279 = vpack.c.bf16 %v2202, %v2202
    %v2280 = vpack.c.bf16 %v2206, %v2204
    %v2281 = vpack.c.bf16 %v2210, %v2208
    %v2282 = vpack.c.bf16 %v2214, %v2212
    %v2283 = vpack.c.bf16 %v2218, %v2216
    %v2284 = vpack.c.bf16 %v2220, %v2220
    %2290 = vrot.lane.b32.xlu0 %v1868, 64
    %v2291 = vpop.permute.xlu0 %2290
    %2292 = vrot.lane.b32.xlu0 %v1869, 64
    %v2293 = vpop.permute.xlu0 %2292
    %2294 = vrot.lane.b32.xlu0 %v1870, 64
    %v2295 = vpop.permute.xlu0 %2294
    %2296 = vrot.lane.b32.xlu0 %v1871, 64
    %v2297 = vpop.permute.xlu0 %2296
    %2298 = vrot.lane.b32.xlu0 %v1872, 64
    %v2299 = vpop.permute.xlu0 %2298
    %v2305 = vsel %vm2112, %v2275, 0
    %v2308 = vsel %vm2112, %v2276, 0
    %v2311 = vsel %vm2112, %v2277, 0
    %v2314 = vsel %vm2112, %v2278, 0
    %v2317 = vsel %vm2112, %v2279, 0
    %vm2319 = vcmask 1043456
    %v2321 = vsel %vm2319, %v2299, 0
    %2323 = vmatprep.subr.bf16.mxu0 0
    %2324 = vmatpush1.bf16.msra.mxu0 %v2291
    %2325 = vmatprep.subr.bf16.mxu0 0
    %2326 = vmatpush1.bf16.msra.mxu0 %v2293
    %2327 = vmatprep.subr.bf16.mxu0 0
    %2328 = vmatpush1.bf16.msra.mxu0 %v2295
    %2329 = vmatprep.subr.bf16.mxu0 0
    %2330 = vmatpush1.bf16.msra.mxu0 %v2297
    %2331 = vmatprep.subr.bf16.mxu0 0
    %2332 = vmatpush1.bf16.msra.mxu0 %v2321
    %2333 = vmatprep.subr.bf16.mxu0 0
    %2334 = vmatpush1.bf16.msra.mxu0 0
    %2335 = vmatprep.subr.bf16.mxu0 0
    %2336 = vmatpush1.bf16.msra.mxu0 0
    %2337 = vmatprep.subr.bf16.mxu0 0
    %2338 = vmatpush1.bf16.msra.mxu0 0
    %2339 = vmatprep.subr.bf16.mxu0 0
    %2340 = vmatpush1.bf16.msra.mxu0 0
    %2341 = vmatprep.subr.bf16.mxu0 0
    %2342 = vmatpush1.bf16.msra.mxu0 0
    %2343 = vmatprep.subr.bf16.mxu0 0
    %2344 = vmatpush1.bf16.msra.mxu0 0
    %2345 = vmatprep.subr.bf16.mxu0 0
    %2346 = vmatpush1.bf16.msra.mxu0 0
    %2347 = vmatprep.subr.bf16.mxu0 0
    %2348 = vmatpush1.bf16.msra.mxu0 0
    %2349 = vmatprep.subr.bf16.mxu0 0
    %2350 = vmatpush1.bf16.msra.mxu0 0
    %2351 = vmatprep.subr.bf16.mxu0 0
    %2352 = vmatpush1.bf16.msra.mxu0 0
    %2353 = vmatprep.subr.bf16.mxu0 0
    %2354 = vmatpush1.bf16.msra.mxu0 0
    %2355 = vmatprep.mubr.bf16.mxu0 0
    %2356 = vmatmul.mubr.bf16.gmra.mrb[0].mxu0 %v2305
    %v2357 = vpop.f32.mrb[0].mxu0
    %v2358 = vadd.f32 0.0, %v2357
    %v2359 = vpop.f32.mrb[0].mxu0
    %v2360 = vpop.f32.mrb[0].mxu0
    %v2361 = vadd.f32 0.0, %v2360
    %v2362 = vpop.f32.mrb[0].mxu0
    %2363 = vmatprep.mubr.bf16.mxu0 0
    %2364 = vmatmul.mubr.bf16.gmra.mrb[0].mxu0 %v2308
    %v2365 = vpop.f32.mrb[0].mxu0
    %v2366 = vadd.f32 0.0, %v2365
    %v2367 = vpop.f32.mrb[0].mxu0
    %v2368 = vpop.f32.mrb[0].mxu0
    %v2369 = vadd.f32 0.0, %v2368
    %v2370 = vpop.f32.mrb[0].mxu0
    %2371 = vmatprep.mubr.bf16.mxu0 0
    %2372 = vmatmul.mubr.bf16.gmra.mrb[0].mxu0 %v2311
    %v2373 = vpop.f32.mrb[0].mxu0
    %v2374 = vadd.f32 0.0, %v2373
    %v2375 = vpop.f32.mrb[0].mxu0
    %v2376 = vpop.f32.mrb[0].mxu0
    %v2377 = vadd.f32 0.0, %v2376
    %v2378 = vpop.f32.mrb[0].mxu0
    %2379 = vmatprep.mubr.bf16.mxu0 0
    %2380 = vmatmul.mubr.bf16.gmra.mrb[0].mxu0 %v2314
    %v2381 = vpop.f32.mrb[0].mxu0
    %v2382 = vadd.f32 0.0, %v2381
    %v2383 = vpop.f32.mrb[0].mxu0
    %v2384 = vpop.f32.mrb[0].mxu0
    %v2385 = vadd.f32 0.0, %v2384
    %v2386 = vpop.f32.mrb[0].mxu0
    %2387 = vmatprep.mubr.bf16.mxu0 0
    %2388 = vmatmul.mubr.bf16.gmra.mrb[0].mxu0 %v2317
    %v2389 = vpop.f32.mrb[0].mxu0
    %v2390 = vadd.f32 0.0, %v2389
    %v2391 = vpop.f32.mrb[0].mxu0
    %v2392 = vpop.f32.mrb[0].mxu0
    %v2393 = vpop.f32.mrb[0].mxu0
    %2394 = vdwg.mxu0
    %2400 = vrot.lane.b32.xlu0 %v1873, 64
    %v2401 = vpop.permute.xlu0 %2400
    %2402 = vrot.lane.b32.xlu0 %v1874, 64
    %v2403 = vpop.permute.xlu0 %2402
    %2404 = vrot.lane.b32.xlu0 %v1875, 64
    %v2405 = vpop.permute.xlu0 %2404
    %2406 = vrot.lane.b32.xlu0 %v1876, 64
    %v2407 = vpop.permute.xlu0 %2406
    %2408 = vrot.lane.b32.xlu0 %v1877, 64
    %v2409 = vpop.permute.xlu0 %2408
    %v2415 = vsel %vm2112, %v2280, 0
    %v2418 = vsel %vm2112, %v2281, 0
    %v2421 = vsel %vm2112, %v2282, 0
    %v2424 = vsel %vm2112, %v2283, 0
    %v2427 = vsel %vm2112, %v2284, 0
    %v2430 = vsel %vm2319, %v2409, 0
    %2432 = vmatprep.subr.bf16.mxu0 0
    %2433 = vmatpush1.bf16.msra.mxu0 %v2401
    %2434 = vmatprep.subr.bf16.mxu0 0
    %2435 = vmatpush1.bf16.msra.mxu0 %v2403
    %2436 = vmatprep.subr.bf16.mxu0 0
    %2437 = vmatpush1.bf16.msra.mxu0 %v2405
    %2438 = vmatprep.subr.bf16.mxu0 0
    %2439 = vmatpush1.bf16.msra.mxu0 %v2407
    %2440 = vmatprep.subr.bf16.mxu0 0
    %2441 = vmatpush1.bf16.msra.mxu0 %v2430
    %2442 = vmatprep.subr.bf16.mxu0 0
    %2443 = vmatpush1.bf16.msra.mxu0 0
    %2444 = vmatprep.subr.bf16.mxu0 0
    %2445 = vmatpush1.bf16.msra.mxu0 0
    %2446 = vmatprep.subr.bf16.mxu0 0
    %2447 = vmatpush1.bf16.msra.mxu0 0
    %2448 = vmatprep.subr.bf16.mxu0 0
    %2449 = vmatpush1.bf16.msra.mxu0 0
    %2450 = vmatprep.subr.bf16.mxu0 0
    %2451 = vmatpush1.bf16.msra.mxu0 0
    %2452 = vmatprep.subr.bf16.mxu0 0
    %2453 = vmatpush1.bf16.msra.mxu0 0
    %2454 = vmatprep.subr.bf16.mxu0 0
    %2455 = vmatpush1.bf16.msra.mxu0 0
    %2456 = vmatprep.subr.bf16.mxu0 0
    %2457 = vmatpush1.bf16.msra.mxu0 0
    %2458 = vmatprep.subr.bf16.mxu0 0
    %2459 = vmatpush1.bf16.msra.mxu0 0
    %2460 = vmatprep.subr.bf16.mxu0 0
    %2461 = vmatpush1.bf16.msra.mxu0 0
    %2462 = vmatprep.subr.bf16.mxu0 0
    %2463 = vmatpush1.bf16.msra.mxu0 0
    %2464 = vmatprep.mubr.bf16.mxu0 0
    %2465 = vmatmul.mubr.bf16.gmra.mrb[0].mxu0 %v2415
    %v2466 = vpop.f32.mrb[0].mxu0
    %v2467 = vadd.f32 0.0, %v2466
    %v2468 = vpop.f32.mrb[0].mxu0
    %v2469 = vpop.f32.mrb[0].mxu0
    %v2470 = vadd.f32 0.0, %v2469
    %v2471 = vpop.f32.mrb[0].mxu0
    %2472 = vmatprep.mubr.bf16.mxu0 0
    %2473 = vmatmul.mubr.bf16.gmra.mrb[0].mxu0 %v2418
    %v2474 = vpop.f32.mrb[0].mxu0
    %v2475 = vadd.f32 0.0, %v2474
    %v2476 = vpop.f32.mrb[0].mxu0
    %v2477 = vpop.f32.mrb[0].mxu0
    %v2478 = vadd.f32 0.0, %v2477
    %v2479 = vpop.f32.mrb[0].mxu0
    %2480 = vmatprep.mubr.bf16.mxu0 0
    %2481 = vmatmul.mubr.bf16.gmra.mrb[0].mxu0 %v2421
    %v2482 = vpop.f32.mrb[0].mxu0
    %v2483 = vadd.f32 0.0, %v2482
    %v2484 = vpop.f32.mrb[0].mxu0
    %v2485 = vpop.f32.mrb[0].mxu0
    %v2486 = vadd.f32 0.0, %v2485
    %v2487 = vpop.f32.mrb[0].mxu0
    %2488 = vmatprep.mubr.bf16.mxu0 0
    %2489 = vmatmul.mubr.bf16.gmra.mrb[0].mxu0 %v2424
    %v2490 = vpop.f32.mrb[0].mxu0
    %v2491 = vadd.f32 0.0, %v2490
    %v2492 = vpop.f32.mrb[0].mxu0
    %v2493 = vpop.f32.mrb[0].mxu0
    %v2494 = vadd.f32 0.0, %v2493
    %v2495 = vpop.f32.mrb[0].mxu0
    %2496 = vmatprep.mubr.bf16.mxu0 0
    %2497 = vmatmul.mubr.bf16.gmra.mrb[0].mxu0 %v2427
    %v2498 = vpop.f32.mrb[0].mxu0
    %v2499 = vadd.f32 0.0, %v2498
    %v2500 = vpop.f32.mrb[0].mxu0
    %v2501 = vpop.f32.mrb[0].mxu0
    %v2502 = vpop.f32.mrb[0].mxu0
    %2503 = vdwg.mxu0
    %v2504 = vrcp.pop %v2223
    %v2505 = vrcp.pop %v2226
    %v2506 = vrcp.pop %v2229
    %v2507 = vrcp.pop %v2232
    %v2508 = vrcp.pop %v2235
    %v2509 = vrcp.pop %v2238
    %v2510 = vrcp.pop %v2241
    %v2511 = vrcp.pop %v2244
    %v2512 = vrcp.pop %v2247
    %v2513 = vrcp.pop %v2250
    %v2514 = vrcp.pop %v2253
    %v2515 = vrcp.pop %v2256
    %v2516 = vrcp.pop %v2259
    %v2517 = vrcp.pop %v2262
    %v2518 = vrcp.pop %v2265
    %v2519 = vrcp.pop %v2268
    %v2520 = vrcp.pop %v2271
    %v2521 = vrcp.pop %v2274
    %v2522 = vmul.f32 %v2358, %v2504
    %v2523 = vmul.f32 %v2361, %v2505
    %v2524 = vmul.f32 %v2366, %v2506
    %v2525 = vmul.f32 %v2369, %v2507
    %v2526 = vmul.f32 %v2374, %v2508
    %v2527 = vmul.f32 %v2377, %v2509
    %v2528 = vmul.f32 %v2382, %v2510
    %v2529 = vmul.f32 %v2385, %v2511
    %v2530 = vmul.f32 %v2390, %v2512
    %v2531 = vmul.f32 %v2467, %v2513
    %v2532 = vmul.f32 %v2470, %v2514
    %v2533 = vmul.f32 %v2475, %v2515
    %v2534 = vmul.f32 %v2478, %v2516
    %v2535 = vmul.f32 %v2483, %v2517
    %v2536 = vmul.f32 %v2486, %v2518
    %v2537 = vmul.f32 %v2491, %v2519
    %v2538 = vmul.f32 %v2494, %v2520
    %v2539 = vmul.f32 %v2499, %v2521
    %v2540 = vadd.f32 %v2522, 0.0
    %v2541 = vadd.f32 %v2523, 0.0
    %v2542 = vadd.f32 %v2524, 0.0
    %v2543 = vadd.f32 %v2525, 0.0
    %v2544 = vadd.f32 %v2526, 0.0
    %v2545 = vadd.f32 %v2527, 0.0
    %v2546 = vadd.f32 %v2528, 0.0
    %v2547 = vadd.f32 %v2529, 0.0
    %v2548 = vadd.f32 %v2530, 0.0
    %v2549 = vadd.f32 %v2531, 0.0
    %v2550 = vadd.f32 %v2532, 0.0
    %v2551 = vadd.f32 %v2533, 0.0
    %v2552 = vadd.f32 %v2534, 0.0
    %v2553 = vadd.f32 %v2535, 0.0
    %v2554 = vadd.f32 %v2536, 0.0
    %v2555 = vadd.f32 %v2537, 0.0
    %v2556 = vadd.f32 %v2538, 0.0
    %v2557 = vadd.f32 %v2539, 0.0
    %vm2558 = vcmp.ge.s32.totalorder %v1039, 16
    %vm2559 = vcmp.lt.s32.totalorder %v1039, 32
    %vm2560 = vmand %vm2558, %vm2559
    %v2561 = vsel %vm2560, 1, 0
    %vm2562 = vcmp.eq.s32.totalorder %v2561, 1
    %vm2563 = vmpackc.low %vm2562, %vm2562
    %v2564 = vsel %vm2563, 65537, 0
    %v2565 = vlaneseq
    %v2566 = vshrl.u32 %v2565, 7
    %v2567 = vsub.s32 0, %v2566
    %v2568 = vrot.slane %v2564, %v2567
    %2569 = vrot.lane.b32.xlu0 %v2568, 64
    %v2570 = vpop.permute.xlu0 %2569
    %vm2571 = vcmp.ne.s16.totalorder %v2570, 0
    %v2572 = vsel %vm2571, %v1844, 0
    %v2573 = vsel %vm2571, %v1845, 0
    %v2574 = vsel %vm2571, %v1846, 0
    %v2575 = vsel %vm2571, %v1847, 0
    %v2576 = vsel %vm2571, %v1848, 0
    %v2577 = vsel %vm2571, %v1849, 0
    %v2578 = vsel %vm2571, %v1850, 0
    %v2579 = vsel %vm2571, %v1851, 0
    %v2580 = vsel %vm2571, %v1852, 0
    %v2581 = vsel %vm2571, %v1853, 0
    %2582 = vrot.lane.b32.xlu0 %v1844, 112
    %v2583 = vpop.permute.xlu0 %2582
    %2584 = vrot.lane.b32.xlu0 %v1845, 112
    %v2585 = vpop.permute.xlu0 %2584
    %2586 = vrot.lane.b32.xlu0 %v1846, 112
    %v2587 = vpop.permute.xlu0 %2586
    %2588 = vrot.lane.b32.xlu0 %v1847, 112
    %v2589 = vpop.permute.xlu0 %2588
    %2590 = vrot.lane.b32.xlu0 %v1848, 112
    %v2591 = vpop.permute.xlu0 %2590
    %2592 = vrot.lane.b32.xlu0 %v1844, 80
    %v2593 = vpop.permute.xlu0 %2592
    %2594 = vrot.lane.b32.xlu0 %v1845, 80
    %v2595 = vpop.permute.xlu0 %2594
    %2596 = vrot.lane.b32.xlu0 %v1846, 80
    %v2597 = vpop.permute.xlu0 %2596
    %2598 = vrot.lane.b32.xlu0 %v1847, 80
    %v2599 = vpop.permute.xlu0 %2598
    %2600 = vrot.lane.b32.xlu0 %v1848, 80
    %v2601 = vpop.permute.xlu0 %2600
    %v2603 = vsel %vm822, %v2583, 0
    %v2606 = vsel %vm822, %v2585, 0
    %v2609 = vsel %vm822, %v2587, 0
    %v2612 = vsel %vm822, %v2589, 0
    %v2615 = vsel %vm822, %v2591, 0
    %v2618 = vsel %vm822, %v2593, 0
    %v2621 = vsel %vm822, %v2595, 0
    %v2624 = vsel %vm822, %v2597, 0
    %v2627 = vsel %vm822, %v2599, 0
    %v2630 = vsel %vm822, %v2601, 0
    %2632 = vmatprep.subr.bf16.mxu0 0
    %2633 = vmatpush1.bf16.xpose.msra.mxu0 %v2618
    %2634 = vmatprep.subr.bf16.mxu0 0
    %2635 = vmatpush1.bf16.xpose.msra.mxu0 %v2621
    %2636 = vmatprep.subr.bf16.mxu0 0
    %2637 = vmatpush1.bf16.xpose.msra.mxu0 %v2624
    %2638 = vmatprep.subr.bf16.mxu0 0
    %2639 = vmatpush1.bf16.xpose.msra.mxu0 %v2627
    %2640 = vmatprep.subr.bf16.mxu0 0
    %2641 = vmatpush1.bf16.xpose.msra.mxu0 %v2630
    %2642 = vmatprep.subr.bf16.mxu0 0
    %2643 = vmatpush1.bf16.xpose.msra.mxu0 0
    %2644 = vmatprep.subr.bf16.mxu0 0
    %2645 = vmatpush1.bf16.xpose.msra.mxu0 0
    %2646 = vmatprep.subr.bf16.mxu0 0
    %2647 = vmatpush1.bf16.xpose.msra.mxu0 0
    %2648 = vmatprep.subr.bf16.mxu0 0
    %2649 = vmatpush1.bf16.xpose.msra.mxu0 0
    %2650 = vmatprep.subr.bf16.mxu0 0
    %2651 = vmatpush1.bf16.xpose.msra.mxu0 0
    %2652 = vmatprep.subr.bf16.mxu0 0
    %2653 = vmatpush1.bf16.xpose.msra.mxu0 0
    %2654 = vmatprep.subr.bf16.mxu0 0
    %2655 = vmatpush1.bf16.xpose.msra.mxu0 0
    %2656 = vmatprep.subr.bf16.mxu0 0
    %2657 = vmatpush1.bf16.xpose.msra.mxu0 0
    %2658 = vmatprep.subr.bf16.mxu0 0
    %2659 = vmatpush1.bf16.xpose.msra.mxu0 0
    %2660 = vmatprep.subr.bf16.mxu0 0
    %2661 = vmatpush1.bf16.xpose.msra.mxu0 0
    %2662 = vmatprep.subr.bf16.mxu0 0
    %2663 = vmatpush1.bf16.xpose.msra.mxu0 0
    %2664 = vmatprep.mubr.bf16.mxu0 0
    %2665 = vmatmul.mubr.bf16.gmra.mrb[0].mxu0 %v2603
    %v2666 = vpop.f32.mrb[0].mxu0
    %v2667 = vadd.f32 0.0, %v2666
    %v2668 = vpop.f32.mrb[0].mxu0
    %v2669 = vpop.f32.mrb[0].mxu0
    %v2670 = vadd.f32 0.0, %v2669
    %v2671 = vpop.f32.mrb[0].mxu0
    %2672 = vmatprep.mubr.bf16.mxu0 0
    %2673 = vmatmul.mubr.bf16.gmra.mrb[0].mxu0 %v2606
    %v2674 = vpop.f32.mrb[0].mxu0
    %v2675 = vadd.f32 0.0, %v2674
    %v2676 = vpop.f32.mrb[0].mxu0
    %v2677 = vpop.f32.mrb[0].mxu0
    %v2678 = vadd.f32 0.0, %v2677
    %v2679 = vpop.f32.mrb[0].mxu0
    %2680 = vmatprep.mubr.bf16.mxu0 0
    %2681 = vmatmul.mubr.bf16.gmra.mrb[0].mxu0 %v2609
    %v2682 = vpop.f32.mrb[0].mxu0
    %v2683 = vadd.f32 0.0, %v2682
    %v2684 = vpop.f32.mrb[0].mxu0
    %v2685 = vpop.f32.mrb[0].mxu0
    %v2686 = vadd.f32 0.0, %v2685
    %v2687 = vpop.f32.mrb[0].mxu0
    %2688 = vmatprep.mubr.bf16.mxu0 0
    %2689 = vmatmul.mubr.bf16.gmra.mrb[0].mxu0 %v2612
    %v2690 = vpop.f32.mrb[0].mxu0
    %v2691 = vadd.f32 0.0, %v2690
    %v2692 = vpop.f32.mrb[0].mxu0
    %v2693 = vpop.f32.mrb[0].mxu0
    %v2694 = vadd.f32 0.0, %v2693
    %v2695 = vpop.f32.mrb[0].mxu0
    %2696 = vmatprep.mubr.bf16.mxu0 0
    %2697 = vmatmul.mubr.bf16.gmra.mrb[0].mxu0 %v2615
    %v2698 = vpop.f32.mrb[0].mxu0
    %v2699 = vadd.f32 0.0, %v2698
    %v2700 = vpop.f32.mrb[0].mxu0
    %v2701 = vpop.f32.mrb[0].mxu0
    %v2702 = vpop.f32.mrb[0].mxu0
    %2703 = vdwg.mxu0
    %2704 = vrot.lane.b32.xlu0 %v1849, 112
    %v2705 = vpop.permute.xlu0 %2704
    %2706 = vrot.lane.b32.xlu0 %v1850, 112
    %v2707 = vpop.permute.xlu0 %2706
    %2708 = vrot.lane.b32.xlu0 %v1851, 112
    %v2709 = vpop.permute.xlu0 %2708
    %2710 = vrot.lane.b32.xlu0 %v1852, 112
    %v2711 = vpop.permute.xlu0 %2710
    %2712 = vrot.lane.b32.xlu0 %v1853, 112
    %v2713 = vpop.permute.xlu0 %2712
    %2714 = vrot.lane.b32.xlu0 %v1849, 80
    %v2715 = vpop.permute.xlu0 %2714
    %2716 = vrot.lane.b32.xlu0 %v1850, 80
    %v2717 = vpop.permute.xlu0 %2716
    %2718 = vrot.lane.b32.xlu0 %v1851, 80
    %v2719 = vpop.permute.xlu0 %2718
    %2720 = vrot.lane.b32.xlu0 %v1852, 80
    %v2721 = vpop.permute.xlu0 %2720
    %2722 = vrot.lane.b32.xlu0 %v1853, 80
    %v2723 = vpop.permute.xlu0 %2722
    %v2725 = vsel %vm822, %v2705, 0
    %v2728 = vsel %vm822, %v2707, 0
    %v2731 = vsel %vm822, %v2709, 0
    %v2734 = vsel %vm822, %v2711, 0
    %v2737 = vsel %vm822, %v2713, 0
    %v2740 = vsel %vm822, %v2715, 0
    %v2743 = vsel %vm822, %v2717, 0
    %v2746 = vsel %vm822, %v2719, 0
    %v2749 = vsel %vm822, %v2721, 0
    %v2752 = vsel %vm822, %v2723, 0
    %2754 = vmatprep.subr.bf16.mxu0 0
    %2755 = vmatpush1.bf16.xpose.msra.mxu0 %v2740
    %2756 = vmatprep.subr.bf16.mxu0 0
    %2757 = vmatpush1.bf16.xpose.msra.mxu0 %v2743
    %2758 = vmatprep.subr.bf16.mxu0 0
    %2759 = vmatpush1.bf16.xpose.msra.mxu0 %v2746
    %2760 = vmatprep.subr.bf16.mxu0 0
    %2761 = vmatpush1.bf16.xpose.msra.mxu0 %v2749
    %2762 = vmatprep.subr.bf16.mxu0 0
    %2763 = vmatpush1.bf16.xpose.msra.mxu0 %v2752
    %2764 = vmatprep.subr.bf16.mxu0 0
    %2765 = vmatpush1.bf16.xpose.msra.mxu0 0
    %2766 = vmatprep.subr.bf16.mxu0 0
    %2767 = vmatpush1.bf16.xpose.msra.mxu0 0
    %2768 = vmatprep.subr.bf16.mxu0 0
    %2769 = vmatpush1.bf16.xpose.msra.mxu0 0
    %2770 = vmatprep.subr.bf16.mxu0 0
    %2771 = vmatpush1.bf16.xpose.msra.mxu0 0
    %2772 = vmatprep.subr.bf16.mxu0 0
    %2773 = vmatpush1.bf16.xpose.msra.mxu0 0
    %2774 = vmatprep.subr.bf16.mxu0 0
    %2775 = vmatpush1.bf16.xpose.msra.mxu0 0
    %2776 = vmatprep.subr.bf16.mxu0 0
    %2777 = vmatpush1.bf16.xpose.msra.mxu0 0
    %2778 = vmatprep.subr.bf16.mxu0 0
    %2779 = vmatpush1.bf16.xpose.msra.mxu0 0
    %2780 = vmatprep.subr.bf16.mxu0 0
    %2781 = vmatpush1.bf16.xpose.msra.mxu0 0
    %2782 = vmatprep.subr.bf16.mxu0 0
    %2783 = vmatpush1.bf16.xpose.msra.mxu0 0
    %2784 = vmatprep.subr.bf16.mxu0 0
    %2785 = vmatpush1.bf16.xpose.msra.mxu0 0
    %2786 = vmatprep.mubr.bf16.mxu0 0
    %2787 = vmatmul.mubr.bf16.gmra.mrb[0].mxu0 %v2725
    %v2788 = vpop.f32.mrb[0].mxu0
    %v2789 = vadd.f32 0.0, %v2788
    %v2790 = vpop.f32.mrb[0].mxu0
    %v2791 = vpop.f32.mrb[0].mxu0
    %v2792 = vadd.f32 0.0, %v2791
    %v2793 = vpop.f32.mrb[0].mxu0
    %2794 = vmatprep.mubr.bf16.mxu0 0
    %2795 = vmatmul.mubr.bf16.gmra.mrb[0].mxu0 %v2728
    %v2796 = vpop.f32.mrb[0].mxu0
    %v2797 = vadd.f32 0.0, %v2796
    %v2798 = vpop.f32.mrb[0].mxu0
    %v2799 = vpop.f32.mrb[0].mxu0
    %v2800 = vadd.f32 0.0, %v2799
    %v2801 = vpop.f32.mrb[0].mxu0
    %2802 = vmatprep.mubr.bf16.mxu0 0
    %2803 = vmatmul.mubr.bf16.gmra.mrb[0].mxu0 %v2731
    %v2804 = vpop.f32.mrb[0].mxu0
    %v2805 = vadd.f32 0.0, %v2804
    %v2806 = vpop.f32.mrb[0].mxu0
    %v2807 = vpop.f32.mrb[0].mxu0
    %v2808 = vadd.f32 0.0, %v2807
    %v2809 = vpop.f32.mrb[0].mxu0
    %2810 = vmatprep.mubr.bf16.mxu0 0
    %2811 = vmatmul.mubr.bf16.gmra.mrb[0].mxu0 %v2734
    %v2812 = vpop.f32.mrb[0].mxu0
    %v2813 = vadd.f32 0.0, %v2812
    %v2814 = vpop.f32.mrb[0].mxu0
    %v2815 = vpop.f32.mrb[0].mxu0
    %v2816 = vadd.f32 0.0, %v2815
    %v2817 = vpop.f32.mrb[0].mxu0
    %2818 = vmatprep.mubr.bf16.mxu0 0
    %2819 = vmatmul.mubr.bf16.gmra.mrb[0].mxu0 %v2737
    %v2820 = vpop.f32.mrb[0].mxu0
    %v2821 = vadd.f32 0.0, %v2820
    %v2822 = vpop.f32.mrb[0].mxu0
    %v2823 = vpop.f32.mrb[0].mxu0
    %v2824 = vpop.f32.mrb[0].mxu0
    %2825 = vdwg.mxu0
    %v2826 = vsel %vm2112, %v2667, -inf
    %2827 = vmax.xlane.f32.xlu0 %v2826
    %v2828 = vpop.xlane.xlu0 %2827
    %v2829 = vsel %vm2112, %v2670, -inf
    %2830 = vmax.xlane.f32.xlu0 %v2829
    %v2831 = vpop.xlane.xlu0 %2830
    %v2832 = vsel %vm2112, %v2675, -inf
    %2833 = vmax.xlane.f32.xlu0 %v2832
    %v2834 = vpop.xlane.xlu0 %2833
    %v2835 = vsel %vm2112, %v2678, -inf
    %2836 = vmax.xlane.f32.xlu0 %v2835
    %v2837 = vpop.xlane.xlu0 %2836
    %v2838 = vsel %vm2112, %v2683, -inf
    %2839 = vmax.xlane.f32.xlu0 %v2838
    %v2840 = vpop.xlane.xlu0 %2839
    %v2841 = vsel %vm2112, %v2686, -inf
    %2842 = vmax.xlane.f32.xlu0 %v2841
    %v2843 = vpop.xlane.xlu0 %2842
    %v2844 = vsel %vm2112, %v2691, -inf
    %2845 = vmax.xlane.f32.xlu0 %v2844
    %v2846 = vpop.xlane.xlu0 %2845
    %v2847 = vsel %vm2112, %v2694, -inf
    %2848 = vmax.xlane.f32.xlu0 %v2847
    %v2849 = vpop.xlane.xlu0 %2848
    %v2850 = vsel %vm2112, %v2699, -inf
    %2851 = vmax.xlane.f32.xlu0 %v2850
    %v2852 = vpop.xlane.xlu0 %2851
    %v2853 = vsel %vm2112, %v2789, -inf
    %2854 = vmax.xlane.f32.xlu0 %v2853
    %v2855 = vpop.xlane.xlu0 %2854
    %v2856 = vsel %vm2112, %v2792, -inf
    %2857 = vmax.xlane.f32.xlu0 %v2856
    %v2858 = vpop.xlane.xlu0 %2857
    %v2859 = vsel %vm2112, %v2797, -inf
    %2860 = vmax.xlane.f32.xlu0 %v2859
    %v2861 = vpop.xlane.xlu0 %2860
    %v2862 = vsel %vm2112, %v2800, -inf
    %2863 = vmax.xlane.f32.xlu0 %v2862
    %v2864 = vpop.xlane.xlu0 %2863
    %v2865 = vsel %vm2112, %v2805, -inf
    %2866 = vmax.xlane.f32.xlu0 %v2865
    %v2867 = vpop.xlane.xlu0 %2866
    %v2868 = vsel %vm2112, %v2808, -inf
    %2869 = vmax.xlane.f32.xlu0 %v2868
    %v2870 = vpop.xlane.xlu0 %2869
    %v2871 = vsel %vm2112, %v2813, -inf
    %2872 = vmax.xlane.f32.xlu0 %v2871
    %v2873 = vpop.xlane.xlu0 %2872
    %v2874 = vsel %vm2112, %v2816, -inf
    %2875 = vmax.xlane.f32.xlu0 %v2874
    %v2876 = vpop.xlane.xlu0 %2875
    %v2877 = vsel %vm2112, %v2821, -inf
    %2878 = vmax.xlane.f32.xlu0 %v2877
    %v2879 = vpop.xlane.xlu0 %2878
    %v2880 = vsub.f32 %v2667, %v2828
    %v2881 = vsub.f32 %v2670, %v2831
    %v2882 = vsub.f32 %v2675, %v2834
    %v2883 = vsub.f32 %v2678, %v2837
    %v2884 = vsub.f32 %v2683, %v2840
    %v2885 = vsub.f32 %v2686, %v2843
    %v2886 = vsub.f32 %v2691, %v2846
    %v2887 = vsub.f32 %v2694, %v2849
    %v2888 = vsub.f32 %v2699, %v2852
    %v2889 = vsub.f32 %v2789, %v2855
    %v2890 = vsub.f32 %v2792, %v2858
    %v2891 = vsub.f32 %v2797, %v2861
    %v2892 = vsub.f32 %v2800, %v2864
    %v2893 = vsub.f32 %v2805, %v2867
    %v2894 = vsub.f32 %v2808, %v2870
    %v2895 = vsub.f32 %v2813, %v2873
    %v2896 = vsub.f32 %v2816, %v2876
    %v2897 = vsub.f32 %v2821, %v2879
    %v2898 = vmul.f32 %v2880, 1.442695
    %v2899 = vpow.pop %v2898
    %v2900 = vmul.f32 %v2881, 1.442695
    %v2901 = vpow.pop %v2900
    %v2902 = vmul.f32 %v2882, 1.442695
    %v2903 = vpow.pop %v2902
    %v2904 = vmul.f32 %v2883, 1.442695
    %v2905 = vpow.pop %v2904
    %v2906 = vmul.f32 %v2884, 1.442695
    %v2907 = vpow.pop %v2906
    %v2908 = vmul.f32 %v2885, 1.442695
    %v2909 = vpow.pop %v2908
    %v2910 = vmul.f32 %v2886, 1.442695
    %v2911 = vpow.pop %v2910
    %v2912 = vmul.f32 %v2887, 1.442695
    %v2913 = vpow.pop %v2912
    %v2914 = vmul.f32 %v2888, 1.442695
    %v2915 = vpow.pop %v2914
    %v2916 = vmul.f32 %v2889, 1.442695
    %v2917 = vpow.pop %v2916
    %v2918 = vmul.f32 %v2890, 1.442695
    %v2919 = vpow.pop %v2918
    %v2920 = vmul.f32 %v2891, 1.442695
    %v2921 = vpow.pop %v2920
    %v2922 = vmul.f32 %v2892, 1.442695
    %v2923 = vpow.pop %v2922
    %v2924 = vmul.f32 %v2893, 1.442695
    %v2925 = vpow.pop %v2924
    %v2926 = vmul.f32 %v2894, 1.442695
    %v2927 = vpow.pop %v2926
    %v2928 = vmul.f32 %v2895, 1.442695
    %v2929 = vpow.pop %v2928
    %v2930 = vmul.f32 %v2896, 1.442695
    %v2931 = vpow.pop %v2930
    %v2932 = vmul.f32 %v2897, 1.442695
    %v2933 = vpow.pop %v2932
    %v2934 = vsel %vm2112, %v2899, 0.0
    %2935 = vadd.xlane.f32.xlu0 %v2934
    %v2936 = vpop.xlane.xlu0 %2935
    %v2937 = vsel %vm2112, %v2901, 0.0
    %2938 = vadd.xlane.f32.xlu0 %v2937
    %v2939 = vpop.xlane.xlu0 %2938
    %v2940 = vsel %vm2112, %v2903, 0.0
    %2941 = vadd.xlane.f32.xlu0 %v2940
    %v2942 = vpop.xlane.xlu0 %2941
    %v2943 = vsel %vm2112, %v2905, 0.0
    %2944 = vadd.xlane.f32.xlu0 %v2943
    %v2945 = vpop.xlane.xlu0 %2944
    %v2946 = vsel %vm2112, %v2907, 0.0
    %2947 = vadd.xlane.f32.xlu0 %v2946
    %v2948 = vpop.xlane.xlu0 %2947
    %v2949 = vsel %vm2112, %v2909, 0.0
    %2950 = vadd.xlane.f32.xlu0 %v2949
    %v2951 = vpop.xlane.xlu0 %2950
    %v2952 = vsel %vm2112, %v2911, 0.0
    %2953 = vadd.xlane.f32.xlu0 %v2952
    %v2954 = vpop.xlane.xlu0 %2953
    %v2955 = vsel %vm2112, %v2913, 0.0
    %2956 = vadd.xlane.f32.xlu0 %v2955
    %v2957 = vpop.xlane.xlu0 %2956
    %v2958 = vsel %vm2112, %v2915, 0.0
    %2959 = vadd.xlane.f32.xlu0 %v2958
    %v2960 = vpop.xlane.xlu0 %2959
    %v2961 = vsel %vm2112, %v2917, 0.0
    %2962 = vadd.xlane.f32.xlu0 %v2961
    %v2963 = vpop.xlane.xlu0 %2962
    %v2964 = vsel %vm2112, %v2919, 0.0
    %2965 = vadd.xlane.f32.xlu0 %v2964
    %v2966 = vpop.xlane.xlu0 %2965
    %v2967 = vsel %vm2112, %v2921, 0.0
    %2968 = vadd.xlane.f32.xlu0 %v2967
    %v2969 = vpop.xlane.xlu0 %2968
    %v2970 = vsel %vm2112, %v2923, 0.0
    %2971 = vadd.xlane.f32.xlu0 %v2970
    %v2972 = vpop.xlane.xlu0 %2971
    %v2973 = vsel %vm2112, %v2925, 0.0
    %2974 = vadd.xlane.f32.xlu0 %v2973
    %v2975 = vpop.xlane.xlu0 %2974
    %v2976 = vsel %vm2112, %v2927, 0.0
    %2977 = vadd.xlane.f32.xlu0 %v2976
    %v2978 = vpop.xlane.xlu0 %2977
    %v2979 = vsel %vm2112, %v2929, 0.0
    %2980 = vadd.xlane.f32.xlu0 %v2979
    %v2981 = vpop.xlane.xlu0 %2980
    %v2982 = vsel %vm2112, %v2931, 0.0
    %2983 = vadd.xlane.f32.xlu0 %v2982
    %v2984 = vpop.xlane.xlu0 %2983
    %v2985 = vsel %vm2112, %v2933, 0.0
    %2986 = vadd.xlane.f32.xlu0 %v2985
    %v2987 = vpop.xlane.xlu0 %2986
    %v2988 = vpack.c.bf16 %v2901, %v2899
    %v2989 = vpack.c.bf16 %v2905, %v2903
    %v2990 = vpack.c.bf16 %v2909, %v2907
    %v2991 = vpack.c.bf16 %v2913, %v2911
    %v2992 = vpack.c.bf16 %v2915, %v2915
    %v2993 = vpack.c.bf16 %v2919, %v2917
    %v2994 = vpack.c.bf16 %v2923, %v2921
    %v2995 = vpack.c.bf16 %v2927, %v2925
    %v2996 = vpack.c.bf16 %v2931, %v2929
    %v2997 = vpack.c.bf16 %v2933, %v2933
    %3003 = vrot.lane.b32.xlu0 %v2572, 64
    %v3004 = vpop.permute.xlu0 %3003
    %3005 = vrot.lane.b32.xlu0 %v2573, 64
    %v3006 = vpop.permute.xlu0 %3005
    %3007 = vrot.lane.b32.xlu0 %v2574, 64
    %v3008 = vpop.permute.xlu0 %3007
    %3009 = vrot.lane.b32.xlu0 %v2575, 64
    %v3010 = vpop.permute.xlu0 %3009
    %3011 = vrot.lane.b32.xlu0 %v2576, 64
    %v3012 = vpop.permute.xlu0 %3011
    %v3018 = vsel %vm2112, %v2988, 0
    %v3021 = vsel %vm2112, %v2989, 0
    %v3024 = vsel %vm2112, %v2990, 0
    %v3027 = vsel %vm2112, %v2991, 0
    %v3030 = vsel %vm2112, %v2992, 0
    %v3033 = vsel %vm2319, %v3012, 0
    %3035 = vmatprep.subr.bf16.mxu0 0
    %3036 = vmatpush1.bf16.msra.mxu0 %v3004
    %3037 = vmatprep.subr.bf16.mxu0 0
    %3038 = vmatpush1.bf16.msra.mxu0 %v3006
    %3039 = vmatprep.subr.bf16.mxu0 0
    %3040 = vmatpush1.bf16.msra.mxu0 %v3008
    %3041 = vmatprep.subr.bf16.mxu0 0
    %3042 = vmatpush1.bf16.msra.mxu0 %v3010
    %3043 = vmatprep.subr.bf16.mxu0 0
    %3044 = vmatpush1.bf16.msra.mxu0 %v3033
    %3045 = vmatprep.subr.bf16.mxu0 0
    %3046 = vmatpush1.bf16.msra.mxu0 0
    %3047 = vmatprep.subr.bf16.mxu0 0
    %3048 = vmatpush1.bf16.msra.mxu0 0
    %3049 = vmatprep.subr.bf16.mxu0 0
    %3050 = vmatpush1.bf16.msra.mxu0 0
    %3051 = vmatprep.subr.bf16.mxu0 0
    %3052 = vmatpush1.bf16.msra.mxu0 0
    %3053 = vmatprep.subr.bf16.mxu0 0
    %3054 = vmatpush1.bf16.msra.mxu0 0
    %3055 = vmatprep.subr.bf16.mxu0 0
    %3056 = vmatpush1.bf16.msra.mxu0 0
    %3057 = vmatprep.subr.bf16.mxu0 0
    %3058 = vmatpush1.bf16.msra.mxu0 0
    %3059 = vmatprep.subr.bf16.mxu0 0
    %3060 = vmatpush1.bf16.msra.mxu0 0
    %3061 = vmatprep.subr.bf16.mxu0 0
    %3062 = vmatpush1.bf16.msra.mxu0 0
    %3063 = vmatprep.subr.bf16.mxu0 0
    %3064 = vmatpush1.bf16.msra.mxu0 0
    %3065 = vmatprep.subr.bf16.mxu0 0
    %3066 = vmatpush1.bf16.msra.mxu0 0
    %3067 = vmatprep.mubr.bf16.mxu0 0
    %3068 = vmatmul.mubr.bf16.gmra.mrb[0].mxu0 %v3018
    %v3069 = vpop.f32.mrb[0].mxu0
    %v3070 = vadd.f32 0.0, %v3069
    %v3071 = vpop.f32.mrb[0].mxu0
    %v3072 = vpop.f32.mrb[0].mxu0
    %v3073 = vadd.f32 0.0, %v3072
    %v3074 = vpop.f32.mrb[0].mxu0
    %3075 = vmatprep.mubr.bf16.mxu0 0
    %3076 = vmatmul.mubr.bf16.gmra.mrb[0].mxu0 %v3021
    %v3077 = vpop.f32.mrb[0].mxu0
    %v3078 = vadd.f32 0.0, %v3077
    %v3079 = vpop.f32.mrb[0].mxu0
    %v3080 = vpop.f32.mrb[0].mxu0
    %v3081 = vadd.f32 0.0, %v3080
    %v3082 = vpop.f32.mrb[0].mxu0
    %3083 = vmatprep.mubr.bf16.mxu0 0
    %3084 = vmatmul.mubr.bf16.gmra.mrb[0].mxu0 %v3024
    %v3085 = vpop.f32.mrb[0].mxu0
    %v3086 = vadd.f32 0.0, %v3085
    %v3087 = vpop.f32.mrb[0].mxu0
    %v3088 = vpop.f32.mrb[0].mxu0
    %v3089 = vadd.f32 0.0, %v3088
    %v3090 = vpop.f32.mrb[0].mxu0
    %3091 = vmatprep.mubr.bf16.mxu0 0
    %3092 = vmatmul.mubr.bf16.gmra.mrb[0].mxu0 %v3027
    %v3093 = vpop.f32.mrb[0].mxu0
    %v3094 = vadd.f32 0.0, %v3093
    %v3095 = vpop.f32.mrb[0].mxu0
    %v3096 = vpop.f32.mrb[0].mxu0
    %v3097 = vadd.f32 0.0, %v3096
    %v3098 = vpop.f32.mrb[0].mxu0
    %3099 = vmatprep.mubr.bf16.mxu0 0
    %3100 = vmatmul.mubr.bf16.gmra.mrb[0].mxu0 %v3030
    %v3101 = vpop.f32.mrb[0].mxu0
    %v3102 = vadd.f32 0.0, %v3101
    %v3103 = vpop.f32.mrb[0].mxu0
    %v3104 = vpop.f32.mrb[0].mxu0
    %v3105 = vpop.f32.mrb[0].mxu0
    %3106 = vdwg.mxu0
    %3112 = vrot.lane.b32.xlu0 %v2577, 64
    %v3113 = vpop.permute.xlu0 %3112
    %3114 = vrot.lane.b32.xlu0 %v2578, 64
    %v3115 = vpop.permute.xlu0 %3114
    %3116 = vrot.lane.b32.xlu0 %v2579, 64
    %v3117 = vpop.permute.xlu0 %3116
    %3118 = vrot.lane.b32.xlu0 %v2580, 64
    %v3119 = vpop.permute.xlu0 %3118
    %3120 = vrot.lane.b32.xlu0 %v2581, 64
    %v3121 = vpop.permute.xlu0 %3120
    %v3127 = vsel %vm2112, %v2993, 0
    %v3130 = vsel %vm2112, %v2994, 0
    %v3133 = vsel %vm2112, %v2995, 0
    %v3136 = vsel %vm2112, %v2996, 0
    %v3139 = vsel %vm2112, %v2997, 0
    %v3142 = vsel %vm2319, %v3121, 0
    %3144 = vmatprep.subr.bf16.mxu0 0
    %3145 = vmatpush1.bf16.msra.mxu0 %v3113
    %3146 = vmatprep.subr.bf16.mxu0 0
    %3147 = vmatpush1.bf16.msra.mxu0 %v3115
    %3148 = vmatprep.subr.bf16.mxu0 0
    %3149 = vmatpush1.bf16.msra.mxu0 %v3117
    %3150 = vmatprep.subr.bf16.mxu0 0
    %3151 = vmatpush1.bf16.msra.mxu0 %v3119
    %3152 = vmatprep.subr.bf16.mxu0 0
    %3153 = vmatpush1.bf16.msra.mxu0 %v3142
    %3154 = vmatprep.subr.bf16.mxu0 0
    %3155 = vmatpush1.bf16.msra.mxu0 0
    %3156 = vmatprep.subr.bf16.mxu0 0
    %3157 = vmatpush1.bf16.msra.mxu0 0
    %3158 = vmatprep.subr.bf16.mxu0 0
    %3159 = vmatpush1.bf16.msra.mxu0 0
    %3160 = vmatprep.subr.bf16.mxu0 0
    %3161 = vmatpush1.bf16.msra.mxu0 0
    %3162 = vmatprep.subr.bf16.mxu0 0
    %3163 = vmatpush1.bf16.msra.mxu0 0
    %3164 = vmatprep.subr.bf16.mxu0 0
    %3165 = vmatpush1.bf16.msra.mxu0 0
    %3166 = vmatprep.subr.bf16.mxu0 0
    %3167 = vmatpush1.bf16.msra.mxu0 0
    %3168 = vmatprep.subr.bf16.mxu0 0
    %3169 = vmatpush1.bf16.msra.mxu0 0
    %3170 = vmatprep.subr.bf16.mxu0 0
    %3171 = vmatpush1.bf16.msra.mxu0 0
    %3172 = vmatprep.subr.bf16.mxu0 0
    %3173 = vmatpush1.bf16.msra.mxu0 0
    %3174 = vmatprep.subr.bf16.mxu0 0
    %3175 = vmatpush1.bf16.msra.mxu0 0
    %3176 = vmatprep.mubr.bf16.mxu0 0
    %3177 = vmatmul.mubr.bf16.gmra.mrb[0].mxu0 %v3127
    %v3178 = vpop.f32.mrb[0].mxu0
    %v3179 = vadd.f32 0.0, %v3178
    %v3180 = vpop.f32.mrb[0].mxu0
    %v3181 = vpop.f32.mrb[0].mxu0
    %v3182 = vadd.f32 0.0, %v3181
    %v3183 = vpop.f32.mrb[0].mxu0
    %3184 = vmatprep.mubr.bf16.mxu0 0
    %3185 = vmatmul.mubr.bf16.gmra.mrb[0].mxu0 %v3130
    %v3186 = vpop.f32.mrb[0].mxu0
    %v3187 = vadd.f32 0.0, %v3186
    %v3188 = vpop.f32.mrb[0].mxu0
    %v3189 = vpop.f32.mrb[0].mxu0
    %v3190 = vadd.f32 0.0, %v3189
    %v3191 = vpop.f32.mrb[0].mxu0
    %3192 = vmatprep.mubr.bf16.mxu0 0
    %3193 = vmatmul.mubr.bf16.gmra.mrb[0].mxu0 %v3133
    %v3194 = vpop.f32.mrb[0].mxu0
    %v3195 = vadd.f32 0.0, %v3194
    %v3196 = vpop.f32.mrb[0].mxu0
    %v3197 = vpop.f32.mrb[0].mxu0
    %v3198 = vadd.f32 0.0, %v3197
    %v3199 = vpop.f32.mrb[0].mxu0
    %3200 = vmatprep.mubr.bf16.mxu0 0
    %3201 = vmatmul.mubr.bf16.gmra.mrb[0].mxu0 %v3136
    %v3202 = vpop.f32.mrb[0].mxu0
    %v3203 = vadd.f32 0.0, %v3202
    %v3204 = vpop.f32.mrb[0].mxu0
    %v3205 = vpop.f32.mrb[0].mxu0
    %v3206 = vadd.f32 0.0, %v3205
    %v3207 = vpop.f32.mrb[0].mxu0
    %3208 = vmatprep.mubr.bf16.mxu0 0
    %3209 = vmatmul.mubr.bf16.gmra.mrb[0].mxu0 %v3139
    %v3210 = vpop.f32.mrb[0].mxu0
    %v3211 = vadd.f32 0.0, %v3210
    %v3212 = vpop.f32.mrb[0].mxu0
    %v3213 = vpop.f32.mrb[0].mxu0
    %v3214 = vpop.f32.mrb[0].mxu0
    %3215 = vdwg.mxu0
    %v3216 = vrcp.pop %v2936
    %v3217 = vrcp.pop %v2939
    %v3218 = vrcp.pop %v2942
    %v3219 = vrcp.pop %v2945
    %v3220 = vrcp.pop %v2948
    %v3221 = vrcp.pop %v2951
    %v3222 = vrcp.pop %v2954
    %v3223 = vrcp.pop %v2957
    %v3224 = vrcp.pop %v2960
    %v3225 = vrcp.pop %v2963
    %v3226 = vrcp.pop %v2966
    %v3227 = vrcp.pop %v2969
    %v3228 = vrcp.pop %v2972
    %v3229 = vrcp.pop %v2975
    %v3230 = vrcp.pop %v2978
    %v3231 = vrcp.pop %v2981
    %v3232 = vrcp.pop %v2984
    %v3233 = vrcp.pop %v2987
    %v3234 = vmul.f32 %v3070, %v3216
    %v3235 = vmul.f32 %v3073, %v3217
    %v3236 = vmul.f32 %v3078, %v3218
    %v3237 = vmul.f32 %v3081, %v3219
    %v3238 = vmul.f32 %v3086, %v3220
    %v3239 = vmul.f32 %v3089, %v3221
    %v3240 = vmul.f32 %v3094, %v3222
    %v3241 = vmul.f32 %v3097, %v3223
    %v3242 = vmul.f32 %v3102, %v3224
    %v3243 = vmul.f32 %v3179, %v3225
    %v3244 = vmul.f32 %v3182, %v3226
    %v3245 = vmul.f32 %v3187, %v3227
    %v3246 = vmul.f32 %v3190, %v3228
    %v3247 = vmul.f32 %v3195, %v3229
    %v3248 = vmul.f32 %v3198, %v3230
    %v3249 = vmul.f32 %v3203, %v3231
    %v3250 = vmul.f32 %v3206, %v3232
    %v3251 = vmul.f32 %v3211, %v3233
    %v3252 = vadd.f32 %v2540, %v3234
    %v3253 = vadd.f32 %v2541, %v3235
    %v3254 = vadd.f32 %v2542, %v3236
    %v3255 = vadd.f32 %v2543, %v3237
    %v3256 = vadd.f32 %v2544, %v3238
    %v3257 = vadd.f32 %v2545, %v3239
    %v3258 = vadd.f32 %v2546, %v3240
    %v3259 = vadd.f32 %v2547, %v3241
    %v3260 = vadd.f32 %v2548, %v3242
    %v3261 = vadd.f32 %v2549, %v3243
    %v3262 = vadd.f32 %v2550, %v3244
    %v3263 = vadd.f32 %v2551, %v3245
    %v3264 = vadd.f32 %v2552, %v3246
    %v3265 = vadd.f32 %v2553, %v3247
    %v3266 = vadd.f32 %v2554, %v3248
    %v3267 = vadd.f32 %v2555, %v3249
    %v3268 = vadd.f32 %v2556, %v3250
    %v3269 = vadd.f32 %v2557, %v3251
    %v3270 = vpack.c.bf16 %v3253, %v3252
    %v3271 = vpack.c.bf16 %v3255, %v3254
    %v3272 = vpack.c.bf16 %v3257, %v3256
    %v3273 = vpack.c.bf16 %v3259, %v3258
    %v3274 = vpack.c.bf16 %v3262, %v3261
    %v3275 = vpack.c.bf16 %v3264, %v3263
    %v3276 = vpack.c.bf16 %v3266, %v3265
    %v3277 = vpack.c.bf16 %v3268, %v3267
    %v3278 = vld [vmem:[%s51] sm:$0xf]
    %v3279 = vld [vmem:[%s51 + $0x4] sm:$0xf]
    %v3280 = vld [vmem:[%s51 + $0x8] sm:$0xf]
    %v3281 = vld [vmem:[%s51 + $0xc] sm:$0xf]
    %v3282 = vld [vmem:[%s53] sm:$0x1]
    %v3284 = vlaneseq
    %v3285 = vshrl.u32 %v3284, 7
    %v3286 = vsub.s32 0, %v3285
    %v3287 = vrot.slane %v3282, %v3286
    %v3293 = vunpack.c.l.b16 %v3278
    %v3294 = vunpack.c.l.b16 %v3279
    %v3295 = vunpack.c.l.b16 %v3280
    %v3296 = vunpack.c.l.b16 %v3281
    %v3297 = vpack.c.b16 %v3294, %v3293
    %v3298 = vpack.c.b16 %v3296, %v3295
    %v3302 = vsel %vm588, %v3270, 0
    %v3305 = vsel %vm588, %v3271, 0
    %v3308 = vsel %vm588, %v3272, 0
    %v3311 = vsel %vm588, %v3273, 0
    %v3314 = vsel %vm588, %v3274, 0
    %v3317 = vsel %vm588, %v3275, 0
    %v3320 = vsel %vm588, %v3276, 0
    %v3323 = vsel %vm588, %v3277, 0
    %3325 = vmatprep.subr.bf16.mxu0 0
    %3326 = vmatpush1.bf16.msra.mxu0 %v3297
    %3327 = vmatprep.subr.bf16.mxu0 0
    %3328 = vmatpush1.bf16.msra.mxu0 %v3298
    %3329 = vmatprep.subr.bf16.mxu0 0
    %3330 = vmatpush1.bf16.msra.mxu0 0
    %3331 = vmatprep.subr.bf16.mxu0 0
    %3332 = vmatpush1.bf16.msra.mxu0 0
    %3333 = vmatprep.subr.bf16.mxu0 0
    %3334 = vmatpush1.bf16.msra.mxu0 0
    %3335 = vmatprep.subr.bf16.mxu0 0
    %3336 = vmatpush1.bf16.msra.mxu0 0
    %3337 = vmatprep.subr.bf16.mxu0 0
    %3338 = vmatpush1.bf16.msra.mxu0 0
    %3339 = vmatprep.subr.bf16.mxu0 0
    %3340 = vmatpush1.bf16.msra.mxu0 0
    %3341 = vmatprep.subr.bf16.mxu0 0
    %3342 = vmatpush1.bf16.msra.mxu0 0
    %3343 = vmatprep.subr.bf16.mxu0 0
    %3344 = vmatpush1.bf16.msra.mxu0 0
    %3345 = vmatprep.subr.bf16.mxu0 0
    %3346 = vmatpush1.bf16.msra.mxu0 0
    %3347 = vmatprep.subr.bf16.mxu0 0
    %3348 = vmatpush1.bf16.msra.mxu0 0
    %3349 = vmatprep.subr.bf16.mxu0 0
    %3350 = vmatpush1.bf16.msra.mxu0 0
    %3351 = vmatprep.subr.bf16.mxu0 0
    %3352 = vmatpush1.bf16.msra.mxu0 0
    %3353 = vmatprep.subr.bf16.mxu0 0
    %3354 = vmatpush1.bf16.msra.mxu0 0
    %3355 = vmatprep.subr.bf16.mxu0 0
    %3356 = vmatpush1.bf16.msra.mxu0 0
    %3357 = vmatprep.mubr.bf16.mxu0 0
    %3358 = vmatmul.mubr.bf16.gmra.mrb[0].mxu0 %v3302
    %v3359 = vpop.f32.mrb[0].mxu0
    %v3360 = vadd.f32 %v3287, %v3359
    %v3361 = vpop.f32.mrb[0].mxu0
    %v3362 = vpop.f32.mrb[0].mxu0
    %v3363 = vadd.f32 %v3287, %v3362
    %v3364 = vpop.f32.mrb[0].mxu0
    %3365 = vmatprep.mubr.bf16.mxu0 0
    %3366 = vmatmul.mubr.bf16.gmra.mrb[0].mxu0 %v3305
    %v3367 = vpop.f32.mrb[0].mxu0
    %v3368 = vadd.f32 %v3287, %v3367
    %v3369 = vpop.f32.mrb[0].mxu0
    %v3370 = vpop.f32.mrb[0].mxu0
    %v3371 = vadd.f32 %v3287, %v3370
    %v3372 = vpop.f32.mrb[0].mxu0
    %3373 = vmatprep.mubr.bf16.mxu0 0
    %3374 = vmatmul.mubr.bf16.gmra.mrb[0].mxu0 %v3308
    %v3375 = vpop.f32.mrb[0].mxu0
    %v3376 = vadd.f32 %v3287, %v3375
    %v3377 = vpop.f32.mrb[0].mxu0
    %v3378 = vpop.f32.mrb[0].mxu0
    %v3379 = vadd.f32 %v3287, %v3378
    %v3380 = vpop.f32.mrb[0].mxu0
    %3381 = vmatprep.mubr.bf16.mxu0 0
    %3382 = vmatmul.mubr.bf16.gmra.mrb[0].mxu0 %v3311
    %v3383 = vpop.f32.mrb[0].mxu0
    %v3384 = vadd.f32 %v3287, %v3383
    %v3385 = vpop.f32.mrb[0].mxu0
    %v3386 = vpop.f32.mrb[0].mxu0
    %v3387 = vadd.f32 %v3287, %v3386
    %v3388 = vpop.f32.mrb[0].mxu0
    %3389 = vmatprep.mubr.bf16.mxu0 0
    %3390 = vmatmul.mubr.bf16.gmra.mrb[0].mxu0 %v3314
    %v3391 = vpop.f32.mrb[0].mxu0
    %v3392 = vadd.f32 %v3287, %v3391
    %v3393 = vpop.f32.mrb[0].mxu0
    %v3394 = vpop.f32.mrb[0].mxu0
    %v3395 = vadd.f32 %v3287, %v3394
    %v3396 = vpop.f32.mrb[0].mxu0
    %3397 = vmatprep.mubr.bf16.mxu0 0
    %3398 = vmatmul.mubr.bf16.gmra.mrb[0].mxu0 %v3317
    %v3399 = vpop.f32.mrb[0].mxu0
    %v3400 = vadd.f32 %v3287, %v3399
    %v3401 = vpop.f32.mrb[0].mxu0
    %v3402 = vpop.f32.mrb[0].mxu0
    %v3403 = vadd.f32 %v3287, %v3402
    %v3404 = vpop.f32.mrb[0].mxu0
    %3405 = vmatprep.mubr.bf16.mxu0 0
    %3406 = vmatmul.mubr.bf16.gmra.mrb[0].mxu0 %v3320
    %v3407 = vpop.f32.mrb[0].mxu0
    %v3408 = vadd.f32 %v3287, %v3407
    %v3409 = vpop.f32.mrb[0].mxu0
    %v3410 = vpop.f32.mrb[0].mxu0
    %v3411 = vadd.f32 %v3287, %v3410
    %v3412 = vpop.f32.mrb[0].mxu0
    %3413 = vmatprep.mubr.bf16.mxu0 0
    %3414 = vmatmul.mubr.bf16.gmra.mrb[0].mxu0 %v3323
    %v3415 = vpop.f32.mrb[0].mxu0
    %v3416 = vadd.f32 %v3287, %v3415
    %v3417 = vpop.f32.mrb[0].mxu0
    %v3418 = vpop.f32.mrb[0].mxu0
    %v3419 = vadd.f32 %v3287, %v3418
    %v3420 = vpop.f32.mrb[0].mxu0
    %3421 = vdwg.mxu0
    %3438 = vrot.lane.b32.xlu0 %v3360, 64
    %v3439 = vpop.permute.xlu0 %3438
    %3440 = vrot.lane.b32.xlu0 %v3363, 64
    %v3441 = vpop.permute.xlu0 %3440
    %3442 = vrot.lane.b32.xlu0 %v3368, 64
    %v3443 = vpop.permute.xlu0 %3442
    %3444 = vrot.lane.b32.xlu0 %v3371, 64
    %v3445 = vpop.permute.xlu0 %3444
    %3446 = vrot.lane.b32.xlu0 %v3376, 64
    %v3447 = vpop.permute.xlu0 %3446
    %3448 = vrot.lane.b32.xlu0 %v3379, 64
    %v3449 = vpop.permute.xlu0 %3448
    %3450 = vrot.lane.b32.xlu0 %v3384, 64
    %v3451 = vpop.permute.xlu0 %3450
    %3452 = vrot.lane.b32.xlu0 %v3387, 64
    %v3453 = vpop.permute.xlu0 %3452
    %3454 = vrot.lane.b32.xlu0 %v3392, 64
    %v3455 = vpop.permute.xlu0 %3454
    %3456 = vrot.lane.b32.xlu0 %v3395, 64
    %v3457 = vpop.permute.xlu0 %3456
    %3458 = vrot.lane.b32.xlu0 %v3400, 64
    %v3459 = vpop.permute.xlu0 %3458
    %3460 = vrot.lane.b32.xlu0 %v3403, 64
    %v3461 = vpop.permute.xlu0 %3460
    %3462 = vrot.lane.b32.xlu0 %v3408, 64
    %v3463 = vpop.permute.xlu0 %3462
    %3464 = vrot.lane.b32.xlu0 %v3411, 64
    %v3465 = vpop.permute.xlu0 %3464
    %3466 = vrot.lane.b32.xlu0 %v3416, 64
    %v3467 = vpop.permute.xlu0 %3466
    %3468 = vrot.lane.b32.xlu0 %v3419, 64
    %v3469 = vpop.permute.xlu0 %3468
    %v3486 = vmul.f32 %v1493, %v3439
    %v3487 = vmul.f32 %v1493, %v3441
    %v3488 = vmul.f32 %v1493, %v3443
    %v3489 = vmul.f32 %v1493, %v3445
    %v3490 = vmul.f32 %v1493, %v3447
    %v3491 = vmul.f32 %v1493, %v3449
    %v3492 = vmul.f32 %v1493, %v3451
    %v3493 = vmul.f32 %v1493, %v3453
    %v3494 = vmul.f32 %v1497, %v3455
    %v3495 = vmul.f32 %v1497, %v3457
    %v3496 = vmul.f32 %v1497, %v3459
    %v3497 = vmul.f32 %v1497, %v3461
    %v3498 = vmul.f32 %v1497, %v3463
    %v3499 = vmul.f32 %v1497, %v3465
    %v3500 = vmul.f32 %v1497, %v3467
    %v3501 = vmul.f32 %v1497, %v3469
    %3518 = vrot.lane.b32.xlu0 %v3486, 64
    %v3519 = vpop.permute.xlu0 %3518
    %3520 = vrot.lane.b32.xlu0 %v3487, 64
    %v3521 = vpop.permute.xlu0 %3520
    %3522 = vrot.lane.b32.xlu0 %v3488, 64
    %v3523 = vpop.permute.xlu0 %3522
    %3524 = vrot.lane.b32.xlu0 %v3489, 64
    %v3525 = vpop.permute.xlu0 %3524
    %3526 = vrot.lane.b32.xlu0 %v3490, 64
    %v3527 = vpop.permute.xlu0 %3526
    %3528 = vrot.lane.b32.xlu0 %v3491, 64
    %v3529 = vpop.permute.xlu0 %3528
    %3530 = vrot.lane.b32.xlu0 %v3492, 64
    %v3531 = vpop.permute.xlu0 %3530
    %3532 = vrot.lane.b32.xlu0 %v3493, 64
    %v3533 = vpop.permute.xlu0 %3532
    %3534 = vrot.lane.b32.xlu0 %v3494, 64
    %v3535 = vpop.permute.xlu0 %3534
    %3536 = vrot.lane.b32.xlu0 %v3495, 64
    %v3537 = vpop.permute.xlu0 %3536
    %3538 = vrot.lane.b32.xlu0 %v3496, 64
    %v3539 = vpop.permute.xlu0 %3538
    %3540 = vrot.lane.b32.xlu0 %v3497, 64
    %v3541 = vpop.permute.xlu0 %3540
    %3542 = vrot.lane.b32.xlu0 %v3498, 64
    %v3543 = vpop.permute.xlu0 %3542
    %3544 = vrot.lane.b32.xlu0 %v3499, 64
    %v3545 = vpop.permute.xlu0 %3544
    %3546 = vrot.lane.b32.xlu0 %v3500, 64
    %v3547 = vpop.permute.xlu0 %3546
    %3548 = vrot.lane.b32.xlu0 %v3501, 64
    %v3549 = vpop.permute.xlu0 %3548
    %v3566 = vadd.f32 %v952, %v3519
    %v3567 = vadd.f32 %v953, %v3521
    %v3568 = vadd.f32 %v954, %v3523
    %v3569 = vadd.f32 %v955, %v3525
    %v3570 = vadd.f32 %v956, %v3527
    %v3571 = vadd.f32 %v957, %v3529
    %v3572 = vadd.f32 %v958, %v3531
    %v3573 = vadd.f32 %v959, %v3533
    %v3574 = vadd.f32 %v960, %v3535
    %v3575 = vadd.f32 %v961, %v3537
    %v3576 = vadd.f32 %v962, %v3539
    %v3577 = vadd.f32 %v963, %v3541
    %v3578 = vadd.f32 %v964, %v3543
    %v3579 = vadd.f32 %v965, %v3545
    %v3580 = vadd.f32 %v966, %v3547
    %v3581 = vadd.f32 %v967, %v3549
    %v3582 = vsel %vm588, %v3566, 0.0
    %3583 = vadd.xlane.f32.xlu0 %v3582
    %v3584 = vpop.xlane.xlu0 %3583
    %v3585 = vsel %vm588, %v3567, 0.0
    %3586 = vadd.xlane.f32.xlu0 %v3585
    %v3587 = vpop.xlane.xlu0 %3586
    %v3588 = vsel %vm588, %v3568, 0.0
    %3589 = vadd.xlane.f32.xlu0 %v3588
    %v3590 = vpop.xlane.xlu0 %3589
    %v3591 = vsel %vm588, %v3569, 0.0
    %3592 = vadd.xlane.f32.xlu0 %v3591
    %v3593 = vpop.xlane.xlu0 %3592
    %v3594 = vsel %vm588, %v3570, 0.0
    %3595 = vadd.xlane.f32.xlu0 %v3594
    %v3596 = vpop.xlane.xlu0 %3595
    %v3597 = vsel %vm588, %v3571, 0.0
    %3598 = vadd.xlane.f32.xlu0 %v3597
    %v3599 = vpop.xlane.xlu0 %3598
    %v3600 = vsel %vm588, %v3572, 0.0
    %3601 = vadd.xlane.f32.xlu0 %v3600
    %v3602 = vpop.xlane.xlu0 %3601
    %v3603 = vsel %vm588, %v3573, 0.0
    %3604 = vadd.xlane.f32.xlu0 %v3603
    %v3605 = vpop.xlane.xlu0 %3604
    %v3606 = vsel %vm588, %v3574, 0.0
    %3607 = vadd.xlane.f32.xlu0 %v3606
    %v3608 = vpop.xlane.xlu0 %3607
    %v3609 = vsel %vm588, %v3575, 0.0
    %3610 = vadd.xlane.f32.xlu0 %v3609
    %v3611 = vpop.xlane.xlu0 %3610
    %v3612 = vsel %vm588, %v3576, 0.0
    %3613 = vadd.xlane.f32.xlu0 %v3612
    %v3614 = vpop.xlane.xlu0 %3613
    %v3615 = vsel %vm588, %v3577, 0.0
    %3616 = vadd.xlane.f32.xlu0 %v3615
    %v3617 = vpop.xlane.xlu0 %3616
    %v3618 = vsel %vm588, %v3578, 0.0
    %3619 = vadd.xlane.f32.xlu0 %v3618
    %v3620 = vpop.xlane.xlu0 %3619
    %v3621 = vsel %vm588, %v3579, 0.0
    %3622 = vadd.xlane.f32.xlu0 %v3621
    %v3623 = vpop.xlane.xlu0 %3622
    %v3624 = vsel %vm588, %v3580, 0.0
    %3625 = vadd.xlane.f32.xlu0 %v3624
    %v3626 = vpop.xlane.xlu0 %3625
    %v3627 = vsel %vm588, %v3581, 0.0
    %3628 = vadd.xlane.f32.xlu0 %v3627
    %v3629 = vpop.xlane.xlu0 %3628
    %v3630 = vmul.f32 %v3584, %v1295
    %v3631 = vmul.f32 %v3587, %v1295
    %v3632 = vmul.f32 %v3590, %v1295
    %v3633 = vmul.f32 %v3593, %v1295
    %v3634 = vmul.f32 %v3596, %v1295
    %v3635 = vmul.f32 %v3599, %v1295
    %v3636 = vmul.f32 %v3602, %v1295
    %v3637 = vmul.f32 %v3605, %v1295
    %v3638 = vmul.f32 %v3608, %v1295
    %v3639 = vmul.f32 %v3611, %v1295
    %v3640 = vmul.f32 %v3614, %v1295
    %v3641 = vmul.f32 %v3617, %v1295
    %v3642 = vmul.f32 %v3620, %v1295
    %v3643 = vmul.f32 %v3623, %v1295
    %v3644 = vmul.f32 %v3626, %v1295
    %v3645 = vmul.f32 %v3629, %v1295
    %v3646 = vsub.f32 %v3566, %v3630
    %v3647 = vsub.f32 %v3567, %v3631
    %v3648 = vsub.f32 %v3568, %v3632
    %v3649 = vsub.f32 %v3569, %v3633
    %v3650 = vsub.f32 %v3570, %v3634
    %v3651 = vsub.f32 %v3571, %v3635
    %v3652 = vsub.f32 %v3572, %v3636
    %v3653 = vsub.f32 %v3573, %v3637
    %v3654 = vsub.f32 %v3574, %v3638
    %v3655 = vsub.f32 %v3575, %v3639
    %v3656 = vsub.f32 %v3576, %v3640
    %v3657 = vsub.f32 %v3577, %v3641
    %v3658 = vsub.f32 %v3578, %v3642
    %v3659 = vsub.f32 %v3579, %v3643
    %v3660 = vsub.f32 %v3580, %v3644
    %v3661 = vsub.f32 %v3581, %v3645
    %v3662 = vmul.f32 %v3646, %v3646
    %v3663 = vmul.f32 %v3647, %v3647
    %v3664 = vmul.f32 %v3648, %v3648
    %v3665 = vmul.f32 %v3649, %v3649
    %v3666 = vmul.f32 %v3650, %v3650
    %v3667 = vmul.f32 %v3651, %v3651
    %v3668 = vmul.f32 %v3652, %v3652
    %v3669 = vmul.f32 %v3653, %v3653
    %v3670 = vmul.f32 %v3654, %v3654
    %v3671 = vmul.f32 %v3655, %v3655
    %v3672 = vmul.f32 %v3656, %v3656
    %v3673 = vmul.f32 %v3657, %v3657
    %v3674 = vmul.f32 %v3658, %v3658
    %v3675 = vmul.f32 %v3659, %v3659
    %v3676 = vmul.f32 %v3660, %v3660
    %v3677 = vmul.f32 %v3661, %v3661
    %v3678 = vsel %vm588, %v3662, 0.0
    %3679 = vadd.xlane.f32.xlu0 %v3678
    %v3680 = vpop.xlane.xlu0 %3679
    %v3681 = vsel %vm588, %v3663, 0.0
    %3682 = vadd.xlane.f32.xlu0 %v3681
    %v3683 = vpop.xlane.xlu0 %3682
    %v3684 = vsel %vm588, %v3664, 0.0
    %3685 = vadd.xlane.f32.xlu0 %v3684
    %v3686 = vpop.xlane.xlu0 %3685
    %v3687 = vsel %vm588, %v3665, 0.0
    %3688 = vadd.xlane.f32.xlu0 %v3687
    %v3689 = vpop.xlane.xlu0 %3688
    %v3690 = vsel %vm588, %v3666, 0.0
    %3691 = vadd.xlane.f32.xlu0 %v3690
    %v3692 = vpop.xlane.xlu0 %3691
    %v3693 = vsel %vm588, %v3667, 0.0
    %3694 = vadd.xlane.f32.xlu0 %v3693
    %v3695 = vpop.xlane.xlu0 %3694
    %v3696 = vsel %vm588, %v3668, 0.0
    %3697 = vadd.xlane.f32.xlu0 %v3696
    %v3698 = vpop.xlane.xlu0 %3697
    %v3699 = vsel %vm588, %v3669, 0.0
    %3700 = vadd.xlane.f32.xlu0 %v3699
    %v3701 = vpop.xlane.xlu0 %3700
    %v3702 = vsel %vm588, %v3670, 0.0
    %3703 = vadd.xlane.f32.xlu0 %v3702
    %v3704 = vpop.xlane.xlu0 %3703
    %v3705 = vsel %vm588, %v3671, 0.0
    %3706 = vadd.xlane.f32.xlu0 %v3705
    %v3707 = vpop.xlane.xlu0 %3706
    %v3708 = vsel %vm588, %v3672, 0.0
    %3709 = vadd.xlane.f32.xlu0 %v3708
    %v3710 = vpop.xlane.xlu0 %3709
    %v3711 = vsel %vm588, %v3673, 0.0
    %3712 = vadd.xlane.f32.xlu0 %v3711
    %v3713 = vpop.xlane.xlu0 %3712
    %v3714 = vsel %vm588, %v3674, 0.0
    %3715 = vadd.xlane.f32.xlu0 %v3714
    %v3716 = vpop.xlane.xlu0 %3715
    %v3717 = vsel %vm588, %v3675, 0.0
    %3718 = vadd.xlane.f32.xlu0 %v3717
    %v3719 = vpop.xlane.xlu0 %3718
    %v3720 = vsel %vm588, %v3676, 0.0
    %3721 = vadd.xlane.f32.xlu0 %v3720
    %v3722 = vpop.xlane.xlu0 %3721
    %v3723 = vsel %vm588, %v3677, 0.0
    %3724 = vadd.xlane.f32.xlu0 %v3723
    %v3725 = vpop.xlane.xlu0 %3724
    %v3726 = vmul.f32 %v3680, %v1295
    %v3727 = vmul.f32 %v3683, %v1295
    %v3728 = vmul.f32 %v3686, %v1295
    %v3729 = vmul.f32 %v3689, %v1295
    %v3730 = vmul.f32 %v3692, %v1295
    %v3731 = vmul.f32 %v3695, %v1295
    %v3732 = vmul.f32 %v3698, %v1295
    %v3733 = vmul.f32 %v3701, %v1295
    %v3734 = vmul.f32 %v3704, %v1295
    %v3735 = vmul.f32 %v3707, %v1295
    %v3736 = vmul.f32 %v3710, %v1295
    %v3737 = vmul.f32 %v3713, %v1295
    %v3738 = vmul.f32 %v3716, %v1295
    %v3739 = vmul.f32 %v3719, %v1295
    %v3740 = vmul.f32 %v3722, %v1295
    %v3741 = vmul.f32 %v3725, %v1295
    %v3742 = vadd.f32 %v3726, 1e-06
    %v3743 = vadd.f32 %v3727, 1e-06
    %v3744 = vadd.f32 %v3728, 1e-06
    %v3745 = vadd.f32 %v3729, 1e-06
    %v3746 = vadd.f32 %v3730, 1e-06
    %v3747 = vadd.f32 %v3731, 1e-06
    %v3748 = vadd.f32 %v3732, 1e-06
    %v3749 = vadd.f32 %v3733, 1e-06
    %v3750 = vadd.f32 %v3734, 1e-06
    %v3751 = vadd.f32 %v3735, 1e-06
    %v3752 = vadd.f32 %v3736, 1e-06
    %v3753 = vadd.f32 %v3737, 1e-06
    %v3754 = vadd.f32 %v3738, 1e-06
    %v3755 = vadd.f32 %v3739, 1e-06
    %v3756 = vadd.f32 %v3740, 1e-06
    %v3757 = vadd.f32 %v3741, 1e-06
    %v3758 = vrsqrt.pop %v3742
    %v3759 = vrsqrt.pop %v3743
    %v3760 = vrsqrt.pop %v3744
    %v3761 = vrsqrt.pop %v3745
    %v3762 = vrsqrt.pop %v3746
    %v3763 = vrsqrt.pop %v3747
    %v3764 = vrsqrt.pop %v3748
    %v3765 = vrsqrt.pop %v3749
    %v3766 = vrsqrt.pop %v3750
    %v3767 = vrsqrt.pop %v3751
    %v3768 = vrsqrt.pop %v3752
    %v3769 = vrsqrt.pop %v3753
    %v3770 = vrsqrt.pop %v3754
    %v3771 = vrsqrt.pop %v3755
    %v3772 = vrsqrt.pop %v3756
    %v3773 = vrsqrt.pop %v3757
    %v3774 = vmul.f32 %v3646, %v3758
    %v3775 = vmul.f32 %v3647, %v3759
    %v3776 = vmul.f32 %v3648, %v3760
    %v3777 = vmul.f32 %v3649, %v3761
    %v3778 = vmul.f32 %v3650, %v3762
    %v3779 = vmul.f32 %v3651, %v3763
    %v3780 = vmul.f32 %v3652, %v3764
    %v3781 = vmul.f32 %v3653, %v3765
    %v3782 = vmul.f32 %v3654, %v3766
    %v3783 = vmul.f32 %v3655, %v3767
    %v3784 = vmul.f32 %v3656, %v3768
    %v3785 = vmul.f32 %v3657, %v3769
    %v3786 = vmul.f32 %v3658, %v3770
    %v3787 = vmul.f32 %v3659, %v3771
    %v3788 = vmul.f32 %v3660, %v3772
    %v3789 = vmul.f32 %v3661, %v3773
    %v3790 = vadd.f32 %v1237, 1.0
    %v3791 = vadd.f32 %v1244, 1.0
    %v3794 = vlaneseq
    %v3795 = vshrl.u32 %v3794, 7
    %v3796 = vsub.s32 0, %v3795
    %v3797 = vrot.slane %v3790, %v3796
    %v3798 = vlaneseq
    %v3799 = vshrl.u32 %v3798, 7
    %v3800 = vsub.s32 0, %v3799
    %v3801 = vrot.slane %v3791, %v3800
    %v3804 = vmul.f32 %v3774, %v3797
    %v3805 = vmul.f32 %v3775, %v3797
    %v3806 = vmul.f32 %v3776, %v3797
    %v3807 = vmul.f32 %v3777, %v3797
    %v3808 = vmul.f32 %v3778, %v3797
    %v3809 = vmul.f32 %v3779, %v3797
    %v3810 = vmul.f32 %v3780, %v3797
    %v3811 = vmul.f32 %v3781, %v3797
    %v3812 = vmul.f32 %v3782, %v3801
    %v3813 = vmul.f32 %v3783, %v3801
    %v3814 = vmul.f32 %v3784, %v3801
    %v3815 = vmul.f32 %v3785, %v3801
    %v3816 = vmul.f32 %v3786, %v3801
    %v3817 = vmul.f32 %v3787, %v3801
    %v3818 = vmul.f32 %v3788, %v3801
    %v3819 = vmul.f32 %v3789, %v3801
    %3820 = vrot.lane.b32.xlu0 %v1493, 32
    %v3821 = vpop.permute.xlu0 %3820
    %3822 = vrot.lane.b32.xlu0 %v1497, 32
    %v3823 = vpop.permute.xlu0 %3822
    %v3826 = vadd.f32 %v3804, %v3821
    %v3827 = vadd.f32 %v3805, %v3821
    %v3828 = vadd.f32 %v3806, %v3821
    %v3829 = vadd.f32 %v3807, %v3821
    %v3830 = vadd.f32 %v3808, %v3821
    %v3831 = vadd.f32 %v3809, %v3821
    %v3832 = vadd.f32 %v3810, %v3821
    %v3833 = vadd.f32 %v3811, %v3821
    %v3834 = vadd.f32 %v3812, %v3823
    %v3835 = vadd.f32 %v3813, %v3823
    %v3836 = vadd.f32 %v3814, %v3823
    %v3837 = vadd.f32 %v3815, %v3823
    %v3838 = vadd.f32 %v3816, %v3823
    %v3839 = vadd.f32 %v3817, %v3823
    %v3840 = vadd.f32 %v3818, %v3823
    %v3841 = vadd.f32 %v3819, %v3823
    %v3842 = vpack.c.bf16 %v3827, %v3826
    %v3843 = vpack.c.bf16 %v3829, %v3828
    %v3844 = vpack.c.bf16 %v3831, %v3830
    %v3845 = vpack.c.bf16 %v3833, %v3832
    %v3846 = vpack.c.bf16 %v3835, %v3834
    %v3847 = vpack.c.bf16 %v3837, %v3836
    %v3848 = vpack.c.bf16 %v3839, %v3838
    %v3849 = vpack.c.bf16 %v3841, %v3840
    %v3850 = vld [vmem:[%s59] sm:$0xf]
    %v3851 = vld [vmem:[%s59 + $0x4] sm:$0xf]
    %v3852 = vld [vmem:[%s59 + $0x8] sm:$0xf]
    %v3853 = vld [vmem:[%s59 + $0xc] sm:$0xf]
    %v3854 = vld [vmem:[#allocation2] sm:$0x1]
    %v3856 = vlaneseq
    %v3857 = vshrl.u32 %v3856, 7
    %v3858 = vsub.s32 0, %v3857
    %v3859 = vrot.slane %v3854, %v3858
    %v3865 = vunpack.c.l.b16 %v3850
    %v3866 = vunpack.c.l.b16 %v3851
    %v3867 = vunpack.c.l.b16 %v3852
    %v3868 = vunpack.c.l.b16 %v3853
    %v3869 = vpack.c.b16 %v3866, %v3865
    %v3870 = vpack.c.b16 %v3868, %v3867
    %v3874 = vsel %vm588, %v3842, 0
    %v3877 = vsel %vm588, %v3843, 0
    %v3880 = vsel %vm588, %v3844, 0
    %v3883 = vsel %vm588, %v3845, 0
    %v3886 = vsel %vm588, %v3846, 0
    %v3889 = vsel %vm588, %v3847, 0
    %v3892 = vsel %vm588, %v3848, 0
    %v3895 = vsel %vm588, %v3849, 0
    %3897 = vmatprep.subr.bf16.mxu0 0
    %3898 = vmatpush1.bf16.msra.mxu0 %v3869
    %3899 = vmatprep.subr.bf16.mxu0 0
    %3900 = vmatpush1.bf16.msra.mxu0 %v3870
    %3901 = vmatprep.subr.bf16.mxu0 0
    %3902 = vmatpush1.bf16.msra.mxu0 0
    %3903 = vmatprep.subr.bf16.mxu0 0
    %3904 = vmatpush1.bf16.msra.mxu0 0
    %3905 = vmatprep.subr.bf16.mxu0 0
    %3906 = vmatpush1.bf16.msra.mxu0 0
    %3907 = vmatprep.subr.bf16.mxu0 0
    %3908 = vmatpush1.bf16.msra.mxu0 0
    %3909 = vmatprep.subr.bf16.mxu0 0
    %3910 = vmatpush1.bf16.msra.mxu0 0
    %3911 = vmatprep.subr.bf16.mxu0 0
    %3912 = vmatpush1.bf16.msra.mxu0 0
    %3913 = vmatprep.subr.bf16.mxu0 0
    %3914 = vmatpush1.bf16.msra.mxu0 0
    %3915 = vmatprep.subr.bf16.mxu0 0
    %3916 = vmatpush1.bf16.msra.mxu0 0
    %3917 = vmatprep.subr.bf16.mxu0 0
    %3918 = vmatpush1.bf16.msra.mxu0 0
    %3919 = vmatprep.subr.bf16.mxu0 0
    %3920 = vmatpush1.bf16.msra.mxu0 0
    %3921 = vmatprep.subr.bf16.mxu0 0
    %3922 = vmatpush1.bf16.msra.mxu0 0
    %3923 = vmatprep.subr.bf16.mxu0 0
    %3924 = vmatpush1.bf16.msra.mxu0 0
    %3925 = vmatprep.subr.bf16.mxu0 0
    %3926 = vmatpush1.bf16.msra.mxu0 0
    %3927 = vmatprep.subr.bf16.mxu0 0
    %3928 = vmatpush1.bf16.msra.mxu0 0
    %3929 = vmatprep.mubr.bf16.mxu0 0
    %3930 = vmatmul.mubr.bf16.gmra.mrb[0].mxu0 %v3874
    %v3931 = vpop.f32.mrb[0].mxu0
    %v3932 = vadd.f32 %v3859, %v3931
    %v3933 = vpop.f32.mrb[0].mxu0
    %v3934 = vpop.f32.mrb[0].mxu0
    %v3935 = vadd.f32 %v3859, %v3934
    %v3936 = vpop.f32.mrb[0].mxu0
    %3937 = vmatprep.mubr.bf16.mxu0 0
    %3938 = vmatmul.mubr.bf16.gmra.mrb[0].mxu0 %v3877
    %v3939 = vpop.f32.mrb[0].mxu0
    %v3940 = vadd.f32 %v3859, %v3939
    %v3941 = vpop.f32.mrb[0].mxu0
    %v3942 = vpop.f32.mrb[0].mxu0
    %v3943 = vadd.f32 %v3859, %v3942
    %v3944 = vpop.f32.mrb[0].mxu0
    %3945 = vmatprep.mubr.bf16.mxu0 0
    %3946 = vmatmul.mubr.bf16.gmra.mrb[0].mxu0 %v3880
    %v3947 = vpop.f32.mrb[0].mxu0
    %v3948 = vadd.f32 %v3859, %v3947
    %v3949 = vpop.f32.mrb[0].mxu0
    %v3950 = vpop.f32.mrb[0].mxu0
    %v3951 = vadd.f32 %v3859, %v3950
    %v3952 = vpop.f32.mrb[0].mxu0
    %3953 = vmatprep.mubr.bf16.mxu0 0
    %3954 = vmatmul.mubr.bf16.gmra.mrb[0].mxu0 %v3883
    %v3955 = vpop.f32.mrb[0].mxu0
    %v3956 = vadd.f32 %v3859, %v3955
    %v3957 = vpop.f32.mrb[0].mxu0
    %v3958 = vpop.f32.mrb[0].mxu0
    %v3959 = vadd.f32 %v3859, %v3958
    %v3960 = vpop.f32.mrb[0].mxu0
    %3961 = vmatprep.mubr.bf16.mxu0 0
    %3962 = vmatmul.mubr.bf16.gmra.mrb[0].mxu0 %v3886
    %v3963 = vpop.f32.mrb[0].mxu0
    %v3964 = vadd.f32 %v3859, %v3963
    %v3965 = vpop.f32.mrb[0].mxu0
    %v3966 = vpop.f32.mrb[0].mxu0
    %v3967 = vadd.f32 %v3859, %v3966
    %v3968 = vpop.f32.mrb[0].mxu0
    %3969 = vmatprep.mubr.bf16.mxu0 0
    %3970 = vmatmul.mubr.bf16.gmra.mrb[0].mxu0 %v3889
    %v3971 = vpop.f32.mrb[0].mxu0
    %v3972 = vadd.f32 %v3859, %v3971
    %v3973 = vpop.f32.mrb[0].mxu0
    %v3974 = vpop.f32.mrb[0].mxu0
    %v3975 = vadd.f32 %v3859, %v3974
    %v3976 = vpop.f32.mrb[0].mxu0
    %3977 = vmatprep.mubr.bf16.mxu0 0
    %3978 = vmatmul.mubr.bf16.gmra.mrb[0].mxu0 %v3892
    %v3979 = vpop.f32.mrb[0].mxu0
    %v3980 = vadd.f32 %v3859, %v3979
    %v3981 = vpop.f32.mrb[0].mxu0
    %v3982 = vpop.f32.mrb[0].mxu0
    %v3983 = vadd.f32 %v3859, %v3982
    %v3984 = vpop.f32.mrb[0].mxu0
    %3985 = vmatprep.mubr.bf16.mxu0 0
    %3986 = vmatmul.mubr.bf16.gmra.mrb[0].mxu0 %v3895
    %v3987 = vpop.f32.mrb[0].mxu0
    %v3988 = vadd.f32 %v3859, %v3987
    %v3989 = vpop.f32.mrb[0].mxu0
    %v3990 = vpop.f32.mrb[0].mxu0
    %v3991 = vadd.f32 %v3859, %v3990
    %v3992 = vpop.f32.mrb[0].mxu0
    %3993 = vdwg.mxu0
    %v3994 = vmul.f32 %v3932, 0.5
    %v3995 = vmul.f32 %v3935, 0.5
    %v3996 = vmul.f32 %v3940, 0.5
    %v3997 = vmul.f32 %v3943, 0.5
    %v3998 = vmul.f32 %v3948, 0.5
    %v3999 = vmul.f32 %v3951, 0.5
    %v4000 = vmul.f32 %v3956, 0.5
    %v4001 = vmul.f32 %v3959, 0.5
    %v4002 = vmul.f32 %v3964, 0.5
    %v4003 = vmul.f32 %v3967, 0.5
    %v4004 = vmul.f32 %v3972, 0.5
    %v4005 = vmul.f32 %v3975, 0.5
    %v4006 = vmul.f32 %v3980, 0.5
    %v4007 = vmul.f32 %v3983, 0.5
    %v4008 = vmul.f32 %v3988, 0.5
    %v4009 = vmul.f32 %v3991, 0.5
    %v4010 = vmul.f32 %v3932, 0.044715
    %v4011 = vmul.f32 %v3935, 0.044715
    %v4012 = vmul.f32 %v3940, 0.044715
    %v4013 = vmul.f32 %v3943, 0.044715
    %v4014 = vmul.f32 %v3948, 0.044715
    %v4015 = vmul.f32 %v3951, 0.044715
    %v4016 = vmul.f32 %v3956, 0.044715
    %v4017 = vmul.f32 %v3959, 0.044715
    %v4018 = vmul.f32 %v3964, 0.044715
    %v4019 = vmul.f32 %v3967, 0.044715
    %v4020 = vmul.f32 %v3972, 0.044715
    %v4021 = vmul.f32 %v3975, 0.044715
    %v4022 = vmul.f32 %v3980, 0.044715
    %v4023 = vmul.f32 %v3983, 0.044715
    %v4024 = vmul.f32 %v3988, 0.044715
    %v4025 = vmul.f32 %v3991, 0.044715
    %v4026 = vmul.f32 %v4010, %v3932
    %v4027 = vmul.f32 %v4011, %v3935
    %v4028 = vmul.f32 %v4012, %v3940
    %v4029 = vmul.f32 %v4013, %v3943
    %v4030 = vmul.f32 %v4014, %v3948
    %v4031 = vmul.f32 %v4015, %v3951
    %v4032 = vmul.f32 %v4016, %v3956
    %v4033 = vmul.f32 %v4017, %v3959
    %v4034 = vmul.f32 %v4018, %v3964
    %v4035 = vmul.f32 %v4019, %v3967
    %v4036 = vmul.f32 %v4020, %v3972
    %v4037 = vmul.f32 %v4021, %v3975
    %v4038 = vmul.f32 %v4022, %v3980
    %v4039 = vmul.f32 %v4023, %v3983
    %v4040 = vmul.f32 %v4024, %v3988
    %v4041 = vmul.f32 %v4025, %v3991
    %v4042 = vmul.f32 %v4026, %v3932
    %v4043 = vmul.f32 %v4027, %v3935
    %v4044 = vmul.f32 %v4028, %v3940
    %v4045 = vmul.f32 %v4029, %v3943
    %v4046 = vmul.f32 %v4030, %v3948
    %v4047 = vmul.f32 %v4031, %v3951
    %v4048 = vmul.f32 %v4032, %v3956
    %v4049 = vmul.f32 %v4033, %v3959
    %v4050 = vmul.f32 %v4034, %v3964
    %v4051 = vmul.f32 %v4035, %v3967
    %v4052 = vmul.f32 %v4036, %v3972
    %v4053 = vmul.f32 %v4037, %v3975
    %v4054 = vmul.f32 %v4038, %v3980
    %v4055 = vmul.f32 %v4039, %v3983
    %v4056 = vmul.f32 %v4040, %v3988
    %v4057 = vmul.f32 %v4041, %v3991
    %v4058 = vadd.f32 %v3932, %v4042
    %v4059 = vadd.f32 %v3935, %v4043
    %v4060 = vadd.f32 %v3940, %v4044
    %v4061 = vadd.f32 %v3943, %v4045
    %v4062 = vadd.f32 %v3948, %v4046
    %v4063 = vadd.f32 %v3951, %v4047
    %v4064 = vadd.f32 %v3956, %v4048
    %v4065 = vadd.f32 %v3959, %v4049
    %v4066 = vadd.f32 %v3964, %v4050
    %v4067 = vadd.f32 %v3967, %v4051
    %v4068 = vadd.f32 %v3972, %v4052
    %v4069 = vadd.f32 %v3975, %v4053
    %v4070 = vadd.f32 %v3980, %v4054
    %v4071 = vadd.f32 %v3983, %v4055
    %v4072 = vadd.f32 %v3988, %v4056
    %v4073 = vadd.f32 %v3991, %v4057
    %v4074 = vmul.f32 %v4058, 0.7978846
    %v4075 = vmul.f32 %v4059, 0.7978846
    %v4076 = vmul.f32 %v4060, 0.7978846
    %v4077 = vmul.f32 %v4061, 0.7978846
    %v4078 = vmul.f32 %v4062, 0.7978846
    %v4079 = vmul.f32 %v4063, 0.7978846
    %v4080 = vmul.f32 %v4064, 0.7978846
    %v4081 = vmul.f32 %v4065, 0.7978846
    %v4082 = vmul.f32 %v4066, 0.7978846
    %v4083 = vmul.f32 %v4067, 0.7978846
    %v4084 = vmul.f32 %v4068, 0.7978846
    %v4085 = vmul.f32 %v4069, 0.7978846
    %v4086 = vmul.f32 %v4070, 0.7978846
    %v4087 = vmul.f32 %v4071, 0.7978846
    %v4088 = vmul.f32 %v4072, 0.7978846
    %v4089 = vmul.f32 %v4073, 0.7978846
    %v4090 = vtanh.pop %v4074
    %v4091 = vtanh.pop %v4075
    %v4092 = vtanh.pop %v4076
    %v4093 = vtanh.pop %v4077
    %v4094 = vtanh.pop %v4078
    %v4095 = vtanh.pop %v4079
    %v4096 = vtanh.pop %v4080
    %v4097 = vtanh.pop %v4081
    %v4098 = vtanh.pop %v4082
    %v4099 = vtanh.pop %v4083
    %v4100 = vtanh.pop %v4084
    %v4101 = vtanh.pop %v4085
    %v4102 = vtanh.pop %v4086
    %v4103 = vtanh.pop %v4087
    %v4104 = vtanh.pop %v4088
    %v4105 = vtanh.pop %v4089
    %v4106 = vadd.f32 %v4090, 1.0
    %v4107 = vadd.f32 %v4091, 1.0
    %v4108 = vadd.f32 %v4092, 1.0
    %v4109 = vadd.f32 %v4093, 1.0
    %v4110 = vadd.f32 %v4094, 1.0
    %v4111 = vadd.f32 %v4095, 1.0
    %v4112 = vadd.f32 %v4096, 1.0
    %v4113 = vadd.f32 %v4097, 1.0
    %v4114 = vadd.f32 %v4098, 1.0
    %v4115 = vadd.f32 %v4099, 1.0
    %v4116 = vadd.f32 %v4100, 1.0
    %v4117 = vadd.f32 %v4101, 1.0
    %v4118 = vadd.f32 %v4102, 1.0
    %v4119 = vadd.f32 %v4103, 1.0
    %v4120 = vadd.f32 %v4104, 1.0
    %v4121 = vadd.f32 %v4105, 1.0
    %v4122 = vmul.f32 %v3994, %v4106
    %v4123 = vmul.f32 %v3995, %v4107
    %v4124 = vmul.f32 %v3996, %v4108
    %v4125 = vmul.f32 %v3997, %v4109
    %v4126 = vmul.f32 %v3998, %v4110
    %v4127 = vmul.f32 %v3999, %v4111
    %v4128 = vmul.f32 %v4000, %v4112
    %v4129 = vmul.f32 %v4001, %v4113
    %v4130 = vmul.f32 %v4002, %v4114
    %v4131 = vmul.f32 %v4003, %v4115
    %v4132 = vmul.f32 %v4004, %v4116
    %v4133 = vmul.f32 %v4005, %v4117
    %v4134 = vmul.f32 %v4006, %v4118
    %v4135 = vmul.f32 %v4007, %v4119
    %v4136 = vmul.f32 %v4008, %v4120
    %v4137 = vmul.f32 %v4009, %v4121
    %v4138 = vpack.c.bf16 %v4123, %v4122
    %v4139 = vpack.c.bf16 %v4125, %v4124
    %v4140 = vpack.c.bf16 %v4127, %v4126
    %v4141 = vpack.c.bf16 %v4129, %v4128
    %v4142 = vpack.c.bf16 %v4131, %v4130
    %v4143 = vpack.c.bf16 %v4133, %v4132
    %v4144 = vpack.c.bf16 %v4135, %v4134
    %v4145 = vpack.c.bf16 %v4137, %v4136
    %v4146 = vld [vmem:[%s63] sm:$0xf]
    %v4147 = vld [vmem:[%s63 + $0x4] sm:$0xf]
    %v4148 = vld [vmem:[%s63 + $0x8] sm:$0xf]
    %v4149 = vld [vmem:[%s63 + $0xc] sm:$0xf]
    %v4150 = vld [vmem:[%s63 + $0x10] sm:$0xf]
    %v4151 = vld [vmem:[%s63 + $0x14] sm:$0xf]
    %v4152 = vld [vmem:[%s63 + $0x18] sm:$0xf]
    %v4153 = vld [vmem:[%s63 + $0x1c] sm:$0xf]
    %v4154 = vld [vmem:[%s63 + $0x20] sm:$0xf]
    %v4155 = vld [vmem:[%s63 + $0x24] sm:$0xf]
    %v4156 = vld [vmem:[%s63 + $0x28] sm:$0xf]
    %v4157 = vld [vmem:[%s63 + $0x2c] sm:$0xf]
    %v4158 = vld [vmem:[%s63 + $0x30] sm:$0xf]
    %v4159 = vld [vmem:[%s63 + $0x34] sm:$0xf]
    %v4160 = vld [vmem:[%s63 + $0x38] sm:$0xf]
    %v4161 = vld [vmem:[%s63 + $0x3c] sm:$0xf]
    %v4162 = vld [vmem:[#allocation4] sm:$0x1]
    %v4164 = vlaneseq
    %v4165 = vshrl.u32 %v4164, 7
    %v4166 = vsub.s32 0, %v4165
    %v4167 = vrot.slane %v4162, %v4166
    %v4185 = vunpack.c.l.b16 %v4146
    %v4186 = vunpack.c.l.b16 %v4147
    %v4187 = vunpack.c.l.b16 %v4148
    %v4188 = vunpack.c.l.b16 %v4149
    %v4189 = vunpack.c.l.b16 %v4150
    %v4190 = vunpack.c.l.b16 %v4151
    %v4191 = vunpack.c.l.b16 %v4152
    %v4192 = vunpack.c.l.b16 %v4153
    %v4193 = vunpack.c.l.b16 %v4154
    %v4194 = vunpack.c.l.b16 %v4155
    %v4195 = vunpack.c.l.b16 %v4156
    %v4196 = vunpack.c.l.b16 %v4157
    %v4197 = vunpack.c.l.b16 %v4158
    %v4198 = vunpack.c.l.b16 %v4159
    %v4199 = vunpack.c.l.b16 %v4160
    %v4200 = vunpack.c.l.b16 %v4161
    %v4201 = vpack.c.b16 %v4186, %v4185
    %v4202 = vpack.c.b16 %v4188, %v4187
    %v4203 = vpack.c.b16 %v4190, %v4189
    %v4204 = vpack.c.b16 %v4192, %v4191
    %v4205 = vpack.c.b16 %v4194, %v4193
    %v4206 = vpack.c.b16 %v4196, %v4195
    %v4207 = vpack.c.b16 %v4198, %v4197
    %v4208 = vpack.c.b16 %v4200, %v4199
    %4217 = vmatprep.subr.bf16.mxu0 0
    %4218 = vmatpush1.bf16.msra.mxu0 %v4201
    %4219 = vmatprep.subr.bf16.mxu0 0
    %4220 = vmatpush1.bf16.msra.mxu0 %v4202
    %4221 = vmatprep.subr.bf16.mxu0 0
    %4222 = vmatpush1.bf16.msra.mxu0 %v4203
    %4223 = vmatprep.subr.bf16.mxu0 0
    %4224 = vmatpush1.bf16.msra.mxu0 %v4204
    %4225 = vmatprep.subr.bf16.mxu0 0
    %4226 = vmatpush1.bf16.msra.mxu0 %v4205
    %4227 = vmatprep.subr.bf16.mxu0 0
    %4228 = vmatpush1.bf16.msra.mxu0 %v4206
    %4229 = vmatprep.subr.bf16.mxu0 0
    %4230 = vmatpush1.bf16.msra.mxu0 %v4207
    %4231 = vmatprep.subr.bf16.mxu0 0
    %4232 = vmatpush1.bf16.msra.mxu0 %v4208
    %4233 = vmatprep.subr.bf16.mxu0 0
    %4234 = vmatpush1.bf16.msra.mxu0 0
    %4235 = vmatprep.subr.bf16.mxu0 0
    %4236 = vmatpush1.bf16.msra.mxu0 0
    %4237 = vmatprep.subr.bf16.mxu0 0
    %4238 = vmatpush1.bf16.msra.mxu0 0
    %4239 = vmatprep.subr.bf16.mxu0 0
    %4240 = vmatpush1.bf16.msra.mxu0 0
    %4241 = vmatprep.subr.bf16.mxu0 0
    %4242 = vmatpush1.bf16.msra.mxu0 0
    %4243 = vmatprep.subr.bf16.mxu0 0
    %4244 = vmatpush1.bf16.msra.mxu0 0
    %4245 = vmatprep.subr.bf16.mxu0 0
    %4246 = vmatpush1.bf16.msra.mxu0 0
    %4247 = vmatprep.subr.bf16.mxu0 0
    %4248 = vmatpush1.bf16.msra.mxu0 0
    %4249 = vmatprep.mubr.bf16.mxu0 0
    %4250 = vmatmul.mubr.bf16.gmra.mrb[0].mxu0 %v4138
    %v4251 = vpop.f32.mrb[0].mxu0
    %v4252 = vadd.f32 %v4167, %v4251
    %v4253 = vpop.f32.mrb[0].mxu0
    %v4254 = vpop.f32.mrb[0].mxu0
    %v4255 = vadd.f32 %v4167, %v4254
    %v4256 = vpop.f32.mrb[0].mxu0
    %4257 = vmatprep.mubr.bf16.mxu0 0
    %4258 = vmatmul.mubr.bf16.gmra.mrb[0].mxu0 %v4139
    %v4259 = vpop.f32.mrb[0].mxu0
    %v4260 = vadd.f32 %v4167, %v4259
    %v4261 = vpop.f32.mrb[0].mxu0
    %v4262 = vpop.f32.mrb[0].mxu0
    %v4263 = vadd.f32 %v4167, %v4262
    %v4264 = vpop.f32.mrb[0].mxu0
    %4265 = vmatprep.mubr.bf16.mxu0 0
    %4266 = vmatmul.mubr.bf16.gmra.mrb[0].mxu0 %v4140
    %v4267 = vpop.f32.mrb[0].mxu0
    %v4268 = vadd.f32 %v4167, %v4267
    %v4269 = vpop.f32.mrb[0].mxu0
    %v4270 = vpop.f32.mrb[0].mxu0
    %v4271 = vadd.f32 %v4167, %v4270
    %v4272 = vpop.f32.mrb[0].mxu0
    %4273 = vmatprep.mubr.bf16.mxu0 0
    %4274 = vmatmul.mubr.bf16.gmra.mrb[0].mxu0 %v4141
    %v4275 = vpop.f32.mrb[0].mxu0
    %v4276 = vadd.f32 %v4167, %v4275
    %v4277 = vpop.f32.mrb[0].mxu0
    %v4278 = vpop.f32.mrb[0].mxu0
    %v4279 = vadd.f32 %v4167, %v4278
    %v4280 = vpop.f32.mrb[0].mxu0
    %4281 = vmatprep.mubr.bf16.mxu0 0
    %4282 = vmatmul.mubr.bf16.gmra.mrb[0].mxu0 %v4142
    %v4283 = vpop.f32.mrb[0].mxu0
    %v4284 = vadd.f32 %v4167, %v4283
    %v4285 = vpop.f32.mrb[0].mxu0
    %v4286 = vpop.f32.mrb[0].mxu0
    %v4287 = vadd.f32 %v4167, %v4286
    %v4288 = vpop.f32.mrb[0].mxu0
    %4289 = vmatprep.mubr.bf16.mxu0 0
    %4290 = vmatmul.mubr.bf16.gmra.mrb[0].mxu0 %v4143
    %v4291 = vpop.f32.mrb[0].mxu0
    %v4292 = vadd.f32 %v4167, %v4291
    %v4293 = vpop.f32.mrb[0].mxu0
    %v4294 = vpop.f32.mrb[0].mxu0
    %v4295 = vadd.f32 %v4167, %v4294
    %v4296 = vpop.f32.mrb[0].mxu0
    %4297 = vmatprep.mubr.bf16.mxu0 0
    %4298 = vmatmul.mubr.bf16.gmra.mrb[0].mxu0 %v4144
    %v4299 = vpop.f32.mrb[0].mxu0
    %v4300 = vadd.f32 %v4167, %v4299
    %v4301 = vpop.f32.mrb[0].mxu0
    %v4302 = vpop.f32.mrb[0].mxu0
    %v4303 = vadd.f32 %v4167, %v4302
    %v4304 = vpop.f32.mrb[0].mxu0
    %4305 = vmatprep.mubr.bf16.mxu0 0
    %4306 = vmatmul.mubr.bf16.gmra.mrb[0].mxu0 %v4145
    %v4307 = vpop.f32.mrb[0].mxu0
    %v4308 = vadd.f32 %v4167, %v4307
    %v4309 = vpop.f32.mrb[0].mxu0
    %v4310 = vpop.f32.mrb[0].mxu0
    %v4311 = vadd.f32 %v4167, %v4310
    %v4312 = vpop.f32.mrb[0].mxu0
    %4313 = vdwg.mxu0
    %v4314 = vlaneseq
    %v4315 = vshrl.u32 %v4314, 7
    %v4316 = vsub.s32 0, %v4315
    %v4317 = vrot.slane %v1237, %v4316
    %v4318 = vlaneseq
    %v4319 = vshrl.u32 %v4318, 7
    %v4320 = vsub.s32 0, %v4319
    %v4321 = vrot.slane %v1244, %v4320
    %4340 = vrot.lane.b32.xlu0 %v4252, 32
    %v4341 = vpop.permute.xlu0 %4340
    %4342 = vrot.lane.b32.xlu0 %v4255, 32
    %v4343 = vpop.permute.xlu0 %4342
    %4344 = vrot.lane.b32.xlu0 %v4260, 32
    %v4345 = vpop.permute.xlu0 %4344
    %4346 = vrot.lane.b32.xlu0 %v4263, 32
    %v4347 = vpop.permute.xlu0 %4346
    %4348 = vrot.lane.b32.xlu0 %v4268, 32
    %v4349 = vpop.permute.xlu0 %4348
    %4350 = vrot.lane.b32.xlu0 %v4271, 32
    %v4351 = vpop.permute.xlu0 %4350
    %4352 = vrot.lane.b32.xlu0 %v4276, 32
    %v4353 = vpop.permute.xlu0 %4352
    %4354 = vrot.lane.b32.xlu0 %v4279, 32
    %v4355 = vpop.permute.xlu0 %4354
    %4356 = vrot.lane.b32.xlu0 %v4284, 32
    %v4357 = vpop.permute.xlu0 %4356
    %4358 = vrot.lane.b32.xlu0 %v4287, 32
    %v4359 = vpop.permute.xlu0 %4358
    %4360 = vrot.lane.b32.xlu0 %v4292, 32
    %v4361 = vpop.permute.xlu0 %4360
    %4362 = vrot.lane.b32.xlu0 %v4295, 32
    %v4363 = vpop.permute.xlu0 %4362
    %4364 = vrot.lane.b32.xlu0 %v4300, 32
    %v4365 = vpop.permute.xlu0 %4364
    %4366 = vrot.lane.b32.xlu0 %v4303, 32
    %v4367 = vpop.permute.xlu0 %4366
    %4368 = vrot.lane.b32.xlu0 %v4308, 32
    %v4369 = vpop.permute.xlu0 %4368
    %4370 = vrot.lane.b32.xlu0 %v4311, 32
    %v4371 = vpop.permute.xlu0 %4370
    %v4388 = vmul.f32 %v4317, %v4341
    %v4389 = vmul.f32 %v4317, %v4343
    %v4390 = vmul.f32 %v4317, %v4345
    %v4391 = vmul.f32 %v4317, %v4347
    %v4392 = vmul.f32 %v4317, %v4349
    %v4393 = vmul.f32 %v4317, %v4351
    %v4394 = vmul.f32 %v4317, %v4353
    %v4395 = vmul.f32 %v4317, %v4355
    %v4396 = vmul.f32 %v4321, %v4357
    %v4397 = vmul.f32 %v4321, %v4359
    %v4398 = vmul.f32 %v4321, %v4361
    %v4399 = vmul.f32 %v4321, %v4363
    %v4400 = vmul.f32 %v4321, %v4365
    %v4401 = vmul.f32 %v4321, %v4367
    %v4402 = vmul.f32 %v4321, %v4369
    %v4403 = vmul.f32 %v4321, %v4371
    %4420 = vrot.lane.b32.xlu0 %v4388, 96
    %v4421 = vpop.permute.xlu0 %4420
    %4422 = vrot.lane.b32.xlu0 %v4389, 96
    %v4423 = vpop.permute.xlu0 %4422
    %4424 = vrot.lane.b32.xlu0 %v4390, 96
    %v4425 = vpop.permute.xlu0 %4424
    %4426 = vrot.lane.b32.xlu0 %v4391, 96
    %v4427 = vpop.permute.xlu0 %4426
    %4428 = vrot.lane.b32.xlu0 %v4392, 96
    %v4429 = vpop.permute.xlu0 %4428
    %4430 = vrot.lane.b32.xlu0 %v4393, 96
    %v4431 = vpop.permute.xlu0 %4430
    %4432 = vrot.lane.b32.xlu0 %v4394, 96
    %v4433 = vpop.permute.xlu0 %4432
    %4434 = vrot.lane.b32.xlu0 %v4395, 96
    %v4435 = vpop.permute.xlu0 %4434
    %4436 = vrot.lane.b32.xlu0 %v4396, 96
    %v4437 = vpop.permute.xlu0 %4436
    %4438 = vrot.lane.b32.xlu0 %v4397, 96
    %v4439 = vpop.permute.xlu0 %4438
    %4440 = vrot.lane.b32.xlu0 %v4398, 96
    %v4441 = vpop.permute.xlu0 %4440
    %4442 = vrot.lane.b32.xlu0 %v4399, 96
    %v4443 = vpop.permute.xlu0 %4442
    %4444 = vrot.lane.b32.xlu0 %v4400, 96
    %v4445 = vpop.permute.xlu0 %4444
    %4446 = vrot.lane.b32.xlu0 %v4401, 96
    %v4447 = vpop.permute.xlu0 %4446
    %4448 = vrot.lane.b32.xlu0 %v4402, 96
    %v4449 = vpop.permute.xlu0 %4448
    %4450 = vrot.lane.b32.xlu0 %v4403, 96
    %v4451 = vpop.permute.xlu0 %4450
    %v4468 = vadd.f32 %v3566, %v4421
    %v4469 = vadd.f32 %v3567, %v4423
    %v4470 = vadd.f32 %v3568, %v4425
    %v4471 = vadd.f32 %v3569, %v4427
    %v4472 = vadd.f32 %v3570, %v4429
    %v4473 = vadd.f32 %v3571, %v4431
    %v4474 = vadd.f32 %v3572, %v4433
    %v4475 = vadd.f32 %v3573, %v4435
    %v4476 = vadd.f32 %v3574, %v4437
    %v4477 = vadd.f32 %v3575, %v4439
    %v4478 = vadd.f32 %v3576, %v4441
    %v4479 = vadd.f32 %v3577, %v4443
    %v4480 = vadd.f32 %v3578, %v4445
    %v4481 = vadd.f32 %v3579, %v4447
    %v4482 = vadd.f32 %v3580, %v4449
    %v4483 = vadd.f32 %v3581, %v4451
    %v4484 = vpack.c.bf16 %v3269, %v3260
    %v4485 = vld [vmem:[%s55] sm:$0xf]
    %v4486 = vld [vmem:[%s55 + $0x4] sm:$0xf]
    %v4487 = vld [vmem:[%s55 + $0x8] sm:$0xf]
    %v4488 = vld [vmem:[%s55 + $0xc] sm:$0xf]
    %v4489 = vld [vmem:[%s57] sm:$0x1]
    %v4491 = vlaneseq
    %v4492 = vshrl.u32 %v4491, 7
    %v4493 = vsub.s32 0, %v4492
    %v4494 = vrot.slane %v4489, %v4493
    %v4500 = vunpack.c.l.b16 %v4485
    %v4501 = vunpack.c.l.b16 %v4486
    %v4502 = vunpack.c.l.b16 %v4487
    %v4503 = vunpack.c.l.b16 %v4488
    %v4504 = vpack.c.b16 %v4501, %v4500
    %v4505 = vpack.c.b16 %v4503, %v4502
    %v4509 = vsel %vm588, %v4484, 0
    %4511 = vmatprep.subr.bf16.mxu0 0
    %4512 = vmatpush1.bf16.msra.mxu0 %v4504
    %4513 = vmatprep.subr.bf16.mxu0 0
    %4514 = vmatpush1.bf16.msra.mxu0 %v4505
    %4515 = vmatprep.subr.bf16.mxu0 0
    %4516 = vmatpush1.bf16.msra.mxu0 0
    %4517 = vmatprep.subr.bf16.mxu0 0
    %4518 = vmatpush1.bf16.msra.mxu0 0
    %4519 = vmatprep.subr.bf16.mxu0 0
    %4520 = vmatpush1.bf16.msra.mxu0 0
    %4521 = vmatprep.subr.bf16.mxu0 0
    %4522 = vmatpush1.bf16.msra.mxu0 0
    %4523 = vmatprep.subr.bf16.mxu0 0
    %4524 = vmatpush1.bf16.msra.mxu0 0
    %4525 = vmatprep.subr.bf16.mxu0 0
    %4526 = vmatpush1.bf16.msra.mxu0 0
    %4527 = vmatprep.subr.bf16.mxu0 0
    %4528 = vmatpush1.bf16.msra.mxu0 0
    %4529 = vmatprep.subr.bf16.mxu0 0
    %4530 = vmatpush1.bf16.msra.mxu0 0
    %4531 = vmatprep.subr.bf16.mxu0 0
    %4532 = vmatpush1.bf16.msra.mxu0 0
    %4533 = vmatprep.subr.bf16.mxu0 0
    %4534 = vmatpush1.bf16.msra.mxu0 0
    %4535 = vmatprep.subr.bf16.mxu0 0
    %4536 = vmatpush1.bf16.msra.mxu0 0
    %4537 = vmatprep.subr.bf16.mxu0 0
    %4538 = vmatpush1.bf16.msra.mxu0 0
    %4539 = vmatprep.subr.bf16.mxu0 0
    %4540 = vmatpush1.bf16.msra.mxu0 0
    %4541 = vmatprep.subr.bf16.mxu0 0
    %4542 = vmatpush1.bf16.msra.mxu0 0
    %4543 = vmatprep.mubr.bf16.mxu0 0
    %4544 = vmatmul.mubr.bf16.gmra.mrb[0].mxu0 %v4509
    %v4545 = vpop.f32.mrb[0].mxu0
    %v4546 = vadd.f32 %v4494, %v4545
    %v4547 = vpop.f32.mrb[0].mxu0
    %v4548 = vpop.f32.mrb[0].mxu0
    %v4549 = vadd.f32 %v4494, %v4548
    %v4550 = vpop.f32.mrb[0].mxu0
    %4551 = vdwg.mxu0
    %4554 = vrot.lane.b32.xlu0 %v4546, 64
    %v4555 = vpop.permute.xlu0 %4554
    %4556 = vrot.lane.b32.xlu0 %v4549, 64
    %v4557 = vpop.permute.xlu0 %4556
    %v4560 = vmul.f32 %v1615, %v4555
    %v4561 = vmul.f32 %v1619, %v4557
    %4564 = vrot.lane.b32.xlu0 %v4560, 64
    %v4565 = vpop.permute.xlu0 %4564
    %4566 = vrot.lane.b32.xlu0 %v4561, 64
    %v4567 = vpop.permute.xlu0 %4566
    %v4570 = vadd.f32 %v1032, %v4565
    %v4571 = vadd.f32 %v1035, %v4567
    %v4572 = vsel %vm588, %v4570, 0.0
    %4573 = vadd.xlane.f32.xlu0 %v4572
    %v4574 = vpop.xlane.xlu0 %4573
    %v4575 = vsel %vm588, %v4571, 0.0
    %4576 = vadd.xlane.f32.xlu0 %v4575
    %v4577 = vpop.xlane.xlu0 %4576
    %v4578 = vmul.f32 %v4574, %v1295
    %v4579 = vmul.f32 %v4577, %v1295
    %v4580 = vsub.f32 %v4570, %v4578
    %v4581 = vsub.f32 %v4571, %v4579
    %v4582 = vmul.f32 %v4580, %v4580
    %v4583 = vmul.f32 %v4581, %v4581
    %v4584 = vsel %vm588, %v4582, 0.0
    %4585 = vadd.xlane.f32.xlu0 %v4584
    %v4586 = vpop.xlane.xlu0 %4585
    %v4587 = vsel %vm588, %v4583, 0.0
    %4588 = vadd.xlane.f32.xlu0 %v4587
    %v4589 = vpop.xlane.xlu0 %4588
    %v4590 = vmul.f32 %v4586, %v1295
    %v4591 = vmul.f32 %v4589, %v1295
    %v4592 = vadd.f32 %v4590, 1e-06
    %v4593 = vadd.f32 %v4591, 1e-06
    %v4594 = vrsqrt.pop %v4592
    %v4595 = vrsqrt.pop %v4593
    %v4596 = vmul.f32 %v4580, %v4594
    %v4597 = vmul.f32 %v4581, %v4595
    %v4598 = vadd.f32 %v1556, 1.0
    %v4599 = vadd.f32 %v1563, 1.0
    %v4602 = vlaneseq
    %v4603 = vshrl.u32 %v4602, 7
    %v4604 = vsub.s32 0, %v4603
    %v4605 = vrot.slane %v4598, %v4604
    %v4606 = vlaneseq
    %v4607 = vshrl.u32 %v4606, 7
    %v4608 = vsub.s32 0, %v4607
    %v4609 = vrot.slane %v4599, %v4608
    %v4612 = vmul.f32 %v4596, %v4605
    %v4613 = vmul.f32 %v4597, %v4609
    %4614 = vrot.lane.b32.xlu0 %v1615, 32
    %v4615 = vpop.permute.xlu0 %4614
    %4616 = vrot.lane.b32.xlu0 %v1619, 32
    %v4617 = vpop.permute.xlu0 %4616
    %v4620 = vadd.f32 %v4612, %v4615
    %v4621 = vadd.f32 %v4613, %v4617
    %v4622 = vpack.c.bf16 %v4621, %v4620
    %v4623 = vld [vmem:[%s67] sm:$0xf]
    %v4624 = vld [vmem:[%s67 + $0x4] sm:$0xf]
    %v4625 = vld [vmem:[%s67 + $0x8] sm:$0xf]
    %v4626 = vld [vmem:[%s67 + $0xc] sm:$0xf]
    %v4627 = vld [vmem:[#allocation6] sm:$0x1]
    %v4629 = vlaneseq
    %v4630 = vshrl.u32 %v4629, 7
    %v4631 = vsub.s32 0, %v4630
    %v4632 = vrot.slane %v4627, %v4631
    %v4638 = vunpack.c.l.b16 %v4623
    %v4639 = vunpack.c.l.b16 %v4624
    %v4640 = vunpack.c.l.b16 %v4625
    %v4641 = vunpack.c.l.b16 %v4626
    %v4642 = vpack.c.b16 %v4639, %v4638
    %v4643 = vpack.c.b16 %v4641, %v4640
    %v4647 = vsel %vm588, %v4622, 0
    %4649 = vmatprep.subr.bf16.mxu0 0
    %4650 = vmatpush1.bf16.msra.mxu0 %v4642
    %4651 = vmatprep.subr.bf16.mxu0 0
    %4652 = vmatpush1.bf16.msra.mxu0 %v4643
    %4653 = vmatprep.subr.bf16.mxu0 0
    %4654 = vmatpush1.bf16.msra.mxu0 0
    %4655 = vmatprep.subr.bf16.mxu0 0
    %4656 = vmatpush1.bf16.msra.mxu0 0
    %4657 = vmatprep.subr.bf16.mxu0 0
    %4658 = vmatpush1.bf16.msra.mxu0 0
    %4659 = vmatprep.subr.bf16.mxu0 0
    %4660 = vmatpush1.bf16.msra.mxu0 0
    %4661 = vmatprep.subr.bf16.mxu0 0
    %4662 = vmatpush1.bf16.msra.mxu0 0
    %4663 = vmatprep.subr.bf16.mxu0 0
    %4664 = vmatpush1.bf16.msra.mxu0 0
    %4665 = vmatprep.subr.bf16.mxu0 0
    %4666 = vmatpush1.bf16.msra.mxu0 0
    %4667 = vmatprep.subr.bf16.mxu0 0
    %4668 = vmatpush1.bf16.msra.mxu0 0
    %4669 = vmatprep.subr.bf16.mxu0 0
    %4670 = vmatpush1.bf16.msra.mxu0 0
    %4671 = vmatprep.subr.bf16.mxu0 0
    %4672 = vmatpush1.bf16.msra.mxu0 0
    %4673 = vmatprep.subr.bf16.mxu0 0
    %4674 = vmatpush1.bf16.msra.mxu0 0
    %4675 = vmatprep.subr.bf16.mxu0 0
    %4676 = vmatpush1.bf16.msra.mxu0 0
    %4677 = vmatprep.subr.bf16.mxu0 0
    %4678 = vmatpush1.bf16.msra.mxu0 0
    %4679 = vmatprep.subr.bf16.mxu0 0
    %4680 = vmatpush1.bf16.msra.mxu0 0
    %4681 = vmatprep.mubr.bf16.mxu0 0
    %4682 = vmatmul.mubr.bf16.gmra.mrb[0].mxu0 %v4647
    %v4683 = vpop.f32.mrb[0].mxu0
    %v4684 = vadd.f32 %v4632, %v4683
    %v4685 = vpop.f32.mrb[0].mxu0
    %v4686 = vpop.f32.mrb[0].mxu0
    %v4687 = vadd.f32 %v4632, %v4686
    %v4688 = vpop.f32.mrb[0].mxu0
    %4689 = vdwg.mxu0
    %v4690 = vmul.f32 %v4684, 0.5
    %v4691 = vmul.f32 %v4687, 0.5
    %v4692 = vmul.f32 %v4684, 0.044715
    %v4693 = vmul.f32 %v4687, 0.044715
    %v4694 = vmul.f32 %v4692, %v4684
    %v4695 = vmul.f32 %v4693, %v4687
    %v4696 = vmul.f32 %v4694, %v4684
    %v4697 = vmul.f32 %v4695, %v4687
    %v4698 = vadd.f32 %v4684, %v4696
    %v4699 = vadd.f32 %v4687, %v4697
    %v4700 = vmul.f32 %v4698, 0.7978846
    %v4701 = vmul.f32 %v4699, 0.7978846
    %v4702 = vtanh.pop %v4700
    %v4703 = vtanh.pop %v4701
    %v4704 = vadd.f32 %v4702, 1.0
    %v4705 = vadd.f32 %v4703, 1.0
    %v4706 = vmul.f32 %v4690, %v4704
    %v4707 = vmul.f32 %v4691, %v4705
    %v4708 = vpack.c.bf16 %v4707, %v4706
    %v4709 = vld [vmem:[%s71] sm:$0xf]
    %v4710 = vld [vmem:[%s71 + $0x4] sm:$0xf]
    %v4711 = vld [vmem:[%s71 + $0x8] sm:$0xf]
    %v4712 = vld [vmem:[%s71 + $0xc] sm:$0xf]
    %v4713 = vld [vmem:[%s71 + $0x10] sm:$0xf]
    %v4714 = vld [vmem:[%s71 + $0x14] sm:$0xf]
    %v4715 = vld [vmem:[%s71 + $0x18] sm:$0xf]
    %v4716 = vld [vmem:[%s71 + $0x1c] sm:$0xf]
    %v4717 = vld [vmem:[%s71 + $0x20] sm:$0xf]
    %v4718 = vld [vmem:[%s71 + $0x24] sm:$0xf]
    %v4719 = vld [vmem:[%s71 + $0x28] sm:$0xf]
    %v4720 = vld [vmem:[%s71 + $0x2c] sm:$0xf]
    %v4721 = vld [vmem:[%s71 + $0x30] sm:$0xf]
    %v4722 = vld [vmem:[%s71 + $0x34] sm:$0xf]
    %v4723 = vld [vmem:[%s71 + $0x38] sm:$0xf]
    %v4724 = vld [vmem:[%s71 + $0x3c] sm:$0xf]
    %v4725 = vld [vmem:[#allocation7] sm:$0x1]
    %v4727 = vlaneseq
    %v4728 = vshrl.u32 %v4727, 7
    %v4729 = vsub.s32 0, %v4728
    %v4730 = vrot.slane %v4725, %v4729
    %v4748 = vunpack.c.l.b16 %v4709
    %v4749 = vunpack.c.l.b16 %v4710
    %v4750 = vunpack.c.l.b16 %v4711
    %v4751 = vunpack.c.l.b16 %v4712
    %v4752 = vunpack.c.l.b16 %v4713
    %v4753 = vunpack.c.l.b16 %v4714
    %v4754 = vunpack.c.l.b16 %v4715
    %v4755 = vunpack.c.l.b16 %v4716
    %v4756 = vunpack.c.l.b16 %v4717
    %v4757 = vunpack.c.l.b16 %v4718
    %v4758 = vunpack.c.l.b16 %v4719
    %v4759 = vunpack.c.l.b16 %v4720
    %v4760 = vunpack.c.l.b16 %v4721
    %v4761 = vunpack.c.l.b16 %v4722
    %v4762 = vunpack.c.l.b16 %v4723
    %v4763 = vunpack.c.l.b16 %v4724
    %v4764 = vpack.c.b16 %v4749, %v4748
    %v4765 = vpack.c.b16 %v4751, %v4750
    %v4766 = vpack.c.b16 %v4753, %v4752
    %v4767 = vpack.c.b16 %v4755, %v4754
    %v4768 = vpack.c.b16 %v4757, %v4756
    %v4769 = vpack.c.b16 %v4759, %v4758
    %v4770 = vpack.c.b16 %v4761, %v4760
    %v4771 = vpack.c.b16 %v4763, %v4762
    %4780 = vmatprep.subr.bf16.mxu0 0
    %4781 = vmatpush1.bf16.msra.mxu0 %v4764
    %4782 = vmatprep.subr.bf16.mxu0 0
    %4783 = vmatpush1.bf16.msra.mxu0 %v4765
    %4784 = vmatprep.subr.bf16.mxu0 0
    %4785 = vmatpush1.bf16.msra.mxu0 %v4766
    %4786 = vmatprep.subr.bf16.mxu0 0
    %4787 = vmatpush1.bf16.msra.mxu0 %v4767
    %4788 = vmatprep.subr.bf16.mxu0 0
    %4789 = vmatpush1.bf16.msra.mxu0 %v4768
    %4790 = vmatprep.subr.bf16.mxu0 0
    %4791 = vmatpush1.bf16.msra.mxu0 %v4769
    %4792 = vmatprep.subr.bf16.mxu0 0
    %4793 = vmatpush1.bf16.msra.mxu0 %v4770
    %4794 = vmatprep.subr.bf16.mxu0 0
    %4795 = vmatpush1.bf16.msra.mxu0 %v4771
    %4796 = vmatprep.subr.bf16.mxu0 0
    %4797 = vmatpush1.bf16.msra.mxu0 0
    %4798 = vmatprep.subr.bf16.mxu0 0
    %4799 = vmatpush1.bf16.msra.mxu0 0
    %4800 = vmatprep.subr.bf16.mxu0 0
    %4801 = vmatpush1.bf16.msra.mxu0 0
    %4802 = vmatprep.subr.bf16.mxu0 0
    %4803 = vmatpush1.bf16.msra.mxu0 0
    %4804 = vmatprep.subr.bf16.mxu0 0
    %4805 = vmatpush1.bf16.msra.mxu0 0
    %4806 = vmatprep.subr.bf16.mxu0 0
    %4807 = vmatpush1.bf16.msra.mxu0 0
    %4808 = vmatprep.subr.bf16.mxu0 0
    %4809 = vmatpush1.bf16.msra.mxu0 0
    %4810 = vmatprep.subr.bf16.mxu0 0
    %4811 = vmatpush1.bf16.msra.mxu0 0
    %4812 = vmatprep.mubr.bf16.mxu0 0
    %4813 = vmatmul.mubr.bf16.gmra.mrb[0].mxu0 %v4708
    %v4814 = vpop.f32.mrb[0].mxu0
    %v4815 = vadd.f32 %v4730, %v4814
    %v4816 = vpop.f32.mrb[0].mxu0
    %v4817 = vpop.f32.mrb[0].mxu0
    %v4818 = vadd.f32 %v4730, %v4817
    %v4819 = vpop.f32.mrb[0].mxu0
    %4820 = vdwg.mxu0
    %v4821 = vlaneseq
    %v4822 = vshrl.u32 %v4821, 7
    %v4823 = vsub.s32 0, %v4822
    %v4824 = vrot.slane %v1556, %v4823
    %v4825 = vlaneseq
    %v4826 = vshrl.u32 %v4825, 7
    %v4827 = vsub.s32 0, %v4826
    %v4828 = vrot.slane %v1563, %v4827
    %4833 = vrot.lane.b32.xlu0 %v4815, 32
    %v4834 = vpop.permute.xlu0 %4833
    %4835 = vrot.lane.b32.xlu0 %v4818, 32
    %v4836 = vpop.permute.xlu0 %4835
    %v4839 = vmul.f32 %v4824, %v4834
    %v4840 = vmul.f32 %v4828, %v4836
    %4843 = vrot.lane.b32.xlu0 %v4839, 96
    %v4844 = vpop.permute.xlu0 %4843
    %4845 = vrot.lane.b32.xlu0 %v4840, 96
    %v4846 = vpop.permute.xlu0 %4845
    %v4849 = vadd.f32 %v4570, %v4844
    %v4850 = vadd.f32 %v4571, %v4846
    %v4851 = vld [vmem:[%s75] sm:$0xff]
    %v4852 = vld [vmem:[%s75 + $0x8] sm:$0xff]
    %v4853 = vld [vmem:[%s75 + $0x10] sm:$0xff]
    %v4854 = vld [vmem:[%s75 + $0x18] sm:$0xff]
    %v4855 = vld [vmem:[%s77] sm:$0x3]
    %v4857 = vlaneseq
    %v4858 = vshrl.u32 %v4857, 7
    %v4859 = vsub.s32 0, %v4858
    %v4860 = vrot.slane %v4855, %v4859
    %v4861 = vlaneseq
    %v4862 = vshrl.u32 %v4861, 7
    %v4863 = vsub.s32 1, %v4862
    %v4864 = vrot.slane %v4855, %v4863
    %v4871 = vunpack.c.l.b16 %v4851
    %v4872 = vunpack.c.h.b16 %v4851
    %v4873 = vunpack.c.l.b16 %v4852
    %v4874 = vunpack.c.h.b16 %v4852
    %v4875 = vunpack.c.l.b16 %v4853
    %v4876 = vunpack.c.h.b16 %v4853
    %v4877 = vunpack.c.l.b16 %v4854
    %v4878 = vunpack.c.h.b16 %v4854
    %v4879 = vpack.c.b16 %v4873, %v4871
    %v4880 = vpack.c.b16 %v4874, %v4872
    %v4881 = vpack.c.b16 %v4877, %v4875
    %v4882 = vpack.c.b16 %v4878, %v4876
    %4887 = vmatprep.subr.bf16.mxu0 %v4880
    %4888 = vmatpush1.bf16.msra.mxu0 %v4879
    %4889 = vmatprep.subr.bf16.mxu0 %v4882
    %4890 = vmatpush1.bf16.msra.mxu0 %v4881
    %4891 = vmatprep.subr.bf16.mxu0 0
    %4892 = vmatpush1.bf16.msra.mxu0 0
    %4893 = vmatprep.subr.bf16.mxu0 0
    %4894 = vmatpush1.bf16.msra.mxu0 0
    %4895 = vmatprep.subr.bf16.mxu0 0
    %4896 = vmatpush1.bf16.msra.mxu0 0
    %4897 = vmatprep.subr.bf16.mxu0 0
    %4898 = vmatpush1.bf16.msra.mxu0 0
    %4899 = vmatprep.subr.bf16.mxu0 0
    %4900 = vmatpush1.bf16.msra.mxu0 0
    %4901 = vmatprep.subr.bf16.mxu0 0
    %4902 = vmatpush1.bf16.msra.mxu0 0
    %4903 = vmatprep.subr.bf16.mxu0 0
    %4904 = vmatpush1.bf16.msra.mxu0 0
    %4905 = vmatprep.subr.bf16.mxu0 0
    %4906 = vmatpush1.bf16.msra.mxu0 0
    %4907 = vmatprep.subr.bf16.mxu0 0
    %4908 = vmatpush1.bf16.msra.mxu0 0
    %4909 = vmatprep.subr.bf16.mxu0 0
    %4910 = vmatpush1.bf16.msra.mxu0 0
    %4911 = vmatprep.subr.bf16.mxu0 0
    %4912 = vmatpush1.bf16.msra.mxu0 0
    %4913 = vmatprep.subr.bf16.mxu0 0
    %4914 = vmatpush1.bf16.msra.mxu0 0
    %4915 = vmatprep.subr.bf16.mxu0 0
    %4916 = vmatpush1.bf16.msra.mxu0 0
    %4917 = vmatprep.subr.bf16.mxu0 0
    %4918 = vmatpush1.bf16.msra.mxu0 0
    %4919 = vmatprep.mubr.bf16.mxu0 0
    %4920 = vmatmul.mubr.bf16.gmra.mrb[0].mxu0 %v1077
    %v4921 = vpop.f32.mrb[0].mxu0
    %v4922 = vadd.f32 %v4860, %v4921
    %v4923 = vpop.f32.mrb[0].mxu0
    %v4924 = vadd.f32 %v4864, %v4923
    %v4925 = vpop.f32.mrb[0].mxu0
    %v4926 = vpop.f32.mrb[0].mxu0
    %4927 = vdwg.mxu0
    %v4928 = vld [vmem:[%s79] sm:$0xf]
    %v4929 = vld [vmem:[%s79 + $0x4] sm:$0xf]
    %v4930 = vld [vmem:[%s79 + $0x8] sm:$0xf]
    %v4931 = vld [vmem:[%s79 + $0xc] sm:$0xf]
    %v4932 = vld [vmem:[#allocation9] sm:$0x1]
    %v4934 = vlaneseq
    %v4935 = vshrl.u32 %v4934, 7
    %v4936 = vsub.s32 0, %v4935
    %v4937 = vrot.slane %v4932, %v4936
    %v4943 = vunpack.c.l.b16 %v4928
    %v4944 = vunpack.c.l.b16 %v4929
    %v4945 = vunpack.c.l.b16 %v4930
    %v4946 = vunpack.c.l.b16 %v4931
    %v4947 = vpack.c.b16 %v4944, %v4943
    %v4948 = vpack.c.b16 %v4946, %v4945
    %4951 = vmatprep.subr.bf16.mxu0 0
    %4952 = vmatpush1.bf16.msra.mxu0 %v4947
    %4953 = vmatprep.subr.bf16.mxu0 0
    %4954 = vmatpush1.bf16.msra.mxu0 %v4948
    %4955 = vmatprep.subr.bf16.mxu0 0
    %4956 = vmatpush1.bf16.msra.mxu0 0
    %4957 = vmatprep.subr.bf16.mxu0 0
    %4958 = vmatpush1.bf16.msra.mxu0 0
    %4959 = vmatprep.subr.bf16.mxu0 0
    %4960 = vmatpush1.bf16.msra.mxu0 0
    %4961 = vmatprep.subr.bf16.mxu0 0
    %4962 = vmatpush1.bf16.msra.mxu0 0
    %4963 = vmatprep.subr.bf16.mxu0 0
    %4964 = vmatpush1.bf16.msra.mxu0 0
    %4965 = vmatprep.subr.bf16.mxu0 0
    %4966 = vmatpush1.bf16.msra.mxu0 0
    %4967 = vmatprep.subr.bf16.mxu0 0
    %4968 = vmatpush1.bf16.msra.mxu0 0
    %4969 = vmatprep.subr.bf16.mxu0 0
    %4970 = vmatpush1.bf16.msra.mxu0 0
    %4971 = vmatprep.subr.bf16.mxu0 0
    %4972 = vmatpush1.bf16.msra.mxu0 0
    %4973 = vmatprep.subr.bf16.mxu0 0
    %4974 = vmatpush1.bf16.msra.mxu0 0
    %4975 = vmatprep.subr.bf16.mxu0 0
    %4976 = vmatpush1.bf16.msra.mxu0 0
    %4977 = vmatprep.subr.bf16.mxu0 0
    %4978 = vmatpush1.bf16.msra.mxu0 0
    %4979 = vmatprep.subr.bf16.mxu0 0
    %4980 = vmatpush1.bf16.msra.mxu0 0
    %4981 = vmatprep.subr.bf16.mxu0 0
    %4982 = vmatpush1.bf16.msra.mxu0 0
    %4983 = vmatprep.mubr.bf16.mxu0 0
    %4984 = vmatmul.mubr.bf16.gmra.mrb[0].mxu0 %v1077
    %v4985 = vpop.f32.mrb[0].mxu0
    %v4986 = vadd.f32 %v4937, %v4985
    %v4987 = vpop.f32.mrb[0].mxu0
    %v4988 = vpop.f32.mrb[0].mxu0
    %v4989 = vpop.f32.mrb[0].mxu0
    %4990 = vdwg.mxu0
    %v4993 = vunpack.c.l.s4 1966171168
    %v4994 = vunpack.c.0.s8 %v4993
    %v4995 = vlaneseq
    %v4996 = vshrl.u32 %v4995, 7
    %v4997 = vsub.s32 %v4994, %v4996
    %v4998 = vrot.slane %v4922, %v4997
    %v4999 = vcombine.high %v4998, %v4998
    %v5001 = vunpack.c.l.s4 1966171168
    %v5002 = vunpack.c.0.s8 %v5001
    %v5003 = vlaneseq
    %v5004 = vshrl.u32 %v5003, 7
    %v5005 = vsub.s32 %v5002, %v5004
    %v5006 = vrot.slane %v4998, %v5005
    %v5008 = vunpack.c.l.s4 1966171168
    %v5009 = vunpack.c.0.s8 %v5008
    %v5010 = vlaneseq
    %v5011 = vshrl.u32 %v5010, 7
    %v5012 = vsub.s32 %v5009, %v5011
    %v5013 = vrot.slane %v4999, %v5012
    %v5018 = vunpack.c.l.s4 1966171168
    %v5019 = vunpack.c.0.s8 %v5018
    %v5020 = vlaneseq
    %v5021 = vshrl.u32 %v5020, 7
    %v5022 = vsub.s32 %v5019, %v5021
    %v5023 = vrot.slane %v4924, %v5022
    %v5024 = vcombine.high %v5023, %v5023
    %v5026 = vunpack.c.l.s4 1966171168
    %v5027 = vunpack.c.0.s8 %v5026
    %v5028 = vlaneseq
    %v5029 = vshrl.u32 %v5028, 7
    %v5030 = vsub.s32 %v5027, %v5029
    %v5031 = vrot.slane %v5023, %v5030
    %v5033 = vunpack.c.l.s4 1966171168
    %v5034 = vunpack.c.0.s8 %v5033
    %v5035 = vlaneseq
    %v5036 = vshrl.u32 %v5035, 7
    %v5037 = vsub.s32 %v5034, %v5036
    %v5038 = vrot.slane %v5024, %v5037
    %v5041 = vsel %vm588, %v4468, 0.0
    %5042 = vadd.xlane.f32.xlu0 %v5041
    %v5043 = vpop.xlane.xlu0 %5042
    %v5044 = vsel %vm588, %v4469, 0.0
    %5045 = vadd.xlane.f32.xlu0 %v5044
    %v5046 = vpop.xlane.xlu0 %5045
    %v5047 = vsel %vm588, %v4470, 0.0
    %5048 = vadd.xlane.f32.xlu0 %v5047
    %v5049 = vpop.xlane.xlu0 %5048
    %v5050 = vsel %vm588, %v4471, 0.0
    %5051 = vadd.xlane.f32.xlu0 %v5050
    %v5052 = vpop.xlane.xlu0 %5051
    %v5053 = vsel %vm588, %v4472, 0.0
    %5054 = vadd.xlane.f32.xlu0 %v5053
    %v5055 = vpop.xlane.xlu0 %5054
    %v5056 = vsel %vm588, %v4473, 0.0
    %5057 = vadd.xlane.f32.xlu0 %v5056
    %v5058 = vpop.xlane.xlu0 %5057
    %v5059 = vsel %vm588, %v4474, 0.0
    %5060 = vadd.xlane.f32.xlu0 %v5059
    %v5061 = vpop.xlane.xlu0 %5060
    %v5062 = vsel %vm588, %v4475, 0.0
    %5063 = vadd.xlane.f32.xlu0 %v5062
    %v5064 = vpop.xlane.xlu0 %5063
    %v5065 = vsel %vm588, %v4476, 0.0
    %5066 = vadd.xlane.f32.xlu0 %v5065
    %v5067 = vpop.xlane.xlu0 %5066
    %v5068 = vsel %vm588, %v4477, 0.0
    %5069 = vadd.xlane.f32.xlu0 %v5068
    %v5070 = vpop.xlane.xlu0 %5069
    %v5071 = vsel %vm588, %v4478, 0.0
    %5072 = vadd.xlane.f32.xlu0 %v5071
    %v5073 = vpop.xlane.xlu0 %5072
    %v5074 = vsel %vm588, %v4479, 0.0
    %5075 = vadd.xlane.f32.xlu0 %v5074
    %v5076 = vpop.xlane.xlu0 %5075
    %v5077 = vsel %vm588, %v4480, 0.0
    %5078 = vadd.xlane.f32.xlu0 %v5077
    %v5079 = vpop.xlane.xlu0 %5078
    %v5080 = vsel %vm588, %v4481, 0.0
    %5081 = vadd.xlane.f32.xlu0 %v5080
    %v5082 = vpop.xlane.xlu0 %5081
    %v5083 = vsel %vm588, %v4482, 0.0
    %5084 = vadd.xlane.f32.xlu0 %v5083
    %v5085 = vpop.xlane.xlu0 %5084
    %v5086 = vsel %vm588, %v4483, 0.0
    %5087 = vadd.xlane.f32.xlu0 %v5086
    %v5088 = vpop.xlane.xlu0 %5087
    %v5089 = vmul.f32 %v5043, %v1295
    %v5090 = vmul.f32 %v5046, %v1295
    %v5091 = vmul.f32 %v5049, %v1295
    %v5092 = vmul.f32 %v5052, %v1295
    %v5093 = vmul.f32 %v5055, %v1295
    %v5094 = vmul.f32 %v5058, %v1295
    %v5095 = vmul.f32 %v5061, %v1295
    %v5096 = vmul.f32 %v5064, %v1295
    %v5097 = vmul.f32 %v5067, %v1295
    %v5098 = vmul.f32 %v5070, %v1295
    %v5099 = vmul.f32 %v5073, %v1295
    %v5100 = vmul.f32 %v5076, %v1295
    %v5101 = vmul.f32 %v5079, %v1295
    %v5102 = vmul.f32 %v5082, %v1295
    %v5103 = vmul.f32 %v5085, %v1295
    %v5104 = vmul.f32 %v5088, %v1295
    %v5105 = vsub.f32 %v4468, %v5089
    %v5106 = vsub.f32 %v4469, %v5090
    %v5107 = vsub.f32 %v4470, %v5091
    %v5108 = vsub.f32 %v4471, %v5092
    %v5109 = vsub.f32 %v4472, %v5093
    %v5110 = vsub.f32 %v4473, %v5094
    %v5111 = vsub.f32 %v4474, %v5095
    %v5112 = vsub.f32 %v4475, %v5096
    %v5113 = vsub.f32 %v4476, %v5097
    %v5114 = vsub.f32 %v4477, %v5098
    %v5115 = vsub.f32 %v4478, %v5099
    %v5116 = vsub.f32 %v4479, %v5100
    %v5117 = vsub.f32 %v4480, %v5101
    %v5118 = vsub.f32 %v4481, %v5102
    %v5119 = vsub.f32 %v4482, %v5103
    %v5120 = vsub.f32 %v4483, %v5104
    %v5121 = vmul.f32 %v5105, %v5105
    %v5122 = vmul.f32 %v5106, %v5106
    %v5123 = vmul.f32 %v5107, %v5107
    %v5124 = vmul.f32 %v5108, %v5108
    %v5125 = vmul.f32 %v5109, %v5109
    %v5126 = vmul.f32 %v5110, %v5110
    %v5127 = vmul.f32 %v5111, %v5111
    %v5128 = vmul.f32 %v5112, %v5112
    %v5129 = vmul.f32 %v5113, %v5113
    %v5130 = vmul.f32 %v5114, %v5114
    %v5131 = vmul.f32 %v5115, %v5115
    %v5132 = vmul.f32 %v5116, %v5116
    %v5133 = vmul.f32 %v5117, %v5117
    %v5134 = vmul.f32 %v5118, %v5118
    %v5135 = vmul.f32 %v5119, %v5119
    %v5136 = vmul.f32 %v5120, %v5120
    %v5137 = vsel %vm588, %v5121, 0.0
    %5138 = vadd.xlane.f32.xlu0 %v5137
    %v5139 = vpop.xlane.xlu0 %5138
    %v5140 = vsel %vm588, %v5122, 0.0
    %5141 = vadd.xlane.f32.xlu0 %v5140
    %v5142 = vpop.xlane.xlu0 %5141
    %v5143 = vsel %vm588, %v5123, 0.0
    %5144 = vadd.xlane.f32.xlu0 %v5143
    %v5145 = vpop.xlane.xlu0 %5144
    %v5146 = vsel %vm588, %v5124, 0.0
    %5147 = vadd.xlane.f32.xlu0 %v5146
    %v5148 = vpop.xlane.xlu0 %5147
    %v5149 = vsel %vm588, %v5125, 0.0
    %5150 = vadd.xlane.f32.xlu0 %v5149
    %v5151 = vpop.xlane.xlu0 %5150
    %v5152 = vsel %vm588, %v5126, 0.0
    %5153 = vadd.xlane.f32.xlu0 %v5152
    %v5154 = vpop.xlane.xlu0 %5153
    %v5155 = vsel %vm588, %v5127, 0.0
    %5156 = vadd.xlane.f32.xlu0 %v5155
    %v5157 = vpop.xlane.xlu0 %5156
    %v5158 = vsel %vm588, %v5128, 0.0
    %5159 = vadd.xlane.f32.xlu0 %v5158
    %v5160 = vpop.xlane.xlu0 %5159
    %v5161 = vsel %vm588, %v5129, 0.0
    %5162 = vadd.xlane.f32.xlu0 %v5161
    %v5163 = vpop.xlane.xlu0 %5162
    %v5164 = vsel %vm588, %v5130, 0.0
    %5165 = vadd.xlane.f32.xlu0 %v5164
    %v5166 = vpop.xlane.xlu0 %5165
    %v5167 = vsel %vm588, %v5131, 0.0
    %5168 = vadd.xlane.f32.xlu0 %v5167
    %v5169 = vpop.xlane.xlu0 %5168
    %v5170 = vsel %vm588, %v5132, 0.0
    %5171 = vadd.xlane.f32.xlu0 %v5170
    %v5172 = vpop.xlane.xlu0 %5171
    %v5173 = vsel %vm588, %v5133, 0.0
    %5174 = vadd.xlane.f32.xlu0 %v5173
    %v5175 = vpop.xlane.xlu0 %5174
    %v5176 = vsel %vm588, %v5134, 0.0
    %5177 = vadd.xlane.f32.xlu0 %v5176
    %v5178 = vpop.xlane.xlu0 %5177
    %v5179 = vsel %vm588, %v5135, 0.0
    %5180 = vadd.xlane.f32.xlu0 %v5179
    %v5181 = vpop.xlane.xlu0 %5180
    %v5182 = vsel %vm588, %v5136, 0.0
    %5183 = vadd.xlane.f32.xlu0 %v5182
    %v5184 = vpop.xlane.xlu0 %5183
    %v5185 = vmul.f32 %v5139, %v1295
    %v5186 = vmul.f32 %v5142, %v1295
    %v5187 = vmul.f32 %v5145, %v1295
    %v5188 = vmul.f32 %v5148, %v1295
    %v5189 = vmul.f32 %v5151, %v1295
    %v5190 = vmul.f32 %v5154, %v1295
    %v5191 = vmul.f32 %v5157, %v1295
    %v5192 = vmul.f32 %v5160, %v1295
    %v5193 = vmul.f32 %v5163, %v1295
    %v5194 = vmul.f32 %v5166, %v1295
    %v5195 = vmul.f32 %v5169, %v1295
    %v5196 = vmul.f32 %v5172, %v1295
    %v5197 = vmul.f32 %v5175, %v1295
    %v5198 = vmul.f32 %v5178, %v1295
    %v5199 = vmul.f32 %v5181, %v1295
    %v5200 = vmul.f32 %v5184, %v1295
    %v5201 = vadd.f32 %v5185, 1e-06
    %v5202 = vadd.f32 %v5186, 1e-06
    %v5203 = vadd.f32 %v5187, 1e-06
    %v5204 = vadd.f32 %v5188, 1e-06
    %v5205 = vadd.f32 %v5189, 1e-06
    %v5206 = vadd.f32 %v5190, 1e-06
    %v5207 = vadd.f32 %v5191, 1e-06
    %v5208 = vadd.f32 %v5192, 1e-06
    %v5209 = vadd.f32 %v5193, 1e-06
    %v5210 = vadd.f32 %v5194, 1e-06
    %v5211 = vadd.f32 %v5195, 1e-06
    %v5212 = vadd.f32 %v5196, 1e-06
    %v5213 = vadd.f32 %v5197, 1e-06
    %v5214 = vadd.f32 %v5198, 1e-06
    %v5215 = vadd.f32 %v5199, 1e-06
    %v5216 = vadd.f32 %v5200, 1e-06
    %v5217 = vrsqrt.pop %v5201
    %v5218 = vrsqrt.pop %v5202
    %v5219 = vrsqrt.pop %v5203
    %v5220 = vrsqrt.pop %v5204
    %v5221 = vrsqrt.pop %v5205
    %v5222 = vrsqrt.pop %v5206
    %v5223 = vrsqrt.pop %v5207
    %v5224 = vrsqrt.pop %v5208
    %v5225 = vrsqrt.pop %v5209
    %v5226 = vrsqrt.pop %v5210
    %v5227 = vrsqrt.pop %v5211
    %v5228 = vrsqrt.pop %v5212
    %v5229 = vrsqrt.pop %v5213
    %v5230 = vrsqrt.pop %v5214
    %v5231 = vrsqrt.pop %v5215
    %v5232 = vrsqrt.pop %v5216
    %v5233 = vmul.f32 %v5105, %v5217
    %v5234 = vmul.f32 %v5106, %v5218
    %v5235 = vmul.f32 %v5107, %v5219
    %v5236 = vmul.f32 %v5108, %v5220
    %v5237 = vmul.f32 %v5109, %v5221
    %v5238 = vmul.f32 %v5110, %v5222
    %v5239 = vmul.f32 %v5111, %v5223
    %v5240 = vmul.f32 %v5112, %v5224
    %v5241 = vmul.f32 %v5113, %v5225
    %v5242 = vmul.f32 %v5114, %v5226
    %v5243 = vmul.f32 %v5115, %v5227
    %v5244 = vmul.f32 %v5116, %v5228
    %v5245 = vmul.f32 %v5117, %v5229
    %v5246 = vmul.f32 %v5118, %v5230
    %v5247 = vmul.f32 %v5119, %v5231
    %v5248 = vmul.f32 %v5120, %v5232
    %v5249 = vadd.f32 %v5006, 1.0
    %v5250 = vadd.f32 %v5013, 1.0
    %v5253 = vlaneseq
    %v5254 = vshrl.u32 %v5253, 7
    %v5255 = vsub.s32 0, %v5254
    %v5256 = vrot.slane %v5249, %v5255
    %v5257 = vlaneseq
    %v5258 = vshrl.u32 %v5257, 7
    %v5259 = vsub.s32 0, %v5258
    %v5260 = vrot.slane %v5250, %v5259
    %5261 = vrot.lane.b32.xlu0 %v5256, 96
    %v5262 = vpop.permute.xlu0 %5261
    %5263 = vrot.lane.b32.xlu0 %v5260, 96
    %v5264 = vpop.permute.xlu0 %5263
    %v5267 = vmul.f32 %v5233, %v5262
    %v5268 = vmul.f32 %v5234, %v5262
    %v5269 = vmul.f32 %v5235, %v5262
    %v5270 = vmul.f32 %v5236, %v5262
    %v5271 = vmul.f32 %v5237, %v5262
    %v5272 = vmul.f32 %v5238, %v5262
    %v5273 = vmul.f32 %v5239, %v5262
    %v5274 = vmul.f32 %v5240, %v5262
    %v5275 = vmul.f32 %v5241, %v5264
    %v5276 = vmul.f32 %v5242, %v5264
    %v5277 = vmul.f32 %v5243, %v5264
    %v5278 = vmul.f32 %v5244, %v5264
    %v5279 = vmul.f32 %v5245, %v5264
    %v5280 = vmul.f32 %v5246, %v5264
    %v5281 = vmul.f32 %v5247, %v5264
    %v5282 = vmul.f32 %v5248, %v5264
    %v5283 = vlaneseq
    %v5284 = vshrl.u32 %v5283, 7
    %v5285 = vsub.s32 0, %v5284
    %v5286 = vrot.slane %v5006, %v5285
    %v5287 = vlaneseq
    %v5288 = vshrl.u32 %v5287, 7
    %v5289 = vsub.s32 0, %v5288
    %v5290 = vrot.slane %v5013, %v5289
    %v5293 = vadd.f32 %v5267, %v5286
    %v5294 = vadd.f32 %v5268, %v5286
    %v5295 = vadd.f32 %v5269, %v5286
    %v5296 = vadd.f32 %v5270, %v5286
    %v5297 = vadd.f32 %v5271, %v5286
    %v5298 = vadd.f32 %v5272, %v5286
    %v5299 = vadd.f32 %v5273, %v5286
    %v5300 = vadd.f32 %v5274, %v5286
    %v5301 = vadd.f32 %v5275, %v5290
    %v5302 = vadd.f32 %v5276, %v5290
    %v5303 = vadd.f32 %v5277, %v5290
    %v5304 = vadd.f32 %v5278, %v5290
    %v5305 = vadd.f32 %v5279, %v5290
    %v5306 = vadd.f32 %v5280, %v5290
    %v5307 = vadd.f32 %v5281, %v5290
    %v5308 = vadd.f32 %v5282, %v5290
    %v5311 = vunpack.c.l.s4 1966171168
    %v5312 = vunpack.c.0.s8 %v5311
    %v5313 = vlaneseq
    %v5314 = vshrl.u32 %v5313, 7
    %v5315 = vsub.s32 %v5312, %v5314
    %v5316 = vrot.slane %v4986, %v5315
    %v5317 = vcombine.high %v5316, %v5316
    %v5319 = vunpack.c.l.s4 1966171168
    %v5320 = vunpack.c.0.s8 %v5319
    %v5321 = vlaneseq
    %v5322 = vshrl.u32 %v5321, 7
    %v5323 = vsub.s32 %v5320, %v5322
    %v5324 = vrot.slane %v5316, %v5323
    %v5326 = vunpack.c.l.s4 1966171168
    %v5327 = vunpack.c.0.s8 %v5326
    %v5328 = vlaneseq
    %v5329 = vshrl.u32 %v5328, 7
    %v5330 = vsub.s32 %v5327, %v5329
    %v5331 = vrot.slane %v5317, %v5330
    %v5334 = vsel %vm588, %v4849, 0.0
    %5335 = vadd.xlane.f32.xlu0 %v5334
    %v5336 = vpop.xlane.xlu0 %5335
    %v5337 = vsel %vm588, %v4850, 0.0
    %5338 = vadd.xlane.f32.xlu0 %v5337
    %v5339 = vpop.xlane.xlu0 %5338
    %v5340 = vmul.f32 %v5336, %v1295
    %v5341 = vmul.f32 %v5339, %v1295
    %v5342 = vsub.f32 %v4849, %v5340
    %v5343 = vsub.f32 %v4850, %v5341
    %v5344 = vmul.f32 %v5342, %v5342
    %v5345 = vmul.f32 %v5343, %v5343
    %v5346 = vsel %vm588, %v5344, 0.0
    %5347 = vadd.xlane.f32.xlu0 %v5346
    %v5348 = vpop.xlane.xlu0 %5347
    %v5349 = vsel %vm588, %v5345, 0.0
    %5350 = vadd.xlane.f32.xlu0 %v5349
    %v5351 = vpop.xlane.xlu0 %5350
    %v5352 = vmul.f32 %v5348, %v1295
    %v5353 = vmul.f32 %v5351, %v1295
    %v5354 = vadd.f32 %v5352, 1e-06
    %v5355 = vadd.f32 %v5353, 1e-06
    %v5356 = vrsqrt.pop %v5354
    %v5357 = vrsqrt.pop %v5355
    %v5358 = vmul.f32 %v5342, %v5356
    %v5359 = vmul.f32 %v5343, %v5357
    %v5360 = vadd.f32 %v5324, 1.0
    %v5361 = vadd.f32 %v5331, 1.0
    %v5364 = vlaneseq
    %v5365 = vshrl.u32 %v5364, 7
    %v5366 = vsub.s32 0, %v5365
    %v5367 = vrot.slane %v5360, %v5366
    %v5368 = vlaneseq
    %v5369 = vshrl.u32 %v5368, 7
    %v5370 = vsub.s32 0, %v5369
    %v5371 = vrot.slane %v5361, %v5370
    %v5374 = vmul.f32 %v5358, %v5367
    %v5375 = vmul.f32 %v5359, %v5371
    %v5376 = vlaneseq
    %v5377 = vshrl.u32 %v5376, 7
    %v5378 = vsub.s32 0, %v5377
    %v5379 = vrot.slane %v5324, %v5378
    %v5380 = vlaneseq
    %v5381 = vshrl.u32 %v5380, 7
    %v5382 = vsub.s32 0, %v5381
    %v5383 = vrot.slane %v5331, %v5382
    %5384 = vrot.lane.b32.xlu0 %v5379, 96
    %v5385 = vpop.permute.xlu0 %5384
    %5386 = vrot.lane.b32.xlu0 %v5383, 96
    %v5387 = vpop.permute.xlu0 %5386
    %v5390 = vadd.f32 %v5374, %v5385
    %v5391 = vadd.f32 %v5375, %v5387
    %v5392 = vpack.c.bf16 %v5294, %v5293
    %v5393 = vpack.c.bf16 %v5296, %v5295
    %v5394 = vpack.c.bf16 %v5298, %v5297
    %v5395 = vpack.c.bf16 %v5300, %v5299
    %v5396 = vpack.c.bf16 %v5302, %v5301
    %v5397 = vpack.c.bf16 %v5304, %v5303
    %v5398 = vpack.c.bf16 %v5306, %v5305
    %v5399 = vpack.c.bf16 %v5308, %v5307
    %v5400 = vld [vmem:[%s83] sm:$0xf]
    %v5401 = vld [vmem:[%s83 + $0x4] sm:$0xf]
    %v5402 = vld [vmem:[%s83 + $0x8] sm:$0xf]
    %v5403 = vld [vmem:[%s83 + $0xc] sm:$0xf]
    %v5404 = vld [vmem:[#allocation10] sm:$0x1]
    %v5406 = vlaneseq
    %v5407 = vshrl.u32 %v5406, 7
    %v5408 = vsub.s32 0, %v5407
    %v5409 = vrot.slane %v5404, %v5408
    %v5415 = vunpack.c.l.b16 %v5400
    %v5416 = vunpack.c.l.b16 %v5401
    %v5417 = vunpack.c.l.b16 %v5402
    %v5418 = vunpack.c.l.b16 %v5403
    %v5419 = vpack.c.b16 %v5416, %v5415
    %v5420 = vpack.c.b16 %v5418, %v5417
    %v5424 = vsel %vm588, %v5392, 0
    %v5427 = vsel %vm588, %v5393, 0
    %v5430 = vsel %vm588, %v5394, 0
    %v5433 = vsel %vm588, %v5395, 0
    %v5436 = vsel %vm588, %v5396, 0
    %v5439 = vsel %vm588, %v5397, 0
    %v5442 = vsel %vm588, %v5398, 0
    %v5445 = vsel %vm588, %v5399, 0
    %5447 = vmatprep.subr.bf16.mxu0 0
    %5448 = vmatpush1.bf16.msra.mxu0 %v5419
    %5449 = vmatprep.subr.bf16.mxu0 0
    %5450 = vmatpush1.bf16.msra.mxu0 %v5420
    %5451 = vmatprep.subr.bf16.mxu0 0
    %5452 = vmatpush1.bf16.msra.mxu0 0
    %5453 = vmatprep.subr.bf16.mxu0 0
    %5454 = vmatpush1.bf16.msra.mxu0 0
    %5455 = vmatprep.subr.bf16.mxu0 0
    %5456 = vmatpush1.bf16.msra.mxu0 0
    %5457 = vmatprep.subr.bf16.mxu0 0
    %5458 = vmatpush1.bf16.msra.mxu0 0
    %5459 = vmatprep.subr.bf16.mxu0 0
    %5460 = vmatpush1.bf16.msra.mxu0 0
    %5461 = vmatprep.subr.bf16.mxu0 0
    %5462 = vmatpush1.bf16.msra.mxu0 0
    %5463 = vmatprep.subr.bf16.mxu0 0
    %5464 = vmatpush1.bf16.msra.mxu0 0
    %5465 = vmatprep.subr.bf16.mxu0 0
    %5466 = vmatpush1.bf16.msra.mxu0 0
    %5467 = vmatprep.subr.bf16.mxu0 0
    %5468 = vmatpush1.bf16.msra.mxu0 0
    %5469 = vmatprep.subr.bf16.mxu0 0
    %5470 = vmatpush1.bf16.msra.mxu0 0
    %5471 = vmatprep.subr.bf16.mxu0 0
    %5472 = vmatpush1.bf16.msra.mxu0 0
    %5473 = vmatprep.subr.bf16.mxu0 0
    %5474 = vmatpush1.bf16.msra.mxu0 0
    %5475 = vmatprep.subr.bf16.mxu0 0
    %5476 = vmatpush1.bf16.msra.mxu0 0
    %5477 = vmatprep.subr.bf16.mxu0 0
    %5478 = vmatpush1.bf16.msra.mxu0 0
    %5479 = vmatprep.mubr.bf16.mxu0 0
    %5480 = vmatmul.mubr.bf16.gmra.mrb[0].mxu0 %v5424
    %v5481 = vpop.f32.mrb[0].mxu0
    %v5482 = vadd.f32 %v5409, %v5481
    %v5483 = vpop.f32.mrb[0].mxu0
    %v5484 = vpop.f32.mrb[0].mxu0
    %v5485 = vadd.f32 %v5409, %v5484
    %v5486 = vpop.f32.mrb[0].mxu0
    %5487 = vmatprep.mubr.bf16.mxu0 0
    %5488 = vmatmul.mubr.bf16.gmra.mrb[0].mxu0 %v5427
    %v5489 = vpop.f32.mrb[0].mxu0
    %v5490 = vadd.f32 %v5409, %v5489
    %v5491 = vpop.f32.mrb[0].mxu0
    %v5492 = vpop.f32.mrb[0].mxu0
    %v5493 = vadd.f32 %v5409, %v5492
    %v5494 = vpop.f32.mrb[0].mxu0
    %5495 = vmatprep.mubr.bf16.mxu0 0
    %5496 = vmatmul.mubr.bf16.gmra.mrb[0].mxu0 %v5430
    %v5497 = vpop.f32.mrb[0].mxu0
    %v5498 = vadd.f32 %v5409, %v5497
    %v5499 = vpop.f32.mrb[0].mxu0
    %v5500 = vpop.f32.mrb[0].mxu0
    %v5501 = vadd.f32 %v5409, %v5500
    %v5502 = vpop.f32.mrb[0].mxu0
    %5503 = vmatprep.mubr.bf16.mxu0 0
    %5504 = vmatmul.mubr.bf16.gmra.mrb[0].mxu0 %v5433
    %v5505 = vpop.f32.mrb[0].mxu0
    %v5506 = vadd.f32 %v5409, %v5505
    %v5507 = vpop.f32.mrb[0].mxu0
    %v5508 = vpop.f32.mrb[0].mxu0
    %v5509 = vadd.f32 %v5409, %v5508
    %v5510 = vpop.f32.mrb[0].mxu0
    %5511 = vmatprep.mubr.bf16.mxu0 0
    %5512 = vmatmul.mubr.bf16.gmra.mrb[0].mxu0 %v5436
    %v5513 = vpop.f32.mrb[0].mxu0
    %v5514 = vadd.f32 %v5409, %v5513
    %v5515 = vpop.f32.mrb[0].mxu0
    %v5516 = vpop.f32.mrb[0].mxu0
    %v5517 = vadd.f32 %v5409, %v5516
    %v5518 = vpop.f32.mrb[0].mxu0
    %5519 = vmatprep.mubr.bf16.mxu0 0
    %5520 = vmatmul.mubr.bf16.gmra.mrb[0].mxu0 %v5439
    %v5521 = vpop.f32.mrb[0].mxu0
    %v5522 = vadd.f32 %v5409, %v5521
    %v5523 = vpop.f32.mrb[0].mxu0
    %v5524 = vpop.f32.mrb[0].mxu0
    %v5525 = vadd.f32 %v5409, %v5524
    %v5526 = vpop.f32.mrb[0].mxu0
    %5527 = vmatprep.mubr.bf16.mxu0 0
    %5528 = vmatmul.mubr.bf16.gmra.mrb[0].mxu0 %v5442
    %v5529 = vpop.f32.mrb[0].mxu0
    %v5530 = vadd.f32 %v5409, %v5529
    %v5531 = vpop.f32.mrb[0].mxu0
    %v5532 = vpop.f32.mrb[0].mxu0
    %v5533 = vadd.f32 %v5409, %v5532
    %v5534 = vpop.f32.mrb[0].mxu0
    %5535 = vmatprep.mubr.bf16.mxu0 0
    %5536 = vmatmul.mubr.bf16.gmra.mrb[0].mxu0 %v5445
    %v5537 = vpop.f32.mrb[0].mxu0
    %v5538 = vadd.f32 %v5409, %v5537
    %v5539 = vpop.f32.mrb[0].mxu0
    %v5540 = vpop.f32.mrb[0].mxu0
    %v5541 = vadd.f32 %v5409, %v5540
    %v5542 = vpop.f32.mrb[0].mxu0
    %5543 = vdwg.mxu0
    %v5544 = vpack.c.bf16 %v5391, %v5390
    %v5545 = vld [vmem:[%s87] sm:$0xf]
    %v5546 = vld [vmem:[%s87 + $0x4] sm:$0xf]
    %v5547 = vld [vmem:[%s87 + $0x8] sm:$0xf]
    %v5548 = vld [vmem:[%s87 + $0xc] sm:$0xf]
    %v5549 = vld [vmem:[#allocation12] sm:$0x1]
    %v5551 = vlaneseq
    %v5552 = vshrl.u32 %v5551, 7
    %v5553 = vsub.s32 0, %v5552
    %v5554 = vrot.slane %v5549, %v5553
    %v5560 = vunpack.c.l.b16 %v5545
    %v5561 = vunpack.c.l.b16 %v5546
    %v5562 = vunpack.c.l.b16 %v5547
    %v5563 = vunpack.c.l.b16 %v5548
    %v5564 = vpack.c.b16 %v5561, %v5560
    %v5565 = vpack.c.b16 %v5563, %v5562
    %v5569 = vsel %vm588, %v5544, 0
    %5571 = vmatprep.subr.bf16.mxu0 0
    %5572 = vmatpush1.bf16.msra.mxu0 %v5564
    %5573 = vmatprep.subr.bf16.mxu0 0
    %5574 = vmatpush1.bf16.msra.mxu0 %v5565
    %5575 = vmatprep.subr.bf16.mxu0 0
    %5576 = vmatpush1.bf16.msra.mxu0 0
    %5577 = vmatprep.subr.bf16.mxu0 0
    %5578 = vmatpush1.bf16.msra.mxu0 0
    %5579 = vmatprep.subr.bf16.mxu0 0
    %5580 = vmatpush1.bf16.msra.mxu0 0
    %5581 = vmatprep.subr.bf16.mxu0 0
    %5582 = vmatpush1.bf16.msra.mxu0 0
    %5583 = vmatprep.subr.bf16.mxu0 0
    %5584 = vmatpush1.bf16.msra.mxu0 0
    %5585 = vmatprep.subr.bf16.mxu0 0
    %5586 = vmatpush1.bf16.msra.mxu0 0
    %5587 = vmatprep.subr.bf16.mxu0 0
    %5588 = vmatpush1.bf16.msra.mxu0 0
    %5589 = vmatprep.subr.bf16.mxu0 0
    %5590 = vmatpush1.bf16.msra.mxu0 0
    %5591 = vmatprep.subr.bf16.mxu0 0
    %5592 = vmatpush1.bf16.msra.mxu0 0
    %5593 = vmatprep.subr.bf16.mxu0 0
    %5594 = vmatpush1.bf16.msra.mxu0 0
    %5595 = vmatprep.subr.bf16.mxu0 0
    %5596 = vmatpush1.bf16.msra.mxu0 0
    %5597 = vmatprep.subr.bf16.mxu0 0
    %5598 = vmatpush1.bf16.msra.mxu0 0
    %5599 = vmatprep.subr.bf16.mxu0 0
    %5600 = vmatpush1.bf16.msra.mxu0 0
    %5601 = vmatprep.subr.bf16.mxu0 0
    %5602 = vmatpush1.bf16.msra.mxu0 0
    %5603 = vmatprep.mubr.bf16.mxu0 0
    %5604 = vmatmul.mubr.bf16.gmra.mrb[0].mxu0 %v5569
    %v5605 = vpop.f32.mrb[0].mxu0
    %v5606 = vadd.f32 %v5554, %v5605
    %v5607 = vpop.f32.mrb[0].mxu0
    %v5608 = vpop.f32.mrb[0].mxu0
    %v5609 = vadd.f32 %v5554, %v5608
    %v5610 = vpop.f32.mrb[0].mxu0
    %5611 = vdwg.mxu0
    %v5612 = vpack.c.bf16 %v5485, %v5482
    %v5613 = vpack.c.bf16 %v5493, %v5490
    %v5614 = vpack.c.bf16 %v5501, %v5498
    %v5615 = vpack.c.bf16 %v5509, %v5506
    %v5616 = vpack.c.bf16 %v5606, %v5606
    %v5617 = vpack.c.bf16 %v5517, %v5514
    %v5618 = vpack.c.bf16 %v5525, %v5522
    %v5619 = vpack.c.bf16 %v5533, %v5530
    %v5620 = vpack.c.bf16 %v5541, %v5538
    %v5621 = vpack.c.bf16 %v5609, %v5609
    %v5622 = vsel %vm1867, %v5612, 0
    %v5623 = vsel %vm1867, %v5613, 0
    %v5624 = vsel %vm1867, %v5614, 0
    %v5625 = vsel %vm1867, %v5615, 0
    %v5626 = vsel %vm1867, %v5616, 0
    %v5627 = vsel %vm1867, %v5617, 0
    %v5628 = vsel %vm1867, %v5618, 0
    %v5629 = vsel %vm1867, %v5619, 0
    %v5630 = vsel %vm1867, %v5620, 0
    %v5631 = vsel %vm1867, %v5621, 0
    %5637 = vrot.lane.b32.xlu0 %v5612, 96
    %v5638 = vpop.permute.xlu0 %5637
    %5639 = vrot.lane.b32.xlu0 %v5613, 96
    %v5640 = vpop.permute.xlu0 %5639
    %5641 = vrot.lane.b32.xlu0 %v5614, 96
    %v5642 = vpop.permute.xlu0 %5641
    %5643 = vrot.lane.b32.xlu0 %v5615, 96
    %v5644 = vpop.permute.xlu0 %5643
    %5645 = vrot.lane.b32.xlu0 %v5616, 96
    %v5646 = vpop.permute.xlu0 %5645
    %v5648 = vsel %vm822, %v5612, 0
    %v5651 = vsel %vm822, %v5613, 0
    %v5654 = vsel %vm822, %v5614, 0
    %v5657 = vsel %vm822, %v5615, 0
    %v5660 = vsel %vm822, %v5616, 0
    %v5663 = vsel %vm822, %v5638, 0
    %v5666 = vsel %vm822, %v5640, 0
    %v5669 = vsel %vm822, %v5642, 0
    %v5672 = vsel %vm822, %v5644, 0
    %v5675 = vsel %vm822, %v5646, 0
    %5677 = vmatprep.subr.bf16.mxu0 0
    %5678 = vmatpush1.bf16.xpose.msra.mxu0 %v5663
    %5679 = vmatprep.subr.bf16.mxu0 0
    %5680 = vmatpush1.bf16.xpose.msra.mxu0 %v5666
    %5681 = vmatprep.subr.bf16.mxu0 0
    %5682 = vmatpush1.bf16.xpose.msra.mxu0 %v5669
    %5683 = vmatprep.subr.bf16.mxu0 0
    %5684 = vmatpush1.bf16.xpose.msra.mxu0 %v5672
    %5685 = vmatprep.subr.bf16.mxu0 0
    %5686 = vmatpush1.bf16.xpose.msra.mxu0 %v5675
    %5687 = vmatprep.subr.bf16.mxu0 0
    %5688 = vmatpush1.bf16.xpose.msra.mxu0 0
    %5689 = vmatprep.subr.bf16.mxu0 0
    %5690 = vmatpush1.bf16.xpose.msra.mxu0 0
    %5691 = vmatprep.subr.bf16.mxu0 0
    %5692 = vmatpush1.bf16.xpose.msra.mxu0 0
    %5693 = vmatprep.subr.bf16.mxu0 0
    %5694 = vmatpush1.bf16.xpose.msra.mxu0 0
    %5695 = vmatprep.subr.bf16.mxu0 0
    %5696 = vmatpush1.bf16.xpose.msra.mxu0 0
    %5697 = vmatprep.subr.bf16.mxu0 0
    %5698 = vmatpush1.bf16.xpose.msra.mxu0 0
    %5699 = vmatprep.subr.bf16.mxu0 0
    %5700 = vmatpush1.bf16.xpose.msra.mxu0 0
    %5701 = vmatprep.subr.bf16.mxu0 0
    %5702 = vmatpush1.bf16.xpose.msra.mxu0 0
    %5703 = vmatprep.subr.bf16.mxu0 0
    %5704 = vmatpush1.bf16.xpose.msra.mxu0 0
    %5705 = vmatprep.subr.bf16.mxu0 0
    %5706 = vmatpush1.bf16.xpose.msra.mxu0 0
    %5707 = vmatprep.subr.bf16.mxu0 0
    %5708 = vmatpush1.bf16.xpose.msra.mxu0 0
    %5709 = vmatprep.mubr.bf16.mxu0 0
    %5710 = vmatmul.mubr.bf16.gmra.mrb[0].mxu0 %v5648
    %v5711 = vpop.f32.mrb[0].mxu0
    %v5712 = vadd.f32 0.0, %v5711
    %v5713 = vpop.f32.mrb[0].mxu0
    %v5714 = vpop.f32.mrb[0].mxu0
    %v5715 = vadd.f32 0.0, %v5714
    %v5716 = vpop.f32.mrb[0].mxu0
    %5717 = vmatprep.mubr.bf16.mxu0 0
    %5718 = vmatmul.mubr.bf16.gmra.mrb[0].mxu0 %v5651
    %v5719 = vpop.f32.mrb[0].mxu0
    %v5720 = vadd.f32 0.0, %v5719
    %v5721 = vpop.f32.mrb[0].mxu0
    %v5722 = vpop.f32.mrb[0].mxu0
    %v5723 = vadd.f32 0.0, %v5722
    %v5724 = vpop.f32.mrb[0].mxu0
    %5725 = vmatprep.mubr.bf16.mxu0 0
    %5726 = vmatmul.mubr.bf16.gmra.mrb[0].mxu0 %v5654
    %v5727 = vpop.f32.mrb[0].mxu0
    %v5728 = vadd.f32 0.0, %v5727
    %v5729 = vpop.f32.mrb[0].mxu0
    %v5730 = vpop.f32.mrb[0].mxu0
    %v5731 = vadd.f32 0.0, %v5730
    %v5732 = vpop.f32.mrb[0].mxu0
    %5733 = vmatprep.mubr.bf16.mxu0 0
    %5734 = vmatmul.mubr.bf16.gmra.mrb[0].mxu0 %v5657
    %v5735 = vpop.f32.mrb[0].mxu0
    %v5736 = vadd.f32 0.0, %v5735
    %v5737 = vpop.f32.mrb[0].mxu0
    %v5738 = vpop.f32.mrb[0].mxu0
    %v5739 = vadd.f32 0.0, %v5738
    %v5740 = vpop.f32.mrb[0].mxu0
    %5741 = vmatprep.mubr.bf16.mxu0 0
    %5742 = vmatmul.mubr.bf16.gmra.mrb[0].mxu0 %v5660
    %v5743 = vpop.f32.mrb[0].mxu0
    %v5744 = vadd.f32 0.0, %v5743
    %v5745 = vpop.f32.mrb[0].mxu0
    %v5746 = vpop.f32.mrb[0].mxu0
    %v5747 = vpop.f32.mrb[0].mxu0
    %5748 = vdwg.mxu0
    %5754 = vrot.lane.b32.xlu0 %v5617, 96
    %v5755 = vpop.permute.xlu0 %5754
    %5756 = vrot.lane.b32.xlu0 %v5618, 96
    %v5757 = vpop.permute.xlu0 %5756
    %5758 = vrot.lane.b32.xlu0 %v5619, 96
    %v5759 = vpop.permute.xlu0 %5758
    %5760 = vrot.lane.b32.xlu0 %v5620, 96
    %v5761 = vpop.permute.xlu0 %5760
    %5762 = vrot.lane.b32.xlu0 %v5621, 96
    %v5763 = vpop.permute.xlu0 %5762
    %v5765 = vsel %vm822, %v5617, 0
    %v5768 = vsel %vm822, %v5618, 0
    %v5771 = vsel %vm822, %v5619, 0
    %v5774 = vsel %vm822, %v5620, 0
    %v5777 = vsel %vm822, %v5621, 0
    %v5780 = vsel %vm822, %v5755, 0
    %v5783 = vsel %vm822, %v5757, 0
    %v5786 = vsel %vm822, %v5759, 0
    %v5789 = vsel %vm822, %v5761, 0
    %v5792 = vsel %vm822, %v5763, 0
    %5794 = vmatprep.subr.bf16.mxu0 0
    %5795 = vmatpush1.bf16.xpose.msra.mxu0 %v5780
    %5796 = vmatprep.subr.bf16.mxu0 0
    %5797 = vmatpush1.bf16.xpose.msra.mxu0 %v5783
    %5798 = vmatprep.subr.bf16.mxu0 0
    %5799 = vmatpush1.bf16.xpose.msra.mxu0 %v5786
    %5800 = vmatprep.subr.bf16.mxu0 0
    %5801 = vmatpush1.bf16.xpose.msra.mxu0 %v5789
    %5802 = vmatprep.subr.bf16.mxu0 0
    %5803 = vmatpush1.bf16.xpose.msra.mxu0 %v5792
    %5804 = vmatprep.subr.bf16.mxu0 0
    %5805 = vmatpush1.bf16.xpose.msra.mxu0 0
    %5806 = vmatprep.subr.bf16.mxu0 0
    %5807 = vmatpush1.bf16.xpose.msra.mxu0 0
    %5808 = vmatprep.subr.bf16.mxu0 0
    %5809 = vmatpush1.bf16.xpose.msra.mxu0 0
    %5810 = vmatprep.subr.bf16.mxu0 0
    %5811 = vmatpush1.bf16.xpose.msra.mxu0 0
    %5812 = vmatprep.subr.bf16.mxu0 0
    %5813 = vmatpush1.bf16.xpose.msra.mxu0 0
    %5814 = vmatprep.subr.bf16.mxu0 0
    %5815 = vmatpush1.bf16.xpose.msra.mxu0 0
    %5816 = vmatprep.subr.bf16.mxu0 0
    %5817 = vmatpush1.bf16.xpose.msra.mxu0 0
    %5818 = vmatprep.subr.bf16.mxu0 0
    %5819 = vmatpush1.bf16.xpose.msra.mxu0 0
    %5820 = vmatprep.subr.bf16.mxu0 0
    %5821 = vmatpush1.bf16.xpose.msra.mxu0 0
    %5822 = vmatprep.subr.bf16.mxu0 0
    %5823 = vmatpush1.bf16.xpose.msra.mxu0 0
    %5824 = vmatprep.subr.bf16.mxu0 0
    %5825 = vmatpush1.bf16.xpose.msra.mxu0 0
    %5826 = vmatprep.mubr.bf16.mxu0 0
    %5827 = vmatmul.mubr.bf16.gmra.mrb[0].mxu0 %v5765
    %v5828 = vpop.f32.mrb[0].mxu0
    %v5829 = vadd.f32 0.0, %v5828
    %v5830 = vpop.f32.mrb[0].mxu0
    %v5831 = vpop.f32.mrb[0].mxu0
    %v5832 = vadd.f32 0.0, %v5831
    %v5833 = vpop.f32.mrb[0].mxu0
    %5834 = vmatprep.mubr.bf16.mxu0 0
    %5835 = vmatmul.mubr.bf16.gmra.mrb[0].mxu0 %v5768
    %v5836 = vpop.f32.mrb[0].mxu0
    %v5837 = vadd.f32 0.0, %v5836
    %v5838 = vpop.f32.mrb[0].mxu0
    %v5839 = vpop.f32.mrb[0].mxu0
    %v5840 = vadd.f32 0.0, %v5839
    %v5841 = vpop.f32.mrb[0].mxu0
    %5842 = vmatprep.mubr.bf16.mxu0 0
    %5843 = vmatmul.mubr.bf16.gmra.mrb[0].mxu0 %v5771
    %v5844 = vpop.f32.mrb[0].mxu0
    %v5845 = vadd.f32 0.0, %v5844
    %v5846 = vpop.f32.mrb[0].mxu0
    %v5847 = vpop.f32.mrb[0].mxu0
    %v5848 = vadd.f32 0.0, %v5847
    %v5849 = vpop.f32.mrb[0].mxu0
    %5850 = vmatprep.mubr.bf16.mxu0 0
    %5851 = vmatmul.mubr.bf16.gmra.mrb[0].mxu0 %v5774
    %v5852 = vpop.f32.mrb[0].mxu0
    %v5853 = vadd.f32 0.0, %v5852
    %v5854 = vpop.f32.mrb[0].mxu0
    %v5855 = vpop.f32.mrb[0].mxu0
    %v5856 = vadd.f32 0.0, %v5855
    %v5857 = vpop.f32.mrb[0].mxu0
    %5858 = vmatprep.mubr.bf16.mxu0 0
    %5859 = vmatmul.mubr.bf16.gmra.mrb[0].mxu0 %v5777
    %v5860 = vpop.f32.mrb[0].mxu0
    %v5861 = vadd.f32 0.0, %v5860
    %v5862 = vpop.f32.mrb[0].mxu0
    %v5863 = vpop.f32.mrb[0].mxu0
    %v5864 = vpop.f32.mrb[0].mxu0
    %5865 = vdwg.mxu0
    %v5866 = vsel %vm2112, %v5712, -inf
    %5867 = vmax.xlane.f32.xlu0 %v5866
    %v5868 = vpop.xlane.xlu0 %5867
    %v5869 = vsel %vm2112, %v5715, -inf
    %5870 = vmax.xlane.f32.xlu0 %v5869
    %v5871 = vpop.xlane.xlu0 %5870
    %v5872 = vsel %vm2112, %v5720, -inf
    %5873 = vmax.xlane.f32.xlu0 %v5872
    %v5874 = vpop.xlane.xlu0 %5873
    %v5875 = vsel %vm2112, %v5723, -inf
    %5876 = vmax.xlane.f32.xlu0 %v5875
    %v5877 = vpop.xlane.xlu0 %5876
    %v5878 = vsel %vm2112, %v5728, -inf
    %5879 = vmax.xlane.f32.xlu0 %v5878
    %v5880 = vpop.xlane.xlu0 %5879
    %v5881 = vsel %vm2112, %v5731, -inf
    %5882 = vmax.xlane.f32.xlu0 %v5881
    %v5883 = vpop.xlane.xlu0 %5882
    %v5884 = vsel %vm2112, %v5736, -inf
    %5885 = vmax.xlane.f32.xlu0 %v5884
    %v5886 = vpop.xlane.xlu0 %5885
    %v5887 = vsel %vm2112, %v5739, -inf
    %5888 = vmax.xlane.f32.xlu0 %v5887
    %v5889 = vpop.xlane.xlu0 %5888
    %v5890 = vsel %vm2112, %v5744, -inf
    %5891 = vmax.xlane.f32.xlu0 %v5890
    %v5892 = vpop.xlane.xlu0 %5891
    %v5893 = vsel %vm2112, %v5829, -inf
    %5894 = vmax.xlane.f32.xlu0 %v5893
    %v5895 = vpop.xlane.xlu0 %5894
    %v5896 = vsel %vm2112, %v5832, -inf
    %5897 = vmax.xlane.f32.xlu0 %v5896
    %v5898 = vpop.xlane.xlu0 %5897
    %v5899 = vsel %vm2112, %v5837, -inf
    %5900 = vmax.xlane.f32.xlu0 %v5899
    %v5901 = vpop.xlane.xlu0 %5900
    %v5902 = vsel %vm2112, %v5840, -inf
    %5903 = vmax.xlane.f32.xlu0 %v5902
    %v5904 = vpop.xlane.xlu0 %5903
    %v5905 = vsel %vm2112, %v5845, -inf
    %5906 = vmax.xlane.f32.xlu0 %v5905
    %v5907 = vpop.xlane.xlu0 %5906
    %v5908 = vsel %vm2112, %v5848, -inf
    %5909 = vmax.xlane.f32.xlu0 %v5908
    %v5910 = vpop.xlane.xlu0 %5909
    %v5911 = vsel %vm2112, %v5853, -inf
    %5912 = vmax.xlane.f32.xlu0 %v5911
    %v5913 = vpop.xlane.xlu0 %5912
    %v5914 = vsel %vm2112, %v5856, -inf
    %5915 = vmax.xlane.f32.xlu0 %v5914
    %v5916 = vpop.xlane.xlu0 %5915
    %v5917 = vsel %vm2112, %v5861, -inf
    %5918 = vmax.xlane.f32.xlu0 %v5917
    %v5919 = vpop.xlane.xlu0 %5918
    %v5920 = vsub.f32 %v5712, %v5868
    %v5921 = vsub.f32 %v5715, %v5871
    %v5922 = vsub.f32 %v5720, %v5874
    %v5923 = vsub.f32 %v5723, %v5877
    %v5924 = vsub.f32 %v5728, %v5880
    %v5925 = vsub.f32 %v5731, %v5883
    %v5926 = vsub.f32 %v5736, %v5886
    %v5927 = vsub.f32 %v5739, %v5889
    %v5928 = vsub.f32 %v5744, %v5892
    %v5929 = vsub.f32 %v5829, %v5895
    %v5930 = vsub.f32 %v5832, %v5898
    %v5931 = vsub.f32 %v5837, %v5901
    %v5932 = vsub.f32 %v5840, %v5904
    %v5933 = vsub.f32 %v5845, %v5907
    %v5934 = vsub.f32 %v5848, %v5910
    %v5935 = vsub.f32 %v5853, %v5913
    %v5936 = vsub.f32 %v5856, %v5916
    %v5937 = vsub.f32 %v5861, %v5919
    %v5938 = vmul.f32 %v5920, 1.442695
    %v5939 = vpow.pop %v5938
    %v5940 = vmul.f32 %v5921, 1.442695
    %v5941 = vpow.pop %v5940
    %v5942 = vmul.f32 %v5922, 1.442695
    %v5943 = vpow.pop %v5942
    %v5944 = vmul.f32 %v5923, 1.442695
    %v5945 = vpow.pop %v5944
    %v5946 = vmul.f32 %v5924, 1.442695
    %v5947 = vpow.pop %v5946
    %v5948 = vmul.f32 %v5925, 1.442695
    %v5949 = vpow.pop %v5948
    %v5950 = vmul.f32 %v5926, 1.442695
    %v5951 = vpow.pop %v5950
    %v5952 = vmul.f32 %v5927, 1.442695
    %v5953 = vpow.pop %v5952
    %v5954 = vmul.f32 %v5928, 1.442695
    %v5955 = vpow.pop %v5954
    %v5956 = vmul.f32 %v5929, 1.442695
    %v5957 = vpow.pop %v5956
    %v5958 = vmul.f32 %v5930, 1.442695
    %v5959 = vpow.pop %v5958
    %v5960 = vmul.f32 %v5931, 1.442695
    %v5961 = vpow.pop %v5960
    %v5962 = vmul.f32 %v5932, 1.442695
    %v5963 = vpow.pop %v5962
    %v5964 = vmul.f32 %v5933, 1.442695
    %v5965 = vpow.pop %v5964
    %v5966 = vmul.f32 %v5934, 1.442695
    %v5967 = vpow.pop %v5966
    %v5968 = vmul.f32 %v5935, 1.442695
    %v5969 = vpow.pop %v5968
    %v5970 = vmul.f32 %v5936, 1.442695
    %v5971 = vpow.pop %v5970
    %v5972 = vmul.f32 %v5937, 1.442695
    %v5973 = vpow.pop %v5972
    %v5974 = vsel %vm2112, %v5939, 0.0
    %5975 = vadd.xlane.f32.xlu0 %v5974
    %v5976 = vpop.xlane.xlu0 %5975
    %v5977 = vsel %vm2112, %v5941, 0.0
    %5978 = vadd.xlane.f32.xlu0 %v5977
    %v5979 = vpop.xlane.xlu0 %5978
    %v5980 = vsel %vm2112, %v5943, 0.0
    %5981 = vadd.xlane.f32.xlu0 %v5980
    %v5982 = vpop.xlane.xlu0 %5981
    %v5983 = vsel %vm2112, %v5945, 0.0
    %5984 = vadd.xlane.f32.xlu0 %v5983
    %v5985 = vpop.xlane.xlu0 %5984
    %v5986 = vsel %vm2112, %v5947, 0.0
    %5987 = vadd.xlane.f32.xlu0 %v5986
    %v5988 = vpop.xlane.xlu0 %5987
    %v5989 = vsel %vm2112, %v5949, 0.0
    %5990 = vadd.xlane.f32.xlu0 %v5989
    %v5991 = vpop.xlane.xlu0 %5990
    %v5992 = vsel %vm2112, %v5951, 0.0
    %5993 = vadd.xlane.f32.xlu0 %v5992
    %v5994 = vpop.xlane.xlu0 %5993
    %v5995 = vsel %vm2112, %v5953, 0.0
    %5996 = vadd.xlane.f32.xlu0 %v5995
    %v5997 = vpop.xlane.xlu0 %5996
    %v5998 = vsel %vm2112, %v5957, 0.0
    %5999 = vadd.xlane.f32.xlu0 %v5998
    %v6000 = vpop.xlane.xlu0 %5999
    %v6001 = vsel %vm2112, %v5959, 0.0
    %6002 = vadd.xlane.f32.xlu0 %v6001
    %v6003 = vpop.xlane.xlu0 %6002
    %v6004 = vsel %vm2112, %v5961, 0.0
    %6005 = vadd.xlane.f32.xlu0 %v6004
    %v6006 = vpop.xlane.xlu0 %6005
    %v6007 = vsel %vm2112, %v5963, 0.0
    %6008 = vadd.xlane.f32.xlu0 %v6007
    %v6009 = vpop.xlane.xlu0 %6008
    %v6010 = vsel %vm2112, %v5965, 0.0
    %6011 = vadd.xlane.f32.xlu0 %v6010
    %v6012 = vpop.xlane.xlu0 %6011
    %v6013 = vsel %vm2112, %v5967, 0.0
    %6014 = vadd.xlane.f32.xlu0 %v6013
    %v6015 = vpop.xlane.xlu0 %6014
    %v6016 = vsel %vm2112, %v5969, 0.0
    %6017 = vadd.xlane.f32.xlu0 %v6016
    %v6018 = vpop.xlane.xlu0 %6017
    %v6019 = vsel %vm2112, %v5971, 0.0
    %6020 = vadd.xlane.f32.xlu0 %v6019
    %v6021 = vpop.xlane.xlu0 %6020
    %v6022 = vpack.c.bf16 %v5941, %v5939
    %v6023 = vpack.c.bf16 %v5945, %v5943
    %v6024 = vpack.c.bf16 %v5949, %v5947
    %v6025 = vpack.c.bf16 %v5953, %v5951
    %v6026 = vpack.c.bf16 %v5955, %v5955
    %v6027 = vpack.c.bf16 %v5959, %v5957
    %v6028 = vpack.c.bf16 %v5963, %v5961
    %v6029 = vpack.c.bf16 %v5967, %v5965
    %v6030 = vpack.c.bf16 %v5971, %v5969
    %v6031 = vpack.c.bf16 %v5973, %v5973
    %6037 = vrot.lane.b32.xlu0 %v5622, 64
    %v6038 = vpop.permute.xlu0 %6037
    %6039 = vrot.lane.b32.xlu0 %v5623, 64
    %v6040 = vpop.permute.xlu0 %6039
    %6041 = vrot.lane.b32.xlu0 %v5624, 64
    %v6042 = vpop.permute.xlu0 %6041
    %6043 = vrot.lane.b32.xlu0 %v5625, 64
    %v6044 = vpop.permute.xlu0 %6043
    %6045 = vrot.lane.b32.xlu0 %v5626, 64
    %v6046 = vpop.permute.xlu0 %6045
    %v6052 = vsel %vm2112, %v6022, 0
    %v6055 = vsel %vm2112, %v6023, 0
    %v6058 = vsel %vm2112, %v6024, 0
    %v6061 = vsel %vm2112, %v6025, 0
    %v6064 = vsel %vm2112, %v6026, 0
    %v6067 = vsel %vm2319, %v6046, 0
    %6069 = vmatprep.subr.bf16.mxu0 0
    %6070 = vmatpush1.bf16.msra.mxu0 %v6038
    %6071 = vmatprep.subr.bf16.mxu0 0
    %6072 = vmatpush1.bf16.msra.mxu0 %v6040
    %6073 = vmatprep.subr.bf16.mxu0 0
    %6074 = vmatpush1.bf16.msra.mxu0 %v6042
    %6075 = vmatprep.subr.bf16.mxu0 0
    %6076 = vmatpush1.bf16.msra.mxu0 %v6044
    %6077 = vmatprep.subr.bf16.mxu0 0
    %6078 = vmatpush1.bf16.msra.mxu0 %v6067
    %6079 = vmatprep.subr.bf16.mxu0 0
    %6080 = vmatpush1.bf16.msra.mxu0 0
    %6081 = vmatprep.subr.bf16.mxu0 0
    %6082 = vmatpush1.bf16.msra.mxu0 0
    %6083 = vmatprep.subr.bf16.mxu0 0
    %6084 = vmatpush1.bf16.msra.mxu0 0
    %6085 = vmatprep.subr.bf16.mxu0 0
    %6086 = vmatpush1.bf16.msra.mxu0 0
    %6087 = vmatprep.subr.bf16.mxu0 0
    %6088 = vmatpush1.bf16.msra.mxu0 0
    %6089 = vmatprep.subr.bf16.mxu0 0
    %6090 = vmatpush1.bf16.msra.mxu0 0
    %6091 = vmatprep.subr.bf16.mxu0 0
    %6092 = vmatpush1.bf16.msra.mxu0 0
    %6093 = vmatprep.subr.bf16.mxu0 0
    %6094 = vmatpush1.bf16.msra.mxu0 0
    %6095 = vmatprep.subr.bf16.mxu0 0
    %6096 = vmatpush1.bf16.msra.mxu0 0
    %6097 = vmatprep.subr.bf16.mxu0 0
    %6098 = vmatpush1.bf16.msra.mxu0 0
    %6099 = vmatprep.subr.bf16.mxu0 0
    %6100 = vmatpush1.bf16.msra.mxu0 0
    %6101 = vmatprep.mubr.bf16.mxu0 0
    %6102 = vmatmul.mubr.bf16.gmra.mrb[0].mxu0 %v6052
    %v6103 = vpop.f32.mrb[0].mxu0
    %v6104 = vadd.f32 0.0, %v6103
    %v6105 = vpop.f32.mrb[0].mxu0
    %v6106 = vpop.f32.mrb[0].mxu0
    %v6107 = vadd.f32 0.0, %v6106
    %v6108 = vpop.f32.mrb[0].mxu0
    %6109 = vmatprep.mubr.bf16.mxu0 0
    %6110 = vmatmul.mubr.bf16.gmra.mrb[0].mxu0 %v6055
    %v6111 = vpop.f32.mrb[0].mxu0
    %v6112 = vadd.f32 0.0, %v6111
    %v6113 = vpop.f32.mrb[0].mxu0
    %v6114 = vpop.f32.mrb[0].mxu0
    %v6115 = vadd.f32 0.0, %v6114
    %v6116 = vpop.f32.mrb[0].mxu0
    %6117 = vmatprep.mubr.bf16.mxu0 0
    %6118 = vmatmul.mubr.bf16.gmra.mrb[0].mxu0 %v6058
    %v6119 = vpop.f32.mrb[0].mxu0
    %v6120 = vadd.f32 0.0, %v6119
    %v6121 = vpop.f32.mrb[0].mxu0
    %v6122 = vpop.f32.mrb[0].mxu0
    %v6123 = vadd.f32 0.0, %v6122
    %v6124 = vpop.f32.mrb[0].mxu0
    %6125 = vmatprep.mubr.bf16.mxu0 0
    %6126 = vmatmul.mubr.bf16.gmra.mrb[0].mxu0 %v6061
    %v6127 = vpop.f32.mrb[0].mxu0
    %v6128 = vadd.f32 0.0, %v6127
    %v6129 = vpop.f32.mrb[0].mxu0
    %v6130 = vpop.f32.mrb[0].mxu0
    %v6131 = vadd.f32 0.0, %v6130
    %v6132 = vpop.f32.mrb[0].mxu0
    %6133 = vmatprep.mubr.bf16.mxu0 0
    %6134 = vmatmul.mubr.bf16.gmra.mrb[0].mxu0 %v6064
    %v6135 = vpop.f32.mrb[0].mxu0
    %v6136 = vpop.f32.mrb[0].mxu0
    %v6137 = vpop.f32.mrb[0].mxu0
    %v6138 = vpop.f32.mrb[0].mxu0
    %6139 = vdwg.mxu0
    %6145 = vrot.lane.b32.xlu0 %v5627, 64
    %v6146 = vpop.permute.xlu0 %6145
    %6147 = vrot.lane.b32.xlu0 %v5628, 64
    %v6148 = vpop.permute.xlu0 %6147
    %6149 = vrot.lane.b32.xlu0 %v5629, 64
    %v6150 = vpop.permute.xlu0 %6149
    %6151 = vrot.lane.b32.xlu0 %v5630, 64
    %v6152 = vpop.permute.xlu0 %6151
    %6153 = vrot.lane.b32.xlu0 %v5631, 64
    %v6154 = vpop.permute.xlu0 %6153
    %v6160 = vsel %vm2112, %v6027, 0
    %v6163 = vsel %vm2112, %v6028, 0
    %v6166 = vsel %vm2112, %v6029, 0
    %v6169 = vsel %vm2112, %v6030, 0
    %v6172 = vsel %vm2112, %v6031, 0
    %v6175 = vsel %vm2319, %v6154, 0
    %6177 = vmatprep.subr.bf16.mxu0 0
    %6178 = vmatpush1.bf16.msra.mxu0 %v6146
    %6179 = vmatprep.subr.bf16.mxu0 0
    %6180 = vmatpush1.bf16.msra.mxu0 %v6148
    %6181 = vmatprep.subr.bf16.mxu0 0
    %6182 = vmatpush1.bf16.msra.mxu0 %v6150
    %6183 = vmatprep.subr.bf16.mxu0 0
    %6184 = vmatpush1.bf16.msra.mxu0 %v6152
    %6185 = vmatprep.subr.bf16.mxu0 0
    %6186 = vmatpush1.bf16.msra.mxu0 %v6175
    %6187 = vmatprep.subr.bf16.mxu0 0
    %6188 = vmatpush1.bf16.msra.mxu0 0
    %6189 = vmatprep.subr.bf16.mxu0 0
    %6190 = vmatpush1.bf16.msra.mxu0 0
    %6191 = vmatprep.subr.bf16.mxu0 0
    %6192 = vmatpush1.bf16.msra.mxu0 0
    %6193 = vmatprep.subr.bf16.mxu0 0
    %6194 = vmatpush1.bf16.msra.mxu0 0
    %6195 = vmatprep.subr.bf16.mxu0 0
    %6196 = vmatpush1.bf16.msra.mxu0 0
    %6197 = vmatprep.subr.bf16.mxu0 0
    %6198 = vmatpush1.bf16.msra.mxu0 0
    %6199 = vmatprep.subr.bf16.mxu0 0
    %6200 = vmatpush1.bf16.msra.mxu0 0
    %6201 = vmatprep.subr.bf16.mxu0 0
    %6202 = vmatpush1.bf16.msra.mxu0 0
    %6203 = vmatprep.subr.bf16.mxu0 0
    %6204 = vmatpush1.bf16.msra.mxu0 0
    %6205 = vmatprep.subr.bf16.mxu0 0
    %6206 = vmatpush1.bf16.msra.mxu0 0
    %6207 = vmatprep.subr.bf16.mxu0 0
    %6208 = vmatpush1.bf16.msra.mxu0 0
    %6209 = vmatprep.mubr.bf16.mxu0 0
    %6210 = vmatmul.mubr.bf16.gmra.mrb[0].mxu0 %v6160
    %v6211 = vpop.f32.mrb[0].mxu0
    %v6212 = vadd.f32 0.0, %v6211
    %v6213 = vpop.f32.mrb[0].mxu0
    %v6214 = vpop.f32.mrb[0].mxu0
    %v6215 = vadd.f32 0.0, %v6214
    %v6216 = vpop.f32.mrb[0].mxu0
    %6217 = vmatprep.mubr.bf16.mxu0 0
    %6218 = vmatmul.mubr.bf16.gmra.mrb[0].mxu0 %v6163
    %v6219 = vpop.f32.mrb[0].mxu0
    %v6220 = vadd.f32 0.0, %v6219
    %v6221 = vpop.f32.mrb[0].mxu0
    %v6222 = vpop.f32.mrb[0].mxu0
    %v6223 = vadd.f32 0.0, %v6222
    %v6224 = vpop.f32.mrb[0].mxu0
    %6225 = vmatprep.mubr.bf16.mxu0 0
    %6226 = vmatmul.mubr.bf16.gmra.mrb[0].mxu0 %v6166
    %v6227 = vpop.f32.mrb[0].mxu0
    %v6228 = vadd.f32 0.0, %v6227
    %v6229 = vpop.f32.mrb[0].mxu0
    %v6230 = vpop.f32.mrb[0].mxu0
    %v6231 = vadd.f32 0.0, %v6230
    %v6232 = vpop.f32.mrb[0].mxu0
    %6233 = vmatprep.mubr.bf16.mxu0 0
    %6234 = vmatmul.mubr.bf16.gmra.mrb[0].mxu0 %v6169
    %v6235 = vpop.f32.mrb[0].mxu0
    %v6236 = vadd.f32 0.0, %v6235
    %v6237 = vpop.f32.mrb[0].mxu0
    %v6238 = vpop.f32.mrb[0].mxu0
    %v6239 = vadd.f32 0.0, %v6238
    %v6240 = vpop.f32.mrb[0].mxu0
    %6241 = vmatprep.mubr.bf16.mxu0 0
    %6242 = vmatmul.mubr.bf16.gmra.mrb[0].mxu0 %v6172
    %v6243 = vpop.f32.mrb[0].mxu0
    %v6244 = vpop.f32.mrb[0].mxu0
    %v6245 = vpop.f32.mrb[0].mxu0
    %v6246 = vpop.f32.mrb[0].mxu0
    %6247 = vdwg.mxu0
    %v6248 = vrcp.pop %v5976
    %v6249 = vrcp.pop %v5979
    %v6250 = vrcp.pop %v5982
    %v6251 = vrcp.pop %v5985
    %v6252 = vrcp.pop %v5988
    %v6253 = vrcp.pop %v5991
    %v6254 = vrcp.pop %v5994
    %v6255 = vrcp.pop %v5997
    %v6256 = vrcp.pop %v6000
    %v6257 = vrcp.pop %v6003
    %v6258 = vrcp.pop %v6006
    %v6259 = vrcp.pop %v6009
    %v6260 = vrcp.pop %v6012
    %v6261 = vrcp.pop %v6015
    %v6262 = vrcp.pop %v6018
    %v6263 = vrcp.pop %v6021
    %v6264 = vmul.f32 %v6104, %v6248
    %v6265 = vmul.f32 %v6107, %v6249
    %v6266 = vmul.f32 %v6112, %v6250
    %v6267 = vmul.f32 %v6115, %v6251
    %v6268 = vmul.f32 %v6120, %v6252
    %v6269 = vmul.f32 %v6123, %v6253
    %v6270 = vmul.f32 %v6128, %v6254
    %v6271 = vmul.f32 %v6131, %v6255
    %v6272 = vmul.f32 %v6212, %v6256
    %v6273 = vmul.f32 %v6215, %v6257
    %v6274 = vmul.f32 %v6220, %v6258
    %v6275 = vmul.f32 %v6223, %v6259
    %v6276 = vmul.f32 %v6228, %v6260
    %v6277 = vmul.f32 %v6231, %v6261
    %v6278 = vmul.f32 %v6236, %v6262
    %v6279 = vmul.f32 %v6239, %v6263
    %v6280 = vadd.f32 %v6264, 0.0
    %v6281 = vadd.f32 %v6265, 0.0
    %v6282 = vadd.f32 %v6266, 0.0
    %v6283 = vadd.f32 %v6267, 0.0
    %v6284 = vadd.f32 %v6268, 0.0
    %v6285 = vadd.f32 %v6269, 0.0
    %v6286 = vadd.f32 %v6270, 0.0
    %v6287 = vadd.f32 %v6271, 0.0
    %v6288 = vadd.f32 %v6272, 0.0
    %v6289 = vadd.f32 %v6273, 0.0
    %v6290 = vadd.f32 %v6274, 0.0
    %v6291 = vadd.f32 %v6275, 0.0
    %v6292 = vadd.f32 %v6276, 0.0
    %v6293 = vadd.f32 %v6277, 0.0
    %v6294 = vadd.f32 %v6278, 0.0
    %v6295 = vadd.f32 %v6279, 0.0
    %v6296 = vsel %vm2571, %v5612, 0
    %v6297 = vsel %vm2571, %v5613, 0
    %v6298 = vsel %vm2571, %v5614, 0
    %v6299 = vsel %vm2571, %v5615, 0
    %v6300 = vsel %vm2571, %v5616, 0
    %v6301 = vsel %vm2571, %v5617, 0
    %v6302 = vsel %vm2571, %v5618, 0
    %v6303 = vsel %vm2571, %v5619, 0
    %v6304 = vsel %vm2571, %v5620, 0
    %v6305 = vsel %vm2571, %v5621, 0
    %6306 = vrot.lane.b32.xlu0 %v5612, 112
    %v6307 = vpop.permute.xlu0 %6306
    %6308 = vrot.lane.b32.xlu0 %v5613, 112
    %v6309 = vpop.permute.xlu0 %6308
    %6310 = vrot.lane.b32.xlu0 %v5614, 112
    %v6311 = vpop.permute.xlu0 %6310
    %6312 = vrot.lane.b32.xlu0 %v5615, 112
    %v6313 = vpop.permute.xlu0 %6312
    %6314 = vrot.lane.b32.xlu0 %v5616, 112
    %v6315 = vpop.permute.xlu0 %6314
    %6316 = vrot.lane.b32.xlu0 %v5612, 80
    %v6317 = vpop.permute.xlu0 %6316
    %6318 = vrot.lane.b32.xlu0 %v5613, 80
    %v6319 = vpop.permute.xlu0 %6318
    %6320 = vrot.lane.b32.xlu0 %v5614, 80
    %v6321 = vpop.permute.xlu0 %6320
    %6322 = vrot.lane.b32.xlu0 %v5615, 80
    %v6323 = vpop.permute.xlu0 %6322
    %6324 = vrot.lane.b32.xlu0 %v5616, 80
    %v6325 = vpop.permute.xlu0 %6324
    %v6327 = vsel %vm822, %v6307, 0
    %v6330 = vsel %vm822, %v6309, 0
    %v6333 = vsel %vm822, %v6311, 0
    %v6336 = vsel %vm822, %v6313, 0
    %v6339 = vsel %vm822, %v6315, 0
    %v6342 = vsel %vm822, %v6317, 0
    %v6345 = vsel %vm822, %v6319, 0
    %v6348 = vsel %vm822, %v6321, 0
    %v6351 = vsel %vm822, %v6323, 0
    %v6354 = vsel %vm822, %v6325, 0
    %6356 = vmatprep.subr.bf16.mxu0 0
    %6357 = vmatpush1.bf16.xpose.msra.mxu0 %v6342
    %6358 = vmatprep.subr.bf16.mxu0 0
    %6359 = vmatpush1.bf16.xpose.msra.mxu0 %v6345
    %6360 = vmatprep.subr.bf16.mxu0 0
    %6361 = vmatpush1.bf16.xpose.msra.mxu0 %v6348
    %6362 = vmatprep.subr.bf16.mxu0 0
    %6363 = vmatpush1.bf16.xpose.msra.mxu0 %v6351
    %6364 = vmatprep.subr.bf16.mxu0 0
    %6365 = vmatpush1.bf16.xpose.msra.mxu0 %v6354
    %6366 = vmatprep.subr.bf16.mxu0 0
    %6367 = vmatpush1.bf16.xpose.msra.mxu0 0
    %6368 = vmatprep.subr.bf16.mxu0 0
    %6369 = vmatpush1.bf16.xpose.msra.mxu0 0
    %6370 = vmatprep.subr.bf16.mxu0 0
    %6371 = vmatpush1.bf16.xpose.msra.mxu0 0
    %6372 = vmatprep.subr.bf16.mxu0 0
    %6373 = vmatpush1.bf16.xpose.msra.mxu0 0
    %6374 = vmatprep.subr.bf16.mxu0 0
    %6375 = vmatpush1.bf16.xpose.msra.mxu0 0
    %6376 = vmatprep.subr.bf16.mxu0 0
    %6377 = vmatpush1.bf16.xpose.msra.mxu0 0
    %6378 = vmatprep.subr.bf16.mxu0 0
    %6379 = vmatpush1.bf16.xpose.msra.mxu0 0
    %6380 = vmatprep.subr.bf16.mxu0 0
    %6381 = vmatpush1.bf16.xpose.msra.mxu0 0
    %6382 = vmatprep.subr.bf16.mxu0 0
    %6383 = vmatpush1.bf16.xpose.msra.mxu0 0
    %6384 = vmatprep.subr.bf16.mxu0 0
    %6385 = vmatpush1.bf16.xpose.msra.mxu0 0
    %6386 = vmatprep.subr.bf16.mxu0 0
    %6387 = vmatpush1.bf16.xpose.msra.mxu0 0
    %6388 = vmatprep.mubr.bf16.mxu0 0
    %6389 = vmatmul.mubr.bf16.gmra.mrb[0].mxu0 %v6327
    %v6390 = vpop.f32.mrb[0].mxu0
    %v6391 = vadd.f32 0.0, %v6390
    %v6392 = vpop.f32.mrb[0].mxu0
    %v6393 = vpop.f32.mrb[0].mxu0
    %v6394 = vadd.f32 0.0, %v6393
    %v6395 = vpop.f32.mrb[0].mxu0
    %6396 = vmatprep.mubr.bf16.mxu0 0
    %6397 = vmatmul.mubr.bf16.gmra.mrb[0].mxu0 %v6330
    %v6398 = vpop.f32.mrb[0].mxu0
    %v6399 = vadd.f32 0.0, %v6398
    %v6400 = vpop.f32.mrb[0].mxu0
    %v6401 = vpop.f32.mrb[0].mxu0
    %v6402 = vadd.f32 0.0, %v6401
    %v6403 = vpop.f32.mrb[0].mxu0
    %6404 = vmatprep.mubr.bf16.mxu0 0
    %6405 = vmatmul.mubr.bf16.gmra.mrb[0].mxu0 %v6333
    %v6406 = vpop.f32.mrb[0].mxu0
    %v6407 = vadd.f32 0.0, %v6406
    %v6408 = vpop.f32.mrb[0].mxu0
    %v6409 = vpop.f32.mrb[0].mxu0
    %v6410 = vadd.f32 0.0, %v6409
    %v6411 = vpop.f32.mrb[0].mxu0
    %6412 = vmatprep.mubr.bf16.mxu0 0
    %6413 = vmatmul.mubr.bf16.gmra.mrb[0].mxu0 %v6336
    %v6414 = vpop.f32.mrb[0].mxu0
    %v6415 = vadd.f32 0.0, %v6414
    %v6416 = vpop.f32.mrb[0].mxu0
    %v6417 = vpop.f32.mrb[0].mxu0
    %v6418 = vadd.f32 0.0, %v6417
    %v6419 = vpop.f32.mrb[0].mxu0
    %6420 = vmatprep.mubr.bf16.mxu0 0
    %6421 = vmatmul.mubr.bf16.gmra.mrb[0].mxu0 %v6339
    %v6422 = vpop.f32.mrb[0].mxu0
    %v6423 = vadd.f32 0.0, %v6422
    %v6424 = vpop.f32.mrb[0].mxu0
    %v6425 = vpop.f32.mrb[0].mxu0
    %v6426 = vpop.f32.mrb[0].mxu0
    %6427 = vdwg.mxu0
    %6428 = vrot.lane.b32.xlu0 %v5617, 112
    %v6429 = vpop.permute.xlu0 %6428
    %6430 = vrot.lane.b32.xlu0 %v5618, 112
    %v6431 = vpop.permute.xlu0 %6430
    %6432 = vrot.lane.b32.xlu0 %v5619, 112
    %v6433 = vpop.permute.xlu0 %6432
    %6434 = vrot.lane.b32.xlu0 %v5620, 112
    %v6435 = vpop.permute.xlu0 %6434
    %6436 = vrot.lane.b32.xlu0 %v5621, 112
    %v6437 = vpop.permute.xlu0 %6436
    %6438 = vrot.lane.b32.xlu0 %v5617, 80
    %v6439 = vpop.permute.xlu0 %6438
    %6440 = vrot.lane.b32.xlu0 %v5618, 80
    %v6441 = vpop.permute.xlu0 %6440
    %6442 = vrot.lane.b32.xlu0 %v5619, 80
    %v6443 = vpop.permute.xlu0 %6442
    %6444 = vrot.lane.b32.xlu0 %v5620, 80
    %v6445 = vpop.permute.xlu0 %6444
    %6446 = vrot.lane.b32.xlu0 %v5621, 80
    %v6447 = vpop.permute.xlu0 %6446
    %v6449 = vsel %vm822, %v6429, 0
    %v6452 = vsel %vm822, %v6431, 0
    %v6455 = vsel %vm822, %v6433, 0
    %v6458 = vsel %vm822, %v6435, 0
    %v6461 = vsel %vm822, %v6437, 0
    %v6464 = vsel %vm822, %v6439, 0
    %v6467 = vsel %vm822, %v6441, 0
    %v6470 = vsel %vm822, %v6443, 0
    %v6473 = vsel %vm822, %v6445, 0
    %v6476 = vsel %vm822, %v6447, 0
    %6478 = vmatprep.subr.bf16.mxu0 0
    %6479 = vmatpush1.bf16.xpose.msra.mxu0 %v6464
    %6480 = vmatprep.subr.bf16.mxu0 0
    %6481 = vmatpush1.bf16.xpose.msra.mxu0 %v6467
    %6482 = vmatprep.subr.bf16.mxu0 0
    %6483 = vmatpush1.bf16.xpose.msra.mxu0 %v6470
    %6484 = vmatprep.subr.bf16.mxu0 0
    %6485 = vmatpush1.bf16.xpose.msra.mxu0 %v6473
    %6486 = vmatprep.subr.bf16.mxu0 0
    %6487 = vmatpush1.bf16.xpose.msra.mxu0 %v6476
    %6488 = vmatprep.subr.bf16.mxu0 0
    %6489 = vmatpush1.bf16.xpose.msra.mxu0 0
    %6490 = vmatprep.subr.bf16.mxu0 0
    %6491 = vmatpush1.bf16.xpose.msra.mxu0 0
    %6492 = vmatprep.subr.bf16.mxu0 0
    %6493 = vmatpush1.bf16.xpose.msra.mxu0 0
    %6494 = vmatprep.subr.bf16.mxu0 0
    %6495 = vmatpush1.bf16.xpose.msra.mxu0 0
    %6496 = vmatprep.subr.bf16.mxu0 0
    %6497 = vmatpush1.bf16.xpose.msra.mxu0 0
    %6498 = vmatprep.subr.bf16.mxu0 0
    %6499 = vmatpush1.bf16.xpose.msra.mxu0 0
    %6500 = vmatprep.subr.bf16.mxu0 0
    %6501 = vmatpush1.bf16.xpose.msra.mxu0 0
    %6502 = vmatprep.subr.bf16.mxu0 0
    %6503 = vmatpush1.bf16.xpose.msra.mxu0 0
    %6504 = vmatprep.subr.bf16.mxu0 0
    %6505 = vmatpush1.bf16.xpose.msra.mxu0 0
    %6506 = vmatprep.subr.bf16.mxu0 0
    %6507 = vmatpush1.bf16.xpose.msra.mxu0 0
    %6508 = vmatprep.subr.bf16.mxu0 0
    %6509 = vmatpush1.bf16.xpose.msra.mxu0 0
    %6510 = vmatprep.mubr.bf16.mxu0 0
    %6511 = vmatmul.mubr.bf16.gmra.mrb[0].mxu0 %v6449
    %v6512 = vpop.f32.mrb[0].mxu0
    %v6513 = vadd.f32 0.0, %v6512
    %v6514 = vpop.f32.mrb[0].mxu0
    %v6515 = vpop.f32.mrb[0].mxu0
    %v6516 = vadd.f32 0.0, %v6515
    %v6517 = vpop.f32.mrb[0].mxu0
    %6518 = vmatprep.mubr.bf16.mxu0 0
    %6519 = vmatmul.mubr.bf16.gmra.mrb[0].mxu0 %v6452
    %v6520 = vpop.f32.mrb[0].mxu0
    %v6521 = vadd.f32 0.0, %v6520
    %v6522 = vpop.f32.mrb[0].mxu0
    %v6523 = vpop.f32.mrb[0].mxu0
    %v6524 = vadd.f32 0.0, %v6523
    %v6525 = vpop.f32.mrb[0].mxu0
    %6526 = vmatprep.mubr.bf16.mxu0 0
    %6527 = vmatmul.mubr.bf16.gmra.mrb[0].mxu0 %v6455
    %v6528 = vpop.f32.mrb[0].mxu0
    %v6529 = vadd.f32 0.0, %v6528
    %v6530 = vpop.f32.mrb[0].mxu0
    %v6531 = vpop.f32.mrb[0].mxu0
    %v6532 = vadd.f32 0.0, %v6531
    %v6533 = vpop.f32.mrb[0].mxu0
    %6534 = vmatprep.mubr.bf16.mxu0 0
    %6535 = vmatmul.mubr.bf16.gmra.mrb[0].mxu0 %v6458
    %v6536 = vpop.f32.mrb[0].mxu0
    %v6537 = vadd.f32 0.0, %v6536
    %v6538 = vpop.f32.mrb[0].mxu0
    %v6539 = vpop.f32.mrb[0].mxu0
    %v6540 = vadd.f32 0.0, %v6539
    %v6541 = vpop.f32.mrb[0].mxu0
    %6542 = vmatprep.mubr.bf16.mxu0 0
    %6543 = vmatmul.mubr.bf16.gmra.mrb[0].mxu0 %v6461
    %v6544 = vpop.f32.mrb[0].mxu0
    %v6545 = vadd.f32 0.0, %v6544
    %v6546 = vpop.f32.mrb[0].mxu0
    %v6547 = vpop.f32.mrb[0].mxu0
    %v6548 = vpop.f32.mrb[0].mxu0
    %6549 = vdwg.mxu0
    %v6550 = vsel %vm2112, %v6391, -inf
    %6551 = vmax.xlane.f32.xlu0 %v6550
    %v6552 = vpop.xlane.xlu0 %6551
    %v6553 = vsel %vm2112, %v6394, -inf
    %6554 = vmax.xlane.f32.xlu0 %v6553
    %v6555 = vpop.xlane.xlu0 %6554
    %v6556 = vsel %vm2112, %v6399, -inf
    %6557 = vmax.xlane.f32.xlu0 %v6556
    %v6558 = vpop.xlane.xlu0 %6557
    %v6559 = vsel %vm2112, %v6402, -inf
    %6560 = vmax.xlane.f32.xlu0 %v6559
    %v6561 = vpop.xlane.xlu0 %6560
    %v6562 = vsel %vm2112, %v6407, -inf
    %6563 = vmax.xlane.f32.xlu0 %v6562
    %v6564 = vpop.xlane.xlu0 %6563
    %v6565 = vsel %vm2112, %v6410, -inf
    %6566 = vmax.xlane.f32.xlu0 %v6565
    %v6567 = vpop.xlane.xlu0 %6566
    %v6568 = vsel %vm2112, %v6415, -inf
    %6569 = vmax.xlane.f32.xlu0 %v6568
    %v6570 = vpop.xlane.xlu0 %6569
    %v6571 = vsel %vm2112, %v6418, -inf
    %6572 = vmax.xlane.f32.xlu0 %v6571
    %v6573 = vpop.xlane.xlu0 %6572
    %v6574 = vsel %vm2112, %v6423, -inf
    %6575 = vmax.xlane.f32.xlu0 %v6574
    %v6576 = vpop.xlane.xlu0 %6575
    %v6577 = vsel %vm2112, %v6513, -inf
    %6578 = vmax.xlane.f32.xlu0 %v6577
    %v6579 = vpop.xlane.xlu0 %6578
    %v6580 = vsel %vm2112, %v6516, -inf
    %6581 = vmax.xlane.f32.xlu0 %v6580
    %v6582 = vpop.xlane.xlu0 %6581
    %v6583 = vsel %vm2112, %v6521, -inf
    %6584 = vmax.xlane.f32.xlu0 %v6583
    %v6585 = vpop.xlane.xlu0 %6584
    %v6586 = vsel %vm2112, %v6524, -inf
    %6587 = vmax.xlane.f32.xlu0 %v6586
    %v6588 = vpop.xlane.xlu0 %6587
    %v6589 = vsel %vm2112, %v6529, -inf
    %6590 = vmax.xlane.f32.xlu0 %v6589
    %v6591 = vpop.xlane.xlu0 %6590
    %v6592 = vsel %vm2112, %v6532, -inf
    %6593 = vmax.xlane.f32.xlu0 %v6592
    %v6594 = vpop.xlane.xlu0 %6593
    %v6595 = vsel %vm2112, %v6537, -inf
    %6596 = vmax.xlane.f32.xlu0 %v6595
    %v6597 = vpop.xlane.xlu0 %6596
    %v6598 = vsel %vm2112, %v6540, -inf
    %6599 = vmax.xlane.f32.xlu0 %v6598
    %v6600 = vpop.xlane.xlu0 %6599
    %v6601 = vsel %vm2112, %v6545, -inf
    %6602 = vmax.xlane.f32.xlu0 %v6601
    %v6603 = vpop.xlane.xlu0 %6602
    %v6604 = vsub.f32 %v6391, %v6552
    %v6605 = vsub.f32 %v6394, %v6555
    %v6606 = vsub.f32 %v6399, %v6558
    %v6607 = vsub.f32 %v6402, %v6561
    %v6608 = vsub.f32 %v6407, %v6564
    %v6609 = vsub.f32 %v6410, %v6567
    %v6610 = vsub.f32 %v6415, %v6570
    %v6611 = vsub.f32 %v6418, %v6573
    %v6612 = vsub.f32 %v6423, %v6576
    %v6613 = vsub.f32 %v6513, %v6579
    %v6614 = vsub.f32 %v6516, %v6582
    %v6615 = vsub.f32 %v6521, %v6585
    %v6616 = vsub.f32 %v6524, %v6588
    %v6617 = vsub.f32 %v6529, %v6591
    %v6618 = vsub.f32 %v6532, %v6594
    %v6619 = vsub.f32 %v6537, %v6597
    %v6620 = vsub.f32 %v6540, %v6600
    %v6621 = vsub.f32 %v6545, %v6603
    %v6622 = vmul.f32 %v6604, 1.442695
    %v6623 = vpow.pop %v6622
    %v6624 = vmul.f32 %v6605, 1.442695
    %v6625 = vpow.pop %v6624
    %v6626 = vmul.f32 %v6606, 1.442695
    %v6627 = vpow.pop %v6626
    %v6628 = vmul.f32 %v6607, 1.442695
    %v6629 = vpow.pop %v6628
    %v6630 = vmul.f32 %v6608, 1.442695
    %v6631 = vpow.pop %v6630
    %v6632 = vmul.f32 %v6609, 1.442695
    %v6633 = vpow.pop %v6632
    %v6634 = vmul.f32 %v6610, 1.442695
    %v6635 = vpow.pop %v6634
    %v6636 = vmul.f32 %v6611, 1.442695
    %v6637 = vpow.pop %v6636
    %v6638 = vmul.f32 %v6612, 1.442695
    %v6639 = vpow.pop %v6638
    %v6640 = vmul.f32 %v6613, 1.442695
    %v6641 = vpow.pop %v6640
    %v6642 = vmul.f32 %v6614, 1.442695
    %v6643 = vpow.pop %v6642
    %v6644 = vmul.f32 %v6615, 1.442695
    %v6645 = vpow.pop %v6644
    %v6646 = vmul.f32 %v6616, 1.442695
    %v6647 = vpow.pop %v6646
    %v6648 = vmul.f32 %v6617, 1.442695
    %v6649 = vpow.pop %v6648
    %v6650 = vmul.f32 %v6618, 1.442695
    %v6651 = vpow.pop %v6650
    %v6652 = vmul.f32 %v6619, 1.442695
    %v6653 = vpow.pop %v6652
    %v6654 = vmul.f32 %v6620, 1.442695
    %v6655 = vpow.pop %v6654
    %v6656 = vmul.f32 %v6621, 1.442695
    %v6657 = vpow.pop %v6656
    %v6658 = vsel %vm2112, %v6623, 0.0
    %6659 = vadd.xlane.f32.xlu0 %v6658
    %v6660 = vpop.xlane.xlu0 %6659
    %v6661 = vsel %vm2112, %v6625, 0.0
    %6662 = vadd.xlane.f32.xlu0 %v6661
    %v6663 = vpop.xlane.xlu0 %6662
    %v6664 = vsel %vm2112, %v6627, 0.0
    %6665 = vadd.xlane.f32.xlu0 %v6664
    %v6666 = vpop.xlane.xlu0 %6665
    %v6667 = vsel %vm2112, %v6629, 0.0
    %6668 = vadd.xlane.f32.xlu0 %v6667
    %v6669 = vpop.xlane.xlu0 %6668
    %v6670 = vsel %vm2112, %v6631, 0.0
    %6671 = vadd.xlane.f32.xlu0 %v6670
    %v6672 = vpop.xlane.xlu0 %6671
    %v6673 = vsel %vm2112, %v6633, 0.0
    %6674 = vadd.xlane.f32.xlu0 %v6673
    %v6675 = vpop.xlane.xlu0 %6674
    %v6676 = vsel %vm2112, %v6635, 0.0
    %6677 = vadd.xlane.f32.xlu0 %v6676
    %v6678 = vpop.xlane.xlu0 %6677
    %v6679 = vsel %vm2112, %v6637, 0.0
    %6680 = vadd.xlane.f32.xlu0 %v6679
    %v6681 = vpop.xlane.xlu0 %6680
    %v6682 = vsel %vm2112, %v6641, 0.0
    %6683 = vadd.xlane.f32.xlu0 %v6682
    %v6684 = vpop.xlane.xlu0 %6683
    %v6685 = vsel %vm2112, %v6643, 0.0
    %6686 = vadd.xlane.f32.xlu0 %v6685
    %v6687 = vpop.xlane.xlu0 %6686
    %v6688 = vsel %vm2112, %v6645, 0.0
    %6689 = vadd.xlane.f32.xlu0 %v6688
    %v6690 = vpop.xlane.xlu0 %6689
    %v6691 = vsel %vm2112, %v6647, 0.0
    %6692 = vadd.xlane.f32.xlu0 %v6691
    %v6693 = vpop.xlane.xlu0 %6692
    %v6694 = vsel %vm2112, %v6649, 0.0
    %6695 = vadd.xlane.f32.xlu0 %v6694
    %v6696 = vpop.xlane.xlu0 %6695
    %v6697 = vsel %vm2112, %v6651, 0.0
    %6698 = vadd.xlane.f32.xlu0 %v6697
    %v6699 = vpop.xlane.xlu0 %6698
    %v6700 = vsel %vm2112, %v6653, 0.0
    %6701 = vadd.xlane.f32.xlu0 %v6700
    %v6702 = vpop.xlane.xlu0 %6701
    %v6703 = vsel %vm2112, %v6655, 0.0
    %6704 = vadd.xlane.f32.xlu0 %v6703
    %v6705 = vpop.xlane.xlu0 %6704
    %v6706 = vpack.c.bf16 %v6625, %v6623
    %v6707 = vpack.c.bf16 %v6629, %v6627
    %v6708 = vpack.c.bf16 %v6633, %v6631
    %v6709 = vpack.c.bf16 %v6637, %v6635
    %v6710 = vpack.c.bf16 %v6639, %v6639
    %v6711 = vpack.c.bf16 %v6643, %v6641
    %v6712 = vpack.c.bf16 %v6647, %v6645
    %v6713 = vpack.c.bf16 %v6651, %v6649
    %v6714 = vpack.c.bf16 %v6655, %v6653
    %v6715 = vpack.c.bf16 %v6657, %v6657
    %6721 = vrot.lane.b32.xlu0 %v6296, 64
    %v6722 = vpop.permute.xlu0 %6721
    %6723 = vrot.lane.b32.xlu0 %v6297, 64
    %v6724 = vpop.permute.xlu0 %6723
    %6725 = vrot.lane.b32.xlu0 %v6298, 64
    %v6726 = vpop.permute.xlu0 %6725
    %6727 = vrot.lane.b32.xlu0 %v6299, 64
    %v6728 = vpop.permute.xlu0 %6727
    %6729 = vrot.lane.b32.xlu0 %v6300, 64
    %v6730 = vpop.permute.xlu0 %6729
    %v6736 = vsel %vm2112, %v6706, 0
    %v6739 = vsel %vm2112, %v6707, 0
    %v6742 = vsel %vm2112, %v6708, 0
    %v6745 = vsel %vm2112, %v6709, 0
    %v6748 = vsel %vm2112, %v6710, 0
    %v6751 = vsel %vm2319, %v6730, 0
    %6753 = vmatprep.subr.bf16.mxu0 0
    %6754 = vmatpush1.bf16.msra.mxu0 %v6722
    %6755 = vmatprep.subr.bf16.mxu0 0
    %6756 = vmatpush1.bf16.msra.mxu0 %v6724
    %6757 = vmatprep.subr.bf16.mxu0 0
    %6758 = vmatpush1.bf16.msra.mxu0 %v6726
    %6759 = vmatprep.subr.bf16.mxu0 0
    %6760 = vmatpush1.bf16.msra.mxu0 %v6728
    %6761 = vmatprep.subr.bf16.mxu0 0
    %6762 = vmatpush1.bf16.msra.mxu0 %v6751
    %6763 = vmatprep.subr.bf16.mxu0 0
    %6764 = vmatpush1.bf16.msra.mxu0 0
    %6765 = vmatprep.subr.bf16.mxu0 0
    %6766 = vmatpush1.bf16.msra.mxu0 0
    %6767 = vmatprep.subr.bf16.mxu0 0
    %6768 = vmatpush1.bf16.msra.mxu0 0
    %6769 = vmatprep.subr.bf16.mxu0 0
    %6770 = vmatpush1.bf16.msra.mxu0 0
    %6771 = vmatprep.subr.bf16.mxu0 0
    %6772 = vmatpush1.bf16.msra.mxu0 0
    %6773 = vmatprep.subr.bf16.mxu0 0
    %6774 = vmatpush1.bf16.msra.mxu0 0
    %6775 = vmatprep.subr.bf16.mxu0 0
    %6776 = vmatpush1.bf16.msra.mxu0 0
    %6777 = vmatprep.subr.bf16.mxu0 0
    %6778 = vmatpush1.bf16.msra.mxu0 0
    %6779 = vmatprep.subr.bf16.mxu0 0
    %6780 = vmatpush1.bf16.msra.mxu0 0
    %6781 = vmatprep.subr.bf16.mxu0 0
    %6782 = vmatpush1.bf16.msra.mxu0 0
    %6783 = vmatprep.subr.bf16.mxu0 0
    %6784 = vmatpush1.bf16.msra.mxu0 0
    %6785 = vmatprep.mubr.bf16.mxu0 0
    %6786 = vmatmul.mubr.bf16.gmra.mrb[0].mxu0 %v6736
    %v6787 = vpop.f32.mrb[0].mxu0
    %v6788 = vadd.f32 0.0, %v6787
    %v6789 = vpop.f32.mrb[0].mxu0
    %v6790 = vpop.f32.mrb[0].mxu0
    %v6791 = vadd.f32 0.0, %v6790
    %v6792 = vpop.f32.mrb[0].mxu0
    %6793 = vmatprep.mubr.bf16.mxu0 0
    %6794 = vmatmul.mubr.bf16.gmra.mrb[0].mxu0 %v6739
    %v6795 = vpop.f32.mrb[0].mxu0
    %v6796 = vadd.f32 0.0, %v6795
    %v6797 = vpop.f32.mrb[0].mxu0
    %v6798 = vpop.f32.mrb[0].mxu0
    %v6799 = vadd.f32 0.0, %v6798
    %v6800 = vpop.f32.mrb[0].mxu0
    %6801 = vmatprep.mubr.bf16.mxu0 0
    %6802 = vmatmul.mubr.bf16.gmra.mrb[0].mxu0 %v6742
    %v6803 = vpop.f32.mrb[0].mxu0
    %v6804 = vadd.f32 0.0, %v6803
    %v6805 = vpop.f32.mrb[0].mxu0
    %v6806 = vpop.f32.mrb[0].mxu0
    %v6807 = vadd.f32 0.0, %v6806
    %v6808 = vpop.f32.mrb[0].mxu0
    %6809 = vmatprep.mubr.bf16.mxu0 0
    %6810 = vmatmul.mubr.bf16.gmra.mrb[0].mxu0 %v6745
    %v6811 = vpop.f32.mrb[0].mxu0
    %v6812 = vadd.f32 0.0, %v6811
    %v6813 = vpop.f32.mrb[0].mxu0
    %v6814 = vpop.f32.mrb[0].mxu0
    %v6815 = vadd.f32 0.0, %v6814
    %v6816 = vpop.f32.mrb[0].mxu0
    %6817 = vmatprep.mubr.bf16.mxu0 0
    %6818 = vmatmul.mubr.bf16.gmra.mrb[0].mxu0 %v6748
    %v6819 = vpop.f32.mrb[0].mxu0
    %v6820 = vpop.f32.mrb[0].mxu0
    %v6821 = vpop.f32.mrb[0].mxu0
    %v6822 = vpop.f32.mrb[0].mxu0
    %6823 = vdwg.mxu0
    %6829 = vrot.lane.b32.xlu0 %v6301, 64
    %v6830 = vpop.permute.xlu0 %6829
    %6831 = vrot.lane.b32.xlu0 %v6302, 64
    %v6832 = vpop.permute.xlu0 %6831
    %6833 = vrot.lane.b32.xlu0 %v6303, 64
    %v6834 = vpop.permute.xlu0 %6833
    %6835 = vrot.lane.b32.xlu0 %v6304, 64
    %v6836 = vpop.permute.xlu0 %6835
    %6837 = vrot.lane.b32.xlu0 %v6305, 64
    %v6838 = vpop.permute.xlu0 %6837
    %v6844 = vsel %vm2112, %v6711, 0
    %v6847 = vsel %vm2112, %v6712, 0
    %v6850 = vsel %vm2112, %v6713, 0
    %v6853 = vsel %vm2112, %v6714, 0
    %v6856 = vsel %vm2112, %v6715, 0
    %v6859 = vsel %vm2319, %v6838, 0
    %6861 = vmatprep.subr.bf16.mxu0 0
    %6862 = vmatpush1.bf16.msra.mxu0 %v6830
    %6863 = vmatprep.subr.bf16.mxu0 0
    %6864 = vmatpush1.bf16.msra.mxu0 %v6832
    %6865 = vmatprep.subr.bf16.mxu0 0
    %6866 = vmatpush1.bf16.msra.mxu0 %v6834
    %6867 = vmatprep.subr.bf16.mxu0 0
    %6868 = vmatpush1.bf16.msra.mxu0 %v6836
    %6869 = vmatprep.subr.bf16.mxu0 0
    %6870 = vmatpush1.bf16.msra.mxu0 %v6859
    %6871 = vmatprep.subr.bf16.mxu0 0
    %6872 = vmatpush1.bf16.msra.mxu0 0
    %6873 = vmatprep.subr.bf16.mxu0 0
    %6874 = vmatpush1.bf16.msra.mxu0 0
    %6875 = vmatprep.subr.bf16.mxu0 0
    %6876 = vmatpush1.bf16.msra.mxu0 0
    %6877 = vmatprep.subr.bf16.mxu0 0
    %6878 = vmatpush1.bf16.msra.mxu0 0
    %6879 = vmatprep.subr.bf16.mxu0 0
    %6880 = vmatpush1.bf16.msra.mxu0 0
    %6881 = vmatprep.subr.bf16.mxu0 0
    %6882 = vmatpush1.bf16.msra.mxu0 0
    %6883 = vmatprep.subr.bf16.mxu0 0
    %6884 = vmatpush1.bf16.msra.mxu0 0
    %6885 = vmatprep.subr.bf16.mxu0 0
    %6886 = vmatpush1.bf16.msra.mxu0 0
    %6887 = vmatprep.subr.bf16.mxu0 0
    %6888 = vmatpush1.bf16.msra.mxu0 0
    %6889 = vmatprep.subr.bf16.mxu0 0
    %6890 = vmatpush1.bf16.msra.mxu0 0
    %6891 = vmatprep.subr.bf16.mxu0 0
    %6892 = vmatpush1.bf16.msra.mxu0 0
    %6893 = vmatprep.mubr.bf16.mxu0 0
    %6894 = vmatmul.mubr.bf16.gmra.mrb[0].mxu0 %v6844
    %v6895 = vpop.f32.mrb[0].mxu0
    %v6896 = vadd.f32 0.0, %v6895
    %v6897 = vpop.f32.mrb[0].mxu0
    %v6898 = vpop.f32.mrb[0].mxu0
    %v6899 = vadd.f32 0.0, %v6898
    %v6900 = vpop.f32.mrb[0].mxu0
    %6901 = vmatprep.mubr.bf16.mxu0 0
    %6902 = vmatmul.mubr.bf16.gmra.mrb[0].mxu0 %v6847
    %v6903 = vpop.f32.mrb[0].mxu0
    %v6904 = vadd.f32 0.0, %v6903
    %v6905 = vpop.f32.mrb[0].mxu0
    %v6906 = vpop.f32.mrb[0].mxu0
    %v6907 = vadd.f32 0.0, %v6906
    %v6908 = vpop.f32.mrb[0].mxu0
    %6909 = vmatprep.mubr.bf16.mxu0 0
    %6910 = vmatmul.mubr.bf16.gmra.mrb[0].mxu0 %v6850
    %v6911 = vpop.f32.mrb[0].mxu0
    %v6912 = vadd.f32 0.0, %v6911
    %v6913 = vpop.f32.mrb[0].mxu0
    %v6914 = vpop.f32.mrb[0].mxu0
    %v6915 = vadd.f32 0.0, %v6914
    %v6916 = vpop.f32.mrb[0].mxu0
    %6917 = vmatprep.mubr.bf16.mxu0 0
    %6918 = vmatmul.mubr.bf16.gmra.mrb[0].mxu0 %v6853
    %v6919 = vpop.f32.mrb[0].mxu0
    %v6920 = vadd.f32 0.0, %v6919
    %v6921 = vpop.f32.mrb[0].mxu0
    %v6922 = vpop.f32.mrb[0].mxu0
    %v6923 = vadd.f32 0.0, %v6922
    %v6924 = vpop.f32.mrb[0].mxu0
    %6925 = vmatprep.mubr.bf16.mxu0 0
    %6926 = vmatmul.mubr.bf16.gmra.mrb[0].mxu0 %v6856
    %v6927 = vpop.f32.mrb[0].mxu0
    %v6928 = vpop.f32.mrb[0].mxu0
    %v6929 = vpop.f32.mrb[0].mxu0
    %v6930 = vpop.f32.mrb[0].mxu0
    %6931 = vdwg.mxu0
    %v6932 = vrcp.pop %v6660
    %v6933 = vrcp.pop %v6663
    %v6934 = vrcp.pop %v6666
    %v6935 = vrcp.pop %v6669
    %v6936 = vrcp.pop %v6672
    %v6937 = vrcp.pop %v6675
    %v6938 = vrcp.pop %v6678
    %v6939 = vrcp.pop %v6681
    %v6940 = vrcp.pop %v6684
    %v6941 = vrcp.pop %v6687
    %v6942 = vrcp.pop %v6690
    %v6943 = vrcp.pop %v6693
    %v6944 = vrcp.pop %v6696
    %v6945 = vrcp.pop %v6699
    %v6946 = vrcp.pop %v6702
    %v6947 = vrcp.pop %v6705
    %v6948 = vmul.f32 %v6788, %v6932
    %v6949 = vmul.f32 %v6791, %v6933
    %v6950 = vmul.f32 %v6796, %v6934
    %v6951 = vmul.f32 %v6799, %v6935
    %v6952 = vmul.f32 %v6804, %v6936
    %v6953 = vmul.f32 %v6807, %v6937
    %v6954 = vmul.f32 %v6812, %v6938
    %v6955 = vmul.f32 %v6815, %v6939
    %v6956 = vmul.f32 %v6896, %v6940
    %v6957 = vmul.f32 %v6899, %v6941
    %v6958 = vmul.f32 %v6904, %v6942
    %v6959 = vmul.f32 %v6907, %v6943
    %v6960 = vmul.f32 %v6912, %v6944
    %v6961 = vmul.f32 %v6915, %v6945
    %v6962 = vmul.f32 %v6920, %v6946
    %v6963 = vmul.f32 %v6923, %v6947
    %v6964 = vadd.f32 %v6280, %v6948
    %v6965 = vadd.f32 %v6281, %v6949
    %v6966 = vadd.f32 %v6282, %v6950
    %v6967 = vadd.f32 %v6283, %v6951
    %v6968 = vadd.f32 %v6284, %v6952
    %v6969 = vadd.f32 %v6285, %v6953
    %v6970 = vadd.f32 %v6286, %v6954
    %v6971 = vadd.f32 %v6287, %v6955
    %v6972 = vadd.f32 %v6288, %v6956
    %v6973 = vadd.f32 %v6289, %v6957
    %v6974 = vadd.f32 %v6290, %v6958
    %v6975 = vadd.f32 %v6291, %v6959
    %v6976 = vadd.f32 %v6292, %v6960
    %v6977 = vadd.f32 %v6293, %v6961
    %v6978 = vadd.f32 %v6294, %v6962
    %v6979 = vadd.f32 %v6295, %v6963
    %v6980 = vpack.c.bf16 %v6965, %v6964
    %v6981 = vpack.c.bf16 %v6967, %v6966
    %v6982 = vpack.c.bf16 %v6969, %v6968
    %v6983 = vpack.c.bf16 %v6971, %v6970
    %v6984 = vpack.c.bf16 %v6973, %v6972
    %v6985 = vpack.c.bf16 %v6975, %v6974
    %v6986 = vpack.c.bf16 %v6977, %v6976
    %v6987 = vpack.c.bf16 %v6979, %v6978
    %v6988 = vld [vmem:[%s91] sm:$0xf]
    %v6989 = vld [vmem:[%s91 + $0x4] sm:$0xf]
    %v6990 = vld [vmem:[%s91 + $0x8] sm:$0xf]
    %v6991 = vld [vmem:[%s91 + $0xc] sm:$0xf]
    %v6992 = vld [vmem:[#allocation13] sm:$0x1]
    %v6994 = vlaneseq
    %v6995 = vshrl.u32 %v6994, 7
    %v6996 = vsub.s32 0, %v6995
    %v6997 = vrot.slane %v6992, %v6996
    %v7003 = vunpack.c.l.b16 %v6988
    %v7004 = vunpack.c.l.b16 %v6989
    %v7005 = vunpack.c.l.b16 %v6990
    %v7006 = vunpack.c.l.b16 %v6991
    %v7007 = vpack.c.b16 %v7004, %v7003
    %v7008 = vpack.c.b16 %v7006, %v7005
    %v7012 = vsel %vm588, %v6980, 0
    %v7015 = vsel %vm588, %v6981, 0
    %v7018 = vsel %vm588, %v6982, 0
    %v7021 = vsel %vm588, %v6983, 0
    %v7024 = vsel %vm588, %v6984, 0
    %v7027 = vsel %vm588, %v6985, 0
    %v7030 = vsel %vm588, %v6986, 0
    %v7033 = vsel %vm588, %v6987, 0
    %7035 = vmatprep.subr.bf16.mxu0 0
    %7036 = vmatpush1.bf16.msra.mxu0 %v7007
    %7037 = vmatprep.subr.bf16.mxu0 0
    %7038 = vmatpush1.bf16.msra.mxu0 %v7008
    %7039 = vmatprep.subr.bf16.mxu0 0
    %7040 = vmatpush1.bf16.msra.mxu0 0
    %7041 = vmatprep.subr.bf16.mxu0 0
    %7042 = vmatpush1.bf16.msra.mxu0 0
    %7043 = vmatprep.subr.bf16.mxu0 0
    %7044 = vmatpush1.bf16.msra.mxu0 0
    %7045 = vmatprep.subr.bf16.mxu0 0
    %7046 = vmatpush1.bf16.msra.mxu0 0
    %7047 = vmatprep.subr.bf16.mxu0 0
    %7048 = vmatpush1.bf16.msra.mxu0 0
    %7049 = vmatprep.subr.bf16.mxu0 0
    %7050 = vmatpush1.bf16.msra.mxu0 0
    %7051 = vmatprep.subr.bf16.mxu0 0
    %7052 = vmatpush1.bf16.msra.mxu0 0
    %7053 = vmatprep.subr.bf16.mxu0 0
    %7054 = vmatpush1.bf16.msra.mxu0 0
    %7055 = vmatprep.subr.bf16.mxu0 0
    %7056 = vmatpush1.bf16.msra.mxu0 0
    %7057 = vmatprep.subr.bf16.mxu0 0
    %7058 = vmatpush1.bf16.msra.mxu0 0
    %7059 = vmatprep.subr.bf16.mxu0 0
    %7060 = vmatpush1.bf16.msra.mxu0 0
    %7061 = vmatprep.subr.bf16.mxu0 0
    %7062 = vmatpush1.bf16.msra.mxu0 0
    %7063 = vmatprep.subr.bf16.mxu0 0
    %7064 = vmatpush1.bf16.msra.mxu0 0
    %7065 = vmatprep.subr.bf16.mxu0 0
    %7066 = vmatpush1.bf16.msra.mxu0 0
    %7067 = vmatprep.mubr.bf16.mxu0 0
    %7068 = vmatmul.mubr.bf16.gmra.mrb[0].mxu0 %v7012
    %v7069 = vpop.f32.mrb[0].mxu0
    %v7070 = vadd.f32 %v6997, %v7069
    %v7071 = vpop.f32.mrb[0].mxu0
    %v7072 = vpop.f32.mrb[0].mxu0
    %v7073 = vadd.f32 %v6997, %v7072
    %v7074 = vpop.f32.mrb[0].mxu0
    %7075 = vmatprep.mubr.bf16.mxu0 0
    %7076 = vmatmul.mubr.bf16.gmra.mrb[0].mxu0 %v7015
    %v7077 = vpop.f32.mrb[0].mxu0
    %v7078 = vadd.f32 %v6997, %v7077
    %v7079 = vpop.f32.mrb[0].mxu0
    %v7080 = vpop.f32.mrb[0].mxu0
    %v7081 = vadd.f32 %v6997, %v7080
    %v7082 = vpop.f32.mrb[0].mxu0
    %7083 = vmatprep.mubr.bf16.mxu0 0
    %7084 = vmatmul.mubr.bf16.gmra.mrb[0].mxu0 %v7018
    %v7085 = vpop.f32.mrb[0].mxu0
    %v7086 = vadd.f32 %v6997, %v7085
    %v7087 = vpop.f32.mrb[0].mxu0
    %v7088 = vpop.f32.mrb[0].mxu0
    %v7089 = vadd.f32 %v6997, %v7088
    %v7090 = vpop.f32.mrb[0].mxu0
    %7091 = vmatprep.mubr.bf16.mxu0 0
    %7092 = vmatmul.mubr.bf16.gmra.mrb[0].mxu0 %v7021
    %v7093 = vpop.f32.mrb[0].mxu0
    %v7094 = vadd.f32 %v6997, %v7093
    %v7095 = vpop.f32.mrb[0].mxu0
    %v7096 = vpop.f32.mrb[0].mxu0
    %v7097 = vadd.f32 %v6997, %v7096
    %v7098 = vpop.f32.mrb[0].mxu0
    %7099 = vmatprep.mubr.bf16.mxu0 0
    %7100 = vmatmul.mubr.bf16.gmra.mrb[0].mxu0 %v7024
    %v7101 = vpop.f32.mrb[0].mxu0
    %v7102 = vadd.f32 %v6997, %v7101
    %v7103 = vpop.f32.mrb[0].mxu0
    %v7104 = vpop.f32.mrb[0].mxu0
    %v7105 = vadd.f32 %v6997, %v7104
    %v7106 = vpop.f32.mrb[0].mxu0
    %7107 = vmatprep.mubr.bf16.mxu0 0
    %7108 = vmatmul.mubr.bf16.gmra.mrb[0].mxu0 %v7027
    %v7109 = vpop.f32.mrb[0].mxu0
    %v7110 = vadd.f32 %v6997, %v7109
    %v7111 = vpop.f32.mrb[0].mxu0
    %v7112 = vpop.f32.mrb[0].mxu0
    %v7113 = vadd.f32 %v6997, %v7112
    %v7114 = vpop.f32.mrb[0].mxu0
    %7115 = vmatprep.mubr.bf16.mxu0 0
    %7116 = vmatmul.mubr.bf16.gmra.mrb[0].mxu0 %v7030
    %v7117 = vpop.f32.mrb[0].mxu0
    %v7118 = vadd.f32 %v6997, %v7117
    %v7119 = vpop.f32.mrb[0].mxu0
    %v7120 = vpop.f32.mrb[0].mxu0
    %v7121 = vadd.f32 %v6997, %v7120
    %v7122 = vpop.f32.mrb[0].mxu0
    %7123 = vmatprep.mubr.bf16.mxu0 0
    %7124 = vmatmul.mubr.bf16.gmra.mrb[0].mxu0 %v7033
    %v7125 = vpop.f32.mrb[0].mxu0
    %v7126 = vadd.f32 %v6997, %v7125
    %v7127 = vpop.f32.mrb[0].mxu0
    %v7128 = vpop.f32.mrb[0].mxu0
    %v7129 = vadd.f32 %v6997, %v7128
    %v7130 = vpop.f32.mrb[0].mxu0
    %7131 = vdwg.mxu0
    %7148 = vrot.lane.b32.xlu0 %v7070, 64
    %v7149 = vpop.permute.xlu0 %7148
    %7150 = vrot.lane.b32.xlu0 %v7073, 64
    %v7151 = vpop.permute.xlu0 %7150
    %7152 = vrot.lane.b32.xlu0 %v7078, 64
    %v7153 = vpop.permute.xlu0 %7152
    %7154 = vrot.lane.b32.xlu0 %v7081, 64
    %v7155 = vpop.permute.xlu0 %7154
    %7156 = vrot.lane.b32.xlu0 %v7086, 64
    %v7157 = vpop.permute.xlu0 %7156
    %7158 = vrot.lane.b32.xlu0 %v7089, 64
    %v7159 = vpop.permute.xlu0 %7158
    %7160 = vrot.lane.b32.xlu0 %v7094, 64
    %v7161 = vpop.permute.xlu0 %7160
    %7162 = vrot.lane.b32.xlu0 %v7097, 64
    %v7163 = vpop.permute.xlu0 %7162
    %7164 = vrot.lane.b32.xlu0 %v7102, 64
    %v7165 = vpop.permute.xlu0 %7164
    %7166 = vrot.lane.b32.xlu0 %v7105, 64
    %v7167 = vpop.permute.xlu0 %7166
    %7168 = vrot.lane.b32.xlu0 %v7110, 64
    %v7169 = vpop.permute.xlu0 %7168
    %7170 = vrot.lane.b32.xlu0 %v7113, 64
    %v7171 = vpop.permute.xlu0 %7170
    %7172 = vrot.lane.b32.xlu0 %v7118, 64
    %v7173 = vpop.permute.xlu0 %7172
    %7174 = vrot.lane.b32.xlu0 %v7121, 64
    %v7175 = vpop.permute.xlu0 %7174
    %7176 = vrot.lane.b32.xlu0 %v7126, 64
    %v7177 = vpop.permute.xlu0 %7176
    %7178 = vrot.lane.b32.xlu0 %v7129, 64
    %v7179 = vpop.permute.xlu0 %7178
    %v7196 = vmul.f32 %v5286, %v7149
    %v7197 = vmul.f32 %v5286, %v7151
    %v7198 = vmul.f32 %v5286, %v7153
    %v7199 = vmul.f32 %v5286, %v7155
    %v7200 = vmul.f32 %v5286, %v7157
    %v7201 = vmul.f32 %v5286, %v7159
    %v7202 = vmul.f32 %v5286, %v7161
    %v7203 = vmul.f32 %v5286, %v7163
    %v7204 = vmul.f32 %v5290, %v7165
    %v7205 = vmul.f32 %v5290, %v7167
    %v7206 = vmul.f32 %v5290, %v7169
    %v7207 = vmul.f32 %v5290, %v7171
    %v7208 = vmul.f32 %v5290, %v7173
    %v7209 = vmul.f32 %v5290, %v7175
    %v7210 = vmul.f32 %v5290, %v7177
    %v7211 = vmul.f32 %v5290, %v7179
    %7228 = vrot.lane.b32.xlu0 %v7196, 64
    %v7229 = vpop.permute.xlu0 %7228
    %7230 = vrot.lane.b32.xlu0 %v7197, 64
    %v7231 = vpop.permute.xlu0 %7230
    %7232 = vrot.lane.b32.xlu0 %v7198, 64
    %v7233 = vpop.permute.xlu0 %7232
    %7234 = vrot.lane.b32.xlu0 %v7199, 64
    %v7235 = vpop.permute.xlu0 %7234
    %7236 = vrot.lane.b32.xlu0 %v7200, 64
    %v7237 = vpop.permute.xlu0 %7236
    %7238 = vrot.lane.b32.xlu0 %v7201, 64
    %v7239 = vpop.permute.xlu0 %7238
    %7240 = vrot.lane.b32.xlu0 %v7202, 64
    %v7241 = vpop.permute.xlu0 %7240
    %7242 = vrot.lane.b32.xlu0 %v7203, 64
    %v7243 = vpop.permute.xlu0 %7242
    %7244 = vrot.lane.b32.xlu0 %v7204, 64
    %v7245 = vpop.permute.xlu0 %7244
    %7246 = vrot.lane.b32.xlu0 %v7205, 64
    %v7247 = vpop.permute.xlu0 %7246
    %7248 = vrot.lane.b32.xlu0 %v7206, 64
    %v7249 = vpop.permute.xlu0 %7248
    %7250 = vrot.lane.b32.xlu0 %v7207, 64
    %v7251 = vpop.permute.xlu0 %7250
    %7252 = vrot.lane.b32.xlu0 %v7208, 64
    %v7253 = vpop.permute.xlu0 %7252
    %7254 = vrot.lane.b32.xlu0 %v7209, 64
    %v7255 = vpop.permute.xlu0 %7254
    %7256 = vrot.lane.b32.xlu0 %v7210, 64
    %v7257 = vpop.permute.xlu0 %7256
    %7258 = vrot.lane.b32.xlu0 %v7211, 64
    %v7259 = vpop.permute.xlu0 %7258
    %v7276 = vadd.f32 %v4468, %v7229
    %v7277 = vadd.f32 %v4469, %v7231
    %v7278 = vadd.f32 %v4470, %v7233
    %v7279 = vadd.f32 %v4471, %v7235
    %v7280 = vadd.f32 %v4472, %v7237
    %v7281 = vadd.f32 %v4473, %v7239
    %v7282 = vadd.f32 %v4474, %v7241
    %v7283 = vadd.f32 %v4475, %v7243
    %v7284 = vadd.f32 %v4476, %v7245
    %v7285 = vadd.f32 %v4477, %v7247
    %v7286 = vadd.f32 %v4478, %v7249
    %v7287 = vadd.f32 %v4479, %v7251
    %v7288 = vadd.f32 %v4480, %v7253
    %v7289 = vadd.f32 %v4481, %v7255
    %v7290 = vadd.f32 %v4482, %v7257
    %v7291 = vadd.f32 %v4483, %v7259
    %v7292 = vsel %vm588, %v7276, 0.0
    %7293 = vadd.xlane.f32.xlu0 %v7292
    %v7294 = vpop.xlane.xlu0 %7293
    %v7295 = vsel %vm588, %v7277, 0.0
    %7296 = vadd.xlane.f32.xlu0 %v7295
    %v7297 = vpop.xlane.xlu0 %7296
    %v7298 = vsel %vm588, %v7278, 0.0
    %7299 = vadd.xlane.f32.xlu0 %v7298
    %v7300 = vpop.xlane.xlu0 %7299
    %v7301 = vsel %vm588, %v7279, 0.0
    %7302 = vadd.xlane.f32.xlu0 %v7301
    %v7303 = vpop.xlane.xlu0 %7302
    %v7304 = vsel %vm588, %v7280, 0.0
    %7305 = vadd.xlane.f32.xlu0 %v7304
    %v7306 = vpop.xlane.xlu0 %7305
    %v7307 = vsel %vm588, %v7281, 0.0
    %7308 = vadd.xlane.f32.xlu0 %v7307
    %v7309 = vpop.xlane.xlu0 %7308
    %v7310 = vsel %vm588, %v7282, 0.0
    %7311 = vadd.xlane.f32.xlu0 %v7310
    %v7312 = vpop.xlane.xlu0 %7311
    %v7313 = vsel %vm588, %v7283, 0.0
    %7314 = vadd.xlane.f32.xlu0 %v7313
    %v7315 = vpop.xlane.xlu0 %7314
    %v7316 = vsel %vm588, %v7284, 0.0
    %7317 = vadd.xlane.f32.xlu0 %v7316
    %v7318 = vpop.xlane.xlu0 %7317
    %v7319 = vsel %vm588, %v7285, 0.0
    %7320 = vadd.xlane.f32.xlu0 %v7319
    %v7321 = vpop.xlane.xlu0 %7320
    %v7322 = vsel %vm588, %v7286, 0.0
    %7323 = vadd.xlane.f32.xlu0 %v7322
    %v7324 = vpop.xlane.xlu0 %7323
    %v7325 = vsel %vm588, %v7287, 0.0
    %7326 = vadd.xlane.f32.xlu0 %v7325
    %v7327 = vpop.xlane.xlu0 %7326
    %v7328 = vsel %vm588, %v7288, 0.0
    %7329 = vadd.xlane.f32.xlu0 %v7328
    %v7330 = vpop.xlane.xlu0 %7329
    %v7331 = vsel %vm588, %v7289, 0.0
    %7332 = vadd.xlane.f32.xlu0 %v7331
    %v7333 = vpop.xlane.xlu0 %7332
    %v7334 = vsel %vm588, %v7290, 0.0
    %7335 = vadd.xlane.f32.xlu0 %v7334
    %v7336 = vpop.xlane.xlu0 %7335
    %v7337 = vsel %vm588, %v7291, 0.0
    %7338 = vadd.xlane.f32.xlu0 %v7337
    %v7339 = vpop.xlane.xlu0 %7338
    %v7340 = vmul.f32 %v7294, %v1295
    %v7341 = vmul.f32 %v7297, %v1295
    %v7342 = vmul.f32 %v7300, %v1295
    %v7343 = vmul.f32 %v7303, %v1295
    %v7344 = vmul.f32 %v7306, %v1295
    %v7345 = vmul.f32 %v7309, %v1295
    %v7346 = vmul.f32 %v7312, %v1295
    %v7347 = vmul.f32 %v7315, %v1295
    %v7348 = vmul.f32 %v7318, %v1295
    %v7349 = vmul.f32 %v7321, %v1295
    %v7350 = vmul.f32 %v7324, %v1295
    %v7351 = vmul.f32 %v7327, %v1295
    %v7352 = vmul.f32 %v7330, %v1295
    %v7353 = vmul.f32 %v7333, %v1295
    %v7354 = vmul.f32 %v7336, %v1295
    %v7355 = vmul.f32 %v7339, %v1295
    %v7356 = vsub.f32 %v7276, %v7340
    %v7357 = vsub.f32 %v7277, %v7341
    %v7358 = vsub.f32 %v7278, %v7342
    %v7359 = vsub.f32 %v7279, %v7343
    %v7360 = vsub.f32 %v7280, %v7344
    %v7361 = vsub.f32 %v7281, %v7345
    %v7362 = vsub.f32 %v7282, %v7346
    %v7363 = vsub.f32 %v7283, %v7347
    %v7364 = vsub.f32 %v7284, %v7348
    %v7365 = vsub.f32 %v7285, %v7349
    %v7366 = vsub.f32 %v7286, %v7350
    %v7367 = vsub.f32 %v7287, %v7351
    %v7368 = vsub.f32 %v7288, %v7352
    %v7369 = vsub.f32 %v7289, %v7353
    %v7370 = vsub.f32 %v7290, %v7354
    %v7371 = vsub.f32 %v7291, %v7355
    %v7372 = vmul.f32 %v7356, %v7356
    %v7373 = vmul.f32 %v7357, %v7357
    %v7374 = vmul.f32 %v7358, %v7358
    %v7375 = vmul.f32 %v7359, %v7359
    %v7376 = vmul.f32 %v7360, %v7360
    %v7377 = vmul.f32 %v7361, %v7361
    %v7378 = vmul.f32 %v7362, %v7362
    %v7379 = vmul.f32 %v7363, %v7363
    %v7380 = vmul.f32 %v7364, %v7364
    %v7381 = vmul.f32 %v7365, %v7365
    %v7382 = vmul.f32 %v7366, %v7366
    %v7383 = vmul.f32 %v7367, %v7367
    %v7384 = vmul.f32 %v7368, %v7368
    %v7385 = vmul.f32 %v7369, %v7369
    %v7386 = vmul.f32 %v7370, %v7370
    %v7387 = vmul.f32 %v7371, %v7371
    %v7388 = vsel %vm588, %v7372, 0.0
    %7389 = vadd.xlane.f32.xlu0 %v7388
    %v7390 = vpop.xlane.xlu0 %7389
    %v7391 = vsel %vm588, %v7373, 0.0
    %7392 = vadd.xlane.f32.xlu0 %v7391
    %v7393 = vpop.xlane.xlu0 %7392
    %v7394 = vsel %vm588, %v7374, 0.0
    %7395 = vadd.xlane.f32.xlu0 %v7394
    %v7396 = vpop.xlane.xlu0 %7395
    %v7397 = vsel %vm588, %v7375, 0.0
    %7398 = vadd.xlane.f32.xlu0 %v7397
    %v7399 = vpop.xlane.xlu0 %7398
    %v7400 = vsel %vm588, %v7376, 0.0
    %7401 = vadd.xlane.f32.xlu0 %v7400
    %v7402 = vpop.xlane.xlu0 %7401
    %v7403 = vsel %vm588, %v7377, 0.0
    %7404 = vadd.xlane.f32.xlu0 %v7403
    %v7405 = vpop.xlane.xlu0 %7404
    %v7406 = vsel %vm588, %v7378, 0.0
    %7407 = vadd.xlane.f32.xlu0 %v7406
    %v7408 = vpop.xlane.xlu0 %7407
    %v7409 = vsel %vm588, %v7379, 0.0
    %7410 = vadd.xlane.f32.xlu0 %v7409
    %v7411 = vpop.xlane.xlu0 %7410
    %v7412 = vsel %vm588, %v7380, 0.0
    %7413 = vadd.xlane.f32.xlu0 %v7412
    %v7414 = vpop.xlane.xlu0 %7413
    %v7415 = vsel %vm588, %v7381, 0.0
    %7416 = vadd.xlane.f32.xlu0 %v7415
    %v7417 = vpop.xlane.xlu0 %7416
    %v7418 = vsel %vm588, %v7382, 0.0
    %7419 = vadd.xlane.f32.xlu0 %v7418
    %v7420 = vpop.xlane.xlu0 %7419
    %v7421 = vsel %vm588, %v7383, 0.0
    %7422 = vadd.xlane.f32.xlu0 %v7421
    %v7423 = vpop.xlane.xlu0 %7422
    %v7424 = vsel %vm588, %v7384, 0.0
    %7425 = vadd.xlane.f32.xlu0 %v7424
    %v7426 = vpop.xlane.xlu0 %7425
    %v7427 = vsel %vm588, %v7385, 0.0
    %7428 = vadd.xlane.f32.xlu0 %v7427
    %v7429 = vpop.xlane.xlu0 %7428
    %v7430 = vsel %vm588, %v7386, 0.0
    %7431 = vadd.xlane.f32.xlu0 %v7430
    %v7432 = vpop.xlane.xlu0 %7431
    %v7433 = vsel %vm588, %v7387, 0.0
    %7434 = vadd.xlane.f32.xlu0 %v7433
    %v7435 = vpop.xlane.xlu0 %7434
    %v7436 = vmul.f32 %v7390, %v1295
    %v7437 = vmul.f32 %v7393, %v1295
    %v7438 = vmul.f32 %v7396, %v1295
    %v7439 = vmul.f32 %v7399, %v1295
    %v7440 = vmul.f32 %v7402, %v1295
    %v7441 = vmul.f32 %v7405, %v1295
    %v7442 = vmul.f32 %v7408, %v1295
    %v7443 = vmul.f32 %v7411, %v1295
    %v7444 = vmul.f32 %v7414, %v1295
    %v7445 = vmul.f32 %v7417, %v1295
    %v7446 = vmul.f32 %v7420, %v1295
    %v7447 = vmul.f32 %v7423, %v1295
    %v7448 = vmul.f32 %v7426, %v1295
    %v7449 = vmul.f32 %v7429, %v1295
    %v7450 = vmul.f32 %v7432, %v1295
    %v7451 = vmul.f32 %v7435, %v1295
    %v7452 = vadd.f32 %v7436, 1e-06
    %v7453 = vadd.f32 %v7437, 1e-06
    %v7454 = vadd.f32 %v7438, 1e-06
    %v7455 = vadd.f32 %v7439, 1e-06
    %v7456 = vadd.f32 %v7440, 1e-06
    %v7457 = vadd.f32 %v7441, 1e-06
    %v7458 = vadd.f32 %v7442, 1e-06
    %v7459 = vadd.f32 %v7443, 1e-06
    %v7460 = vadd.f32 %v7444, 1e-06
    %v7461 = vadd.f32 %v7445, 1e-06
    %v7462 = vadd.f32 %v7446, 1e-06
    %v7463 = vadd.f32 %v7447, 1e-06
    %v7464 = vadd.f32 %v7448, 1e-06
    %v7465 = vadd.f32 %v7449, 1e-06
    %v7466 = vadd.f32 %v7450, 1e-06
    %v7467 = vadd.f32 %v7451, 1e-06
    %v7468 = vrsqrt.pop %v7452
    %v7469 = vrsqrt.pop %v7453
    %v7470 = vrsqrt.pop %v7454
    %v7471 = vrsqrt.pop %v7455
    %v7472 = vrsqrt.pop %v7456
    %v7473 = vrsqrt.pop %v7457
    %v7474 = vrsqrt.pop %v7458
    %v7475 = vrsqrt.pop %v7459
    %v7476 = vrsqrt.pop %v7460
    %v7477 = vrsqrt.pop %v7461
    %v7478 = vrsqrt.pop %v7462
    %v7479 = vrsqrt.pop %v7463
    %v7480 = vrsqrt.pop %v7464
    %v7481 = vrsqrt.pop %v7465
    %v7482 = vrsqrt.pop %v7466
    %v7483 = vrsqrt.pop %v7467
    %v7484 = vmul.f32 %v7356, %v7468
    %v7485 = vmul.f32 %v7357, %v7469
    %v7486 = vmul.f32 %v7358, %v7470
    %v7487 = vmul.f32 %v7359, %v7471
    %v7488 = vmul.f32 %v7360, %v7472
    %v7489 = vmul.f32 %v7361, %v7473
    %v7490 = vmul.f32 %v7362, %v7474
    %v7491 = vmul.f32 %v7363, %v7475
    %v7492 = vmul.f32 %v7364, %v7476
    %v7493 = vmul.f32 %v7365, %v7477
    %v7494 = vmul.f32 %v7366, %v7478
    %v7495 = vmul.f32 %v7367, %v7479
    %v7496 = vmul.f32 %v7368, %v7480
    %v7497 = vmul.f32 %v7369, %v7481
    %v7498 = vmul.f32 %v7370, %v7482
    %v7499 = vmul.f32 %v7371, %v7483
    %v7500 = vadd.f32 %v5031, 1.0
    %v7501 = vadd.f32 %v5038, 1.0
    %v7504 = vlaneseq
    %v7505 = vshrl.u32 %v7504, 7
    %v7506 = vsub.s32 0, %v7505
    %v7507 = vrot.slane %v7500, %v7506
    %v7508 = vlaneseq
    %v7509 = vshrl.u32 %v7508, 7
    %v7510 = vsub.s32 0, %v7509
    %v7511 = vrot.slane %v7501, %v7510
    %v7514 = vmul.f32 %v7484, %v7507
    %v7515 = vmul.f32 %v7485, %v7507
    %v7516 = vmul.f32 %v7486, %v7507
    %v7517 = vmul.f32 %v7487, %v7507
    %v7518 = vmul.f32 %v7488, %v7507
    %v7519 = vmul.f32 %v7489, %v7507
    %v7520 = vmul.f32 %v7490, %v7507
    %v7521 = vmul.f32 %v7491, %v7507
    %v7522 = vmul.f32 %v7492, %v7511
    %v7523 = vmul.f32 %v7493, %v7511
    %v7524 = vmul.f32 %v7494, %v7511
    %v7525 = vmul.f32 %v7495, %v7511
    %v7526 = vmul.f32 %v7496, %v7511
    %v7527 = vmul.f32 %v7497, %v7511
    %v7528 = vmul.f32 %v7498, %v7511
    %v7529 = vmul.f32 %v7499, %v7511
    %7530 = vrot.lane.b32.xlu0 %v5286, 32
    %v7531 = vpop.permute.xlu0 %7530
    %7532 = vrot.lane.b32.xlu0 %v5290, 32
    %v7533 = vpop.permute.xlu0 %7532
    %v7536 = vadd.f32 %v7514, %v7531
    %v7537 = vadd.f32 %v7515, %v7531
    %v7538 = vadd.f32 %v7516, %v7531
    %v7539 = vadd.f32 %v7517, %v7531
    %v7540 = vadd.f32 %v7518, %v7531
    %v7541 = vadd.f32 %v7519, %v7531
    %v7542 = vadd.f32 %v7520, %v7531
    %v7543 = vadd.f32 %v7521, %v7531
    %v7544 = vadd.f32 %v7522, %v7533
    %v7545 = vadd.f32 %v7523, %v7533
    %v7546 = vadd.f32 %v7524, %v7533
    %v7547 = vadd.f32 %v7525, %v7533
    %v7548 = vadd.f32 %v7526, %v7533
    %v7549 = vadd.f32 %v7527, %v7533
    %v7550 = vadd.f32 %v7528, %v7533
    %v7551 = vadd.f32 %v7529, %v7533
    %v7552 = vpack.c.bf16 %v7537, %v7536
    %v7553 = vpack.c.bf16 %v7539, %v7538
    %v7554 = vpack.c.bf16 %v7541, %v7540
    %v7555 = vpack.c.bf16 %v7543, %v7542
    %v7556 = vpack.c.bf16 %v7545, %v7544
    %v7557 = vpack.c.bf16 %v7547, %v7546
    %v7558 = vpack.c.bf16 %v7549, %v7548
    %v7559 = vpack.c.bf16 %v7551, %v7550
    %v7560 = vld [vmem:[%s95] sm:$0xf]
    %v7561 = vld [vmem:[%s95 + $0x4] sm:$0xf]
    %v7562 = vld [vmem:[%s95 + $0x8] sm:$0xf]
    %v7563 = vld [vmem:[%s95 + $0xc] sm:$0xf]
    %v7564 = vld [vmem:[#allocation15] sm:$0x1]
    %v7566 = vlaneseq
    %v7567 = vshrl.u32 %v7566, 7
    %v7568 = vsub.s32 0, %v7567
    %v7569 = vrot.slane %v7564, %v7568
    %v7575 = vunpack.c.l.b16 %v7560
    %v7576 = vunpack.c.l.b16 %v7561
    %v7577 = vunpack.c.l.b16 %v7562
    %v7578 = vunpack.c.l.b16 %v7563
    %v7579 = vpack.c.b16 %v7576, %v7575
    %v7580 = vpack.c.b16 %v7578, %v7577
    %v7584 = vsel %vm588, %v7552, 0
    %v7587 = vsel %vm588, %v7553, 0
    %v7590 = vsel %vm588, %v7554, 0
    %v7593 = vsel %vm588, %v7555, 0
    %v7596 = vsel %vm588, %v7556, 0
    %v7599 = vsel %vm588, %v7557, 0
    %v7602 = vsel %vm588, %v7558, 0
    %v7605 = vsel %vm588, %v7559, 0
    %7607 = vmatprep.subr.bf16.mxu0 0
    %7608 = vmatpush1.bf16.msra.mxu0 %v7579
    %7609 = vmatprep.subr.bf16.mxu0 0
    %7610 = vmatpush1.bf16.msra.mxu0 %v7580
    %7611 = vmatprep.subr.bf16.mxu0 0
    %7612 = vmatpush1.bf16.msra.mxu0 0
    %7613 = vmatprep.subr.bf16.mxu0 0
    %7614 = vmatpush1.bf16.msra.mxu0 0
    %7615 = vmatprep.subr.bf16.mxu0 0
    %7616 = vmatpush1.bf16.msra.mxu0 0
    %7617 = vmatprep.subr.bf16.mxu0 0
    %7618 = vmatpush1.bf16.msra.mxu0 0
    %7619 = vmatprep.subr.bf16.mxu0 0
    %7620 = vmatpush1.bf16.msra.mxu0 0
    %7621 = vmatprep.subr.bf16.mxu0 0
    %7622 = vmatpush1.bf16.msra.mxu0 0
    %7623 = vmatprep.subr.bf16.mxu0 0
    %7624 = vmatpush1.bf16.msra.mxu0 0
    %7625 = vmatprep.subr.bf16.mxu0 0
    %7626 = vmatpush1.bf16.msra.mxu0 0
    %7627 = vmatprep.subr.bf16.mxu0 0
    %7628 = vmatpush1.bf16.msra.mxu0 0
    %7629 = vmatprep.subr.bf16.mxu0 0
    %7630 = vmatpush1.bf16.msra.mxu0 0
    %7631 = vmatprep.subr.bf16.mxu0 0
    %7632 = vmatpush1.bf16.msra.mxu0 0
    %7633 = vmatprep.subr.bf16.mxu0 0
    %7634 = vmatpush1.bf16.msra.mxu0 0
    %7635 = vmatprep.subr.bf16.mxu0 0
    %7636 = vmatpush1.bf16.msra.mxu0 0
    %7637 = vmatprep.subr.bf16.mxu0 0
    %7638 = vmatpush1.bf16.msra.mxu0 0
    %7639 = vmatprep.mubr.bf16.mxu0 0
    %7640 = vmatmul.mubr.bf16.gmra.mrb[0].mxu0 %v7584
    %v7641 = vpop.f32.mrb[0].mxu0
    %v7642 = vadd.f32 %v7569, %v7641
    %v7643 = vpop.f32.mrb[0].mxu0
    %v7644 = vpop.f32.mrb[0].mxu0
    %v7645 = vadd.f32 %v7569, %v7644
    %v7646 = vpop.f32.mrb[0].mxu0
    %7647 = vmatprep.mubr.bf16.mxu0 0
    %7648 = vmatmul.mubr.bf16.gmra.mrb[0].mxu0 %v7587
    %v7649 = vpop.f32.mrb[0].mxu0
    %v7650 = vadd.f32 %v7569, %v7649
    %v7651 = vpop.f32.mrb[0].mxu0
    %v7652 = vpop.f32.mrb[0].mxu0
    %v7653 = vadd.f32 %v7569, %v7652
    %v7654 = vpop.f32.mrb[0].mxu0
    %7655 = vmatprep.mubr.bf16.mxu0 0
    %7656 = vmatmul.mubr.bf16.gmra.mrb[0].mxu0 %v7590
    %v7657 = vpop.f32.mrb[0].mxu0
    %v7658 = vadd.f32 %v7569, %v7657
    %v7659 = vpop.f32.mrb[0].mxu0
    %v7660 = vpop.f32.mrb[0].mxu0
    %v7661 = vadd.f32 %v7569, %v7660
    %v7662 = vpop.f32.mrb[0].mxu0
    %7663 = vmatprep.mubr.bf16.mxu0 0
    %7664 = vmatmul.mubr.bf16.gmra.mrb[0].mxu0 %v7593
    %v7665 = vpop.f32.mrb[0].mxu0
    %v7666 = vadd.f32 %v7569, %v7665
    %v7667 = vpop.f32.mrb[0].mxu0
    %v7668 = vpop.f32.mrb[0].mxu0
    %v7669 = vadd.f32 %v7569, %v7668
    %v7670 = vpop.f32.mrb[0].mxu0
    %7671 = vmatprep.mubr.bf16.mxu0 0
    %7672 = vmatmul.mubr.bf16.gmra.mrb[0].mxu0 %v7596
    %v7673 = vpop.f32.mrb[0].mxu0
    %v7674 = vadd.f32 %v7569, %v7673
    %v7675 = vpop.f32.mrb[0].mxu0
    %v7676 = vpop.f32.mrb[0].mxu0
    %v7677 = vadd.f32 %v7569, %v7676
    %v7678 = vpop.f32.mrb[0].mxu0
    %7679 = vmatprep.mubr.bf16.mxu0 0
    %7680 = vmatmul.mubr.bf16.gmra.mrb[0].mxu0 %v7599
    %v7681 = vpop.f32.mrb[0].mxu0
    %v7682 = vadd.f32 %v7569, %v7681
    %v7683 = vpop.f32.mrb[0].mxu0
    %v7684 = vpop.f32.mrb[0].mxu0
    %v7685 = vadd.f32 %v7569, %v7684
    %v7686 = vpop.f32.mrb[0].mxu0
    %7687 = vmatprep.mubr.bf16.mxu0 0
    %7688 = vmatmul.mubr.bf16.gmra.mrb[0].mxu0 %v7602
    %v7689 = vpop.f32.mrb[0].mxu0
    %v7690 = vadd.f32 %v7569, %v7689
    %v7691 = vpop.f32.mrb[0].mxu0
    %v7692 = vpop.f32.mrb[0].mxu0
    %v7693 = vadd.f32 %v7569, %v7692
    %v7694 = vpop.f32.mrb[0].mxu0
    %7695 = vmatprep.mubr.bf16.mxu0 0
    %7696 = vmatmul.mubr.bf16.gmra.mrb[0].mxu0 %v7605
    %v7697 = vpop.f32.mrb[0].mxu0
    %v7698 = vadd.f32 %v7569, %v7697
    %v7699 = vpop.f32.mrb[0].mxu0
    %v7700 = vpop.f32.mrb[0].mxu0
    %v7701 = vadd.f32 %v7569, %v7700
    %v7702 = vpop.f32.mrb[0].mxu0
    %7703 = vdwg.mxu0
    %v7704 = vmul.f32 %v7642, 0.5
    %v7705 = vmul.f32 %v7645, 0.5
    %v7706 = vmul.f32 %v7650, 0.5
    %v7707 = vmul.f32 %v7653, 0.5
    %v7708 = vmul.f32 %v7658, 0.5
    %v7709 = vmul.f32 %v7661, 0.5
    %v7710 = vmul.f32 %v7666, 0.5
    %v7711 = vmul.f32 %v7669, 0.5
    %v7712 = vmul.f32 %v7674, 0.5
    %v7713 = vmul.f32 %v7677, 0.5
    %v7714 = vmul.f32 %v7682, 0.5
    %v7715 = vmul.f32 %v7685, 0.5
    %v7716 = vmul.f32 %v7690, 0.5
    %v7717 = vmul.f32 %v7693, 0.5
    %v7718 = vmul.f32 %v7698, 0.5
    %v7719 = vmul.f32 %v7701, 0.5
    %v7720 = vmul.f32 %v7642, 0.044715
    %v7721 = vmul.f32 %v7645, 0.044715
    %v7722 = vmul.f32 %v7650, 0.044715
    %v7723 = vmul.f32 %v7653, 0.044715
    %v7724 = vmul.f32 %v7658, 0.044715
    %v7725 = vmul.f32 %v7661, 0.044715
    %v7726 = vmul.f32 %v7666, 0.044715
    %v7727 = vmul.f32 %v7669, 0.044715
    %v7728 = vmul.f32 %v7674, 0.044715
    %v7729 = vmul.f32 %v7677, 0.044715
    %v7730 = vmul.f32 %v7682, 0.044715
    %v7731 = vmul.f32 %v7685, 0.044715
    %v7732 = vmul.f32 %v7690, 0.044715
    %v7733 = vmul.f32 %v7693, 0.044715
    %v7734 = vmul.f32 %v7698, 0.044715
    %v7735 = vmul.f32 %v7701, 0.044715
    %v7736 = vmul.f32 %v7720, %v7642
    %v7737 = vmul.f32 %v7721, %v7645
    %v7738 = vmul.f32 %v7722, %v7650
    %v7739 = vmul.f32 %v7723, %v7653
    %v7740 = vmul.f32 %v7724, %v7658
    %v7741 = vmul.f32 %v7725, %v7661
    %v7742 = vmul.f32 %v7726, %v7666
    %v7743 = vmul.f32 %v7727, %v7669
    %v7744 = vmul.f32 %v7728, %v7674
    %v7745 = vmul.f32 %v7729, %v7677
    %v7746 = vmul.f32 %v7730, %v7682
    %v7747 = vmul.f32 %v7731, %v7685
    %v7748 = vmul.f32 %v7732, %v7690
    %v7749 = vmul.f32 %v7733, %v7693
    %v7750 = vmul.f32 %v7734, %v7698
    %v7751 = vmul.f32 %v7735, %v7701
    %v7752 = vmul.f32 %v7736, %v7642
    %v7753 = vmul.f32 %v7737, %v7645
    %v7754 = vmul.f32 %v7738, %v7650
    %v7755 = vmul.f32 %v7739, %v7653
    %v7756 = vmul.f32 %v7740, %v7658
    %v7757 = vmul.f32 %v7741, %v7661
    %v7758 = vmul.f32 %v7742, %v7666
    %v7759 = vmul.f32 %v7743, %v7669
    %v7760 = vmul.f32 %v7744, %v7674
    %v7761 = vmul.f32 %v7745, %v7677
    %v7762 = vmul.f32 %v7746, %v7682
    %v7763 = vmul.f32 %v7747, %v7685
    %v7764 = vmul.f32 %v7748, %v7690
    %v7765 = vmul.f32 %v7749, %v7693
    %v7766 = vmul.f32 %v7750, %v7698
    %v7767 = vmul.f32 %v7751, %v7701
    %v7768 = vadd.f32 %v7642, %v7752
    %v7769 = vadd.f32 %v7645, %v7753
    %v7770 = vadd.f32 %v7650, %v7754
    %v7771 = vadd.f32 %v7653, %v7755
    %v7772 = vadd.f32 %v7658, %v7756
    %v7773 = vadd.f32 %v7661, %v7757
    %v7774 = vadd.f32 %v7666, %v7758
    %v7775 = vadd.f32 %v7669, %v7759
    %v7776 = vadd.f32 %v7674, %v7760
    %v7777 = vadd.f32 %v7677, %v7761
    %v7778 = vadd.f32 %v7682, %v7762
    %v7779 = vadd.f32 %v7685, %v7763
    %v7780 = vadd.f32 %v7690, %v7764
    %v7781 = vadd.f32 %v7693, %v7765
    %v7782 = vadd.f32 %v7698, %v7766
    %v7783 = vadd.f32 %v7701, %v7767
    %v7784 = vmul.f32 %v7768, 0.7978846
    %v7785 = vmul.f32 %v7769, 0.7978846
    %v7786 = vmul.f32 %v7770, 0.7978846
    %v7787 = vmul.f32 %v7771, 0.7978846
    %v7788 = vmul.f32 %v7772, 0.7978846
    %v7789 = vmul.f32 %v7773, 0.7978846
    %v7790 = vmul.f32 %v7774, 0.7978846
    %v7791 = vmul.f32 %v7775, 0.7978846
    %v7792 = vmul.f32 %v7776, 0.7978846
    %v7793 = vmul.f32 %v7777, 0.7978846
    %v7794 = vmul.f32 %v7778, 0.7978846
    %v7795 = vmul.f32 %v7779, 0.7978846
    %v7796 = vmul.f32 %v7780, 0.7978846
    %v7797 = vmul.f32 %v7781, 0.7978846
    %v7798 = vmul.f32 %v7782, 0.7978846
    %v7799 = vmul.f32 %v7783, 0.7978846
    %v7800 = vtanh.pop %v7784
    %v7801 = vtanh.pop %v7785
    %v7802 = vtanh.pop %v7786
    %v7803 = vtanh.pop %v7787
    %v7804 = vtanh.pop %v7788
    %v7805 = vtanh.pop %v7789
    %v7806 = vtanh.pop %v7790
    %v7807 = vtanh.pop %v7791
    %v7808 = vtanh.pop %v7792
    %v7809 = vtanh.pop %v7793
    %v7810 = vtanh.pop %v7794
    %v7811 = vtanh.pop %v7795
    %v7812 = vtanh.pop %v7796
    %v7813 = vtanh.pop %v7797
    %v7814 = vtanh.pop %v7798
    %v7815 = vtanh.pop %v7799
    %v7816 = vadd.f32 %v7800, 1.0
    %v7817 = vadd.f32 %v7801, 1.0
    %v7818 = vadd.f32 %v7802, 1.0
    %v7819 = vadd.f32 %v7803, 1.0
    %v7820 = vadd.f32 %v7804, 1.0
    %v7821 = vadd.f32 %v7805, 1.0
    %v7822 = vadd.f32 %v7806, 1.0
    %v7823 = vadd.f32 %v7807, 1.0
    %v7824 = vadd.f32 %v7808, 1.0
    %v7825 = vadd.f32 %v7809, 1.0
    %v7826 = vadd.f32 %v7810, 1.0
    %v7827 = vadd.f32 %v7811, 1.0
    %v7828 = vadd.f32 %v7812, 1.0
    %v7829 = vadd.f32 %v7813, 1.0
    %v7830 = vadd.f32 %v7814, 1.0
    %v7831 = vadd.f32 %v7815, 1.0
    %v7832 = vmul.f32 %v7704, %v7816
    %v7833 = vmul.f32 %v7705, %v7817
    %v7834 = vmul.f32 %v7706, %v7818
    %v7835 = vmul.f32 %v7707, %v7819
    %v7836 = vmul.f32 %v7708, %v7820
    %v7837 = vmul.f32 %v7709, %v7821
    %v7838 = vmul.f32 %v7710, %v7822
    %v7839 = vmul.f32 %v7711, %v7823
    %v7840 = vmul.f32 %v7712, %v7824
    %v7841 = vmul.f32 %v7713, %v7825
    %v7842 = vmul.f32 %v7714, %v7826
    %v7843 = vmul.f32 %v7715, %v7827
    %v7844 = vmul.f32 %v7716, %v7828
    %v7845 = vmul.f32 %v7717, %v7829
    %v7846 = vmul.f32 %v7718, %v7830
    %v7847 = vmul.f32 %v7719, %v7831
    %v7848 = vpack.c.bf16 %v7833, %v7832
    %v7849 = vpack.c.bf16 %v7835, %v7834
    %v7850 = vpack.c.bf16 %v7837, %v7836
    %v7851 = vpack.c.bf16 %v7839, %v7838
    %v7852 = vpack.c.bf16 %v7841, %v7840
    %v7853 = vpack.c.bf16 %v7843, %v7842
    %v7854 = vpack.c.bf16 %v7845, %v7844
    %v7855 = vpack.c.bf16 %v7847, %v7846
    %v7856 = vld [vmem:[%s99] sm:$0xf]
    %v7857 = vld [vmem:[%s99 + $0x4] sm:$0xf]
    %v7858 = vld [vmem:[%s99 + $0x8] sm:$0xf]
    %v7859 = vld [vmem:[%s99 + $0xc] sm:$0xf]
    %v7860 = vld [vmem:[%s99 + $0x10] sm:$0xf]
    %v7861 = vld [vmem:[%s99 + $0x14] sm:$0xf]
    %v7862 = vld [vmem:[%s99 + $0x18] sm:$0xf]
    %v7863 = vld [vmem:[%s99 + $0x1c] sm:$0xf]
    %v7864 = vld [vmem:[%s99 + $0x20] sm:$0xf]
    %v7865 = vld [vmem:[%s99 + $0x24] sm:$0xf]
    %v7866 = vld [vmem:[%s99 + $0x28] sm:$0xf]
    %v7867 = vld [vmem:[%s99 + $0x2c] sm:$0xf]
    %v7868 = vld [vmem:[%s99 + $0x30] sm:$0xf]
    %v7869 = vld [vmem:[%s99 + $0x34] sm:$0xf]
    %v7870 = vld [vmem:[%s99 + $0x38] sm:$0xf]
    %v7871 = vld [vmem:[%s99 + $0x3c] sm:$0xf]
    %v7872 = vld [vmem:[#allocation16] sm:$0x1]
    %v7874 = vlaneseq
    %v7875 = vshrl.u32 %v7874, 7
    %v7876 = vsub.s32 0, %v7875
    %v7877 = vrot.slane %v7872, %v7876
    %v7895 = vunpack.c.l.b16 %v7856
    %v7896 = vunpack.c.l.b16 %v7857
    %v7897 = vunpack.c.l.b16 %v7858
    %v7898 = vunpack.c.l.b16 %v7859
    %v7899 = vunpack.c.l.b16 %v7860
    %v7900 = vunpack.c.l.b16 %v7861
    %v7901 = vunpack.c.l.b16 %v7862
    %v7902 = vunpack.c.l.b16 %v7863
    %v7903 = vunpack.c.l.b16 %v7864
    %v7904 = vunpack.c.l.b16 %v7865
    %v7905 = vunpack.c.l.b16 %v7866
    %v7906 = vunpack.c.l.b16 %v7867
    %v7907 = vunpack.c.l.b16 %v7868
    %v7908 = vunpack.c.l.b16 %v7869
    %v7909 = vunpack.c.l.b16 %v7870
    %v7910 = vunpack.c.l.b16 %v7871
    %v7911 = vpack.c.b16 %v7896, %v7895
    %v7912 = vpack.c.b16 %v7898, %v7897
    %v7913 = vpack.c.b16 %v7900, %v7899
    %v7914 = vpack.c.b16 %v7902, %v7901
    %v7915 = vpack.c.b16 %v7904, %v7903
    %v7916 = vpack.c.b16 %v7906, %v7905
    %v7917 = vpack.c.b16 %v7908, %v7907
    %v7918 = vpack.c.b16 %v7910, %v7909
    %7927 = vmatprep.subr.bf16.mxu0 0
    %7928 = vmatpush1.bf16.msra.mxu0 %v7911
    %7929 = vmatprep.subr.bf16.mxu0 0
    %7930 = vmatpush1.bf16.msra.mxu0 %v7912
    %7931 = vmatprep.subr.bf16.mxu0 0
    %7932 = vmatpush1.bf16.msra.mxu0 %v7913
    %7933 = vmatprep.subr.bf16.mxu0 0
    %7934 = vmatpush1.bf16.msra.mxu0 %v7914
    %7935 = vmatprep.subr.bf16.mxu0 0
    %7936 = vmatpush1.bf16.msra.mxu0 %v7915
    %7937 = vmatprep.subr.bf16.mxu0 0
    %7938 = vmatpush1.bf16.msra.mxu0 %v7916
    %7939 = vmatprep.subr.bf16.mxu0 0
    %7940 = vmatpush1.bf16.msra.mxu0 %v7917
    %7941 = vmatprep.subr.bf16.mxu0 0
    %7942 = vmatpush1.bf16.msra.mxu0 %v7918
    %7943 = vmatprep.subr.bf16.mxu0 0
    %7944 = vmatpush1.bf16.msra.mxu0 0
    %7945 = vmatprep.subr.bf16.mxu0 0
    %7946 = vmatpush1.bf16.msra.mxu0 0
    %7947 = vmatprep.subr.bf16.mxu0 0
    %7948 = vmatpush1.bf16.msra.mxu0 0
    %7949 = vmatprep.subr.bf16.mxu0 0
    %7950 = vmatpush1.bf16.msra.mxu0 0
    %7951 = vmatprep.subr.bf16.mxu0 0
    %7952 = vmatpush1.bf16.msra.mxu0 0
    %7953 = vmatprep.subr.bf16.mxu0 0
    %7954 = vmatpush1.bf16.msra.mxu0 0
    %7955 = vmatprep.subr.bf16.mxu0 0
    %7956 = vmatpush1.bf16.msra.mxu0 0
    %7957 = vmatprep.subr.bf16.mxu0 0
    %7958 = vmatpush1.bf16.msra.mxu0 0
    %7959 = vmatprep.mubr.bf16.mxu0 0
    %7960 = vmatmul.mubr.bf16.gmra.mrb[0].mxu0 %v7848
    %v7961 = vpop.f32.mrb[0].mxu0
    %v7962 = vadd.f32 %v7877, %v7961
    %v7963 = vpop.f32.mrb[0].mxu0
    %v7964 = vpop.f32.mrb[0].mxu0
    %v7965 = vadd.f32 %v7877, %v7964
    %v7966 = vpop.f32.mrb[0].mxu0
    %7967 = vmatprep.mubr.bf16.mxu0 0
    %7968 = vmatmul.mubr.bf16.gmra.mrb[0].mxu0 %v7849
    %v7969 = vpop.f32.mrb[0].mxu0
    %v7970 = vadd.f32 %v7877, %v7969
    %v7971 = vpop.f32.mrb[0].mxu0
    %v7972 = vpop.f32.mrb[0].mxu0
    %v7973 = vadd.f32 %v7877, %v7972
    %v7974 = vpop.f32.mrb[0].mxu0
    %7975 = vmatprep.mubr.bf16.mxu0 0
    %7976 = vmatmul.mubr.bf16.gmra.mrb[0].mxu0 %v7850
    %v7977 = vpop.f32.mrb[0].mxu0
    %v7978 = vadd.f32 %v7877, %v7977
    %v7979 = vpop.f32.mrb[0].mxu0
    %v7980 = vpop.f32.mrb[0].mxu0
    %v7981 = vadd.f32 %v7877, %v7980
    %v7982 = vpop.f32.mrb[0].mxu0
    %7983 = vmatprep.mubr.bf16.mxu0 0
    %7984 = vmatmul.mubr.bf16.gmra.mrb[0].mxu0 %v7851
    %v7985 = vpop.f32.mrb[0].mxu0
    %v7986 = vadd.f32 %v7877, %v7985
    %v7987 = vpop.f32.mrb[0].mxu0
    %v7988 = vpop.f32.mrb[0].mxu0
    %v7989 = vadd.f32 %v7877, %v7988
    %v7990 = vpop.f32.mrb[0].mxu0
    %7991 = vmatprep.mubr.bf16.mxu0 0
    %7992 = vmatmul.mubr.bf16.gmra.mrb[0].mxu0 %v7852
    %v7993 = vpop.f32.mrb[0].mxu0
    %v7994 = vadd.f32 %v7877, %v7993
    %v7995 = vpop.f32.mrb[0].mxu0
    %v7996 = vpop.f32.mrb[0].mxu0
    %v7997 = vadd.f32 %v7877, %v7996
    %v7998 = vpop.f32.mrb[0].mxu0
    %7999 = vmatprep.mubr.bf16.mxu0 0
    %8000 = vmatmul.mubr.bf16.gmra.mrb[0].mxu0 %v7853
    %v8001 = vpop.f32.mrb[0].mxu0
    %v8002 = vadd.f32 %v7877, %v8001
    %v8003 = vpop.f32.mrb[0].mxu0
    %v8004 = vpop.f32.mrb[0].mxu0
    %v8005 = vadd.f32 %v7877, %v8004
    %v8006 = vpop.f32.mrb[0].mxu0
    %8007 = vmatprep.mubr.bf16.mxu0 0
    %8008 = vmatmul.mubr.bf16.gmra.mrb[0].mxu0 %v7854
    %v8009 = vpop.f32.mrb[0].mxu0
    %v8010 = vadd.f32 %v7877, %v8009
    %v8011 = vpop.f32.mrb[0].mxu0
    %v8012 = vpop.f32.mrb[0].mxu0
    %v8013 = vadd.f32 %v7877, %v8012
    %v8014 = vpop.f32.mrb[0].mxu0
    %8015 = vmatprep.mubr.bf16.mxu0 0
    %8016 = vmatmul.mubr.bf16.gmra.mrb[0].mxu0 %v7855
    %v8017 = vpop.f32.mrb[0].mxu0
    %v8018 = vadd.f32 %v7877, %v8017
    %v8019 = vpop.f32.mrb[0].mxu0
    %v8020 = vpop.f32.mrb[0].mxu0
    %v8021 = vadd.f32 %v7877, %v8020
    %v8022 = vpop.f32.mrb[0].mxu0
    %8023 = vdwg.mxu0
    %v8024 = vlaneseq
    %v8025 = vshrl.u32 %v8024, 7
    %v8026 = vsub.s32 0, %v8025
    %v8027 = vrot.slane %v5031, %v8026
    %v8028 = vlaneseq
    %v8029 = vshrl.u32 %v8028, 7
    %v8030 = vsub.s32 0, %v8029
    %v8031 = vrot.slane %v5038, %v8030
    %8050 = vrot.lane.b32.xlu0 %v7962, 32
    %v8051 = vpop.permute.xlu0 %8050
    %8052 = vrot.lane.b32.xlu0 %v7965, 32
    %v8053 = vpop.permute.xlu0 %8052
    %8054 = vrot.lane.b32.xlu0 %v7970, 32
    %v8055 = vpop.permute.xlu0 %8054
    %8056 = vrot.lane.b32.xlu0 %v7973, 32
    %v8057 = vpop.permute.xlu0 %8056
    %8058 = vrot.lane.b32.xlu0 %v7978, 32
    %v8059 = vpop.permute.xlu0 %8058
    %8060 = vrot.lane.b32.xlu0 %v7981, 32
    %v8061 = vpop.permute.xlu0 %8060
    %8062 = vrot.lane.b32.xlu0 %v7986, 32
    %v8063 = vpop.permute.xlu0 %8062
    %8064 = vrot.lane.b32.xlu0 %v7989, 32
    %v8065 = vpop.permute.xlu0 %8064
    %8066 = vrot.lane.b32.xlu0 %v7994, 32
    %v8067 = vpop.permute.xlu0 %8066
    %8068 = vrot.lane.b32.xlu0 %v7997, 32
    %v8069 = vpop.permute.xlu0 %8068
    %8070 = vrot.lane.b32.xlu0 %v8002, 32
    %v8071 = vpop.permute.xlu0 %8070
    %8072 = vrot.lane.b32.xlu0 %v8005, 32
    %v8073 = vpop.permute.xlu0 %8072
    %8074 = vrot.lane.b32.xlu0 %v8010, 32
    %v8075 = vpop.permute.xlu0 %8074
    %8076 = vrot.lane.b32.xlu0 %v8013, 32
    %v8077 = vpop.permute.xlu0 %8076
    %8078 = vrot.lane.b32.xlu0 %v8018, 32
    %v8079 = vpop.permute.xlu0 %8078
    %8080 = vrot.lane.b32.xlu0 %v8021, 32
    %v8081 = vpop.permute.xlu0 %8080
    %v8098 = vmul.f32 %v8027, %v8051
    %v8099 = vmul.f32 %v8027, %v8053
    %v8100 = vmul.f32 %v8027, %v8055
    %v8101 = vmul.f32 %v8027, %v8057
    %v8102 = vmul.f32 %v8027, %v8059
    %v8103 = vmul.f32 %v8027, %v8061
    %v8104 = vmul.f32 %v8027, %v8063
    %v8105 = vmul.f32 %v8027, %v8065
    %v8106 = vmul.f32 %v8031, %v8067
    %v8107 = vmul.f32 %v8031, %v8069
    %v8108 = vmul.f32 %v8031, %v8071
    %v8109 = vmul.f32 %v8031, %v8073
    %v8110 = vmul.f32 %v8031, %v8075
    %v8111 = vmul.f32 %v8031, %v8077
    %v8112 = vmul.f32 %v8031, %v8079
    %v8113 = vmul.f32 %v8031, %v8081
    %8130 = vrot.lane.b32.xlu0 %v8098, 96
    %v8131 = vpop.permute.xlu0 %8130
    %8132 = vrot.lane.b32.xlu0 %v8099, 96
    %v8133 = vpop.permute.xlu0 %8132
    %8134 = vrot.lane.b32.xlu0 %v8100, 96
    %v8135 = vpop.permute.xlu0 %8134
    %8136 = vrot.lane.b32.xlu0 %v8101, 96
    %v8137 = vpop.permute.xlu0 %8136
    %8138 = vrot.lane.b32.xlu0 %v8102, 96
    %v8139 = vpop.permute.xlu0 %8138
    %8140 = vrot.lane.b32.xlu0 %v8103, 96
    %v8141 = vpop.permute.xlu0 %8140
    %8142 = vrot.lane.b32.xlu0 %v8104, 96
    %v8143 = vpop.permute.xlu0 %8142
    %8144 = vrot.lane.b32.xlu0 %v8105, 96
    %v8145 = vpop.permute.xlu0 %8144
    %8146 = vrot.lane.b32.xlu0 %v8106, 96
    %v8147 = vpop.permute.xlu0 %8146
    %8148 = vrot.lane.b32.xlu0 %v8107, 96
    %v8149 = vpop.permute.xlu0 %8148
    %8150 = vrot.lane.b32.xlu0 %v8108, 96
    %v8151 = vpop.permute.xlu0 %8150
    %8152 = vrot.lane.b32.xlu0 %v8109, 96
    %v8153 = vpop.permute.xlu0 %8152
    %8154 = vrot.lane.b32.xlu0 %v8110, 96
    %v8155 = vpop.permute.xlu0 %8154
    %8156 = vrot.lane.b32.xlu0 %v8111, 96
    %v8157 = vpop.permute.xlu0 %8156
    %8158 = vrot.lane.b32.xlu0 %v8112, 96
    %v8159 = vpop.permute.xlu0 %8158
    %8160 = vrot.lane.b32.xlu0 %v8113, 96
    %v8161 = vpop.permute.xlu0 %8160
    %v8178 = vadd.f32 %v7276, %v8131
    %v8179 = vadd.f32 %v7277, %v8133
    %v8180 = vadd.f32 %v7278, %v8135
    %v8181 = vadd.f32 %v7279, %v8137
    %v8182 = vadd.f32 %v7280, %v8139
    %v8183 = vadd.f32 %v7281, %v8141
    %v8184 = vadd.f32 %v7282, %v8143
    %v8185 = vadd.f32 %v7283, %v8145
    %v8186 = vadd.f32 %v7284, %v8147
    %v8187 = vadd.f32 %v7285, %v8149
    %v8188 = vadd.f32 %v7286, %v8151
    %v8189 = vadd.f32 %v7287, %v8153
    %v8190 = vadd.f32 %v7288, %v8155
    %v8191 = vadd.f32 %v7289, %v8157
    %v8192 = vadd.f32 %v7290, %v8159
    %v8193 = vadd.f32 %v7291, %v8161
    %v8194 = vld [vmem:[%s103] sm:$0xf]
    %v8195 = vld [vmem:[%s103 + $0x4] sm:$0xf]
    %v8196 = vld [vmem:[%s103 + $0x8] sm:$0xf]
    %v8197 = vld [vmem:[%s103 + $0xc] sm:$0xf]
    %v8198 = vld [vmem:[#allocation18] sm:$0x1]
    %v8200 = vlaneseq
    %v8201 = vshrl.u32 %v8200, 7
    %v8202 = vsub.s32 0, %v8201
    %v8203 = vrot.slane %v8198, %v8202
    %v8209 = vunpack.c.l.b16 %v8194
    %v8210 = vunpack.c.l.b16 %v8195
    %v8211 = vunpack.c.l.b16 %v8196
    %v8212 = vunpack.c.l.b16 %v8197
    %v8213 = vpack.c.b16 %v8210, %v8209
    %v8214 = vpack.c.b16 %v8212, %v8211
    %8217 = vmatprep.subr.bf16.mxu0 0
    %8218 = vmatpush1.bf16.msra.mxu0 %v8213
    %8219 = vmatprep.subr.bf16.mxu0 0
    %8220 = vmatpush1.bf16.msra.mxu0 %v8214
    %8221 = vmatprep.subr.bf16.mxu0 0
    %8222 = vmatpush1.bf16.msra.mxu0 0
    %8223 = vmatprep.subr.bf16.mxu0 0
    %8224 = vmatpush1.bf16.msra.mxu0 0
    %8225 = vmatprep.subr.bf16.mxu0 0
    %8226 = vmatpush1.bf16.msra.mxu0 0
    %8227 = vmatprep.subr.bf16.mxu0 0
    %8228 = vmatpush1.bf16.msra.mxu0 0
    %8229 = vmatprep.subr.bf16.mxu0 0
    %8230 = vmatpush1.bf16.msra.mxu0 0
    %8231 = vmatprep.subr.bf16.mxu0 0
    %8232 = vmatpush1.bf16.msra.mxu0 0
    %8233 = vmatprep.subr.bf16.mxu0 0
    %8234 = vmatpush1.bf16.msra.mxu0 0
    %8235 = vmatprep.subr.bf16.mxu0 0
    %8236 = vmatpush1.bf16.msra.mxu0 0
    %8237 = vmatprep.subr.bf16.mxu0 0
    %8238 = vmatpush1.bf16.msra.mxu0 0
    %8239 = vmatprep.subr.bf16.mxu0 0
    %8240 = vmatpush1.bf16.msra.mxu0 0
    %8241 = vmatprep.subr.bf16.mxu0 0
    %8242 = vmatpush1.bf16.msra.mxu0 0
    %8243 = vmatprep.subr.bf16.mxu0 0
    %8244 = vmatpush1.bf16.msra.mxu0 0
    %8245 = vmatprep.subr.bf16.mxu0 0
    %8246 = vmatpush1.bf16.msra.mxu0 0
    %8247 = vmatprep.subr.bf16.mxu0 0
    %8248 = vmatpush1.bf16.msra.mxu0 0
    %8249 = vmatprep.mubr.bf16.mxu0 0
    %8250 = vmatmul.mubr.bf16.gmra.mrb[0].mxu0 %v1077
    %v8251 = vpop.f32.mrb[0].mxu0
    %v8252 = vadd.f32 %v8203, %v8251
    %v8253 = vpop.f32.mrb[0].mxu0
    %v8254 = vpop.f32.mrb[0].mxu0
    %v8255 = vpop.f32.mrb[0].mxu0
    %8256 = vdwg.mxu0
    %v8259 = vunpack.c.l.s4 1966171168
    %v8260 = vunpack.c.0.s8 %v8259
    %v8261 = vlaneseq
    %v8262 = vshrl.u32 %v8261, 7
    %v8263 = vsub.s32 %v8260, %v8262
    %v8264 = vrot.slane %v8252, %v8263
    %v8265 = vcombine.high %v8264, %v8264
    %v8267 = vunpack.c.l.s4 1966171168
    %v8268 = vunpack.c.0.s8 %v8267
    %v8269 = vlaneseq
    %v8270 = vshrl.u32 %v8269, 7
    %v8271 = vsub.s32 %v8268, %v8270
    %v8272 = vrot.slane %v8264, %v8271
    %v8274 = vunpack.c.l.s4 1966171168
    %v8275 = vunpack.c.0.s8 %v8274
    %v8276 = vlaneseq
    %v8277 = vshrl.u32 %v8276, 7
    %v8278 = vsub.s32 %v8275, %v8277
    %v8279 = vrot.slane %v8265, %v8278
    %v8282 = vsel %vm588, %v8178, 0.0
    %8283 = vadd.xlane.f32.xlu0 %v8282
    %v8284 = vpop.xlane.xlu0 %8283
    %v8285 = vsel %vm588, %v8179, 0.0
    %8286 = vadd.xlane.f32.xlu0 %v8285
    %v8287 = vpop.xlane.xlu0 %8286
    %v8288 = vsel %vm588, %v8180, 0.0
    %8289 = vadd.xlane.f32.xlu0 %v8288
    %v8290 = vpop.xlane.xlu0 %8289
    %v8291 = vsel %vm588, %v8181, 0.0
    %8292 = vadd.xlane.f32.xlu0 %v8291
    %v8293 = vpop.xlane.xlu0 %8292
    %v8294 = vsel %vm588, %v8182, 0.0
    %8295 = vadd.xlane.f32.xlu0 %v8294
    %v8296 = vpop.xlane.xlu0 %8295
    %v8297 = vsel %vm588, %v8183, 0.0
    %8298 = vadd.xlane.f32.xlu0 %v8297
    %v8299 = vpop.xlane.xlu0 %8298
    %v8300 = vsel %vm588, %v8184, 0.0
    %8301 = vadd.xlane.f32.xlu0 %v8300
    %v8302 = vpop.xlane.xlu0 %8301
    %v8303 = vsel %vm588, %v8185, 0.0
    %8304 = vadd.xlane.f32.xlu0 %v8303
    %v8305 = vpop.xlane.xlu0 %8304
    %v8306 = vsel %vm588, %v8186, 0.0
    %8307 = vadd.xlane.f32.xlu0 %v8306
    %v8308 = vpop.xlane.xlu0 %8307
    %v8309 = vsel %vm588, %v8187, 0.0
    %8310 = vadd.xlane.f32.xlu0 %v8309
    %v8311 = vpop.xlane.xlu0 %8310
    %v8312 = vsel %vm588, %v8188, 0.0
    %8313 = vadd.xlane.f32.xlu0 %v8312
    %v8314 = vpop.xlane.xlu0 %8313
    %v8315 = vsel %vm588, %v8189, 0.0
    %8316 = vadd.xlane.f32.xlu0 %v8315
    %v8317 = vpop.xlane.xlu0 %8316
    %v8318 = vsel %vm588, %v8190, 0.0
    %8319 = vadd.xlane.f32.xlu0 %v8318
    %v8320 = vpop.xlane.xlu0 %8319
    %v8321 = vsel %vm588, %v8191, 0.0
    %8322 = vadd.xlane.f32.xlu0 %v8321
    %v8323 = vpop.xlane.xlu0 %8322
    %v8324 = vsel %vm588, %v8192, 0.0
    %8325 = vadd.xlane.f32.xlu0 %v8324
    %v8326 = vpop.xlane.xlu0 %8325
    %v8327 = vsel %vm588, %v8193, 0.0
    %8328 = vadd.xlane.f32.xlu0 %v8327
    %v8329 = vpop.xlane.xlu0 %8328
    %v8330 = vmul.f32 %v8284, %v1295
    %v8331 = vmul.f32 %v8287, %v1295
    %v8332 = vmul.f32 %v8290, %v1295
    %v8333 = vmul.f32 %v8293, %v1295
    %v8334 = vmul.f32 %v8296, %v1295
    %v8335 = vmul.f32 %v8299, %v1295
    %v8336 = vmul.f32 %v8302, %v1295
    %v8337 = vmul.f32 %v8305, %v1295
    %v8338 = vmul.f32 %v8308, %v1295
    %v8339 = vmul.f32 %v8311, %v1295
    %v8340 = vmul.f32 %v8314, %v1295
    %v8341 = vmul.f32 %v8317, %v1295
    %v8342 = vmul.f32 %v8320, %v1295
    %v8343 = vmul.f32 %v8323, %v1295
    %v8344 = vmul.f32 %v8326, %v1295
    %v8345 = vmul.f32 %v8329, %v1295
    %v8346 = vsub.f32 %v8178, %v8330
    %v8347 = vsub.f32 %v8179, %v8331
    %v8348 = vsub.f32 %v8180, %v8332
    %v8349 = vsub.f32 %v8181, %v8333
    %v8350 = vsub.f32 %v8182, %v8334
    %v8351 = vsub.f32 %v8183, %v8335
    %v8352 = vsub.f32 %v8184, %v8336
    %v8353 = vsub.f32 %v8185, %v8337
    %v8354 = vsub.f32 %v8186, %v8338
    %v8355 = vsub.f32 %v8187, %v8339
    %v8356 = vsub.f32 %v8188, %v8340
    %v8357 = vsub.f32 %v8189, %v8341
    %v8358 = vsub.f32 %v8190, %v8342
    %v8359 = vsub.f32 %v8191, %v8343
    %v8360 = vsub.f32 %v8192, %v8344
    %v8361 = vsub.f32 %v8193, %v8345
    %v8362 = vmul.f32 %v8346, %v8346
    %v8363 = vmul.f32 %v8347, %v8347
    %v8364 = vmul.f32 %v8348, %v8348
    %v8365 = vmul.f32 %v8349, %v8349
    %v8366 = vmul.f32 %v8350, %v8350
    %v8367 = vmul.f32 %v8351, %v8351
    %v8368 = vmul.f32 %v8352, %v8352
    %v8369 = vmul.f32 %v8353, %v8353
    %v8370 = vmul.f32 %v8354, %v8354
    %v8371 = vmul.f32 %v8355, %v8355
    %v8372 = vmul.f32 %v8356, %v8356
    %v8373 = vmul.f32 %v8357, %v8357
    %v8374 = vmul.f32 %v8358, %v8358
    %v8375 = vmul.f32 %v8359, %v8359
    %v8376 = vmul.f32 %v8360, %v8360
    %v8377 = vmul.f32 %v8361, %v8361
    %v8378 = vsel %vm588, %v8362, 0.0
    %8379 = vadd.xlane.f32.xlu0 %v8378
    %v8380 = vpop.xlane.xlu0 %8379
    %v8381 = vsel %vm588, %v8363, 0.0
    %8382 = vadd.xlane.f32.xlu0 %v8381
    %v8383 = vpop.xlane.xlu0 %8382
    %v8384 = vsel %vm588, %v8364, 0.0
    %8385 = vadd.xlane.f32.xlu0 %v8384
    %v8386 = vpop.xlane.xlu0 %8385
    %v8387 = vsel %vm588, %v8365, 0.0
    %8388 = vadd.xlane.f32.xlu0 %v8387
    %v8389 = vpop.xlane.xlu0 %8388
    %v8390 = vsel %vm588, %v8366, 0.0
    %8391 = vadd.xlane.f32.xlu0 %v8390
    %v8392 = vpop.xlane.xlu0 %8391
    %v8393 = vsel %vm588, %v8367, 0.0
    %8394 = vadd.xlane.f32.xlu0 %v8393
    %v8395 = vpop.xlane.xlu0 %8394
    %v8396 = vsel %vm588, %v8368, 0.0
    %8397 = vadd.xlane.f32.xlu0 %v8396
    %v8398 = vpop.xlane.xlu0 %8397
    %v8399 = vsel %vm588, %v8369, 0.0
    %8400 = vadd.xlane.f32.xlu0 %v8399
    %v8401 = vpop.xlane.xlu0 %8400
    %v8402 = vsel %vm588, %v8370, 0.0
    %8403 = vadd.xlane.f32.xlu0 %v8402
    %v8404 = vpop.xlane.xlu0 %8403
    %v8405 = vsel %vm588, %v8371, 0.0
    %8406 = vadd.xlane.f32.xlu0 %v8405
    %v8407 = vpop.xlane.xlu0 %8406
    %v8408 = vsel %vm588, %v8372, 0.0
    %8409 = vadd.xlane.f32.xlu0 %v8408
    %v8410 = vpop.xlane.xlu0 %8409
    %v8411 = vsel %vm588, %v8373, 0.0
    %8412 = vadd.xlane.f32.xlu0 %v8411
    %v8413 = vpop.xlane.xlu0 %8412
    %v8414 = vsel %vm588, %v8374, 0.0
    %8415 = vadd.xlane.f32.xlu0 %v8414
    %v8416 = vpop.xlane.xlu0 %8415
    %v8417 = vsel %vm588, %v8375, 0.0
    %8418 = vadd.xlane.f32.xlu0 %v8417
    %v8419 = vpop.xlane.xlu0 %8418
    %v8420 = vsel %vm588, %v8376, 0.0
    %8421 = vadd.xlane.f32.xlu0 %v8420
    %v8422 = vpop.xlane.xlu0 %8421
    %v8423 = vsel %vm588, %v8377, 0.0
    %8424 = vadd.xlane.f32.xlu0 %v8423
    %v8425 = vpop.xlane.xlu0 %8424
    %v8426 = vmul.f32 %v8380, %v1295
    %v8427 = vmul.f32 %v8383, %v1295
    %v8428 = vmul.f32 %v8386, %v1295
    %v8429 = vmul.f32 %v8389, %v1295
    %v8430 = vmul.f32 %v8392, %v1295
    %v8431 = vmul.f32 %v8395, %v1295
    %v8432 = vmul.f32 %v8398, %v1295
    %v8433 = vmul.f32 %v8401, %v1295
    %v8434 = vmul.f32 %v8404, %v1295
    %v8435 = vmul.f32 %v8407, %v1295
    %v8436 = vmul.f32 %v8410, %v1295
    %v8437 = vmul.f32 %v8413, %v1295
    %v8438 = vmul.f32 %v8416, %v1295
    %v8439 = vmul.f32 %v8419, %v1295
    %v8440 = vmul.f32 %v8422, %v1295
    %v8441 = vmul.f32 %v8425, %v1295
    %v8442 = vadd.f32 %v8426, 1e-06
    %v8443 = vadd.f32 %v8427, 1e-06
    %v8444 = vadd.f32 %v8428, 1e-06
    %v8445 = vadd.f32 %v8429, 1e-06
    %v8446 = vadd.f32 %v8430, 1e-06
    %v8447 = vadd.f32 %v8431, 1e-06
    %v8448 = vadd.f32 %v8432, 1e-06
    %v8449 = vadd.f32 %v8433, 1e-06
    %v8450 = vadd.f32 %v8434, 1e-06
    %v8451 = vadd.f32 %v8435, 1e-06
    %v8452 = vadd.f32 %v8436, 1e-06
    %v8453 = vadd.f32 %v8437, 1e-06
    %v8454 = vadd.f32 %v8438, 1e-06
    %v8455 = vadd.f32 %v8439, 1e-06
    %v8456 = vadd.f32 %v8440, 1e-06
    %v8457 = vadd.f32 %v8441, 1e-06
    %v8458 = vrsqrt.pop %v8442
    %v8459 = vrsqrt.pop %v8443
    %v8460 = vrsqrt.pop %v8444
    %v8461 = vrsqrt.pop %v8445
    %v8462 = vrsqrt.pop %v8446
    %v8463 = vrsqrt.pop %v8447
    %v8464 = vrsqrt.pop %v8448
    %v8465 = vrsqrt.pop %v8449
    %v8466 = vrsqrt.pop %v8450
    %v8467 = vrsqrt.pop %v8451
    %v8468 = vrsqrt.pop %v8452
    %v8469 = vrsqrt.pop %v8453
    %v8470 = vrsqrt.pop %v8454
    %v8471 = vrsqrt.pop %v8455
    %v8472 = vrsqrt.pop %v8456
    %v8473 = vrsqrt.pop %v8457
    %v8474 = vmul.f32 %v8346, %v8458
    %v8475 = vmul.f32 %v8347, %v8459
    %v8476 = vmul.f32 %v8348, %v8460
    %v8477 = vmul.f32 %v8349, %v8461
    %v8478 = vmul.f32 %v8350, %v8462
    %v8479 = vmul.f32 %v8351, %v8463
    %v8480 = vmul.f32 %v8352, %v8464
    %v8481 = vmul.f32 %v8353, %v8465
    %v8482 = vmul.f32 %v8354, %v8466
    %v8483 = vmul.f32 %v8355, %v8467
    %v8484 = vmul.f32 %v8356, %v8468
    %v8485 = vmul.f32 %v8357, %v8469
    %v8486 = vmul.f32 %v8358, %v8470
    %v8487 = vmul.f32 %v8359, %v8471
    %v8488 = vmul.f32 %v8360, %v8472
    %v8489 = vmul.f32 %v8361, %v8473
    %v8490 = vadd.f32 %v8272, 1.0
    %v8491 = vadd.f32 %v8279, 1.0
    %v8494 = vlaneseq
    %v8495 = vshrl.u32 %v8494, 7
    %v8496 = vsub.s32 0, %v8495
    %v8497 = vrot.slane %v8490, %v8496
    %v8498 = vlaneseq
    %v8499 = vshrl.u32 %v8498, 7
    %v8500 = vsub.s32 0, %v8499
    %v8501 = vrot.slane %v8491, %v8500
    %v8504 = vmul.f32 %v8474, %v8497
    %v8505 = vmul.f32 %v8475, %v8497
    %v8506 = vmul.f32 %v8476, %v8497
    %v8507 = vmul.f32 %v8477, %v8497
    %v8508 = vmul.f32 %v8478, %v8497
    %v8509 = vmul.f32 %v8479, %v8497
    %v8510 = vmul.f32 %v8480, %v8497
    %v8511 = vmul.f32 %v8481, %v8497
    %v8512 = vmul.f32 %v8482, %v8501
    %v8513 = vmul.f32 %v8483, %v8501
    %v8514 = vmul.f32 %v8484, %v8501
    %v8515 = vmul.f32 %v8485, %v8501
    %v8516 = vmul.f32 %v8486, %v8501
    %v8517 = vmul.f32 %v8487, %v8501
    %v8518 = vmul.f32 %v8488, %v8501
    %v8519 = vmul.f32 %v8489, %v8501
    %v8520 = vlaneseq
    %v8521 = vshrl.u32 %v8520, 7
    %v8522 = vsub.s32 0, %v8521
    %v8523 = vrot.slane %v8272, %v8522
    %v8524 = vlaneseq
    %v8525 = vshrl.u32 %v8524, 7
    %v8526 = vsub.s32 0, %v8525
    %v8527 = vrot.slane %v8279, %v8526
    %8528 = vrot.lane.b32.xlu0 %v8523, 96
    %v8529 = vpop.permute.xlu0 %8528
    %8530 = vrot.lane.b32.xlu0 %v8527, 96
    %v8531 = vpop.permute.xlu0 %8530
    %v8534 = vadd.f32 %v8504, %v8529
    %v8535 = vadd.f32 %v8505, %v8529
    %v8536 = vadd.f32 %v8506, %v8529
    %v8537 = vadd.f32 %v8507, %v8529
    %v8538 = vadd.f32 %v8508, %v8529
    %v8539 = vadd.f32 %v8509, %v8529
    %v8540 = vadd.f32 %v8510, %v8529
    %v8541 = vadd.f32 %v8511, %v8529
    %v8542 = vadd.f32 %v8512, %v8531
    %v8543 = vadd.f32 %v8513, %v8531
    %v8544 = vadd.f32 %v8514, %v8531
    %v8545 = vadd.f32 %v8515, %v8531
    %v8546 = vadd.f32 %v8516, %v8531
    %v8547 = vadd.f32 %v8517, %v8531
    %v8548 = vadd.f32 %v8518, %v8531
    %v8549 = vadd.f32 %v8519, %v8531
    %v8550 = vpack.c.bf16 %v8535, %v8534
    %v8551 = vpack.c.bf16 %v8537, %v8536
    %v8552 = vpack.c.bf16 %v8539, %v8538
    %v8553 = vpack.c.bf16 %v8541, %v8540
    %v8554 = vpack.c.bf16 %v8543, %v8542
    %v8555 = vpack.c.bf16 %v8545, %v8544
    %v8556 = vpack.c.bf16 %v8547, %v8546
    %v8557 = vpack.c.bf16 %v8549, %v8548
    %v8558 = vld [vmem:[%s107] sm:$0xf]
    %v8559 = vld [vmem:[%s107 + $0x4] sm:$0xf]
    %v8560 = vld [vmem:[%s107 + $0x8] sm:$0xf]
    %v8561 = vld [vmem:[%s107 + $0xc] sm:$0xf]
    %v8562 = vld [vmem:[#allocation19] sm:$0x1]
    %v8564 = vlaneseq
    %v8565 = vshrl.u32 %v8564, 7
    %v8566 = vsub.s32 0, %v8565
    %v8567 = vrot.slane %v8562, %v8566
    %v8573 = vunpack.c.l.b16 %v8558
    %v8574 = vunpack.c.l.b16 %v8559
    %v8575 = vunpack.c.l.b16 %v8560
    %v8576 = vunpack.c.l.b16 %v8561
    %v8577 = vpack.c.b16 %v8574, %v8573
    %v8578 = vpack.c.b16 %v8576, %v8575
    %v8582 = vsel %vm588, %v8550, 0
    %v8585 = vsel %vm588, %v8551, 0
    %v8588 = vsel %vm588, %v8552, 0
    %v8591 = vsel %vm588, %v8553, 0
    %v8594 = vsel %vm588, %v8554, 0
    %v8597 = vsel %vm588, %v8555, 0
    %v8600 = vsel %vm588, %v8556, 0
    %v8603 = vsel %vm588, %v8557, 0
    %8605 = vmatprep.subr.bf16.mxu0 0
    %8606 = vmatpush1.bf16.msra.mxu0 %v8577
    %8607 = vmatprep.subr.bf16.mxu0 0
    %8608 = vmatpush1.bf16.msra.mxu0 %v8578
    %8609 = vmatprep.subr.bf16.mxu0 0
    %8610 = vmatpush1.bf16.msra.mxu0 0
    %8611 = vmatprep.subr.bf16.mxu0 0
    %8612 = vmatpush1.bf16.msra.mxu0 0
    %8613 = vmatprep.subr.bf16.mxu0 0
    %8614 = vmatpush1.bf16.msra.mxu0 0
    %8615 = vmatprep.subr.bf16.mxu0 0
    %8616 = vmatpush1.bf16.msra.mxu0 0
    %8617 = vmatprep.subr.bf16.mxu0 0
    %8618 = vmatpush1.bf16.msra.mxu0 0
    %8619 = vmatprep.subr.bf16.mxu0 0
    %8620 = vmatpush1.bf16.msra.mxu0 0
    %8621 = vmatprep.subr.bf16.mxu0 0
    %8622 = vmatpush1.bf16.msra.mxu0 0
    %8623 = vmatprep.subr.bf16.mxu0 0
    %8624 = vmatpush1.bf16.msra.mxu0 0
    %8625 = vmatprep.subr.bf16.mxu0 0
    %8626 = vmatpush1.bf16.msra.mxu0 0
    %8627 = vmatprep.subr.bf16.mxu0 0
    %8628 = vmatpush1.bf16.msra.mxu0 0
    %8629 = vmatprep.subr.bf16.mxu0 0
    %8630 = vmatpush1.bf16.msra.mxu0 0
    %8631 = vmatprep.subr.bf16.mxu0 0
    %8632 = vmatpush1.bf16.msra.mxu0 0
    %8633 = vmatprep.subr.bf16.mxu0 0
    %8634 = vmatpush1.bf16.msra.mxu0 0
    %8635 = vmatprep.subr.bf16.mxu0 0
    %8636 = vmatpush1.bf16.msra.mxu0 0
    %8637 = vmatprep.mubr.bf16.mxu0 0
    %8638 = vmatmul.mubr.bf16.gmra.mrb[0].mxu0 %v8582
    %v8639 = vpop.f32.mrb[0].mxu0
    %v8640 = vadd.f32 %v8567, %v8639
    %v8641 = vpop.f32.mrb[0].mxu0
    %v8642 = vpop.f32.mrb[0].mxu0
    %v8643 = vadd.f32 %v8567, %v8642
    %v8644 = vpop.f32.mrb[0].mxu0
    %8645 = vmatprep.mubr.bf16.mxu0 0
    %8646 = vmatmul.mubr.bf16.gmra.mrb[0].mxu0 %v8585
    %v8647 = vpop.f32.mrb[0].mxu0
    %v8648 = vadd.f32 %v8567, %v8647
    %v8649 = vpop.f32.mrb[0].mxu0
    %v8650 = vpop.f32.mrb[0].mxu0
    %v8651 = vadd.f32 %v8567, %v8650
    %v8652 = vpop.f32.mrb[0].mxu0
    %8653 = vmatprep.mubr.bf16.mxu0 0
    %8654 = vmatmul.mubr.bf16.gmra.mrb[0].mxu0 %v8588
    %v8655 = vpop.f32.mrb[0].mxu0
    %v8656 = vadd.f32 %v8567, %v8655
    %v8657 = vpop.f32.mrb[0].mxu0
    %v8658 = vpop.f32.mrb[0].mxu0
    %v8659 = vadd.f32 %v8567, %v8658
    %v8660 = vpop.f32.mrb[0].mxu0
    %8661 = vmatprep.mubr.bf16.mxu0 0
    %8662 = vmatmul.mubr.bf16.gmra.mrb[0].mxu0 %v8591
    %v8663 = vpop.f32.mrb[0].mxu0
    %v8664 = vadd.f32 %v8567, %v8663
    %v8665 = vpop.f32.mrb[0].mxu0
    %v8666 = vpop.f32.mrb[0].mxu0
    %v8667 = vadd.f32 %v8567, %v8666
    %v8668 = vpop.f32.mrb[0].mxu0
    %8669 = vmatprep.mubr.bf16.mxu0 0
    %8670 = vmatmul.mubr.bf16.gmra.mrb[0].mxu0 %v8594
    %v8671 = vpop.f32.mrb[0].mxu0
    %v8672 = vadd.f32 %v8567, %v8671
    %v8673 = vpop.f32.mrb[0].mxu0
    %v8674 = vpop.f32.mrb[0].mxu0
    %v8675 = vadd.f32 %v8567, %v8674
    %v8676 = vpop.f32.mrb[0].mxu0
    %8677 = vmatprep.mubr.bf16.mxu0 0
    %8678 = vmatmul.mubr.bf16.gmra.mrb[0].mxu0 %v8597
    %v8679 = vpop.f32.mrb[0].mxu0
    %v8680 = vadd.f32 %v8567, %v8679
    %v8681 = vpop.f32.mrb[0].mxu0
    %v8682 = vpop.f32.mrb[0].mxu0
    %v8683 = vadd.f32 %v8567, %v8682
    %v8684 = vpop.f32.mrb[0].mxu0
    %8685 = vmatprep.mubr.bf16.mxu0 0
    %8686 = vmatmul.mubr.bf16.gmra.mrb[0].mxu0 %v8600
    %v8687 = vpop.f32.mrb[0].mxu0
    %v8688 = vadd.f32 %v8567, %v8687
    %v8689 = vpop.f32.mrb[0].mxu0
    %v8690 = vpop.f32.mrb[0].mxu0
    %v8691 = vadd.f32 %v8567, %v8690
    %v8692 = vpop.f32.mrb[0].mxu0
    %8693 = vmatprep.mubr.bf16.mxu0 0
    %8694 = vmatmul.mubr.bf16.gmra.mrb[0].mxu0 %v8603
    %v8695 = vpop.f32.mrb[0].mxu0
    %v8696 = vadd.f32 %v8567, %v8695
    %v8697 = vpop.f32.mrb[0].mxu0
    %v8698 = vpop.f32.mrb[0].mxu0
    %v8699 = vadd.f32 %v8567, %v8698
    %v8700 = vpop.f32.mrb[0].mxu0
    %8701 = vdwg.mxu0
    %8702 = vst.msk [vmem:[%s111] sm:$0xff] %vm822, %v8640
    %8703 = vst.msk [vmem:[%s111 + $0x8] sm:$0xff] %vm822, %v8643
    %8704 = vst.msk [vmem:[%s111 + $0x10] sm:$0xff] %vm822, %v8648
    %8705 = vst.msk [vmem:[%s111 + $0x18] sm:$0xff] %vm822, %v8651
    %8706 = vst.msk [vmem:[%s111 + $0x20] sm:$0xff] %vm822, %v8656
    %8707 = vst.msk [vmem:[%s111 + $0x28] sm:$0xff] %vm822, %v8659
    %8708 = vst.msk [vmem:[%s111 + $0x30] sm:$0xff] %vm822, %v8664
    %8709 = vst.msk [vmem:[%s111 + $0x38] sm:$0xff] %vm822, %v8667
    %8710 = vst.msk [vmem:[%s111 + $0x40] sm:$0xff] %vm822, %v8672
    %8711 = vst.msk [vmem:[%s111 + $0x48] sm:$0xff] %vm822, %v8675
    %8712 = vst.msk [vmem:[%s111 + $0x50] sm:$0xff] %vm822, %v8680
    %8713 = vst.msk [vmem:[%s111 + $0x58] sm:$0xff] %vm822, %v8683
    %8714 = vst.msk [vmem:[%s111 + $0x60] sm:$0xff] %vm822, %v8688
    %8715 = vst.msk [vmem:[%s111 + $0x68] sm:$0xff] %vm822, %v8691
    %8716 = vst.msk [vmem:[%s111 + $0x70] sm:$0xff] %vm822, %v8696
    %8717 = vst.msk [vmem:[%s111 + $0x78] sm:$0xff] %vm822, %v8699
    // Predicated region
    $region270: #{sd3_transformer_forward.1} parent=1 // pred_check
      _
    $region271: #{sd3_transformer_forward.1} parent=1 // pred_check_branch
      %8719 = sbr.rel (0) target = $region273
    $region272: #{sd3_transformer_forward.1} parent=1 // pred_region
      _
    $region273: #{sd3_transformer_forward.1} parent=1 // pred_fallthru
      _
    // Predicated region
    $region274: #{sd3_transformer_forward.1} parent=1 // pred_check
      _
    $region275: #{sd3_transformer_forward.1} parent=1 // pred_check_branch
      %8721 = sbr.rel (0) target = $region277
    $region276: #{sd3_transformer_forward.1} parent=1 // pred_region
      _
    $region277: #{sd3_transformer_forward.1} parent=1 // pred_fallthru
      _
    %8722 = vsyncpa [#allocation3], 1
    %8723 = vsyncpa [#allocation5], 1
    %8724 = vsyncpa [#allocation8], 1
    %8725 = vsyncpa [#allocation11], 1
    %8726 = vsyncpa [#allocation14], 1
    %8727 = vsyncpa [#allocation17], 1
    %8728 = vsyncpa [#allocation20], 1

</llo_original>
